<compile_context>
chip_gen: v6e
topology: v6e:2x2x1
jax: 0.10.0
libtpu: 0.0.40
codegen_flags: <defaults>
</compile_context>

<pallas_src>
import functools

import jax
import jax.numpy as jnp
from jax.experimental import pallas as pl
from jax.experimental.pallas import tpu as pltpu


def _round_up(n, m):
    return (n + m - 1) // m * m


# --------------------------- exact-ish GELU (erf) ----------------------------
# torch.nn.functional.gelu default is the exact erf-based GELU. We evaluate erf
# with the Abramowitz & Stegun 7.1.26 polynomial (max abs err ~1.5e-7) so the
# kernel only needs exp / mul / add / div / select — all guaranteed to lower.
_ERF_P = 0.3275911
_ERF_A = (0.254829592, -0.284496736, 1.421413741, -1.453152027, 1.061405429)


def _erf_approx(x):
    a1, a2, a3, a4, a5 = _ERF_A
    s = jnp.where(x >= 0.0, 1.0, -1.0)
    ax = jnp.abs(x)
    t = 1.0 / (1.0 + _ERF_P * ax)
    poly = ((((a5 * t + a4) * t + a3) * t + a2) * t + a1) * t
    return s * (1.0 - poly * jnp.exp(-ax * ax))


def _gelu(x):
    # Exact (erf-based) GELU; _gelu(0) == 0 exactly (needed for the pad trick).
    return 0.5 * x * (1.0 + _erf_approx(x * 0.7071067811865476))


# ------------------------------ fused FFN kernel -----------------------------
def _ffn_kernel(x_ref, w1_ref, wd_ref, w3_ref, o_ref, h_ref, g_ref, *, H, W, G_pad):
    # x_ref : (1, Np_pad, C)   flattened zero-padded image (Np = (H+2)*(W+2))
    # w1_ref: (C, Cm)          1x1 conv #1
    # wd_ref: (9, Cm)          3x3 depthwise conv taps (row-major ky,kx)
    # w3_ref: (Cm, C)          1x1 conv #2
    # o_ref : (1, G_pad, C)    flattened output (G = H*W)
    # h_ref : VMEM (Np_pad, Cm) scratch — GELU(x @ w1) on the padded grid
    # g_ref : VMEM (G_pad, Cm)  scratch — GELU(depthwise conv) on the valid grid
    Wp = W + 2
    Cm = w1_ref.shape[1]
    G = H * W

    # Stage 1: pointwise conv (C -> Cm) + GELU, one big MXU matmul.
    h = jnp.dot(x_ref[0], w1_ref[...], preferred_element_type=jnp.float32)
    h_ref[...] = _gelu(h)  # padded border rows are exactly 0

    # Keep the (rare) alignment-pad tail of g defined; its rows are discarded.
    if G_pad != G:
        g_ref[pl.ds(G, G_pad - G), :] = jnp.zeros((G_pad - G, Cm), jnp.float32)

    # Stage 2: depthwise 3x3 conv + GELU, one output row at a time (pure VPU,
    # 2D slices of the flat scratch — no reshapes needed).
    wd = wd_ref[...]  # (9, Cm)
    for y in range(H):
        acc = jnp.zeros((W, Cm), jnp.float32)
        for dy in range(3):
            seg = h_ref[pl.ds((y + dy) * Wp, Wp), :]  # full padded row (Wp, Cm)
            for dx in range(3):
                k = 3 * dy + dx
                acc = acc + seg[dx:dx + W, :] * wd[k:k + 1, :]
        g_ref[pl.ds(y * W, W), :] = _gelu(acc)

    # Stage 3: pointwise conv (Cm -> C), one big MXU matmul into the output.
    out = jnp.dot(g_ref[...], w3_ref[...], preferred_element_type=jnp.float32)
    o_ref[0] = out.astype(o_ref.dtype)


def feedforward_pallas(x, w1, wd, w3):
    """x: (B, H, W, C) channels-last. w1: (C, Cm), wd: (3, 3, Cm), w3: (Cm, C)."""
    B, H, W, C = x.shape
    Cm = w1.shape[1]
    Hp, Wp = H + 2, W + 2
    Np = Hp * Wp
    Np_pad = _round_up(Np, 8)
    G = H * W
    G_pad = _round_up(G, 8)

    # Spatial zero-pad: bias-free convs + GELU(0)==0 means this border turns
    # into the zero border required by the padding=1 depthwise conv.
    x_pad = jnp.pad(x, ((0, 0), (1, 1), (1, 1), (0, 0)))
    x_flat = x_pad.reshape(B, Np, C)
    if Np_pad != Np:
        x_flat = jnp.pad(x_flat, ((0, 0), (0, Np_pad - Np), (0, 0)))
    wd_flat = wd.reshape(9, Cm)

    kernel = functools.partial(_ffn_kernel, H=H, W=W, G_pad=G_pad)
    out_flat = pl.pallas_call(
        kernel,
        out_shape=jax.ShapeDtypeStruct((B, G_pad, C), x.dtype),
        grid_spec=pltpu.PrefetchScalarGridSpec(
            num_scalar_prefetch=0,
            grid=(B,),
            in_specs=[
                pl.BlockSpec((1, Np_pad, C), lambda b: (b, 0, 0)),
                pl.BlockSpec((C, Cm), lambda b: (0, 0)),
                pl.BlockSpec((9, Cm), lambda b: (0, 0)),
                pl.BlockSpec((Cm, C), lambda b: (0, 0)),
            ],
            out_specs=pl.BlockSpec((1, G_pad, C), lambda b: (b, 0, 0)),
            scratch_shapes=[
                pltpu.VMEM((Np_pad, Cm), jnp.float32),
                pltpu.VMEM((G_pad, Cm), jnp.float32),
            ],
        ),
        compiler_params=pltpu.CompilerParams(
            dimension_semantics=("parallel",),
            vmem_limit_bytes=48 * 1024 * 1024,
        ),
    )(x_flat, w1, wd_flat, w3)
    return out_flat[:, :G, :].reshape(B, H, W, C)


# --------------------------- module-style wrapper ----------------------------
class FeedForwardPallas:
    """Pallas TPU port of the PyTorch FeedForward (channels-last)."""

    def __init__(self, dim, mult=4, *, key):
        cm = dim * mult
        self.dim, self.mult = dim, mult
        k1, k2, k3 = jax.random.split(key, 3)
        # Weight layouts: w1[c_in, c_out], wd[ky, kx, c], w3[c_in, c_out]
        # (the PyTorch Conv2d weights squeezed / transposed to channels-last).
        self.w1 = jax.random.normal(k1, (dim, cm), jnp.float32) / dim ** 0.5
        self.wd = jax.random.normal(k2, (3, 3, cm), jnp.float32) / 3.0
        self.w3 = jax.random.normal(k3, (cm, dim), jnp.float32) / cm ** 0.5

    def __call__(self, x):
        return feedforward_pallas(x, self.w1, self.wd, self.w3)


# -------------------------------- reference ----------------------------------
def feedforward_ref(x, w1, wd, w3):
    hi = jax.lax.Precision.HIGHEST
    B, H, W, _ = x.shape
    h = jax.nn.gelu(jnp.einsum("bhwc,cm->bhwm", x, w1, precision=hi),
                    approximate=False)
    hp = jnp.pad(h, ((0, 0), (1, 1), (1, 1), (0, 0)))
    g = jnp.zeros_like(h)
    for dy in range(3):
        for dx in range(3):
            g = g + hp[:, dy:dy + H, dx:dx + W, :] * wd[dy, dx, :]
    g = jax.nn.gelu(g, approximate=False)
    return jnp.einsum("bhwm,mc->bhwc", g, w3, precision=hi)


if __name__ == "__main__":
    key = jax.random.PRNGKey(0)
    B, H, W, C = 2, 16, 16, 32           # x: [b, h, w, c], dim = 32, mult = 4
    kx, kmod = jax.random.split(key)
    x = jax.random.normal(kx, (B, H, W, C), dtype=jnp.float32)

    module = FeedForwardPallas(C, mult=4, key=kmod)
    out = jax.block_until_ready(module(x))

    ref = feedforward_ref(x, module.w1, module.wd, module.w3)
    assert out.shape == (B, H, W, C)
    max_err = float(jnp.max(jnp.abs(out - ref)))
    assert jnp.allclose(out, ref, atol=2e-3, rtol=2e-3), (
        f"mismatch vs reference: max abs err {max_err}")

    print("KERNEL_OK")
</pallas_src>

<mosaic_0001>
module attributes {stable_mosaic.version = 11 : i64} {
  func.func @_ffn_kernel(%arg0: i32, %arg1: memref<1x328x32xf32, #tpu.memory_space<vmem>>, %arg2: memref<32x128xf32, #tpu.memory_space<vmem>>, %arg3: memref<9x128xf32, #tpu.memory_space<vmem>>, %arg4: memref<128x32xf32, #tpu.memory_space<vmem>>, %arg5: memref<1x256x32xf32, #tpu.memory_space<vmem>>, %arg6: memref<328x128xf32, #tpu.memory_space<vmem>>, %arg7: memref<256x128xf32, #tpu.memory_space<vmem>>) attributes {dimension_semantics = [#tpu.dimension_semantics<parallel>], iteration_bounds = array<i64: 2>, scalar_prefetch = 0 : i64, scratch_operands = 2 : i64, tpu.core_type = #tpu.core_type<tc>, window_params = [{transform_indices = @transform_0, window_bounds = array<i64: 1, 328, 32>}, {pipeline_mode = #tpu.pipeline_mode<synchronous>, transform_indices = @transform_1, window_bounds = array<i64: 32, 128>}, {pipeline_mode = #tpu.pipeline_mode<synchronous>, transform_indices = @transform_2, window_bounds = array<i64: 9, 128>}, {pipeline_mode = #tpu.pipeline_mode<synchronous>, transform_indices = @transform_3, window_bounds = array<i64: 128, 32>}, {transform_indices = @transform_4, window_bounds = array<i64: 1, 256, 32>}]} {
    %c0 = arith.constant 0 : index
    %c0_0 = arith.constant 0 : index
    %c0_1 = arith.constant 0 : index
    %0 = vector.load %arg1[%c0, %c0_0, %c0_1] : memref<1x328x32xf32, #tpu.memory_space<vmem>>, vector<1x328x32xf32>
    %1 = vector.shape_cast %0 : vector<1x328x32xf32> to vector<328x32xf32>
    %c0_2 = arith.constant 0 : index
    %c0_3 = arith.constant 0 : index
    %2 = vector.load %arg2[%c0_2, %c0_3] : memref<32x128xf32, #tpu.memory_space<vmem>>, vector<32x128xf32>
    %cst = arith.constant dense<0.000000e+00> : vector<328x128xf32>
    %3 = tpu.matmul %1, %2, %cst {dimension_numbers = #tpu.dot_dimension_numbers<[1], [0], [0], [1], [0, 0, 1, 1], [], []>} : vector<328x32xf32>, vector<32x128xf32>, vector<328x128xf32> -> vector<328x128xf32>
    %cst_4 = arith.constant 5.000000e-01 : f32
    %4 = vector.broadcast %cst_4 : f32 to vector<328x128xf32>
    %5 = arith.mulf %4, %3 : vector<328x128xf32>
    %cst_5 = arith.constant 0.707106769 : f32
    %6 = vector.broadcast %cst_5 : f32 to vector<328x128xf32>
    %7 = arith.mulf %3, %6 : vector<328x128xf32>
    %cst_6 = arith.constant 0.000000e+00 : f32
    %8 = vector.broadcast %cst_6 : f32 to vector<328x128xf32>
    %9 = arith.cmpf oge, %7, %8 : vector<328x128xf32>
    %cst_7 = arith.constant 1.000000e+00 : f32
    %cst_8 = arith.constant -1.000000e+00 : f32
    %10 = vector.broadcast %cst_7 : f32 to vector<328x128xf32>
    %11 = vector.broadcast %cst_8 : f32 to vector<328x128xf32>
    %12 = arith.select %9, %10, %11 : vector<328x128xi1>, vector<328x128xf32>
    %13 = math.absf %7 : vector<328x128xf32>
    %cst_9 = arith.constant 0.327591091 : f32
    %14 = vector.broadcast %cst_9 : f32 to vector<328x128xf32>
    %15 = arith.mulf %14, %13 : vector<328x128xf32>
    %cst_10 = arith.constant 1.000000e+00 : f32
    %16 = vector.broadcast %cst_10 : f32 to vector<328x128xf32>
    %17 = arith.addf %16, %15 : vector<328x128xf32>
    %cst_11 = arith.constant 1.000000e+00 : f32
    %18 = vector.broadcast %cst_11 : f32 to vector<328x128xf32>
    %19 = arith.divf %18, %17 : vector<328x128xf32>
    %cst_12 = arith.constant 1.06140542 : f32
    %20 = vector.broadcast %cst_12 : f32 to vector<328x128xf32>
    %21 = arith.mulf %20, %19 : vector<328x128xf32>
    %cst_13 = arith.constant -1.45315206 : f32
    %22 = vector.broadcast %cst_13 : f32 to vector<328x128xf32>
    %23 = arith.addf %21, %22 : vector<328x128xf32>
    %24 = arith.mulf %23, %19 : vector<328x128xf32>
    %cst_14 = arith.constant 1.42141378 : f32
    %25 = vector.broadcast %cst_14 : f32 to vector<328x128xf32>
    %26 = arith.addf %24, %25 : vector<328x128xf32>
    %27 = arith.mulf %26, %19 : vector<328x128xf32>
    %cst_15 = arith.constant -0.284496725 : f32
    %28 = vector.broadcast %cst_15 : f32 to vector<328x128xf32>
    %29 = arith.addf %27, %28 : vector<328x128xf32>
    %30 = arith.mulf %29, %19 : vector<328x128xf32>
    %cst_16 = arith.constant 0.254829586 : f32
    %31 = vector.broadcast %cst_16 : f32 to vector<328x128xf32>
    %32 = arith.addf %30, %31 : vector<328x128xf32>
    %33 = arith.mulf %32, %19 : vector<328x128xf32>
    %cst_17 = arith.constant 0.000000e+00 : f32
    %34 = vector.broadcast %cst_17 : f32 to vector<328x128xf32>
    %35 = arith.subf %34, %13 : vector<328x128xf32>
    %36 = arith.mulf %35, %13 : vector<328x128xf32>
    %37 = math.exp %36 : vector<328x128xf32>
    %38 = arith.mulf %33, %37 : vector<328x128xf32>
    %cst_18 = arith.constant 1.000000e+00 : f32
    %39 = vector.broadcast %cst_18 : f32 to vector<328x128xf32>
    %40 = arith.subf %39, %38 : vector<328x128xf32>
    %41 = arith.mulf %12, %40 : vector<328x128xf32>
    %cst_19 = arith.constant 1.000000e+00 : f32
    %42 = vector.broadcast %cst_19 : f32 to vector<328x128xf32>
    %43 = arith.addf %42, %41 : vector<328x128xf32>
    %44 = arith.mulf %5, %43 : vector<328x128xf32>
    %c0_20 = arith.constant 0 : index
    %c0_21 = arith.constant 0 : index
    %45 = vector.load %arg6[%c0_20, %c0_21] : memref<328x128xf32, #tpu.memory_space<vmem>>, vector<328x128xf32>
    tpu.vector_store %arg6[%c0_20, %c0_21], %44 {strides = array<i32>} : memref<328x128xf32, #tpu.memory_space<vmem>>, vector<328x128xf32>,
    %c0_22 = arith.constant 0 : index
    %c0_23 = arith.constant 0 : index
    %46 = vector.load %arg3[%c0_22, %c0_23] : memref<9x128xf32, #tpu.memory_space<vmem>>, vector<9x128xf32>
    %cst_24 = arith.constant 0.000000e+00 : f32
    %47 = vector.broadcast %cst_24 : f32 to vector<16x128xf32>
    %c0_25 = arith.constant 0 : index
    %c0_26 = arith.constant 0 : index
    %48 = vector.load %arg6[%c0_25, %c0_26] : memref<328x128xf32, #tpu.memory_space<vmem>>, vector<18x128xf32>
    %49 = vector.extract_strided_slice %48 {offsets = [0, 0], sizes = [16, 128], strides = [1, 1]} : vector<18x128xf32> to vector<16x128xf32>
    %50 = vector.extract_strided_slice %46 {offsets = [0, 0], sizes = [1, 128], strides = [1, 1]} : vector<9x128xf32> to vector<1x128xf32>
    %51 = vector.broadcast %50 : vector<1x128xf32> to vector<16x128xf32>
    %52 = arith.mulf %49, %51 : vector<16x128xf32>
    %53 = arith.addf %47, %52 : vector<16x128xf32>
    %54 = vector.extract_strided_slice %48 {offsets = [1, 0], sizes = [16, 128], strides = [1, 1]} : vector<18x128xf32> to vector<16x128xf32>
    %55 = vector.extract_strided_slice %46 {offsets = [1, 0], sizes = [1, 128], strides = [1, 1]} : vector<9x128xf32> to vector<1x128xf32>
    %56 = vector.broadcast %55 : vector<1x128xf32> to vector<16x128xf32>
    %57 = arith.mulf %54, %56 : vector<16x128xf32>
    %58 = arith.addf %53, %57 : vector<16x128xf32>
    %59 = vector.extract_strided_slice %48 {offsets = [2, 0], sizes = [16, 128], strides = [1, 1]} : vector<18x128xf32> to vector<16x128xf32>
    %60 = vector.extract_strided_slice %46 {offsets = [2, 0], sizes = [1, 128], strides = [1, 1]} : vector<9x128xf32> to vector<1x128xf32>
    %61 = vector.broadcast %60 : vector<1x128xf32> to vector<16x128xf32>
    %62 = arith.mulf %59, %61 : vector<16x128xf32>
    %63 = arith.addf %58, %62 : vector<16x128xf32>
    %c18 = arith.constant 18 : index
    %c0_27 = arith.constant 0 : index
    %64 = vector.load %arg6[%c18, %c0_27] : memref<328x128xf32, #tpu.memory_space<vmem>>, vector<18x128xf32>
    %65 = vector.extract_strided_slice %64 {offsets = [0, 0], sizes = [16, 128], strides = [1, 1]} : vector<18x128xf32> to vector<16x128xf32>
    %66 = vector.extract_strided_slice %46 {offsets = [3, 0], sizes = [1, 128], strides = [1, 1]} : vector<9x128xf32> to vector<1x128xf32>
    %67 = vector.broadcast %66 : vector<1x128xf32> to vector<16x128xf32>
    %68 = arith.mulf %65, %67 : vector<16x128xf32>
    %69 = arith.addf %63, %68 : vector<16x128xf32>
    %70 = vector.extract_strided_slice %64 {offsets = [1, 0], sizes = [16, 128], strides = [1, 1]} : vector<18x128xf32> to vector<16x128xf32>
    %71 = vector.extract_strided_slice %46 {offsets = [4, 0], sizes = [1, 128], strides = [1, 1]} : vector<9x128xf32> to vector<1x128xf32>
    %72 = vector.broadcast %71 : vector<1x128xf32> to vector<16x128xf32>
    %73 = arith.mulf %70, %72 : vector<16x128xf32>
    %74 = arith.addf %69, %73 : vector<16x128xf32>
    %75 = vector.extract_strided_slice %64 {offsets = [2, 0], sizes = [16, 128], strides = [1, 1]} : vector<18x128xf32> to vector<16x128xf32>
    %76 = vector.extract_strided_slice %46 {offsets = [5, 0], sizes = [1, 128], strides = [1, 1]} : vector<9x128xf32> to vector<1x128xf32>
    %77 = vector.broadcast %76 : vector<1x128xf32> to vector<16x128xf32>
    %78 = arith.mulf %75, %77 : vector<16x128xf32>
    %79 = arith.addf %74, %78 : vector<16x128xf32>
    %c36 = arith.constant 36 : index
    %c0_28 = arith.constant 0 : index
    %80 = vector.load %arg6[%c36, %c0_28] : memref<328x128xf32, #tpu.memory_space<vmem>>, vector<18x128xf32>
    %81 = vector.extract_strided_slice %80 {offsets = [0, 0], sizes = [16, 128], strides = [1, 1]} : vector<18x128xf32> to vector<16x128xf32>
    %82 = vector.extract_strided_slice %46 {offsets = [6, 0], sizes = [1, 128], strides = [1, 1]} : vector<9x128xf32> to vector<1x128xf32>
    %83 = vector.broadcast %82 : vector<1x128xf32> to vector<16x128xf32>
    %84 = arith.mulf %81, %83 : vector<16x128xf32>
    %85 = arith.addf %79, %84 : vector<16x128xf32>
    %86 = vector.extract_strided_slice %80 {offsets = [1, 0], sizes = [16, 128], strides = [1, 1]} : vector<18x128xf32> to vector<16x128xf32>
    %87 = vector.extract_strided_slice %46 {offsets = [7, 0], sizes = [1, 128], strides = [1, 1]} : vector<9x128xf32> to vector<1x128xf32>
    %88 = vector.broadcast %87 : vector<1x128xf32> to vector<16x128xf32>
    %89 = arith.mulf %86, %88 : vector<16x128xf32>
    %90 = arith.addf %85, %89 : vector<16x128xf32>
    %91 = vector.extract_strided_slice %80 {offsets = [2, 0], sizes = [16, 128], strides = [1, 1]} : vector<18x128xf32> to vector<16x128xf32>
    %92 = vector.extract_strided_slice %46 {offsets = [8, 0], sizes = [1, 128], strides = [1, 1]} : vector<9x128xf32> to vector<1x128xf32>
    %93 = vector.broadcast %92 : vector<1x128xf32> to vector<16x128xf32>
    %94 = arith.mulf %91, %93 : vector<16x128xf32>
    %95 = arith.addf %90, %94 : vector<16x128xf32>
    %cst_29 = arith.constant 5.000000e-01 : f32
    %96 = vector.broadcast %cst_29 : f32 to vector<16x128xf32>
    %97 = arith.mulf %96, %95 : vector<16x128xf32>
    %cst_30 = arith.constant 0.707106769 : f32
    %98 = vector.broadcast %cst_30 : f32 to vector<16x128xf32>
    %99 = arith.mulf %95, %98 : vector<16x128xf32>
    %cst_31 = arith.constant 0.000000e+00 : f32
    %100 = vector.broadcast %cst_31 : f32 to vector<16x128xf32>
    %101 = arith.cmpf oge, %99, %100 : vector<16x128xf32>
    %cst_32 = arith.constant 1.000000e+00 : f32
    %cst_33 = arith.constant -1.000000e+00 : f32
    %102 = vector.broadcast %cst_32 : f32 to vector<16x128xf32>
    %103 = vector.broadcast %cst_33 : f32 to vector<16x128xf32>
    %104 = arith.select %101, %102, %103 : vector<16x128xi1>, vector<16x128xf32>
    %105 = math.absf %99 : vector<16x128xf32>
    %cst_34 = arith.constant 0.327591091 : f32
    %106 = vector.broadcast %cst_34 : f32 to vector<16x128xf32>
    %107 = arith.mulf %106, %105 : vector<16x128xf32>
    %cst_35 = arith.constant 1.000000e+00 : f32
    %108 = vector.broadcast %cst_35 : f32 to vector<16x128xf32>
    %109 = arith.addf %108, %107 : vector<16x128xf32>
    %cst_36 = arith.constant 1.000000e+00 : f32
    %110 = vector.broadcast %cst_36 : f32 to vector<16x128xf32>
    %111 = arith.divf %110, %109 : vector<16x128xf32>
    %cst_37 = arith.constant 1.06140542 : f32
    %112 = vector.broadcast %cst_37 : f32 to vector<16x128xf32>
    %113 = arith.mulf %112, %111 : vector<16x128xf32>
    %cst_38 = arith.constant -1.45315206 : f32
    %114 = vector.broadcast %cst_38 : f32 to vector<16x128xf32>
    %115 = arith.addf %113, %114 : vector<16x128xf32>
    %116 = arith.mulf %115, %111 : vector<16x128xf32>
    %cst_39 = arith.constant 1.42141378 : f32
    %117 = vector.broadcast %cst_39 : f32 to vector<16x128xf32>
    %118 = arith.addf %116, %117 : vector<16x128xf32>
    %119 = arith.mulf %118, %111 : vector<16x128xf32>
    %cst_40 = arith.constant -0.284496725 : f32
    %120 = vector.broadcast %cst_40 : f32 to vector<16x128xf32>
    %121 = arith.addf %119, %120 : vector<16x128xf32>
    %122 = arith.mulf %121, %111 : vector<16x128xf32>
    %cst_41 = arith.constant 0.254829586 : f32
    %123 = vector.broadcast %cst_41 : f32 to vector<16x128xf32>
    %124 = arith.addf %122, %123 : vector<16x128xf32>
    %125 = arith.mulf %124, %111 : vector<16x128xf32>
    %cst_42 = arith.constant 0.000000e+00 : f32
    %126 = vector.broadcast %cst_42 : f32 to vector<16x128xf32>
    %127 = arith.subf %126, %105 : vector<16x128xf32>
    %128 = arith.mulf %127, %105 : vector<16x128xf32>
    %129 = math.exp %128 : vector<16x128xf32>
    %130 = arith.mulf %125, %129 : vector<16x128xf32>
    %cst_43 = arith.constant 1.000000e+00 : f32
    %131 = vector.broadcast %cst_43 : f32 to vector<16x128xf32>
    %132 = arith.subf %131, %130 : vector<16x128xf32>
    %133 = arith.mulf %104, %132 : vector<16x128xf32>
    %cst_44 = arith.constant 1.000000e+00 : f32
    %134 = vector.broadcast %cst_44 : f32 to vector<16x128xf32>
    %135 = arith.addf %134, %133 : vector<16x128xf32>
    %136 = arith.mulf %97, %135 : vector<16x128xf32>
    %c0_45 = arith.constant 0 : index
    %c0_46 = arith.constant 0 : index
    %137 = vector.load %arg7[%c0_45, %c0_46] : memref<256x128xf32, #tpu.memory_space<vmem>>, vector<16x128xf32>
    tpu.vector_store %arg7[%c0_45, %c0_46], %136 {strides = array<i32>} : memref<256x128xf32, #tpu.memory_space<vmem>>, vector<16x128xf32>,
    %cst_47 = arith.constant 0.000000e+00 : f32
    %138 = vector.broadcast %cst_47 : f32 to vector<16x128xf32>
    %c18_48 = arith.constant 18 : index
    %c0_49 = arith.constant 0 : index
    %139 = vector.load %arg6[%c18_48, %c0_49] : memref<328x128xf32, #tpu.memory_space<vmem>>, vector<18x128xf32>
    %140 = vector.extract_strided_slice %139 {offsets = [0, 0], sizes = [16, 128], strides = [1, 1]} : vector<18x128xf32> to vector<16x128xf32>
    %141 = vector.extract_strided_slice %46 {offsets = [0, 0], sizes = [1, 128], strides = [1, 1]} : vector<9x128xf32> to vector<1x128xf32>
    %142 = vector.broadcast %141 : vector<1x128xf32> to vector<16x128xf32>
    %143 = arith.mulf %140, %142 : vector<16x128xf32>
    %144 = arith.addf %138, %143 : vector<16x128xf32>
    %145 = vector.extract_strided_slice %139 {offsets = [1, 0], sizes = [16, 128], strides = [1, 1]} : vector<18x128xf32> to vector<16x128xf32>
    %146 = vector.extract_strided_slice %46 {offsets = [1, 0], sizes = [1, 128], strides = [1, 1]} : vector<9x128xf32> to vector<1x128xf32>
    %147 = vector.broadcast %146 : vector<1x128xf32> to vector<16x128xf32>
    %148 = arith.mulf %145, %147 : vector<16x128xf32>
    %149 = arith.addf %144, %148 : vector<16x128xf32>
    %150 = vector.extract_strided_slice %139 {offsets = [2, 0], sizes = [16, 128], strides = [1, 1]} : vector<18x128xf32> to vector<16x128xf32>
    %151 = vector.extract_strided_slice %46 {offsets = [2, 0], sizes = [1, 128], strides = [1, 1]} : vector<9x128xf32> to vector<1x128xf32>
    %152 = vector.broadcast %151 : vector<1x128xf32> to vector<16x128xf32>
    %153 = arith.mulf %150, %152 : vector<16x128xf32>
    %154 = arith.addf %149, %153 : vector<16x128xf32>
    %c36_50 = arith.constant 36 : index
    %c0_51 = arith.constant 0 : index
    %155 = vector.load %arg6[%c36_50, %c0_51] : memref<328x128xf32, #tpu.memory_space<vmem>>, vector<18x128xf32>
    %156 = vector.extract_strided_slice %155 {offsets = [0, 0], sizes = [16, 128], strides = [1, 1]} : vector<18x128xf32> to vector<16x128xf32>
    %157 = vector.extract_strided_slice %46 {offsets = [3, 0], sizes = [1, 128], strides = [1, 1]} : vector<9x128xf32> to vector<1x128xf32>
    %158 = vector.broadcast %157 : vector<1x128xf32> to vector<16x128xf32>
    %159 = arith.mulf %156, %158 : vector<16x128xf32>
    %160 = arith.addf %154, %159 : vector<16x128xf32>
    %161 = vector.extract_strided_slice %155 {offsets = [1, 0], sizes = [16, 128], strides = [1, 1]} : vector<18x128xf32> to vector<16x128xf32>
    %162 = vector.extract_strided_slice %46 {offsets = [4, 0], sizes = [1, 128], strides = [1, 1]} : vector<9x128xf32> to vector<1x128xf32>
    %163 = vector.broadcast %162 : vector<1x128xf32> to vector<16x128xf32>
    %164 = arith.mulf %161, %163 : vector<16x128xf32>
    %165 = arith.addf %160, %164 : vector<16x128xf32>
    %166 = vector.extract_strided_slice %155 {offsets = [2, 0], sizes = [16, 128], strides = [1, 1]} : vector<18x128xf32> to vector<16x128xf32>
    %167 = vector.extract_strided_slice %46 {offsets = [5, 0], sizes = [1, 128], strides = [1, 1]} : vector<9x128xf32> to vector<1x128xf32>
    %168 = vector.broadcast %167 : vector<1x128xf32> to vector<16x128xf32>
    %169 = arith.mulf %166, %168 : vector<16x128xf32>
    %170 = arith.addf %165, %169 : vector<16x128xf32>
    %c54 = arith.constant 54 : index
    %c0_52 = arith.constant 0 : index
    %171 = vector.load %arg6[%c54, %c0_52] : memref<328x128xf32, #tpu.memory_space<vmem>>, vector<18x128xf32>
    %172 = vector.extract_strided_slice %171 {offsets = [0, 0], sizes = [16, 128], strides = [1, 1]} : vector<18x128xf32> to vector<16x128xf32>
    %173 = vector.extract_strided_slice %46 {offsets = [6, 0], sizes = [1, 128], strides = [1, 1]} : vector<9x128xf32> to vector<1x128xf32>
    %174 = vector.broadcast %173 : vector<1x128xf32> to vector<16x128xf32>
    %175 = arith.mulf %172, %174 : vector<16x128xf32>
    %176 = arith.addf %170, %175 : vector<16x128xf32>
    %177 = vector.extract_strided_slice %171 {offsets = [1, 0], sizes = [16, 128], strides = [1, 1]} : vector<18x128xf32> to vector<16x128xf32>
    %178 = vector.extract_strided_slice %46 {offsets = [7, 0], sizes = [1, 128], strides = [1, 1]} : vector<9x128xf32> to vector<1x128xf32>
    %179 = vector.broadcast %178 : vector<1x128xf32> to vector<16x128xf32>
    %180 = arith.mulf %177, %179 : vector<16x128xf32>
    %181 = arith.addf %176, %180 : vector<16x128xf32>
    %182 = vector.extract_strided_slice %171 {offsets = [2, 0], sizes = [16, 128], strides = [1, 1]} : vector<18x128xf32> to vector<16x128xf32>
    %183 = vector.extract_strided_slice %46 {offsets = [8, 0], sizes = [1, 128], strides = [1, 1]} : vector<9x128xf32> to vector<1x128xf32>
    %184 = vector.broadcast %183 : vector<1x128xf32> to vector<16x128xf32>
    %185 = arith.mulf %182, %184 : vector<16x128xf32>
    %186 = arith.addf %181, %185 : vector<16x128xf32>
    %cst_53 = arith.constant 5.000000e-01 : f32
    %187 = vector.broadcast %cst_53 : f32 to vector<16x128xf32>
    %188 = arith.mulf %187, %186 : vector<16x128xf32>
    %cst_54 = arith.constant 0.707106769 : f32
    %189 = vector.broadcast %cst_54 : f32 to vector<16x128xf32>
    %190 = arith.mulf %186, %189 : vector<16x128xf32>
    %cst_55 = arith.constant 0.000000e+00 : f32
    %191 = vector.broadcast %cst_55 : f32 to vector<16x128xf32>
    %192 = arith.cmpf oge, %190, %191 : vector<16x128xf32>
    %cst_56 = arith.constant 1.000000e+00 : f32
    %cst_57 = arith.constant -1.000000e+00 : f32
    %193 = vector.broadcast %cst_56 : f32 to vector<16x128xf32>
    %194 = vector.broadcast %cst_57 : f32 to vector<16x128xf32>
    %195 = arith.select %192, %193, %194 : vector<16x128xi1>, vector<16x128xf32>
    %196 = math.absf %190 : vector<16x128xf32>
    %cst_58 = arith.constant 0.327591091 : f32
    %197 = vector.broadcast %cst_58 : f32 to vector<16x128xf32>
    %198 = arith.mulf %197, %196 : vector<16x128xf32>
    %cst_59 = arith.constant 1.000000e+00 : f32
    %199 = vector.broadcast %cst_59 : f32 to vector<16x128xf32>
    %200 = arith.addf %199, %198 : vector<16x128xf32>
    %cst_60 = arith.constant 1.000000e+00 : f32
    %201 = vector.broadcast %cst_60 : f32 to vector<16x128xf32>
    %202 = arith.divf %201, %200 : vector<16x128xf32>
    %cst_61 = arith.constant 1.06140542 : f32
    %203 = vector.broadcast %cst_61 : f32 to vector<16x128xf32>
    %204 = arith.mulf %203, %202 : vector<16x128xf32>
    %cst_62 = arith.constant -1.45315206 : f32
    %205 = vector.broadcast %cst_62 : f32 to vector<16x128xf32>
    %206 = arith.addf %204, %205 : vector<16x128xf32>
    %207 = arith.mulf %206, %202 : vector<16x128xf32>
    %cst_63 = arith.constant 1.42141378 : f32
    %208 = vector.broadcast %cst_63 : f32 to vector<16x128xf32>
    %209 = arith.addf %207, %208 : vector<16x128xf32>
    %210 = arith.mulf %209, %202 : vector<16x128xf32>
    %cst_64 = arith.constant -0.284496725 : f32
    %211 = vector.broadcast %cst_64 : f32 to vector<16x128xf32>
    %212 = arith.addf %210, %211 : vector<16x128xf32>
    %213 = arith.mulf %212, %202 : vector<16x128xf32>
    %cst_65 = arith.constant 0.254829586 : f32
    %214 = vector.broadcast %cst_65 : f32 to vector<16x128xf32>
    %215 = arith.addf %213, %214 : vector<16x128xf32>
    %216 = arith.mulf %215, %202 : vector<16x128xf32>
    %cst_66 = arith.constant 0.000000e+00 : f32
    %217 = vector.broadcast %cst_66 : f32 to vector<16x128xf32>
    %218 = arith.subf %217, %196 : vector<16x128xf32>
    %219 = arith.mulf %218, %196 : vector<16x128xf32>
    %220 = math.exp %219 : vector<16x128xf32>
    %221 = arith.mulf %216, %220 : vector<16x128xf32>
    %cst_67 = arith.constant 1.000000e+00 : f32
    %222 = vector.broadcast %cst_67 : f32 to vector<16x128xf32>
    %223 = arith.subf %222, %221 : vector<16x128xf32>
    %224 = arith.mulf %195, %223 : vector<16x128xf32>
    %cst_68 = arith.constant 1.000000e+00 : f32
    %225 = vector.broadcast %cst_68 : f32 to vector<16x128xf32>
    %226 = arith.addf %225, %224 : vector<16x128xf32>
    %227 = arith.mulf %188, %226 : vector<16x128xf32>
    %c16 = arith.constant 16 : index
    %c0_69 = arith.constant 0 : index
    %228 = vector.load %arg7[%c16, %c0_69] : memref<256x128xf32, #tpu.memory_space<vmem>>, vector<16x128xf32>
    tpu.vector_store %arg7[%c16, %c0_69], %227 {strides = array<i32>} : memref<256x128xf32, #tpu.memory_space<vmem>>, vector<16x128xf32>,
    %cst_70 = arith.constant 0.000000e+00 : f32
    %229 = vector.broadcast %cst_70 : f32 to vector<16x128xf32>
    %c36_71 = arith.constant 36 : index
    %c0_72 = arith.constant 0 : index
    %230 = vector.load %arg6[%c36_71, %c0_72] : memref<328x128xf32, #tpu.memory_space<vmem>>, vector<18x128xf32>
    %231 = vector.extract_strided_slice %230 {offsets = [0, 0], sizes = [16, 128], strides = [1, 1]} : vector<18x128xf32> to vector<16x128xf32>
    %232 = vector.extract_strided_slice %46 {offsets = [0, 0], sizes = [1, 128], strides = [1, 1]} : vector<9x128xf32> to vector<1x128xf32>
    %233 = vector.broadcast %232 : vector<1x128xf32> to vector<16x128xf32>
    %234 = arith.mulf %231, %233 : vector<16x128xf32>
    %235 = arith.addf %229, %234 : vector<16x128xf32>
    %236 = vector.extract_strided_slice %230 {offsets = [1, 0], sizes = [16, 128], strides = [1, 1]} : vector<18x128xf32> to vector<16x128xf32>
    %237 = vector.extract_strided_slice %46 {offsets = [1, 0], sizes = [1, 128], strides = [1, 1]} : vector<9x128xf32> to vector<1x128xf32>
    %238 = vector.broadcast %237 : vector<1x128xf32> to vector<16x128xf32>
    %239 = arith.mulf %236, %238 : vector<16x128xf32>
    %240 = arith.addf %235, %239 : vector<16x128xf32>
    %241 = vector.extract_strided_slice %230 {offsets = [2, 0], sizes = [16, 128], strides = [1, 1]} : vector<18x128xf32> to vector<16x128xf32>
    %242 = vector.extract_strided_slice %46 {offsets = [2, 0], sizes = [1, 128], strides = [1, 1]} : vector<9x128xf32> to vector<1x128xf32>
    %243 = vector.broadcast %242 : vector<1x128xf32> to vector<16x128xf32>
    %244 = arith.mulf %241, %243 : vector<16x128xf32>
    %245 = arith.addf %240, %244 : vector<16x128xf32>
    %c54_73 = arith.constant 54 : index
    %c0_74 = arith.constant 0 : index
    %246 = vector.load %arg6[%c54_73, %c0_74] : memref<328x128xf32, #tpu.memory_space<vmem>>, vector<18x128xf32>
    %247 = vector.extract_strided_slice %246 {offsets = [0, 0], sizes = [16, 128], strides = [1, 1]} : vector<18x128xf32> to vector<16x128xf32>
    %248 = vector.extract_strided_slice %46 {offsets = [3, 0], sizes = [1, 128], strides = [1, 1]} : vector<9x128xf32> to vector<1x128xf32>
    %249 = vector.broadcast %248 : vector<1x128xf32> to vector<16x128xf32>
    %250 = arith.mulf %247, %249 : vector<16x128xf32>
    %251 = arith.addf %245, %250 : vector<16x128xf32>
    %252 = vector.extract_strided_slice %246 {offsets = [1, 0], sizes = [16, 128], strides = [1, 1]} : vector<18x128xf32> to vector<16x128xf32>
    %253 = vector.extract_strided_slice %46 {offsets = [4, 0], sizes = [1, 128], strides = [1, 1]} : vector<9x128xf32> to vector<1x128xf32>
    %254 = vector.broadcast %253 : vector<1x128xf32> to vector<16x128xf32>
    %255 = arith.mulf %252, %254 : vector<16x128xf32>
    %256 = arith.addf %251, %255 : vector<16x128xf32>
    %257 = vector.extract_strided_slice %246 {offsets = [2, 0], sizes = [16, 128], strides = [1, 1]} : vector<18x128xf32> to vector<16x128xf32>
    %258 = vector.extract_strided_slice %46 {offsets = [5, 0], sizes = [1, 128], strides = [1, 1]} : vector<9x128xf32> to vector<1x128xf32>
    %259 = vector.broadcast %258 : vector<1x128xf32> to vector<16x128xf32>
    %260 = arith.mulf %257, %259 : vector<16x128xf32>
    %261 = arith.addf %256, %260 : vector<16x128xf32>
    %c72 = arith.constant 72 : index
    %c0_75 = arith.constant 0 : index
    %262 = vector.load %arg6[%c72, %c0_75] : memref<328x128xf32, #tpu.memory_space<vmem>>, vector<18x128xf32>
    %263 = vector.extract_strided_slice %262 {offsets = [0, 0], sizes = [16, 128], strides = [1, 1]} : vector<18x128xf32> to vector<16x128xf32>
    %264 = vector.extract_strided_slice %46 {offsets = [6, 0], sizes = [1, 128], strides = [1, 1]} : vector<9x128xf32> to vector<1x128xf32>
    %265 = vector.broadcast %264 : vector<1x128xf32> to vector<16x128xf32>
    %266 = arith.mulf %263, %265 : vector<16x128xf32>
    %267 = arith.addf %261, %266 : vector<16x128xf32>
    %268 = vector.extract_strided_slice %262 {offsets = [1, 0], sizes = [16, 128], strides = [1, 1]} : vector<18x128xf32> to vector<16x128xf32>
    %269 = vector.extract_strided_slice %46 {offsets = [7, 0], sizes = [1, 128], strides = [1, 1]} : vector<9x128xf32> to vector<1x128xf32>
    %270 = vector.broadcast %269 : vector<1x128xf32> to vector<16x128xf32>
    %271 = arith.mulf %268, %270 : vector<16x128xf32>
    %272 = arith.addf %267, %271 : vector<16x128xf32>
    %273 = vector.extract_strided_slice %262 {offsets = [2, 0], sizes = [16, 128], strides = [1, 1]} : vector<18x128xf32> to vector<16x128xf32>
    %274 = vector.extract_strided_slice %46 {offsets = [8, 0], sizes = [1, 128], strides = [1, 1]} : vector<9x128xf32> to vector<1x128xf32>
    %275 = vector.broadcast %274 : vector<1x128xf32> to vector<16x128xf32>
    %276 = arith.mulf %273, %275 : vector<16x128xf32>
    %277 = arith.addf %272, %276 : vector<16x128xf32>
    %cst_76 = arith.constant 5.000000e-01 : f32
    %278 = vector.broadcast %cst_76 : f32 to vector<16x128xf32>
    %279 = arith.mulf %278, %277 : vector<16x128xf32>
    %cst_77 = arith.constant 0.707106769 : f32
    %280 = vector.broadcast %cst_77 : f32 to vector<16x128xf32>
    %281 = arith.mulf %277, %280 : vector<16x128xf32>
    %cst_78 = arith.constant 0.000000e+00 : f32
    %282 = vector.broadcast %cst_78 : f32 to vector<16x128xf32>
    %283 = arith.cmpf oge, %281, %282 : vector<16x128xf32>
    %cst_79 = arith.constant 1.000000e+00 : f32
    %cst_80 = arith.constant -1.000000e+00 : f32
    %284 = vector.broadcast %cst_79 : f32 to vector<16x128xf32>
    %285 = vector.broadcast %cst_80 : f32 to vector<16x128xf32>
    %286 = arith.select %283, %284, %285 : vector<16x128xi1>, vector<16x128xf32>
    %287 = math.absf %281 : vector<16x128xf32>
    %cst_81 = arith.constant 0.327591091 : f32
    %288 = vector.broadcast %cst_81 : f32 to vector<16x128xf32>
    %289 = arith.mulf %288, %287 : vector<16x128xf32>
    %cst_82 = arith.constant 1.000000e+00 : f32
    %290 = vector.broadcast %cst_82 : f32 to vector<16x128xf32>
    %291 = arith.addf %290, %289 : vector<16x128xf32>
    %cst_83 = arith.constant 1.000000e+00 : f32
    %292 = vector.broadcast %cst_83 : f32 to vector<16x128xf32>
    %293 = arith.divf %292, %291 : vector<16x128xf32>
    %cst_84 = arith.constant 1.06140542 : f32
    %294 = vector.broadcast %cst_84 : f32 to vector<16x128xf32>
    %295 = arith.mulf %294, %293 : vector<16x128xf32>
    %cst_85 = arith.constant -1.45315206 : f32
    %296 = vector.broadcast %cst_85 : f32 to vector<16x128xf32>
    %297 = arith.addf %295, %296 : vector<16x128xf32>
    %298 = arith.mulf %297, %293 : vector<16x128xf32>
    %cst_86 = arith.constant 1.42141378 : f32
    %299 = vector.broadcast %cst_86 : f32 to vector<16x128xf32>
    %300 = arith.addf %298, %299 : vector<16x128xf32>
    %301 = arith.mulf %300, %293 : vector<16x128xf32>
    %cst_87 = arith.constant -0.284496725 : f32
    %302 = vector.broadcast %cst_87 : f32 to vector<16x128xf32>
    %303 = arith.addf %301, %302 : vector<16x128xf32>
    %304 = arith.mulf %303, %293 : vector<16x128xf32>
    %cst_88 = arith.constant 0.254829586 : f32
    %305 = vector.broadcast %cst_88 : f32 to vector<16x128xf32>
    %306 = arith.addf %304, %305 : vector<16x128xf32>
    %307 = arith.mulf %306, %293 : vector<16x128xf32>
    %cst_89 = arith.constant 0.000000e+00 : f32
    %308 = vector.broadcast %cst_89 : f32 to vector<16x128xf32>
    %309 = arith.subf %308, %287 : vector<16x128xf32>
    %310 = arith.mulf %309, %287 : vector<16x128xf32>
    %311 = math.exp %310 : vector<16x128xf32>
    %312 = arith.mulf %307, %311 : vector<16x128xf32>
    %cst_90 = arith.constant 1.000000e+00 : f32
    %313 = vector.broadcast %cst_90 : f32 to vector<16x128xf32>
    %314 = arith.subf %313, %312 : vector<16x128xf32>
    %315 = arith.mulf %286, %314 : vector<16x128xf32>
    %cst_91 = arith.constant 1.000000e+00 : f32
    %316 = vector.broadcast %cst_91 : f32 to vector<16x128xf32>
    %317 = arith.addf %316, %315 : vector<16x128xf32>
    %318 = arith.mulf %279, %317 : vector<16x128xf32>
    %c32 = arith.constant 32 : index
    %c0_92 = arith.constant 0 : index
    %319 = vector.load %arg7[%c32, %c0_92] : memref<256x128xf32, #tpu.memory_space<vmem>>, vector<16x128xf32>
    tpu.vector_store %arg7[%c32, %c0_92], %318 {strides = array<i32>} : memref<256x128xf32, #tpu.memory_space<vmem>>, vector<16x128xf32>,
    %cst_93 = arith.constant 0.000000e+00 : f32
    %320 = vector.broadcast %cst_93 : f32 to vector<16x128xf32>
    %c54_94 = arith.constant 54 : index
    %c0_95 = arith.constant 0 : index
    %321 = vector.load %arg6[%c54_94, %c0_95] : memref<328x128xf32, #tpu.memory_space<vmem>>, vector<18x128xf32>
    %322 = vector.extract_strided_slice %321 {offsets = [0, 0], sizes = [16, 128], strides = [1, 1]} : vector<18x128xf32> to vector<16x128xf32>
    %323 = vector.extract_strided_slice %46 {offsets = [0, 0], sizes = [1, 128], strides = [1, 1]} : vector<9x128xf32> to vector<1x128xf32>
    %324 = vector.broadcast %323 : vector<1x128xf32> to vector<16x128xf32>
    %325 = arith.mulf %322, %324 : vector<16x128xf32>
    %326 = arith.addf %320, %325 : vector<16x128xf32>
    %327 = vector.extract_strided_slice %321 {offsets = [1, 0], sizes = [16, 128], strides = [1, 1]} : vector<18x128xf32> to vector<16x128xf32>
    %328 = vector.extract_strided_slice %46 {offsets = [1, 0], sizes = [1, 128], strides = [1, 1]} : vector<9x128xf32> to vector<1x128xf32>
    %329 = vector.broadcast %328 : vector<1x128xf32> to vector<16x128xf32>
    %330 = arith.mulf %327, %329 : vector<16x128xf32>
    %331 = arith.addf %326, %330 : vector<16x128xf32>
    %332 = vector.extract_strided_slice %321 {offsets = [2, 0], sizes = [16, 128], strides = [1, 1]} : vector<18x128xf32> to vector<16x128xf32>
    %333 = vector.extract_strided_slice %46 {offsets = [2, 0], sizes = [1, 128], strides = [1, 1]} : vector<9x128xf32> to vector<1x128xf32>
    %334 = vector.broadcast %333 : vector<1x128xf32> to vector<16x128xf32>
    %335 = arith.mulf %332, %334 : vector<16x128xf32>
    %336 = arith.addf %331, %335 : vector<16x128xf32>
    %c72_96 = arith.constant 72 : index
    %c0_97 = arith.constant 0 : index
    %337 = vector.load %arg6[%c72_96, %c0_97] : memref<328x128xf32, #tpu.memory_space<vmem>>, vector<18x128xf32>
    %338 = vector.extract_strided_slice %337 {offsets = [0, 0], sizes = [16, 128], strides = [1, 1]} : vector<18x128xf32> to vector<16x128xf32>
    %339 = vector.extract_strided_slice %46 {offsets = [3, 0], sizes = [1, 128], strides = [1, 1]} : vector<9x128xf32> to vector<1x128xf32>
    %340 = vector.broadcast %339 : vector<1x128xf32> to vector<16x128xf32>
    %341 = arith.mulf %338, %340 : vector<16x128xf32>
    %342 = arith.addf %336, %341 : vector<16x128xf32>
    %343 = vector.extract_strided_slice %337 {offsets = [1, 0], sizes = [16, 128], strides = [1, 1]} : vector<18x128xf32> to vector<16x128xf32>
    %344 = vector.extract_strided_slice %46 {offsets = [4, 0], sizes = [1, 128], strides = [1, 1]} : vector<9x128xf32> to vector<1x128xf32>
    %345 = vector.broadcast %344 : vector<1x128xf32> to vector<16x128xf32>
    %346 = arith.mulf %343, %345 : vector<16x128xf32>
    %347 = arith.addf %342, %346 : vector<16x128xf32>
    %348 = vector.extract_strided_slice %337 {offsets = [2, 0], sizes = [16, 128], strides = [1, 1]} : vector<18x128xf32> to vector<16x128xf32>
    %349 = vector.extract_strided_slice %46 {offsets = [5, 0], sizes = [1, 128], strides = [1, 1]} : vector<9x128xf32> to vector<1x128xf32>
    %350 = vector.broadcast %349 : vector<1x128xf32> to vector<16x128xf32>
    %351 = arith.mulf %348, %350 : vector<16x128xf32>
    %352 = arith.addf %347, %351 : vector<16x128xf32>
    %c90 = arith.constant 90 : index
    %c0_98 = arith.constant 0 : index
    %353 = vector.load %arg6[%c90, %c0_98] : memref<328x128xf32, #tpu.memory_space<vmem>>, vector<18x128xf32>
    %354 = vector.extract_strided_slice %353 {offsets = [0, 0], sizes = [16, 128], strides = [1, 1]} : vector<18x128xf32> to vector<16x128xf32>
    %355 = vector.extract_strided_slice %46 {offsets = [6, 0], sizes = [1, 128], strides = [1, 1]} : vector<9x128xf32> to vector<1x128xf32>
    %356 = vector.broadcast %355 : vector<1x128xf32> to vector<16x128xf32>
    %357 = arith.mulf %354, %356 : vector<16x128xf32>
    %358 = arith.addf %352, %357 : vector<16x128xf32>
    %359 = vector.extract_strided_slice %353 {offsets = [1, 0], sizes = [16, 128], strides = [1, 1]} : vector<18x128xf32> to vector<16x128xf32>
    %360 = vector.extract_strided_slice %46 {offsets = [7, 0], sizes = [1, 128], strides = [1, 1]} : vector<9x128xf32> to vector<1x128xf32>
    %361 = vector.broadcast %360 : vector<1x128xf32> to vector<16x128xf32>
    %362 = arith.mulf %359, %361 : vector<16x128xf32>
    %363 = arith.addf %358, %362 : vector<16x128xf32>
    %364 = vector.extract_strided_slice %353 {offsets = [2, 0], sizes = [16, 128], strides = [1, 1]} : vector<18x128xf32> to vector<16x128xf32>
    %365 = vector.extract_strided_slice %46 {offsets = [8, 0], sizes = [1, 128], strides = [1, 1]} : vector<9x128xf32> to vector<1x128xf32>
    %366 = vector.broadcast %365 : vector<1x128xf32> to vector<16x128xf32>
    %367 = arith.mulf %364, %366 : vector<16x128xf32>
    %368 = arith.addf %363, %367 : vector<16x128xf32>
    %cst_99 = arith.constant 5.000000e-01 : f32
    %369 = vector.broadcast %cst_99 : f32 to vector<16x128xf32>
    %370 = arith.mulf %369, %368 : vector<16x128xf32>
    %cst_100 = arith.constant 0.707106769 : f32
    %371 = vector.broadcast %cst_100 : f32 to vector<16x128xf32>
    %372 = arith.mulf %368, %371 : vector<16x128xf32>
    %cst_101 = arith.constant 0.000000e+00 : f32
    %373 = vector.broadcast %cst_101 : f32 to vector<16x128xf32>
    %374 = arith.cmpf oge, %372, %373 : vector<16x128xf32>
    %cst_102 = arith.constant 1.000000e+00 : f32
    %cst_103 = arith.constant -1.000000e+00 : f32
    %375 = vector.broadcast %cst_102 : f32 to vector<16x128xf32>
    %376 = vector.broadcast %cst_103 : f32 to vector<16x128xf32>
    %377 = arith.select %374, %375, %376 : vector<16x128xi1>, vector<16x128xf32>
    %378 = math.absf %372 : vector<16x128xf32>
    %cst_104 = arith.constant 0.327591091 : f32
    %379 = vector.broadcast %cst_104 : f32 to vector<16x128xf32>
    %380 = arith.mulf %379, %378 : vector<16x128xf32>
    %cst_105 = arith.constant 1.000000e+00 : f32
    %381 = vector.broadcast %cst_105 : f32 to vector<16x128xf32>
    %382 = arith.addf %381, %380 : vector<16x128xf32>
    %cst_106 = arith.constant 1.000000e+00 : f32
    %383 = vector.broadcast %cst_106 : f32 to vector<16x128xf32>
    %384 = arith.divf %383, %382 : vector<16x128xf32>
    %cst_107 = arith.constant 1.06140542 : f32
    %385 = vector.broadcast %cst_107 : f32 to vector<16x128xf32>
    %386 = arith.mulf %385, %384 : vector<16x128xf32>
    %cst_108 = arith.constant -1.45315206 : f32
    %387 = vector.broadcast %cst_108 : f32 to vector<16x128xf32>
    %388 = arith.addf %386, %387 : vector<16x128xf32>
    %389 = arith.mulf %388, %384 : vector<16x128xf32>
    %cst_109 = arith.constant 1.42141378 : f32
    %390 = vector.broadcast %cst_109 : f32 to vector<16x128xf32>
    %391 = arith.addf %389, %390 : vector<16x128xf32>
    %392 = arith.mulf %391, %384 : vector<16x128xf32>
    %cst_110 = arith.constant -0.284496725 : f32
    %393 = vector.broadcast %cst_110 : f32 to vector<16x128xf32>
    %394 = arith.addf %392, %393 : vector<16x128xf32>
    %395 = arith.mulf %394, %384 : vector<16x128xf32>
    %cst_111 = arith.constant 0.254829586 : f32
    %396 = vector.broadcast %cst_111 : f32 to vector<16x128xf32>
    %397 = arith.addf %395, %396 : vector<16x128xf32>
    %398 = arith.mulf %397, %384 : vector<16x128xf32>
    %cst_112 = arith.constant 0.000000e+00 : f32
    %399 = vector.broadcast %cst_112 : f32 to vector<16x128xf32>
    %400 = arith.subf %399, %378 : vector<16x128xf32>
    %401 = arith.mulf %400, %378 : vector<16x128xf32>
    %402 = math.exp %401 : vector<16x128xf32>
    %403 = arith.mulf %398, %402 : vector<16x128xf32>
    %cst_113 = arith.constant 1.000000e+00 : f32
    %404 = vector.broadcast %cst_113 : f32 to vector<16x128xf32>
    %405 = arith.subf %404, %403 : vector<16x128xf32>
    %406 = arith.mulf %377, %405 : vector<16x128xf32>
    %cst_114 = arith.constant 1.000000e+00 : f32
    %407 = vector.broadcast %cst_114 : f32 to vector<16x128xf32>
    %408 = arith.addf %407, %406 : vector<16x128xf32>
    %409 = arith.mulf %370, %408 : vector<16x128xf32>
    %c48 = arith.constant 48 : index
    %c0_115 = arith.constant 0 : index
    %410 = vector.load %arg7[%c48, %c0_115] : memref<256x128xf32, #tpu.memory_space<vmem>>, vector<16x128xf32>
    tpu.vector_store %arg7[%c48, %c0_115], %409 {strides = array<i32>} : memref<256x128xf32, #tpu.memory_space<vmem>>, vector<16x128xf32>,
    %cst_116 = arith.constant 0.000000e+00 : f32
    %411 = vector.broadcast %cst_116 : f32 to vector<16x128xf32>
    %c72_117 = arith.constant 72 : index
    %c0_118 = arith.constant 0 : index
    %412 = vector.load %arg6[%c72_117, %c0_118] : memref<328x128xf32, #tpu.memory_space<vmem>>, vector<18x128xf32>
    %413 = vector.extract_strided_slice %412 {offsets = [0, 0], sizes = [16, 128], strides = [1, 1]} : vector<18x128xf32> to vector<16x128xf32>
    %414 = vector.extract_strided_slice %46 {offsets = [0, 0], sizes = [1, 128], strides = [1, 1]} : vector<9x128xf32> to vector<1x128xf32>
    %415 = vector.broadcast %414 : vector<1x128xf32> to vector<16x128xf32>
    %416 = arith.mulf %413, %415 : vector<16x128xf32>
    %417 = arith.addf %411, %416 : vector<16x128xf32>
    %418 = vector.extract_strided_slice %412 {offsets = [1, 0], sizes = [16, 128], strides = [1, 1]} : vector<18x128xf32> to vector<16x128xf32>
    %419 = vector.extract_strided_slice %46 {offsets = [1, 0], sizes = [1, 128], strides = [1, 1]} : vector<9x128xf32> to vector<1x128xf32>
    %420 = vector.broadcast %419 : vector<1x128xf32> to vector<16x128xf32>
    %421 = arith.mulf %418, %420 : vector<16x128xf32>
    %422 = arith.addf %417, %421 : vector<16x128xf32>
    %423 = vector.extract_strided_slice %412 {offsets = [2, 0], sizes = [16, 128], strides = [1, 1]} : vector<18x128xf32> to vector<16x128xf32>
    %424 = vector.extract_strided_slice %46 {offsets = [2, 0], sizes = [1, 128], strides = [1, 1]} : vector<9x128xf32> to vector<1x128xf32>
    %425 = vector.broadcast %424 : vector<1x128xf32> to vector<16x128xf32>
    %426 = arith.mulf %423, %425 : vector<16x128xf32>
    %427 = arith.addf %422, %426 : vector<16x128xf32>
    %c90_119 = arith.constant 90 : index
    %c0_120 = arith.constant 0 : index
    %428 = vector.load %arg6[%c90_119, %c0_120] : memref<328x128xf32, #tpu.memory_space<vmem>>, vector<18x128xf32>
    %429 = vector.extract_strided_slice %428 {offsets = [0, 0], sizes = [16, 128], strides = [1, 1]} : vector<18x128xf32> to vector<16x128xf32>
    %430 = vector.extract_strided_slice %46 {offsets = [3, 0], sizes = [1, 128], strides = [1, 1]} : vector<9x128xf32> to vector<1x128xf32>
    %431 = vector.broadcast %430 : vector<1x128xf32> to vector<16x128xf32>
    %432 = arith.mulf %429, %431 : vector<16x128xf32>
    %433 = arith.addf %427, %432 : vector<16x128xf32>
    %434 = vector.extract_strided_slice %428 {offsets = [1, 0], sizes = [16, 128], strides = [1, 1]} : vector<18x128xf32> to vector<16x128xf32>
    %435 = vector.extract_strided_slice %46 {offsets = [4, 0], sizes = [1, 128], strides = [1, 1]} : vector<9x128xf32> to vector<1x128xf32>
    %436 = vector.broadcast %435 : vector<1x128xf32> to vector<16x128xf32>
    %437 = arith.mulf %434, %436 : vector<16x128xf32>
    %438 = arith.addf %433, %437 : vector<16x128xf32>
    %439 = vector.extract_strided_slice %428 {offsets = [2, 0], sizes = [16, 128], strides = [1, 1]} : vector<18x128xf32> to vector<16x128xf32>
    %440 = vector.extract_strided_slice %46 {offsets = [5, 0], sizes = [1, 128], strides = [1, 1]} : vector<9x128xf32> to vector<1x128xf32>
    %441 = vector.broadcast %440 : vector<1x128xf32> to vector<16x128xf32>
    %442 = arith.mulf %439, %441 : vector<16x128xf32>
    %443 = arith.addf %438, %442 : vector<16x128xf32>
    %c108 = arith.constant 108 : index
    %c0_121 = arith.constant 0 : index
    %444 = vector.load %arg6[%c108, %c0_121] : memref<328x128xf32, #tpu.memory_space<vmem>>, vector<18x128xf32>
    %445 = vector.extract_strided_slice %444 {offsets = [0, 0], sizes = [16, 128], strides = [1, 1]} : vector<18x128xf32> to vector<16x128xf32>
    %446 = vector.extract_strided_slice %46 {offsets = [6, 0], sizes = [1, 128], strides = [1, 1]} : vector<9x128xf32> to vector<1x128xf32>
    %447 = vector.broadcast %446 : vector<1x128xf32> to vector<16x128xf32>
    %448 = arith.mulf %445, %447 : vector<16x128xf32>
    %449 = arith.addf %443, %448 : vector<16x128xf32>
    %450 = vector.extract_strided_slice %444 {offsets = [1, 0], sizes = [16, 128], strides = [1, 1]} : vector<18x128xf32> to vector<16x128xf32>
    %451 = vector.extract_strided_slice %46 {offsets = [7, 0], sizes = [1, 128], strides = [1, 1]} : vector<9x128xf32> to vector<1x128xf32>
    %452 = vector.broadcast %451 : vector<1x128xf32> to vector<16x128xf32>
    %453 = arith.mulf %450, %452 : vector<16x128xf32>
    %454 = arith.addf %449, %453 : vector<16x128xf32>
    %455 = vector.extract_strided_slice %444 {offsets = [2, 0], sizes = [16, 128], strides = [1, 1]} : vector<18x128xf32> to vector<16x128xf32>
    %456 = vector.extract_strided_slice %46 {offsets = [8, 0], sizes = [1, 128], strides = [1, 1]} : vector<9x128xf32> to vector<1x128xf32>
    %457 = vector.broadcast %456 : vector<1x128xf32> to vector<16x128xf32>
    %458 = arith.mulf %455, %457 : vector<16x128xf32>
    %459 = arith.addf %454, %458 : vector<16x128xf32>
    %cst_122 = arith.constant 5.000000e-01 : f32
    %460 = vector.broadcast %cst_122 : f32 to vector<16x128xf32>
    %461 = arith.mulf %460, %459 : vector<16x128xf32>
    %cst_123 = arith.constant 0.707106769 : f32
    %462 = vector.broadcast %cst_123 : f32 to vector<16x128xf32>
    %463 = arith.mulf %459, %462 : vector<16x128xf32>
    %cst_124 = arith.constant 0.000000e+00 : f32
    %464 = vector.broadcast %cst_124 : f32 to vector<16x128xf32>
    %465 = arith.cmpf oge, %463, %464 : vector<16x128xf32>
    %cst_125 = arith.constant 1.000000e+00 : f32
    %cst_126 = arith.constant -1.000000e+00 : f32
    %466 = vector.broadcast %cst_125 : f32 to vector<16x128xf32>
    %467 = vector.broadcast %cst_126 : f32 to vector<16x128xf32>
    %468 = arith.select %465, %466, %467 : vector<16x128xi1>, vector<16x128xf32>
    %469 = math.absf %463 : vector<16x128xf32>
    %cst_127 = arith.constant 0.327591091 : f32
    %470 = vector.broadcast %cst_127 : f32 to vector<16x128xf32>
    %471 = arith.mulf %470, %469 : vector<16x128xf32>
    %cst_128 = arith.constant 1.000000e+00 : f32
    %472 = vector.broadcast %cst_128 : f32 to vector<16x128xf32>
    %473 = arith.addf %472, %471 : vector<16x128xf32>
    %cst_129 = arith.constant 1.000000e+00 : f32
    %474 = vector.broadcast %cst_129 : f32 to vector<16x128xf32>
    %475 = arith.divf %474, %473 : vector<16x128xf32>
    %cst_130 = arith.constant 1.06140542 : f32
    %476 = vector.broadcast %cst_130 : f32 to vector<16x128xf32>
    %477 = arith.mulf %476, %475 : vector<16x128xf32>
    %cst_131 = arith.constant -1.45315206 : f32
    %478 = vector.broadcast %cst_131 : f32 to vector<16x128xf32>
    %479 = arith.addf %477, %478 : vector<16x128xf32>
    %480 = arith.mulf %479, %475 : vector<16x128xf32>
    %cst_132 = arith.constant 1.42141378 : f32
    %481 = vector.broadcast %cst_132 : f32 to vector<16x128xf32>
    %482 = arith.addf %480, %481 : vector<16x128xf32>
    %483 = arith.mulf %482, %475 : vector<16x128xf32>
    %cst_133 = arith.constant -0.284496725 : f32
    %484 = vector.broadcast %cst_133 : f32 to vector<16x128xf32>
    %485 = arith.addf %483, %484 : vector<16x128xf32>
    %486 = arith.mulf %485, %475 : vector<16x128xf32>
    %cst_134 = arith.constant 0.254829586 : f32
    %487 = vector.broadcast %cst_134 : f32 to vector<16x128xf32>
    %488 = arith.addf %486, %487 : vector<16x128xf32>
    %489 = arith.mulf %488, %475 : vector<16x128xf32>
    %cst_135 = arith.constant 0.000000e+00 : f32
    %490 = vector.broadcast %cst_135 : f32 to vector<16x128xf32>
    %491 = arith.subf %490, %469 : vector<16x128xf32>
    %492 = arith.mulf %491, %469 : vector<16x128xf32>
    %493 = math.exp %492 : vector<16x128xf32>
    %494 = arith.mulf %489, %493 : vector<16x128xf32>
    %cst_136 = arith.constant 1.000000e+00 : f32
    %495 = vector.broadcast %cst_136 : f32 to vector<16x128xf32>
    %496 = arith.subf %495, %494 : vector<16x128xf32>
    %497 = arith.mulf %468, %496 : vector<16x128xf32>
    %cst_137 = arith.constant 1.000000e+00 : f32
    %498 = vector.broadcast %cst_137 : f32 to vector<16x128xf32>
    %499 = arith.addf %498, %497 : vector<16x128xf32>
    %500 = arith.mulf %461, %499 : vector<16x128xf32>
    %c64 = arith.constant 64 : index
    %c0_138 = arith.constant 0 : index
    %501 = vector.load %arg7[%c64, %c0_138] : memref<256x128xf32, #tpu.memory_space<vmem>>, vector<16x128xf32>
    tpu.vector_store %arg7[%c64, %c0_138], %500 {strides = array<i32>} : memref<256x128xf32, #tpu.memory_space<vmem>>, vector<16x128xf32>,
    %cst_139 = arith.constant 0.000000e+00 : f32
    %502 = vector.broadcast %cst_139 : f32 to vector<16x128xf32>
    %c90_140 = arith.constant 90 : index
    %c0_141 = arith.constant 0 : index
    %503 = vector.load %arg6[%c90_140, %c0_141] : memref<328x128xf32, #tpu.memory_space<vmem>>, vector<18x128xf32>
    %504 = vector.extract_strided_slice %503 {offsets = [0, 0], sizes = [16, 128], strides = [1, 1]} : vector<18x128xf32> to vector<16x128xf32>
    %505 = vector.extract_strided_slice %46 {offsets = [0, 0], sizes = [1, 128], strides = [1, 1]} : vector<9x128xf32> to vector<1x128xf32>
    %506 = vector.broadcast %505 : vector<1x128xf32> to vector<16x128xf32>
    %507 = arith.mulf %504, %506 : vector<16x128xf32>
    %508 = arith.addf %502, %507 : vector<16x128xf32>
    %509 = vector.extract_strided_slice %503 {offsets = [1, 0], sizes = [16, 128], strides = [1, 1]} : vector<18x128xf32> to vector<16x128xf32>
    %510 = vector.extract_strided_slice %46 {offsets = [1, 0], sizes = [1, 128], strides = [1, 1]} : vector<9x128xf32> to vector<1x128xf32>
    %511 = vector.broadcast %510 : vector<1x128xf32> to vector<16x128xf32>
    %512 = arith.mulf %509, %511 : vector<16x128xf32>
    %513 = arith.addf %508, %512 : vector<16x128xf32>
    %514 = vector.extract_strided_slice %503 {offsets = [2, 0], sizes = [16, 128], strides = [1, 1]} : vector<18x128xf32> to vector<16x128xf32>
    %515 = vector.extract_strided_slice %46 {offsets = [2, 0], sizes = [1, 128], strides = [1, 1]} : vector<9x128xf32> to vector<1x128xf32>
    %516 = vector.broadcast %515 : vector<1x128xf32> to vector<16x128xf32>
    %517 = arith.mulf %514, %516 : vector<16x128xf32>
    %518 = arith.addf %513, %517 : vector<16x128xf32>
    %c108_142 = arith.constant 108 : index
    %c0_143 = arith.constant 0 : index
    %519 = vector.load %arg6[%c108_142, %c0_143] : memref<328x128xf32, #tpu.memory_space<vmem>>, vector<18x128xf32>
    %520 = vector.extract_strided_slice %519 {offsets = [0, 0], sizes = [16, 128], strides = [1, 1]} : vector<18x128xf32> to vector<16x128xf32>
    %521 = vector.extract_strided_slice %46 {offsets = [3, 0], sizes = [1, 128], strides = [1, 1]} : vector<9x128xf32> to vector<1x128xf32>
    %522 = vector.broadcast %521 : vector<1x128xf32> to vector<16x128xf32>
    %523 = arith.mulf %520, %522 : vector<16x128xf32>
    %524 = arith.addf %518, %523 : vector<16x128xf32>
    %525 = vector.extract_strided_slice %519 {offsets = [1, 0], sizes = [16, 128], strides = [1, 1]} : vector<18x128xf32> to vector<16x128xf32>
    %526 = vector.extract_strided_slice %46 {offsets = [4, 0], sizes = [1, 128], strides = [1, 1]} : vector<9x128xf32> to vector<1x128xf32>
    %527 = vector.broadcast %526 : vector<1x128xf32> to vector<16x128xf32>
    %528 = arith.mulf %525, %527 : vector<16x128xf32>
    %529 = arith.addf %524, %528 : vector<16x128xf32>
    %530 = vector.extract_strided_slice %519 {offsets = [2, 0], sizes = [16, 128], strides = [1, 1]} : vector<18x128xf32> to vector<16x128xf32>
    %531 = vector.extract_strided_slice %46 {offsets = [5, 0], sizes = [1, 128], strides = [1, 1]} : vector<9x128xf32> to vector<1x128xf32>
    %532 = vector.broadcast %531 : vector<1x128xf32> to vector<16x128xf32>
    %533 = arith.mulf %530, %532 : vector<16x128xf32>
    %534 = arith.addf %529, %533 : vector<16x128xf32>
    %c126 = arith.constant 126 : index
    %c0_144 = arith.constant 0 : index
    %535 = vector.load %arg6[%c126, %c0_144] : memref<328x128xf32, #tpu.memory_space<vmem>>, vector<18x128xf32>
    %536 = vector.extract_strided_slice %535 {offsets = [0, 0], sizes = [16, 128], strides = [1, 1]} : vector<18x128xf32> to vector<16x128xf32>
    %537 = vector.extract_strided_slice %46 {offsets = [6, 0], sizes = [1, 128], strides = [1, 1]} : vector<9x128xf32> to vector<1x128xf32>
    %538 = vector.broadcast %537 : vector<1x128xf32> to vector<16x128xf32>
    %539 = arith.mulf %536, %538 : vector<16x128xf32>
    %540 = arith.addf %534, %539 : vector<16x128xf32>
    %541 = vector.extract_strided_slice %535 {offsets = [1, 0], sizes = [16, 128], strides = [1, 1]} : vector<18x128xf32> to vector<16x128xf32>
    %542 = vector.extract_strided_slice %46 {offsets = [7, 0], sizes = [1, 128], strides = [1, 1]} : vector<9x128xf32> to vector<1x128xf32>
    %543 = vector.broadcast %542 : vector<1x128xf32> to vector<16x128xf32>
    %544 = arith.mulf %541, %543 : vector<16x128xf32>
    %545 = arith.addf %540, %544 : vector<16x128xf32>
    %546 = vector.extract_strided_slice %535 {offsets = [2, 0], sizes = [16, 128], strides = [1, 1]} : vector<18x128xf32> to vector<16x128xf32>
    %547 = vector.extract_strided_slice %46 {offsets = [8, 0], sizes = [1, 128], strides = [1, 1]} : vector<9x128xf32> to vector<1x128xf32>
    %548 = vector.broadcast %547 : vector<1x128xf32> to vector<16x128xf32>
    %549 = arith.mulf %546, %548 : vector<16x128xf32>
    %550 = arith.addf %545, %549 : vector<16x128xf32>
    %cst_145 = arith.constant 5.000000e-01 : f32
    %551 = vector.broadcast %cst_145 : f32 to vector<16x128xf32>
    %552 = arith.mulf %551, %550 : vector<16x128xf32>
    %cst_146 = arith.constant 0.707106769 : f32
    %553 = vector.broadcast %cst_146 : f32 to vector<16x128xf32>
    %554 = arith.mulf %550, %553 : vector<16x128xf32>
    %cst_147 = arith.constant 0.000000e+00 : f32
    %555 = vector.broadcast %cst_147 : f32 to vector<16x128xf32>
    %556 = arith.cmpf oge, %554, %555 : vector<16x128xf32>
    %cst_148 = arith.constant 1.000000e+00 : f32
    %cst_149 = arith.constant -1.000000e+00 : f32
    %557 = vector.broadcast %cst_148 : f32 to vector<16x128xf32>
    %558 = vector.broadcast %cst_149 : f32 to vector<16x128xf32>
    %559 = arith.select %556, %557, %558 : vector<16x128xi1>, vector<16x128xf32>
    %560 = math.absf %554 : vector<16x128xf32>
    %cst_150 = arith.constant 0.327591091 : f32
    %561 = vector.broadcast %cst_150 : f32 to vector<16x128xf32>
    %562 = arith.mulf %561, %560 : vector<16x128xf32>
    %cst_151 = arith.constant 1.000000e+00 : f32
    %563 = vector.broadcast %cst_151 : f32 to vector<16x128xf32>
    %564 = arith.addf %563, %562 : vector<16x128xf32>
    %cst_152 = arith.constant 1.000000e+00 : f32
    %565 = vector.broadcast %cst_152 : f32 to vector<16x128xf32>
    %566 = arith.divf %565, %564 : vector<16x128xf32>
    %cst_153 = arith.constant 1.06140542 : f32
    %567 = vector.broadcast %cst_153 : f32 to vector<16x128xf32>
    %568 = arith.mulf %567, %566 : vector<16x128xf32>
    %cst_154 = arith.constant -1.45315206 : f32
    %569 = vector.broadcast %cst_154 : f32 to vector<16x128xf32>
    %570 = arith.addf %568, %569 : vector<16x128xf32>
    %571 = arith.mulf %570, %566 : vector<16x128xf32>
    %cst_155 = arith.constant 1.42141378 : f32
    %572 = vector.broadcast %cst_155 : f32 to vector<16x128xf32>
    %573 = arith.addf %571, %572 : vector<16x128xf32>
    %574 = arith.mulf %573, %566 : vector<16x128xf32>
    %cst_156 = arith.constant -0.284496725 : f32
    %575 = vector.broadcast %cst_156 : f32 to vector<16x128xf32>
    %576 = arith.addf %574, %575 : vector<16x128xf32>
    %577 = arith.mulf %576, %566 : vector<16x128xf32>
    %cst_157 = arith.constant 0.254829586 : f32
    %578 = vector.broadcast %cst_157 : f32 to vector<16x128xf32>
    %579 = arith.addf %577, %578 : vector<16x128xf32>
    %580 = arith.mulf %579, %566 : vector<16x128xf32>
    %cst_158 = arith.constant 0.000000e+00 : f32
    %581 = vector.broadcast %cst_158 : f32 to vector<16x128xf32>
    %582 = arith.subf %581, %560 : vector<16x128xf32>
    %583 = arith.mulf %582, %560 : vector<16x128xf32>
    %584 = math.exp %583 : vector<16x128xf32>
    %585 = arith.mulf %580, %584 : vector<16x128xf32>
    %cst_159 = arith.constant 1.000000e+00 : f32
    %586 = vector.broadcast %cst_159 : f32 to vector<16x128xf32>
    %587 = arith.subf %586, %585 : vector<16x128xf32>
    %588 = arith.mulf %559, %587 : vector<16x128xf32>
    %cst_160 = arith.constant 1.000000e+00 : f32
    %589 = vector.broadcast %cst_160 : f32 to vector<16x128xf32>
    %590 = arith.addf %589, %588 : vector<16x128xf32>
    %591 = arith.mulf %552, %590 : vector<16x128xf32>
    %c80 = arith.constant 80 : index
    %c0_161 = arith.constant 0 : index
    %592 = vector.load %arg7[%c80, %c0_161] : memref<256x128xf32, #tpu.memory_space<vmem>>, vector<16x128xf32>
    tpu.vector_store %arg7[%c80, %c0_161], %591 {strides = array<i32>} : memref<256x128xf32, #tpu.memory_space<vmem>>, vector<16x128xf32>,
    %cst_162 = arith.constant 0.000000e+00 : f32
    %593 = vector.broadcast %cst_162 : f32 to vector<16x128xf32>
    %c108_163 = arith.constant 108 : index
    %c0_164 = arith.constant 0 : index
    %594 = vector.load %arg6[%c108_163, %c0_164] : memref<328x128xf32, #tpu.memory_space<vmem>>, vector<18x128xf32>
    %595 = vector.extract_strided_slice %594 {offsets = [0, 0], sizes = [16, 128], strides = [1, 1]} : vector<18x128xf32> to vector<16x128xf32>
    %596 = vector.extract_strided_slice %46 {offsets = [0, 0], sizes = [1, 128], strides = [1, 1]} : vector<9x128xf32> to vector<1x128xf32>
    %597 = vector.broadcast %596 : vector<1x128xf32> to vector<16x128xf32>
    %598 = arith.mulf %595, %597 : vector<16x128xf32>
    %599 = arith.addf %593, %598 : vector<16x128xf32>
    %600 = vector.extract_strided_slice %594 {offsets = [1, 0], sizes = [16, 128], strides = [1, 1]} : vector<18x128xf32> to vector<16x128xf32>
    %601 = vector.extract_strided_slice %46 {offsets = [1, 0], sizes = [1, 128], strides = [1, 1]} : vector<9x128xf32> to vector<1x128xf32>
    %602 = vector.broadcast %601 : vector<1x128xf32> to vector<16x128xf32>
    %603 = arith.mulf %600, %602 : vector<16x128xf32>
    %604 = arith.addf %599, %603 : vector<16x128xf32>
    %605 = vector.extract_strided_slice %594 {offsets = [2, 0], sizes = [16, 128], strides = [1, 1]} : vector<18x128xf32> to vector<16x128xf32>
    %606 = vector.extract_strided_slice %46 {offsets = [2, 0], sizes = [1, 128], strides = [1, 1]} : vector<9x128xf32> to vector<1x128xf32>
    %607 = vector.broadcast %606 : vector<1x128xf32> to vector<16x128xf32>
    %608 = arith.mulf %605, %607 : vector<16x128xf32>
    %609 = arith.addf %604, %608 : vector<16x128xf32>
    %c126_165 = arith.constant 126 : index
    %c0_166 = arith.constant 0 : index
    %610 = vector.load %arg6[%c126_165, %c0_166] : memref<328x128xf32, #tpu.memory_space<vmem>>, vector<18x128xf32>
    %611 = vector.extract_strided_slice %610 {offsets = [0, 0], sizes = [16, 128], strides = [1, 1]} : vector<18x128xf32> to vector<16x128xf32>
    %612 = vector.extract_strided_slice %46 {offsets = [3, 0], sizes = [1, 128], strides = [1, 1]} : vector<9x128xf32> to vector<1x128xf32>
    %613 = vector.broadcast %612 : vector<1x128xf32> to vector<16x128xf32>
    %614 = arith.mulf %611, %613 : vector<16x128xf32>
    %615 = arith.addf %609, %614 : vector<16x128xf32>
    %616 = vector.extract_strided_slice %610 {offsets = [1, 0], sizes = [16, 128], strides = [1, 1]} : vector<18x128xf32> to vector<16x128xf32>
    %617 = vector.extract_strided_slice %46 {offsets = [4, 0], sizes = [1, 128], strides = [1, 1]} : vector<9x128xf32> to vector<1x128xf32>
    %618 = vector.broadcast %617 : vector<1x128xf32> to vector<16x128xf32>
    %619 = arith.mulf %616, %618 : vector<16x128xf32>
    %620 = arith.addf %615, %619 : vector<16x128xf32>
    %621 = vector.extract_strided_slice %610 {offsets = [2, 0], sizes = [16, 128], strides = [1, 1]} : vector<18x128xf32> to vector<16x128xf32>
    %622 = vector.extract_strided_slice %46 {offsets = [5, 0], sizes = [1, 128], strides = [1, 1]} : vector<9x128xf32> to vector<1x128xf32>
    %623 = vector.broadcast %622 : vector<1x128xf32> to vector<16x128xf32>
    %624 = arith.mulf %621, %623 : vector<16x128xf32>
    %625 = arith.addf %620, %624 : vector<16x128xf32>
    %c144 = arith.constant 144 : index
    %c0_167 = arith.constant 0 : index
    %626 = vector.load %arg6[%c144, %c0_167] : memref<328x128xf32, #tpu.memory_space<vmem>>, vector<18x128xf32>
    %627 = vector.extract_strided_slice %626 {offsets = [0, 0], sizes = [16, 128], strides = [1, 1]} : vector<18x128xf32> to vector<16x128xf32>
    %628 = vector.extract_strided_slice %46 {offsets = [6, 0], sizes = [1, 128], strides = [1, 1]} : vector<9x128xf32> to vector<1x128xf32>
    %629 = vector.broadcast %628 : vector<1x128xf32> to vector<16x128xf32>
    %630 = arith.mulf %627, %629 : vector<16x128xf32>
    %631 = arith.addf %625, %630 : vector<16x128xf32>
    %632 = vector.extract_strided_slice %626 {offsets = [1, 0], sizes = [16, 128], strides = [1, 1]} : vector<18x128xf32> to vector<16x128xf32>
    %633 = vector.extract_strided_slice %46 {offsets = [7, 0], sizes = [1, 128], strides = [1, 1]} : vector<9x128xf32> to vector<1x128xf32>
    %634 = vector.broadcast %633 : vector<1x128xf32> to vector<16x128xf32>
    %635 = arith.mulf %632, %634 : vector<16x128xf32>
    %636 = arith.addf %631, %635 : vector<16x128xf32>
    %637 = vector.extract_strided_slice %626 {offsets = [2, 0], sizes = [16, 128], strides = [1, 1]} : vector<18x128xf32> to vector<16x128xf32>
    %638 = vector.extract_strided_slice %46 {offsets = [8, 0], sizes = [1, 128], strides = [1, 1]} : vector<9x128xf32> to vector<1x128xf32>
    %639 = vector.broadcast %638 : vector<1x128xf32> to vector<16x128xf32>
    %640 = arith.mulf %637, %639 : vector<16x128xf32>
    %641 = arith.addf %636, %640 : vector<16x128xf32>
    %cst_168 = arith.constant 5.000000e-01 : f32
    %642 = vector.broadcast %cst_168 : f32 to vector<16x128xf32>
    %643 = arith.mulf %642, %641 : vector<16x128xf32>
    %cst_169 = arith.constant 0.707106769 : f32
    %644 = vector.broadcast %cst_169 : f32 to vector<16x128xf32>
    %645 = arith.mulf %641, %644 : vector<16x128xf32>
    %cst_170 = arith.constant 0.000000e+00 : f32
    %646 = vector.broadcast %cst_170 : f32 to vector<16x128xf32>
    %647 = arith.cmpf oge, %645, %646 : vector<16x128xf32>
    %cst_171 = arith.constant 1.000000e+00 : f32
    %cst_172 = arith.constant -1.000000e+00 : f32
    %648 = vector.broadcast %cst_171 : f32 to vector<16x128xf32>
    %649 = vector.broadcast %cst_172 : f32 to vector<16x128xf32>
    %650 = arith.select %647, %648, %649 : vector<16x128xi1>, vector<16x128xf32>
    %651 = math.absf %645 : vector<16x128xf32>
    %cst_173 = arith.constant 0.327591091 : f32
    %652 = vector.broadcast %cst_173 : f32 to vector<16x128xf32>
    %653 = arith.mulf %652, %651 : vector<16x128xf32>
    %cst_174 = arith.constant 1.000000e+00 : f32
    %654 = vector.broadcast %cst_174 : f32 to vector<16x128xf32>
    %655 = arith.addf %654, %653 : vector<16x128xf32>
    %cst_175 = arith.constant 1.000000e+00 : f32
    %656 = vector.broadcast %cst_175 : f32 to vector<16x128xf32>
    %657 = arith.divf %656, %655 : vector<16x128xf32>
    %cst_176 = arith.constant 1.06140542 : f32
    %658 = vector.broadcast %cst_176 : f32 to vector<16x128xf32>
    %659 = arith.mulf %658, %657 : vector<16x128xf32>
    %cst_177 = arith.constant -1.45315206 : f32
    %660 = vector.broadcast %cst_177 : f32 to vector<16x128xf32>
    %661 = arith.addf %659, %660 : vector<16x128xf32>
    %662 = arith.mulf %661, %657 : vector<16x128xf32>
    %cst_178 = arith.constant 1.42141378 : f32
    %663 = vector.broadcast %cst_178 : f32 to vector<16x128xf32>
    %664 = arith.addf %662, %663 : vector<16x128xf32>
    %665 = arith.mulf %664, %657 : vector<16x128xf32>
    %cst_179 = arith.constant -0.284496725 : f32
    %666 = vector.broadcast %cst_179 : f32 to vector<16x128xf32>
    %667 = arith.addf %665, %666 : vector<16x128xf32>
    %668 = arith.mulf %667, %657 : vector<16x128xf32>
    %cst_180 = arith.constant 0.254829586 : f32
    %669 = vector.broadcast %cst_180 : f32 to vector<16x128xf32>
    %670 = arith.addf %668, %669 : vector<16x128xf32>
    %671 = arith.mulf %670, %657 : vector<16x128xf32>
    %cst_181 = arith.constant 0.000000e+00 : f32
    %672 = vector.broadcast %cst_181 : f32 to vector<16x128xf32>
    %673 = arith.subf %672, %651 : vector<16x128xf32>
    %674 = arith.mulf %673, %651 : vector<16x128xf32>
    %675 = math.exp %674 : vector<16x128xf32>
    %676 = arith.mulf %671, %675 : vector<16x128xf32>
    %cst_182 = arith.constant 1.000000e+00 : f32
    %677 = vector.broadcast %cst_182 : f32 to vector<16x128xf32>
    %678 = arith.subf %677, %676 : vector<16x128xf32>
    %679 = arith.mulf %650, %678 : vector<16x128xf32>
    %cst_183 = arith.constant 1.000000e+00 : f32
    %680 = vector.broadcast %cst_183 : f32 to vector<16x128xf32>
    %681 = arith.addf %680, %679 : vector<16x128xf32>
    %682 = arith.mulf %643, %681 : vector<16x128xf32>
    %c96 = arith.constant 96 : index
    %c0_184 = arith.constant 0 : index
    %683 = vector.load %arg7[%c96, %c0_184] : memref<256x128xf32, #tpu.memory_space<vmem>>, vector<16x128xf32>
    tpu.vector_store %arg7[%c96, %c0_184], %682 {strides = array<i32>} : memref<256x128xf32, #tpu.memory_space<vmem>>, vector<16x128xf32>,
    %cst_185 = arith.constant 0.000000e+00 : f32
    %684 = vector.broadcast %cst_185 : f32 to vector<16x128xf32>
    %c126_186 = arith.constant 126 : index
    %c0_187 = arith.constant 0 : index
    %685 = vector.load %arg6[%c126_186, %c0_187] : memref<328x128xf32, #tpu.memory_space<vmem>>, vector<18x128xf32>
    %686 = vector.extract_strided_slice %685 {offsets = [0, 0], sizes = [16, 128], strides = [1, 1]} : vector<18x128xf32> to vector<16x128xf32>
    %687 = vector.extract_strided_slice %46 {offsets = [0, 0], sizes = [1, 128], strides = [1, 1]} : vector<9x128xf32> to vector<1x128xf32>
    %688 = vector.broadcast %687 : vector<1x128xf32> to vector<16x128xf32>
    %689 = arith.mulf %686, %688 : vector<16x128xf32>
    %690 = arith.addf %684, %689 : vector<16x128xf32>
    %691 = vector.extract_strided_slice %685 {offsets = [1, 0], sizes = [16, 128], strides = [1, 1]} : vector<18x128xf32> to vector<16x128xf32>
    %692 = vector.extract_strided_slice %46 {offsets = [1, 0], sizes = [1, 128], strides = [1, 1]} : vector<9x128xf32> to vector<1x128xf32>
    %693 = vector.broadcast %692 : vector<1x128xf32> to vector<16x128xf32>
    %694 = arith.mulf %691, %693 : vector<16x128xf32>
    %695 = arith.addf %690, %694 : vector<16x128xf32>
    %696 = vector.extract_strided_slice %685 {offsets = [2, 0], sizes = [16, 128], strides = [1, 1]} : vector<18x128xf32> to vector<16x128xf32>
    %697 = vector.extract_strided_slice %46 {offsets = [2, 0], sizes = [1, 128], strides = [1, 1]} : vector<9x128xf32> to vector<1x128xf32>
    %698 = vector.broadcast %697 : vector<1x128xf32> to vector<16x128xf32>
    %699 = arith.mulf %696, %698 : vector<16x128xf32>
    %700 = arith.addf %695, %699 : vector<16x128xf32>
    %c144_188 = arith.constant 144 : index
    %c0_189 = arith.constant 0 : index
    %701 = vector.load %arg6[%c144_188, %c0_189] : memref<328x128xf32, #tpu.memory_space<vmem>>, vector<18x128xf32>
    %702 = vector.extract_strided_slice %701 {offsets = [0, 0], sizes = [16, 128], strides = [1, 1]} : vector<18x128xf32> to vector<16x128xf32>
    %703 = vector.extract_strided_slice %46 {offsets = [3, 0], sizes = [1, 128], strides = [1, 1]} : vector<9x128xf32> to vector<1x128xf32>
    %704 = vector.broadcast %703 : vector<1x128xf32> to vector<16x128xf32>
    %705 = arith.mulf %702, %704 : vector<16x128xf32>
    %706 = arith.addf %700, %705 : vector<16x128xf32>
    %707 = vector.extract_strided_slice %701 {offsets = [1, 0], sizes = [16, 128], strides = [1, 1]} : vector<18x128xf32> to vector<16x128xf32>
    %708 = vector.extract_strided_slice %46 {offsets = [4, 0], sizes = [1, 128], strides = [1, 1]} : vector<9x128xf32> to vector<1x128xf32>
    %709 = vector.broadcast %708 : vector<1x128xf32> to vector<16x128xf32>
    %710 = arith.mulf %707, %709 : vector<16x128xf32>
    %711 = arith.addf %706, %710 : vector<16x128xf32>
    %712 = vector.extract_strided_slice %701 {offsets = [2, 0], sizes = [16, 128], strides = [1, 1]} : vector<18x128xf32> to vector<16x128xf32>
    %713 = vector.extract_strided_slice %46 {offsets = [5, 0], sizes = [1, 128], strides = [1, 1]} : vector<9x128xf32> to vector<1x128xf32>
    %714 = vector.broadcast %713 : vector<1x128xf32> to vector<16x128xf32>
    %715 = arith.mulf %712, %714 : vector<16x128xf32>
    %716 = arith.addf %711, %715 : vector<16x128xf32>
    %c162 = arith.constant 162 : index
    %c0_190 = arith.constant 0 : index
    %717 = vector.load %arg6[%c162, %c0_190] : memref<328x128xf32, #tpu.memory_space<vmem>>, vector<18x128xf32>
    %718 = vector.extract_strided_slice %717 {offsets = [0, 0], sizes = [16, 128], strides = [1, 1]} : vector<18x128xf32> to vector<16x128xf32>
    %719 = vector.extract_strided_slice %46 {offsets = [6, 0], sizes = [1, 128], strides = [1, 1]} : vector<9x128xf32> to vector<1x128xf32>
    %720 = vector.broadcast %719 : vector<1x128xf32> to vector<16x128xf32>
    %721 = arith.mulf %718, %720 : vector<16x128xf32>
    %722 = arith.addf %716, %721 : vector<16x128xf32>
    %723 = vector.extract_strided_slice %717 {offsets = [1, 0], sizes = [16, 128], strides = [1, 1]} : vector<18x128xf32> to vector<16x128xf32>
    %724 = vector.extract_strided_slice %46 {offsets = [7, 0], sizes = [1, 128], strides = [1, 1]} : vector<9x128xf32> to vector<1x128xf32>
    %725 = vector.broadcast %724 : vector<1x128xf32> to vector<16x128xf32>
    %726 = arith.mulf %723, %725 : vector<16x128xf32>
    %727 = arith.addf %722, %726 : vector<16x128xf32>
    %728 = vector.extract_strided_slice %717 {offsets = [2, 0], sizes = [16, 128], strides = [1, 1]} : vector<18x128xf32> to vector<16x128xf32>
    %729 = vector.extract_strided_slice %46 {offsets = [8, 0], sizes = [1, 128], strides = [1, 1]} : vector<9x128xf32> to vector<1x128xf32>
    %730 = vector.broadcast %729 : vector<1x128xf32> to vector<16x128xf32>
    %731 = arith.mulf %728, %730 : vector<16x128xf32>
    %732 = arith.addf %727, %731 : vector<16x128xf32>
    %cst_191 = arith.constant 5.000000e-01 : f32
    %733 = vector.broadcast %cst_191 : f32 to vector<16x128xf32>
    %734 = arith.mulf %733, %732 : vector<16x128xf32>
    %cst_192 = arith.constant 0.707106769 : f32
    %735 = vector.broadcast %cst_192 : f32 to vector<16x128xf32>
    %736 = arith.mulf %732, %735 : vector<16x128xf32>
    %cst_193 = arith.constant 0.000000e+00 : f32
    %737 = vector.broadcast %cst_193 : f32 to vector<16x128xf32>
    %738 = arith.cmpf oge, %736, %737 : vector<16x128xf32>
    %cst_194 = arith.constant 1.000000e+00 : f32
    %cst_195 = arith.constant -1.000000e+00 : f32
    %739 = vector.broadcast %cst_194 : f32 to vector<16x128xf32>
    %740 = vector.broadcast %cst_195 : f32 to vector<16x128xf32>
    %741 = arith.select %738, %739, %740 : vector<16x128xi1>, vector<16x128xf32>
    %742 = math.absf %736 : vector<16x128xf32>
    %cst_196 = arith.constant 0.327591091 : f32
    %743 = vector.broadcast %cst_196 : f32 to vector<16x128xf32>
    %744 = arith.mulf %743, %742 : vector<16x128xf32>
    %cst_197 = arith.constant 1.000000e+00 : f32
    %745 = vector.broadcast %cst_197 : f32 to vector<16x128xf32>
    %746 = arith.addf %745, %744 : vector<16x128xf32>
    %cst_198 = arith.constant 1.000000e+00 : f32
    %747 = vector.broadcast %cst_198 : f32 to vector<16x128xf32>
    %748 = arith.divf %747, %746 : vector<16x128xf32>
    %cst_199 = arith.constant 1.06140542 : f32
    %749 = vector.broadcast %cst_199 : f32 to vector<16x128xf32>
    %750 = arith.mulf %749, %748 : vector<16x128xf32>
    %cst_200 = arith.constant -1.45315206 : f32
    %751 = vector.broadcast %cst_200 : f32 to vector<16x128xf32>
    %752 = arith.addf %750, %751 : vector<16x128xf32>
    %753 = arith.mulf %752, %748 : vector<16x128xf32>
    %cst_201 = arith.constant 1.42141378 : f32
    %754 = vector.broadcast %cst_201 : f32 to vector<16x128xf32>
    %755 = arith.addf %753, %754 : vector<16x128xf32>
    %756 = arith.mulf %755, %748 : vector<16x128xf32>
    %cst_202 = arith.constant -0.284496725 : f32
    %757 = vector.broadcast %cst_202 : f32 to vector<16x128xf32>
    %758 = arith.addf %756, %757 : vector<16x128xf32>
    %759 = arith.mulf %758, %748 : vector<16x128xf32>
    %cst_203 = arith.constant 0.254829586 : f32
    %760 = vector.broadcast %cst_203 : f32 to vector<16x128xf32>
    %761 = arith.addf %759, %760 : vector<16x128xf32>
    %762 = arith.mulf %761, %748 : vector<16x128xf32>
    %cst_204 = arith.constant 0.000000e+00 : f32
    %763 = vector.broadcast %cst_204 : f32 to vector<16x128xf32>
    %764 = arith.subf %763, %742 : vector<16x128xf32>
    %765 = arith.mulf %764, %742 : vector<16x128xf32>
    %766 = math.exp %765 : vector<16x128xf32>
    %767 = arith.mulf %762, %766 : vector<16x128xf32>
    %cst_205 = arith.constant 1.000000e+00 : f32
    %768 = vector.broadcast %cst_205 : f32 to vector<16x128xf32>
    %769 = arith.subf %768, %767 : vector<16x128xf32>
    %770 = arith.mulf %741, %769 : vector<16x128xf32>
    %cst_206 = arith.constant 1.000000e+00 : f32
    %771 = vector.broadcast %cst_206 : f32 to vector<16x128xf32>
    %772 = arith.addf %771, %770 : vector<16x128xf32>
    %773 = arith.mulf %734, %772 : vector<16x128xf32>
    %c112 = arith.constant 112 : index
    %c0_207 = arith.constant 0 : index
    %774 = vector.load %arg7[%c112, %c0_207] : memref<256x128xf32, #tpu.memory_space<vmem>>, vector<16x128xf32>
    tpu.vector_store %arg7[%c112, %c0_207], %773 {strides = array<i32>} : memref<256x128xf32, #tpu.memory_space<vmem>>, vector<16x128xf32>,
    %cst_208 = arith.constant 0.000000e+00 : f32
    %775 = vector.broadcast %cst_208 : f32 to vector<16x128xf32>
    %c144_209 = arith.constant 144 : index
    %c0_210 = arith.constant 0 : index
    %776 = vector.load %arg6[%c144_209, %c0_210] : memref<328x128xf32, #tpu.memory_space<vmem>>, vector<18x128xf32>
    %777 = vector.extract_strided_slice %776 {offsets = [0, 0], sizes = [16, 128], strides = [1, 1]} : vector<18x128xf32> to vector<16x128xf32>
    %778 = vector.extract_strided_slice %46 {offsets = [0, 0], sizes = [1, 128], strides = [1, 1]} : vector<9x128xf32> to vector<1x128xf32>
    %779 = vector.broadcast %778 : vector<1x128xf32> to vector<16x128xf32>
    %780 = arith.mulf %777, %779 : vector<16x128xf32>
    %781 = arith.addf %775, %780 : vector<16x128xf32>
    %782 = vector.extract_strided_slice %776 {offsets = [1, 0], sizes = [16, 128], strides = [1, 1]} : vector<18x128xf32> to vector<16x128xf32>
    %783 = vector.extract_strided_slice %46 {offsets = [1, 0], sizes = [1, 128], strides = [1, 1]} : vector<9x128xf32> to vector<1x128xf32>
    %784 = vector.broadcast %783 : vector<1x128xf32> to vector<16x128xf32>
    %785 = arith.mulf %782, %784 : vector<16x128xf32>
    %786 = arith.addf %781, %785 : vector<16x128xf32>
    %787 = vector.extract_strided_slice %776 {offsets = [2, 0], sizes = [16, 128], strides = [1, 1]} : vector<18x128xf32> to vector<16x128xf32>
    %788 = vector.extract_strided_slice %46 {offsets = [2, 0], sizes = [1, 128], strides = [1, 1]} : vector<9x128xf32> to vector<1x128xf32>
    %789 = vector.broadcast %788 : vector<1x128xf32> to vector<16x128xf32>
    %790 = arith.mulf %787, %789 : vector<16x128xf32>
    %791 = arith.addf %786, %790 : vector<16x128xf32>
    %c162_211 = arith.constant 162 : index
    %c0_212 = arith.constant 0 : index
    %792 = vector.load %arg6[%c162_211, %c0_212] : memref<328x128xf32, #tpu.memory_space<vmem>>, vector<18x128xf32>
    %793 = vector.extract_strided_slice %792 {offsets = [0, 0], sizes = [16, 128], strides = [1, 1]} : vector<18x128xf32> to vector<16x128xf32>
    %794 = vector.extract_strided_slice %46 {offsets = [3, 0], sizes = [1, 128], strides = [1, 1]} : vector<9x128xf32> to vector<1x128xf32>
    %795 = vector.broadcast %794 : vector<1x128xf32> to vector<16x128xf32>
    %796 = arith.mulf %793, %795 : vector<16x128xf32>
    %797 = arith.addf %791, %796 : vector<16x128xf32>
    %798 = vector.extract_strided_slice %792 {offsets = [1, 0], sizes = [16, 128], strides = [1, 1]} : vector<18x128xf32> to vector<16x128xf32>
    %799 = vector.extract_strided_slice %46 {offsets = [4, 0], sizes = [1, 128], strides = [1, 1]} : vector<9x128xf32> to vector<1x128xf32>
    %800 = vector.broadcast %799 : vector<1x128xf32> to vector<16x128xf32>
    %801 = arith.mulf %798, %800 : vector<16x128xf32>
    %802 = arith.addf %797, %801 : vector<16x128xf32>
    %803 = vector.extract_strided_slice %792 {offsets = [2, 0], sizes = [16, 128], strides = [1, 1]} : vector<18x128xf32> to vector<16x128xf32>
    %804 = vector.extract_strided_slice %46 {offsets = [5, 0], sizes = [1, 128], strides = [1, 1]} : vector<9x128xf32> to vector<1x128xf32>
    %805 = vector.broadcast %804 : vector<1x128xf32> to vector<16x128xf32>
    %806 = arith.mulf %803, %805 : vector<16x128xf32>
    %807 = arith.addf %802, %806 : vector<16x128xf32>
    %c180 = arith.constant 180 : index
    %c0_213 = arith.constant 0 : index
    %808 = vector.load %arg6[%c180, %c0_213] : memref<328x128xf32, #tpu.memory_space<vmem>>, vector<18x128xf32>
    %809 = vector.extract_strided_slice %808 {offsets = [0, 0], sizes = [16, 128], strides = [1, 1]} : vector<18x128xf32> to vector<16x128xf32>
    %810 = vector.extract_strided_slice %46 {offsets = [6, 0], sizes = [1, 128], strides = [1, 1]} : vector<9x128xf32> to vector<1x128xf32>
    %811 = vector.broadcast %810 : vector<1x128xf32> to vector<16x128xf32>
    %812 = arith.mulf %809, %811 : vector<16x128xf32>
    %813 = arith.addf %807, %812 : vector<16x128xf32>
    %814 = vector.extract_strided_slice %808 {offsets = [1, 0], sizes = [16, 128], strides = [1, 1]} : vector<18x128xf32> to vector<16x128xf32>
    %815 = vector.extract_strided_slice %46 {offsets = [7, 0], sizes = [1, 128], strides = [1, 1]} : vector<9x128xf32> to vector<1x128xf32>
    %816 = vector.broadcast %815 : vector<1x128xf32> to vector<16x128xf32>
    %817 = arith.mulf %814, %816 : vector<16x128xf32>
    %818 = arith.addf %813, %817 : vector<16x128xf32>
    %819 = vector.extract_strided_slice %808 {offsets = [2, 0], sizes = [16, 128], strides = [1, 1]} : vector<18x128xf32> to vector<16x128xf32>
    %820 = vector.extract_strided_slice %46 {offsets = [8, 0], sizes = [1, 128], strides = [1, 1]} : vector<9x128xf32> to vector<1x128xf32>
    %821 = vector.broadcast %820 : vector<1x128xf32> to vector<16x128xf32>
    %822 = arith.mulf %819, %821 : vector<16x128xf32>
    %823 = arith.addf %818, %822 : vector<16x128xf32>
    %cst_214 = arith.constant 5.000000e-01 : f32
    %824 = vector.broadcast %cst_214 : f32 to vector<16x128xf32>
    %825 = arith.mulf %824, %823 : vector<16x128xf32>
    %cst_215 = arith.constant 0.707106769 : f32
    %826 = vector.broadcast %cst_215 : f32 to vector<16x128xf32>
    %827 = arith.mulf %823, %826 : vector<16x128xf32>
    %cst_216 = arith.constant 0.000000e+00 : f32
    %828 = vector.broadcast %cst_216 : f32 to vector<16x128xf32>
    %829 = arith.cmpf oge, %827, %828 : vector<16x128xf32>
    %cst_217 = arith.constant 1.000000e+00 : f32
    %cst_218 = arith.constant -1.000000e+00 : f32
    %830 = vector.broadcast %cst_217 : f32 to vector<16x128xf32>
    %831 = vector.broadcast %cst_218 : f32 to vector<16x128xf32>
    %832 = arith.select %829, %830, %831 : vector<16x128xi1>, vector<16x128xf32>
    %833 = math.absf %827 : vector<16x128xf32>
    %cst_219 = arith.constant 0.327591091 : f32
    %834 = vector.broadcast %cst_219 : f32 to vector<16x128xf32>
    %835 = arith.mulf %834, %833 : vector<16x128xf32>
    %cst_220 = arith.constant 1.000000e+00 : f32
    %836 = vector.broadcast %cst_220 : f32 to vector<16x128xf32>
    %837 = arith.addf %836, %835 : vector<16x128xf32>
    %cst_221 = arith.constant 1.000000e+00 : f32
    %838 = vector.broadcast %cst_221 : f32 to vector<16x128xf32>
    %839 = arith.divf %838, %837 : vector<16x128xf32>
    %cst_222 = arith.constant 1.06140542 : f32
    %840 = vector.broadcast %cst_222 : f32 to vector<16x128xf32>
    %841 = arith.mulf %840, %839 : vector<16x128xf32>
    %cst_223 = arith.constant -1.45315206 : f32
    %842 = vector.broadcast %cst_223 : f32 to vector<16x128xf32>
    %843 = arith.addf %841, %842 : vector<16x128xf32>
    %844 = arith.mulf %843, %839 : vector<16x128xf32>
    %cst_224 = arith.constant 1.42141378 : f32
    %845 = vector.broadcast %cst_224 : f32 to vector<16x128xf32>
    %846 = arith.addf %844, %845 : vector<16x128xf32>
    %847 = arith.mulf %846, %839 : vector<16x128xf32>
    %cst_225 = arith.constant -0.284496725 : f32
    %848 = vector.broadcast %cst_225 : f32 to vector<16x128xf32>
    %849 = arith.addf %847, %848 : vector<16x128xf32>
    %850 = arith.mulf %849, %839 : vector<16x128xf32>
    %cst_226 = arith.constant 0.254829586 : f32
    %851 = vector.broadcast %cst_226 : f32 to vector<16x128xf32>
    %852 = arith.addf %850, %851 : vector<16x128xf32>
    %853 = arith.mulf %852, %839 : vector<16x128xf32>
    %cst_227 = arith.constant 0.000000e+00 : f32
    %854 = vector.broadcast %cst_227 : f32 to vector<16x128xf32>
    %855 = arith.subf %854, %833 : vector<16x128xf32>
    %856 = arith.mulf %855, %833 : vector<16x128xf32>
    %857 = math.exp %856 : vector<16x128xf32>
    %858 = arith.mulf %853, %857 : vector<16x128xf32>
    %cst_228 = arith.constant 1.000000e+00 : f32
    %859 = vector.broadcast %cst_228 : f32 to vector<16x128xf32>
    %860 = arith.subf %859, %858 : vector<16x128xf32>
    %861 = arith.mulf %832, %860 : vector<16x128xf32>
    %cst_229 = arith.constant 1.000000e+00 : f32
    %862 = vector.broadcast %cst_229 : f32 to vector<16x128xf32>
    %863 = arith.addf %862, %861 : vector<16x128xf32>
    %864 = arith.mulf %825, %863 : vector<16x128xf32>
    %c128 = arith.constant 128 : index
    %c0_230 = arith.constant 0 : index
    %865 = vector.load %arg7[%c128, %c0_230] : memref<256x128xf32, #tpu.memory_space<vmem>>, vector<16x128xf32>
    tpu.vector_store %arg7[%c128, %c0_230], %864 {strides = array<i32>} : memref<256x128xf32, #tpu.memory_space<vmem>>, vector<16x128xf32>,
    %cst_231 = arith.constant 0.000000e+00 : f32
    %866 = vector.broadcast %cst_231 : f32 to vector<16x128xf32>
    %c162_232 = arith.constant 162 : index
    %c0_233 = arith.constant 0 : index
    %867 = vector.load %arg6[%c162_232, %c0_233] : memref<328x128xf32, #tpu.memory_space<vmem>>, vector<18x128xf32>
    %868 = vector.extract_strided_slice %867 {offsets = [0, 0], sizes = [16, 128], strides = [1, 1]} : vector<18x128xf32> to vector<16x128xf32>
    %869 = vector.extract_strided_slice %46 {offsets = [0, 0], sizes = [1, 128], strides = [1, 1]} : vector<9x128xf32> to vector<1x128xf32>
    %870 = vector.broadcast %869 : vector<1x128xf32> to vector<16x128xf32>
    %871 = arith.mulf %868, %870 : vector<16x128xf32>
    %872 = arith.addf %866, %871 : vector<16x128xf32>
    %873 = vector.extract_strided_slice %867 {offsets = [1, 0], sizes = [16, 128], strides = [1, 1]} : vector<18x128xf32> to vector<16x128xf32>
    %874 = vector.extract_strided_slice %46 {offsets = [1, 0], sizes = [1, 128], strides = [1, 1]} : vector<9x128xf32> to vector<1x128xf32>
    %875 = vector.broadcast %874 : vector<1x128xf32> to vector<16x128xf32>
    %876 = arith.mulf %873, %875 : vector<16x128xf32>
    %877 = arith.addf %872, %876 : vector<16x128xf32>
    %878 = vector.extract_strided_slice %867 {offsets = [2, 0], sizes = [16, 128], strides = [1, 1]} : vector<18x128xf32> to vector<16x128xf32>
    %879 = vector.extract_strided_slice %46 {offsets = [2, 0], sizes = [1, 128], strides = [1, 1]} : vector<9x128xf32> to vector<1x128xf32>
    %880 = vector.broadcast %879 : vector<1x128xf32> to vector<16x128xf32>
    %881 = arith.mulf %878, %880 : vector<16x128xf32>
    %882 = arith.addf %877, %881 : vector<16x128xf32>
    %c180_234 = arith.constant 180 : index
    %c0_235 = arith.constant 0 : index
    %883 = vector.load %arg6[%c180_234, %c0_235] : memref<328x128xf32, #tpu.memory_space<vmem>>, vector<18x128xf32>
    %884 = vector.extract_strided_slice %883 {offsets = [0, 0], sizes = [16, 128], strides = [1, 1]} : vector<18x128xf32> to vector<16x128xf32>
    %885 = vector.extract_strided_slice %46 {offsets = [3, 0], sizes = [1, 128], strides = [1, 1]} : vector<9x128xf32> to vector<1x128xf32>
    %886 = vector.broadcast %885 : vector<1x128xf32> to vector<16x128xf32>
    %887 = arith.mulf %884, %886 : vector<16x128xf32>
    %888 = arith.addf %882, %887 : vector<16x128xf32>
    %889 = vector.extract_strided_slice %883 {offsets = [1, 0], sizes = [16, 128], strides = [1, 1]} : vector<18x128xf32> to vector<16x128xf32>
    %890 = vector.extract_strided_slice %46 {offsets = [4, 0], sizes = [1, 128], strides = [1, 1]} : vector<9x128xf32> to vector<1x128xf32>
    %891 = vector.broadcast %890 : vector<1x128xf32> to vector<16x128xf32>
    %892 = arith.mulf %889, %891 : vector<16x128xf32>
    %893 = arith.addf %888, %892 : vector<16x128xf32>
    %894 = vector.extract_strided_slice %883 {offsets = [2, 0], sizes = [16, 128], strides = [1, 1]} : vector<18x128xf32> to vector<16x128xf32>
    %895 = vector.extract_strided_slice %46 {offsets = [5, 0], sizes = [1, 128], strides = [1, 1]} : vector<9x128xf32> to vector<1x128xf32>
    %896 = vector.broadcast %895 : vector<1x128xf32> to vector<16x128xf32>
    %897 = arith.mulf %894, %896 : vector<16x128xf32>
    %898 = arith.addf %893, %897 : vector<16x128xf32>
    %c198 = arith.constant 198 : index
    %c0_236 = arith.constant 0 : index
    %899 = vector.load %arg6[%c198, %c0_236] : memref<328x128xf32, #tpu.memory_space<vmem>>, vector<18x128xf32>
    %900 = vector.extract_strided_slice %899 {offsets = [0, 0], sizes = [16, 128], strides = [1, 1]} : vector<18x128xf32> to vector<16x128xf32>
    %901 = vector.extract_strided_slice %46 {offsets = [6, 0], sizes = [1, 128], strides = [1, 1]} : vector<9x128xf32> to vector<1x128xf32>
    %902 = vector.broadcast %901 : vector<1x128xf32> to vector<16x128xf32>
    %903 = arith.mulf %900, %902 : vector<16x128xf32>
    %904 = arith.addf %898, %903 : vector<16x128xf32>
    %905 = vector.extract_strided_slice %899 {offsets = [1, 0], sizes = [16, 128], strides = [1, 1]} : vector<18x128xf32> to vector<16x128xf32>
    %906 = vector.extract_strided_slice %46 {offsets = [7, 0], sizes = [1, 128], strides = [1, 1]} : vector<9x128xf32> to vector<1x128xf32>
    %907 = vector.broadcast %906 : vector<1x128xf32> to vector<16x128xf32>
    %908 = arith.mulf %905, %907 : vector<16x128xf32>
    %909 = arith.addf %904, %908 : vector<16x128xf32>
    %910 = vector.extract_strided_slice %899 {offsets = [2, 0], sizes = [16, 128], strides = [1, 1]} : vector<18x128xf32> to vector<16x128xf32>
    %911 = vector.extract_strided_slice %46 {offsets = [8, 0], sizes = [1, 128], strides = [1, 1]} : vector<9x128xf32> to vector<1x128xf32>
    %912 = vector.broadcast %911 : vector<1x128xf32> to vector<16x128xf32>
    %913 = arith.mulf %910, %912 : vector<16x128xf32>
    %914 = arith.addf %909, %913 : vector<16x128xf32>
    %cst_237 = arith.constant 5.000000e-01 : f32
    %915 = vector.broadcast %cst_237 : f32 to vector<16x128xf32>
    %916 = arith.mulf %915, %914 : vector<16x128xf32>
    %cst_238 = arith.constant 0.707106769 : f32
    %917 = vector.broadcast %cst_238 : f32 to vector<16x128xf32>
    %918 = arith.mulf %914, %917 : vector<16x128xf32>
    %cst_239 = arith.constant 0.000000e+00 : f32
    %919 = vector.broadcast %cst_239 : f32 to vector<16x128xf32>
    %920 = arith.cmpf oge, %918, %919 : vector<16x128xf32>
    %cst_240 = arith.constant 1.000000e+00 : f32
    %cst_241 = arith.constant -1.000000e+00 : f32
    %921 = vector.broadcast %cst_240 : f32 to vector<16x128xf32>
    %922 = vector.broadcast %cst_241 : f32 to vector<16x128xf32>
    %923 = arith.select %920, %921, %922 : vector<16x128xi1>, vector<16x128xf32>
    %924 = math.absf %918 : vector<16x128xf32>
    %cst_242 = arith.constant 0.327591091 : f32
    %925 = vector.broadcast %cst_242 : f32 to vector<16x128xf32>
    %926 = arith.mulf %925, %924 : vector<16x128xf32>
    %cst_243 = arith.constant 1.000000e+00 : f32
    %927 = vector.broadcast %cst_243 : f32 to vector<16x128xf32>
    %928 = arith.addf %927, %926 : vector<16x128xf32>
    %cst_244 = arith.constant 1.000000e+00 : f32
    %929 = vector.broadcast %cst_244 : f32 to vector<16x128xf32>
    %930 = arith.divf %929, %928 : vector<16x128xf32>
    %cst_245 = arith.constant 1.06140542 : f32
    %931 = vector.broadcast %cst_245 : f32 to vector<16x128xf32>
    %932 = arith.mulf %931, %930 : vector<16x128xf32>
    %cst_246 = arith.constant -1.45315206 : f32
    %933 = vector.broadcast %cst_246 : f32 to vector<16x128xf32>
    %934 = arith.addf %932, %933 : vector<16x128xf32>
    %935 = arith.mulf %934, %930 : vector<16x128xf32>
    %cst_247 = arith.constant 1.42141378 : f32
    %936 = vector.broadcast %cst_247 : f32 to vector<16x128xf32>
    %937 = arith.addf %935, %936 : vector<16x128xf32>
    %938 = arith.mulf %937, %930 : vector<16x128xf32>
    %cst_248 = arith.constant -0.284496725 : f32
    %939 = vector.broadcast %cst_248 : f32 to vector<16x128xf32>
    %940 = arith.addf %938, %939 : vector<16x128xf32>
    %941 = arith.mulf %940, %930 : vector<16x128xf32>
    %cst_249 = arith.constant 0.254829586 : f32
    %942 = vector.broadcast %cst_249 : f32 to vector<16x128xf32>
    %943 = arith.addf %941, %942 : vector<16x128xf32>
    %944 = arith.mulf %943, %930 : vector<16x128xf32>
    %cst_250 = arith.constant 0.000000e+00 : f32
    %945 = vector.broadcast %cst_250 : f32 to vector<16x128xf32>
    %946 = arith.subf %945, %924 : vector<16x128xf32>
    %947 = arith.mulf %946, %924 : vector<16x128xf32>
    %948 = math.exp %947 : vector<16x128xf32>
    %949 = arith.mulf %944, %948 : vector<16x128xf32>
    %cst_251 = arith.constant 1.000000e+00 : f32
    %950 = vector.broadcast %cst_251 : f32 to vector<16x128xf32>
    %951 = arith.subf %950, %949 : vector<16x128xf32>
    %952 = arith.mulf %923, %951 : vector<16x128xf32>
    %cst_252 = arith.constant 1.000000e+00 : f32
    %953 = vector.broadcast %cst_252 : f32 to vector<16x128xf32>
    %954 = arith.addf %953, %952 : vector<16x128xf32>
    %955 = arith.mulf %916, %954 : vector<16x128xf32>
    %c144_253 = arith.constant 144 : index
    %c0_254 = arith.constant 0 : index
    %956 = vector.load %arg7[%c144_253, %c0_254] : memref<256x128xf32, #tpu.memory_space<vmem>>, vector<16x128xf32>
    tpu.vector_store %arg7[%c144_253, %c0_254], %955 {strides = array<i32>} : memref<256x128xf32, #tpu.memory_space<vmem>>, vector<16x128xf32>,
    %cst_255 = arith.constant 0.000000e+00 : f32
    %957 = vector.broadcast %cst_255 : f32 to vector<16x128xf32>
    %c180_256 = arith.constant 180 : index
    %c0_257 = arith.constant 0 : index
    %958 = vector.load %arg6[%c180_256, %c0_257] : memref<328x128xf32, #tpu.memory_space<vmem>>, vector<18x128xf32>
    %959 = vector.extract_strided_slice %958 {offsets = [0, 0], sizes = [16, 128], strides = [1, 1]} : vector<18x128xf32> to vector<16x128xf32>
    %960 = vector.extract_strided_slice %46 {offsets = [0, 0], sizes = [1, 128], strides = [1, 1]} : vector<9x128xf32> to vector<1x128xf32>
    %961 = vector.broadcast %960 : vector<1x128xf32> to vector<16x128xf32>
    %962 = arith.mulf %959, %961 : vector<16x128xf32>
    %963 = arith.addf %957, %962 : vector<16x128xf32>
    %964 = vector.extract_strided_slice %958 {offsets = [1, 0], sizes = [16, 128], strides = [1, 1]} : vector<18x128xf32> to vector<16x128xf32>
    %965 = vector.extract_strided_slice %46 {offsets = [1, 0], sizes = [1, 128], strides = [1, 1]} : vector<9x128xf32> to vector<1x128xf32>
    %966 = vector.broadcast %965 : vector<1x128xf32> to vector<16x128xf32>
    %967 = arith.mulf %964, %966 : vector<16x128xf32>
    %968 = arith.addf %963, %967 : vector<16x128xf32>
    %969 = vector.extract_strided_slice %958 {offsets = [2, 0], sizes = [16, 128], strides = [1, 1]} : vector<18x128xf32> to vector<16x128xf32>
    %970 = vector.extract_strided_slice %46 {offsets = [2, 0], sizes = [1, 128], strides = [1, 1]} : vector<9x128xf32> to vector<1x128xf32>
    %971 = vector.broadcast %970 : vector<1x128xf32> to vector<16x128xf32>
    %972 = arith.mulf %969, %971 : vector<16x128xf32>
    %973 = arith.addf %968, %972 : vector<16x128xf32>
    %c198_258 = arith.constant 198 : index
    %c0_259 = arith.constant 0 : index
    %974 = vector.load %arg6[%c198_258, %c0_259] : memref<328x128xf32, #tpu.memory_space<vmem>>, vector<18x128xf32>
    %975 = vector.extract_strided_slice %974 {offsets = [0, 0], sizes = [16, 128], strides = [1, 1]} : vector<18x128xf32> to vector<16x128xf32>
    %976 = vector.extract_strided_slice %46 {offsets = [3, 0], sizes = [1, 128], strides = [1, 1]} : vector<9x128xf32> to vector<1x128xf32>
    %977 = vector.broadcast %976 : vector<1x128xf32> to vector<16x128xf32>
    %978 = arith.mulf %975, %977 : vector<16x128xf32>
    %979 = arith.addf %973, %978 : vector<16x128xf32>
    %980 = vector.extract_strided_slice %974 {offsets = [1, 0], sizes = [16, 128], strides = [1, 1]} : vector<18x128xf32> to vector<16x128xf32>
    %981 = vector.extract_strided_slice %46 {offsets = [4, 0], sizes = [1, 128], strides = [1, 1]} : vector<9x128xf32> to vector<1x128xf32>
    %982 = vector.broadcast %981 : vector<1x128xf32> to vector<16x128xf32>
    %983 = arith.mulf %980, %982 : vector<16x128xf32>
    %984 = arith.addf %979, %983 : vector<16x128xf32>
    %985 = vector.extract_strided_slice %974 {offsets = [2, 0], sizes = [16, 128], strides = [1, 1]} : vector<18x128xf32> to vector<16x128xf32>
    %986 = vector.extract_strided_slice %46 {offsets = [5, 0], sizes = [1, 128], strides = [1, 1]} : vector<9x128xf32> to vector<1x128xf32>
    %987 = vector.broadcast %986 : vector<1x128xf32> to vector<16x128xf32>
    %988 = arith.mulf %985, %987 : vector<16x128xf32>
    %989 = arith.addf %984, %988 : vector<16x128xf32>
    %c216 = arith.constant 216 : index
    %c0_260 = arith.constant 0 : index
    %990 = vector.load %arg6[%c216, %c0_260] : memref<328x128xf32, #tpu.memory_space<vmem>>, vector<18x128xf32>
    %991 = vector.extract_strided_slice %990 {offsets = [0, 0], sizes = [16, 128], strides = [1, 1]} : vector<18x128xf32> to vector<16x128xf32>
    %992 = vector.extract_strided_slice %46 {offsets = [6, 0], sizes = [1, 128], strides = [1, 1]} : vector<9x128xf32> to vector<1x128xf32>
    %993 = vector.broadcast %992 : vector<1x128xf32> to vector<16x128xf32>
    %994 = arith.mulf %991, %993 : vector<16x128xf32>
    %995 = arith.addf %989, %994 : vector<16x128xf32>
    %996 = vector.extract_strided_slice %990 {offsets = [1, 0], sizes = [16, 128], strides = [1, 1]} : vector<18x128xf32> to vector<16x128xf32>
    %997 = vector.extract_strided_slice %46 {offsets = [7, 0], sizes = [1, 128], strides = [1, 1]} : vector<9x128xf32> to vector<1x128xf32>
    %998 = vector.broadcast %997 : vector<1x128xf32> to vector<16x128xf32>
    %999 = arith.mulf %996, %998 : vector<16x128xf32>
    %1000 = arith.addf %995, %999 : vector<16x128xf32>
    %1001 = vector.extract_strided_slice %990 {offsets = [2, 0], sizes = [16, 128], strides = [1, 1]} : vector<18x128xf32> to vector<16x128xf32>
    %1002 = vector.extract_strided_slice %46 {offsets = [8, 0], sizes = [1, 128], strides = [1, 1]} : vector<9x128xf32> to vector<1x128xf32>
    %1003 = vector.broadcast %1002 : vector<1x128xf32> to vector<16x128xf32>
    %1004 = arith.mulf %1001, %1003 : vector<16x128xf32>
    %1005 = arith.addf %1000, %1004 : vector<16x128xf32>
    %cst_261 = arith.constant 5.000000e-01 : f32
    %1006 = vector.broadcast %cst_261 : f32 to vector<16x128xf32>
    %1007 = arith.mulf %1006, %1005 : vector<16x128xf32>
    %cst_262 = arith.constant 0.707106769 : f32
    %1008 = vector.broadcast %cst_262 : f32 to vector<16x128xf32>
    %1009 = arith.mulf %1005, %1008 : vector<16x128xf32>
    %cst_263 = arith.constant 0.000000e+00 : f32
    %1010 = vector.broadcast %cst_263 : f32 to vector<16x128xf32>
    %1011 = arith.cmpf oge, %1009, %1010 : vector<16x128xf32>
    %cst_264 = arith.constant 1.000000e+00 : f32
    %cst_265 = arith.constant -1.000000e+00 : f32
    %1012 = vector.broadcast %cst_264 : f32 to vector<16x128xf32>
    %1013 = vector.broadcast %cst_265 : f32 to vector<16x128xf32>
    %1014 = arith.select %1011, %1012, %1013 : vector<16x128xi1>, vector<16x128xf32>
    %1015 = math.absf %1009 : vector<16x128xf32>
    %cst_266 = arith.constant 0.327591091 : f32
    %1016 = vector.broadcast %cst_266 : f32 to vector<16x128xf32>
    %1017 = arith.mulf %1016, %1015 : vector<16x128xf32>
    %cst_267 = arith.constant 1.000000e+00 : f32
    %1018 = vector.broadcast %cst_267 : f32 to vector<16x128xf32>
    %1019 = arith.addf %1018, %1017 : vector<16x128xf32>
    %cst_268 = arith.constant 1.000000e+00 : f32
    %1020 = vector.broadcast %cst_268 : f32 to vector<16x128xf32>
    %1021 = arith.divf %1020, %1019 : vector<16x128xf32>
    %cst_269 = arith.constant 1.06140542 : f32
    %1022 = vector.broadcast %cst_269 : f32 to vector<16x128xf32>
    %1023 = arith.mulf %1022, %1021 : vector<16x128xf32>
    %cst_270 = arith.constant -1.45315206 : f32
    %1024 = vector.broadcast %cst_270 : f32 to vector<16x128xf32>
    %1025 = arith.addf %1023, %1024 : vector<16x128xf32>
    %1026 = arith.mulf %1025, %1021 : vector<16x128xf32>
    %cst_271 = arith.constant 1.42141378 : f32
    %1027 = vector.broadcast %cst_271 : f32 to vector<16x128xf32>
    %1028 = arith.addf %1026, %1027 : vector<16x128xf32>
    %1029 = arith.mulf %1028, %1021 : vector<16x128xf32>
    %cst_272 = arith.constant -0.284496725 : f32
    %1030 = vector.broadcast %cst_272 : f32 to vector<16x128xf32>
    %1031 = arith.addf %1029, %1030 : vector<16x128xf32>
    %1032 = arith.mulf %1031, %1021 : vector<16x128xf32>
    %cst_273 = arith.constant 0.254829586 : f32
    %1033 = vector.broadcast %cst_273 : f32 to vector<16x128xf32>
    %1034 = arith.addf %1032, %1033 : vector<16x128xf32>
    %1035 = arith.mulf %1034, %1021 : vector<16x128xf32>
    %cst_274 = arith.constant 0.000000e+00 : f32
    %1036 = vector.broadcast %cst_274 : f32 to vector<16x128xf32>
    %1037 = arith.subf %1036, %1015 : vector<16x128xf32>
    %1038 = arith.mulf %1037, %1015 : vector<16x128xf32>
    %1039 = math.exp %1038 : vector<16x128xf32>
    %1040 = arith.mulf %1035, %1039 : vector<16x128xf32>
    %cst_275 = arith.constant 1.000000e+00 : f32
    %1041 = vector.broadcast %cst_275 : f32 to vector<16x128xf32>
    %1042 = arith.subf %1041, %1040 : vector<16x128xf32>
    %1043 = arith.mulf %1014, %1042 : vector<16x128xf32>
    %cst_276 = arith.constant 1.000000e+00 : f32
    %1044 = vector.broadcast %cst_276 : f32 to vector<16x128xf32>
    %1045 = arith.addf %1044, %1043 : vector<16x128xf32>
    %1046 = arith.mulf %1007, %1045 : vector<16x128xf32>
    %c160 = arith.constant 160 : index
    %c0_277 = arith.constant 0 : index
    %1047 = vector.load %arg7[%c160, %c0_277] : memref<256x128xf32, #tpu.memory_space<vmem>>, vector<16x128xf32>
    tpu.vector_store %arg7[%c160, %c0_277], %1046 {strides = array<i32>} : memref<256x128xf32, #tpu.memory_space<vmem>>, vector<16x128xf32>,
    %cst_278 = arith.constant 0.000000e+00 : f32
    %1048 = vector.broadcast %cst_278 : f32 to vector<16x128xf32>
    %c198_279 = arith.constant 198 : index
    %c0_280 = arith.constant 0 : index
    %1049 = vector.load %arg6[%c198_279, %c0_280] : memref<328x128xf32, #tpu.memory_space<vmem>>, vector<18x128xf32>
    %1050 = vector.extract_strided_slice %1049 {offsets = [0, 0], sizes = [16, 128], strides = [1, 1]} : vector<18x128xf32> to vector<16x128xf32>
    %1051 = vector.extract_strided_slice %46 {offsets = [0, 0], sizes = [1, 128], strides = [1, 1]} : vector<9x128xf32> to vector<1x128xf32>
    %1052 = vector.broadcast %1051 : vector<1x128xf32> to vector<16x128xf32>
    %1053 = arith.mulf %1050, %1052 : vector<16x128xf32>
    %1054 = arith.addf %1048, %1053 : vector<16x128xf32>
    %1055 = vector.extract_strided_slice %1049 {offsets = [1, 0], sizes = [16, 128], strides = [1, 1]} : vector<18x128xf32> to vector<16x128xf32>
    %1056 = vector.extract_strided_slice %46 {offsets = [1, 0], sizes = [1, 128], strides = [1, 1]} : vector<9x128xf32> to vector<1x128xf32>
    %1057 = vector.broadcast %1056 : vector<1x128xf32> to vector<16x128xf32>
    %1058 = arith.mulf %1055, %1057 : vector<16x128xf32>
    %1059 = arith.addf %1054, %1058 : vector<16x128xf32>
    %1060 = vector.extract_strided_slice %1049 {offsets = [2, 0], sizes = [16, 128], strides = [1, 1]} : vector<18x128xf32> to vector<16x128xf32>
    %1061 = vector.extract_strided_slice %46 {offsets = [2, 0], sizes = [1, 128], strides = [1, 1]} : vector<9x128xf32> to vector<1x128xf32>
    %1062 = vector.broadcast %1061 : vector<1x128xf32> to vector<16x128xf32>
    %1063 = arith.mulf %1060, %1062 : vector<16x128xf32>
    %1064 = arith.addf %1059, %1063 : vector<16x128xf32>
    %c216_281 = arith.constant 216 : index
    %c0_282 = arith.constant 0 : index
    %1065 = vector.load %arg6[%c216_281, %c0_282] : memref<328x128xf32, #tpu.memory_space<vmem>>, vector<18x128xf32>
    %1066 = vector.extract_strided_slice %1065 {offsets = [0, 0], sizes = [16, 128], strides = [1, 1]} : vector<18x128xf32> to vector<16x128xf32>
    %1067 = vector.extract_strided_slice %46 {offsets = [3, 0], sizes = [1, 128], strides = [1, 1]} : vector<9x128xf32> to vector<1x128xf32>
    %1068 = vector.broadcast %1067 : vector<1x128xf32> to vector<16x128xf32>
    %1069 = arith.mulf %1066, %1068 : vector<16x128xf32>
    %1070 = arith.addf %1064, %1069 : vector<16x128xf32>
    %1071 = vector.extract_strided_slice %1065 {offsets = [1, 0], sizes = [16, 128], strides = [1, 1]} : vector<18x128xf32> to vector<16x128xf32>
    %1072 = vector.extract_strided_slice %46 {offsets = [4, 0], sizes = [1, 128], strides = [1, 1]} : vector<9x128xf32> to vector<1x128xf32>
    %1073 = vector.broadcast %1072 : vector<1x128xf32> to vector<16x128xf32>
    %1074 = arith.mulf %1071, %1073 : vector<16x128xf32>
    %1075 = arith.addf %1070, %1074 : vector<16x128xf32>
    %1076 = vector.extract_strided_slice %1065 {offsets = [2, 0], sizes = [16, 128], strides = [1, 1]} : vector<18x128xf32> to vector<16x128xf32>
    %1077 = vector.extract_strided_slice %46 {offsets = [5, 0], sizes = [1, 128], strides = [1, 1]} : vector<9x128xf32> to vector<1x128xf32>
    %1078 = vector.broadcast %1077 : vector<1x128xf32> to vector<16x128xf32>
    %1079 = arith.mulf %1076, %1078 : vector<16x128xf32>
    %1080 = arith.addf %1075, %1079 : vector<16x128xf32>
    %c234 = arith.constant 234 : index
    %c0_283 = arith.constant 0 : index
    %1081 = vector.load %arg6[%c234, %c0_283] : memref<328x128xf32, #tpu.memory_space<vmem>>, vector<18x128xf32>
    %1082 = vector.extract_strided_slice %1081 {offsets = [0, 0], sizes = [16, 128], strides = [1, 1]} : vector<18x128xf32> to vector<16x128xf32>
    %1083 = vector.extract_strided_slice %46 {offsets = [6, 0], sizes = [1, 128], strides = [1, 1]} : vector<9x128xf32> to vector<1x128xf32>
    %1084 = vector.broadcast %1083 : vector<1x128xf32> to vector<16x128xf32>
    %1085 = arith.mulf %1082, %1084 : vector<16x128xf32>
    %1086 = arith.addf %1080, %1085 : vector<16x128xf32>
    %1087 = vector.extract_strided_slice %1081 {offsets = [1, 0], sizes = [16, 128], strides = [1, 1]} : vector<18x128xf32> to vector<16x128xf32>
    %1088 = vector.extract_strided_slice %46 {offsets = [7, 0], sizes = [1, 128], strides = [1, 1]} : vector<9x128xf32> to vector<1x128xf32>
    %1089 = vector.broadcast %1088 : vector<1x128xf32> to vector<16x128xf32>
    %1090 = arith.mulf %1087, %1089 : vector<16x128xf32>
    %1091 = arith.addf %1086, %1090 : vector<16x128xf32>
    %1092 = vector.extract_strided_slice %1081 {offsets = [2, 0], sizes = [16, 128], strides = [1, 1]} : vector<18x128xf32> to vector<16x128xf32>
    %1093 = vector.extract_strided_slice %46 {offsets = [8, 0], sizes = [1, 128], strides = [1, 1]} : vector<9x128xf32> to vector<1x128xf32>
    %1094 = vector.broadcast %1093 : vector<1x128xf32> to vector<16x128xf32>
    %1095 = arith.mulf %1092, %1094 : vector<16x128xf32>
    %1096 = arith.addf %1091, %1095 : vector<16x128xf32>
    %cst_284 = arith.constant 5.000000e-01 : f32
    %1097 = vector.broadcast %cst_284 : f32 to vector<16x128xf32>
    %1098 = arith.mulf %1097, %1096 : vector<16x128xf32>
    %cst_285 = arith.constant 0.707106769 : f32
    %1099 = vector.broadcast %cst_285 : f32 to vector<16x128xf32>
    %1100 = arith.mulf %1096, %1099 : vector<16x128xf32>
    %cst_286 = arith.constant 0.000000e+00 : f32
    %1101 = vector.broadcast %cst_286 : f32 to vector<16x128xf32>
    %1102 = arith.cmpf oge, %1100, %1101 : vector<16x128xf32>
    %cst_287 = arith.constant 1.000000e+00 : f32
    %cst_288 = arith.constant -1.000000e+00 : f32
    %1103 = vector.broadcast %cst_287 : f32 to vector<16x128xf32>
    %1104 = vector.broadcast %cst_288 : f32 to vector<16x128xf32>
    %1105 = arith.select %1102, %1103, %1104 : vector<16x128xi1>, vector<16x128xf32>
    %1106 = math.absf %1100 : vector<16x128xf32>
    %cst_289 = arith.constant 0.327591091 : f32
    %1107 = vector.broadcast %cst_289 : f32 to vector<16x128xf32>
    %1108 = arith.mulf %1107, %1106 : vector<16x128xf32>
    %cst_290 = arith.constant 1.000000e+00 : f32
    %1109 = vector.broadcast %cst_290 : f32 to vector<16x128xf32>
    %1110 = arith.addf %1109, %1108 : vector<16x128xf32>
    %cst_291 = arith.constant 1.000000e+00 : f32
    %1111 = vector.broadcast %cst_291 : f32 to vector<16x128xf32>
    %1112 = arith.divf %1111, %1110 : vector<16x128xf32>
    %cst_292 = arith.constant 1.06140542 : f32
    %1113 = vector.broadcast %cst_292 : f32 to vector<16x128xf32>
    %1114 = arith.mulf %1113, %1112 : vector<16x128xf32>
    %cst_293 = arith.constant -1.45315206 : f32
    %1115 = vector.broadcast %cst_293 : f32 to vector<16x128xf32>
    %1116 = arith.addf %1114, %1115 : vector<16x128xf32>
    %1117 = arith.mulf %1116, %1112 : vector<16x128xf32>
    %cst_294 = arith.constant 1.42141378 : f32
    %1118 = vector.broadcast %cst_294 : f32 to vector<16x128xf32>
    %1119 = arith.addf %1117, %1118 : vector<16x128xf32>
    %1120 = arith.mulf %1119, %1112 : vector<16x128xf32>
    %cst_295 = arith.constant -0.284496725 : f32
    %1121 = vector.broadcast %cst_295 : f32 to vector<16x128xf32>
    %1122 = arith.addf %1120, %1121 : vector<16x128xf32>
    %1123 = arith.mulf %1122, %1112 : vector<16x128xf32>
    %cst_296 = arith.constant 0.254829586 : f32
    %1124 = vector.broadcast %cst_296 : f32 to vector<16x128xf32>
    %1125 = arith.addf %1123, %1124 : vector<16x128xf32>
    %1126 = arith.mulf %1125, %1112 : vector<16x128xf32>
    %cst_297 = arith.constant 0.000000e+00 : f32
    %1127 = vector.broadcast %cst_297 : f32 to vector<16x128xf32>
    %1128 = arith.subf %1127, %1106 : vector<16x128xf32>
    %1129 = arith.mulf %1128, %1106 : vector<16x128xf32>
    %1130 = math.exp %1129 : vector<16x128xf32>
    %1131 = arith.mulf %1126, %1130 : vector<16x128xf32>
    %cst_298 = arith.constant 1.000000e+00 : f32
    %1132 = vector.broadcast %cst_298 : f32 to vector<16x128xf32>
    %1133 = arith.subf %1132, %1131 : vector<16x128xf32>
    %1134 = arith.mulf %1105, %1133 : vector<16x128xf32>
    %cst_299 = arith.constant 1.000000e+00 : f32
    %1135 = vector.broadcast %cst_299 : f32 to vector<16x128xf32>
    %1136 = arith.addf %1135, %1134 : vector<16x128xf32>
    %1137 = arith.mulf %1098, %1136 : vector<16x128xf32>
    %c176 = arith.constant 176 : index
    %c0_300 = arith.constant 0 : index
    %1138 = vector.load %arg7[%c176, %c0_300] : memref<256x128xf32, #tpu.memory_space<vmem>>, vector<16x128xf32>
    tpu.vector_store %arg7[%c176, %c0_300], %1137 {strides = array<i32>} : memref<256x128xf32, #tpu.memory_space<vmem>>, vector<16x128xf32>,
    %cst_301 = arith.constant 0.000000e+00 : f32
    %1139 = vector.broadcast %cst_301 : f32 to vector<16x128xf32>
    %c216_302 = arith.constant 216 : index
    %c0_303 = arith.constant 0 : index
    %1140 = vector.load %arg6[%c216_302, %c0_303] : memref<328x128xf32, #tpu.memory_space<vmem>>, vector<18x128xf32>
    %1141 = vector.extract_strided_slice %1140 {offsets = [0, 0], sizes = [16, 128], strides = [1, 1]} : vector<18x128xf32> to vector<16x128xf32>
    %1142 = vector.extract_strided_slice %46 {offsets = [0, 0], sizes = [1, 128], strides = [1, 1]} : vector<9x128xf32> to vector<1x128xf32>
    %1143 = vector.broadcast %1142 : vector<1x128xf32> to vector<16x128xf32>
    %1144 = arith.mulf %1141, %1143 : vector<16x128xf32>
    %1145 = arith.addf %1139, %1144 : vector<16x128xf32>
    %1146 = vector.extract_strided_slice %1140 {offsets = [1, 0], sizes = [16, 128], strides = [1, 1]} : vector<18x128xf32> to vector<16x128xf32>
    %1147 = vector.extract_strided_slice %46 {offsets = [1, 0], sizes = [1, 128], strides = [1, 1]} : vector<9x128xf32> to vector<1x128xf32>
    %1148 = vector.broadcast %1147 : vector<1x128xf32> to vector<16x128xf32>
    %1149 = arith.mulf %1146, %1148 : vector<16x128xf32>
    %1150 = arith.addf %1145, %1149 : vector<16x128xf32>
    %1151 = vector.extract_strided_slice %1140 {offsets = [2, 0], sizes = [16, 128], strides = [1, 1]} : vector<18x128xf32> to vector<16x128xf32>
    %1152 = vector.extract_strided_slice %46 {offsets = [2, 0], sizes = [1, 128], strides = [1, 1]} : vector<9x128xf32> to vector<1x128xf32>
    %1153 = vector.broadcast %1152 : vector<1x128xf32> to vector<16x128xf32>
    %1154 = arith.mulf %1151, %1153 : vector<16x128xf32>
    %1155 = arith.addf %1150, %1154 : vector<16x128xf32>
    %c234_304 = arith.constant 234 : index
    %c0_305 = arith.constant 0 : index
    %1156 = vector.load %arg6[%c234_304, %c0_305] : memref<328x128xf32, #tpu.memory_space<vmem>>, vector<18x128xf32>
    %1157 = vector.extract_strided_slice %1156 {offsets = [0, 0], sizes = [16, 128], strides = [1, 1]} : vector<18x128xf32> to vector<16x128xf32>
    %1158 = vector.extract_strided_slice %46 {offsets = [3, 0], sizes = [1, 128], strides = [1, 1]} : vector<9x128xf32> to vector<1x128xf32>
    %1159 = vector.broadcast %1158 : vector<1x128xf32> to vector<16x128xf32>
    %1160 = arith.mulf %1157, %1159 : vector<16x128xf32>
    %1161 = arith.addf %1155, %1160 : vector<16x128xf32>
    %1162 = vector.extract_strided_slice %1156 {offsets = [1, 0], sizes = [16, 128], strides = [1, 1]} : vector<18x128xf32> to vector<16x128xf32>
    %1163 = vector.extract_strided_slice %46 {offsets = [4, 0], sizes = [1, 128], strides = [1, 1]} : vector<9x128xf32> to vector<1x128xf32>
    %1164 = vector.broadcast %1163 : vector<1x128xf32> to vector<16x128xf32>
    %1165 = arith.mulf %1162, %1164 : vector<16x128xf32>
    %1166 = arith.addf %1161, %1165 : vector<16x128xf32>
    %1167 = vector.extract_strided_slice %1156 {offsets = [2, 0], sizes = [16, 128], strides = [1, 1]} : vector<18x128xf32> to vector<16x128xf32>
    %1168 = vector.extract_strided_slice %46 {offsets = [5, 0], sizes = [1, 128], strides = [1, 1]} : vector<9x128xf32> to vector<1x128xf32>
    %1169 = vector.broadcast %1168 : vector<1x128xf32> to vector<16x128xf32>
    %1170 = arith.mulf %1167, %1169 : vector<16x128xf32>
    %1171 = arith.addf %1166, %1170 : vector<16x128xf32>
    %c252 = arith.constant 252 : index
    %c0_306 = arith.constant 0 : index
    %1172 = vector.load %arg6[%c252, %c0_306] : memref<328x128xf32, #tpu.memory_space<vmem>>, vector<18x128xf32>
    %1173 = vector.extract_strided_slice %1172 {offsets = [0, 0], sizes = [16, 128], strides = [1, 1]} : vector<18x128xf32> to vector<16x128xf32>
    %1174 = vector.extract_strided_slice %46 {offsets = [6, 0], sizes = [1, 128], strides = [1, 1]} : vector<9x128xf32> to vector<1x128xf32>
    %1175 = vector.broadcast %1174 : vector<1x128xf32> to vector<16x128xf32>
    %1176 = arith.mulf %1173, %1175 : vector<16x128xf32>
    %1177 = arith.addf %1171, %1176 : vector<16x128xf32>
    %1178 = vector.extract_strided_slice %1172 {offsets = [1, 0], sizes = [16, 128], strides = [1, 1]} : vector<18x128xf32> to vector<16x128xf32>
    %1179 = vector.extract_strided_slice %46 {offsets = [7, 0], sizes = [1, 128], strides = [1, 1]} : vector<9x128xf32> to vector<1x128xf32>
    %1180 = vector.broadcast %1179 : vector<1x128xf32> to vector<16x128xf32>
    %1181 = arith.mulf %1178, %1180 : vector<16x128xf32>
    %1182 = arith.addf %1177, %1181 : vector<16x128xf32>
    %1183 = vector.extract_strided_slice %1172 {offsets = [2, 0], sizes = [16, 128], strides = [1, 1]} : vector<18x128xf32> to vector<16x128xf32>
    %1184 = vector.extract_strided_slice %46 {offsets = [8, 0], sizes = [1, 128], strides = [1, 1]} : vector<9x128xf32> to vector<1x128xf32>
    %1185 = vector.broadcast %1184 : vector<1x128xf32> to vector<16x128xf32>
    %1186 = arith.mulf %1183, %1185 : vector<16x128xf32>
    %1187 = arith.addf %1182, %1186 : vector<16x128xf32>
    %cst_307 = arith.constant 5.000000e-01 : f32
    %1188 = vector.broadcast %cst_307 : f32 to vector<16x128xf32>
    %1189 = arith.mulf %1188, %1187 : vector<16x128xf32>
    %cst_308 = arith.constant 0.707106769 : f32
    %1190 = vector.broadcast %cst_308 : f32 to vector<16x128xf32>
    %1191 = arith.mulf %1187, %1190 : vector<16x128xf32>
    %cst_309 = arith.constant 0.000000e+00 : f32
    %1192 = vector.broadcast %cst_309 : f32 to vector<16x128xf32>
    %1193 = arith.cmpf oge, %1191, %1192 : vector<16x128xf32>
    %cst_310 = arith.constant 1.000000e+00 : f32
    %cst_311 = arith.constant -1.000000e+00 : f32
    %1194 = vector.broadcast %cst_310 : f32 to vector<16x128xf32>
    %1195 = vector.broadcast %cst_311 : f32 to vector<16x128xf32>
    %1196 = arith.select %1193, %1194, %1195 : vector<16x128xi1>, vector<16x128xf32>
    %1197 = math.absf %1191 : vector<16x128xf32>
    %cst_312 = arith.constant 0.327591091 : f32
    %1198 = vector.broadcast %cst_312 : f32 to vector<16x128xf32>
    %1199 = arith.mulf %1198, %1197 : vector<16x128xf32>
    %cst_313 = arith.constant 1.000000e+00 : f32
    %1200 = vector.broadcast %cst_313 : f32 to vector<16x128xf32>
    %1201 = arith.addf %1200, %1199 : vector<16x128xf32>
    %cst_314 = arith.constant 1.000000e+00 : f32
    %1202 = vector.broadcast %cst_314 : f32 to vector<16x128xf32>
    %1203 = arith.divf %1202, %1201 : vector<16x128xf32>
    %cst_315 = arith.constant 1.06140542 : f32
    %1204 = vector.broadcast %cst_315 : f32 to vector<16x128xf32>
    %1205 = arith.mulf %1204, %1203 : vector<16x128xf32>
    %cst_316 = arith.constant -1.45315206 : f32
    %1206 = vector.broadcast %cst_316 : f32 to vector<16x128xf32>
    %1207 = arith.addf %1205, %1206 : vector<16x128xf32>
    %1208 = arith.mulf %1207, %1203 : vector<16x128xf32>
    %cst_317 = arith.constant 1.42141378 : f32
    %1209 = vector.broadcast %cst_317 : f32 to vector<16x128xf32>
    %1210 = arith.addf %1208, %1209 : vector<16x128xf32>
    %1211 = arith.mulf %1210, %1203 : vector<16x128xf32>
    %cst_318 = arith.constant -0.284496725 : f32
    %1212 = vector.broadcast %cst_318 : f32 to vector<16x128xf32>
    %1213 = arith.addf %1211, %1212 : vector<16x128xf32>
    %1214 = arith.mulf %1213, %1203 : vector<16x128xf32>
    %cst_319 = arith.constant 0.254829586 : f32
    %1215 = vector.broadcast %cst_319 : f32 to vector<16x128xf32>
    %1216 = arith.addf %1214, %1215 : vector<16x128xf32>
    %1217 = arith.mulf %1216, %1203 : vector<16x128xf32>
    %cst_320 = arith.constant 0.000000e+00 : f32
    %1218 = vector.broadcast %cst_320 : f32 to vector<16x128xf32>
    %1219 = arith.subf %1218, %1197 : vector<16x128xf32>
    %1220 = arith.mulf %1219, %1197 : vector<16x128xf32>
    %1221 = math.exp %1220 : vector<16x128xf32>
    %1222 = arith.mulf %1217, %1221 : vector<16x128xf32>
    %cst_321 = arith.constant 1.000000e+00 : f32
    %1223 = vector.broadcast %cst_321 : f32 to vector<16x128xf32>
    %1224 = arith.subf %1223, %1222 : vector<16x128xf32>
    %1225 = arith.mulf %1196, %1224 : vector<16x128xf32>
    %cst_322 = arith.constant 1.000000e+00 : f32
    %1226 = vector.broadcast %cst_322 : f32 to vector<16x128xf32>
    %1227 = arith.addf %1226, %1225 : vector<16x128xf32>
    %1228 = arith.mulf %1189, %1227 : vector<16x128xf32>
    %c192 = arith.constant 192 : index
    %c0_323 = arith.constant 0 : index
    %1229 = vector.load %arg7[%c192, %c0_323] : memref<256x128xf32, #tpu.memory_space<vmem>>, vector<16x128xf32>
    tpu.vector_store %arg7[%c192, %c0_323], %1228 {strides = array<i32>} : memref<256x128xf32, #tpu.memory_space<vmem>>, vector<16x128xf32>,
    %cst_324 = arith.constant 0.000000e+00 : f32
    %1230 = vector.broadcast %cst_324 : f32 to vector<16x128xf32>
    %c234_325 = arith.constant 234 : index
    %c0_326 = arith.constant 0 : index
    %1231 = vector.load %arg6[%c234_325, %c0_326] : memref<328x128xf32, #tpu.memory_space<vmem>>, vector<18x128xf32>
    %1232 = vector.extract_strided_slice %1231 {offsets = [0, 0], sizes = [16, 128], strides = [1, 1]} : vector<18x128xf32> to vector<16x128xf32>
    %1233 = vector.extract_strided_slice %46 {offsets = [0, 0], sizes = [1, 128], strides = [1, 1]} : vector<9x128xf32> to vector<1x128xf32>
    %1234 = vector.broadcast %1233 : vector<1x128xf32> to vector<16x128xf32>
    %1235 = arith.mulf %1232, %1234 : vector<16x128xf32>
    %1236 = arith.addf %1230, %1235 : vector<16x128xf32>
    %1237 = vector.extract_strided_slice %1231 {offsets = [1, 0], sizes = [16, 128], strides = [1, 1]} : vector<18x128xf32> to vector<16x128xf32>
    %1238 = vector.extract_strided_slice %46 {offsets = [1, 0], sizes = [1, 128], strides = [1, 1]} : vector<9x128xf32> to vector<1x128xf32>
    %1239 = vector.broadcast %1238 : vector<1x128xf32> to vector<16x128xf32>
    %1240 = arith.mulf %1237, %1239 : vector<16x128xf32>
    %1241 = arith.addf %1236, %1240 : vector<16x128xf32>
    %1242 = vector.extract_strided_slice %1231 {offsets = [2, 0], sizes = [16, 128], strides = [1, 1]} : vector<18x128xf32> to vector<16x128xf32>
    %1243 = vector.extract_strided_slice %46 {offsets = [2, 0], sizes = [1, 128], strides = [1, 1]} : vector<9x128xf32> to vector<1x128xf32>
    %1244 = vector.broadcast %1243 : vector<1x128xf32> to vector<16x128xf32>
    %1245 = arith.mulf %1242, %1244 : vector<16x128xf32>
    %1246 = arith.addf %1241, %1245 : vector<16x128xf32>
    %c252_327 = arith.constant 252 : index
    %c0_328 = arith.constant 0 : index
    %1247 = vector.load %arg6[%c252_327, %c0_328] : memref<328x128xf32, #tpu.memory_space<vmem>>, vector<18x128xf32>
    %1248 = vector.extract_strided_slice %1247 {offsets = [0, 0], sizes = [16, 128], strides = [1, 1]} : vector<18x128xf32> to vector<16x128xf32>
    %1249 = vector.extract_strided_slice %46 {offsets = [3, 0], sizes = [1, 128], strides = [1, 1]} : vector<9x128xf32> to vector<1x128xf32>
    %1250 = vector.broadcast %1249 : vector<1x128xf32> to vector<16x128xf32>
    %1251 = arith.mulf %1248, %1250 : vector<16x128xf32>
    %1252 = arith.addf %1246, %1251 : vector<16x128xf32>
    %1253 = vector.extract_strided_slice %1247 {offsets = [1, 0], sizes = [16, 128], strides = [1, 1]} : vector<18x128xf32> to vector<16x128xf32>
    %1254 = vector.extract_strided_slice %46 {offsets = [4, 0], sizes = [1, 128], strides = [1, 1]} : vector<9x128xf32> to vector<1x128xf32>
    %1255 = vector.broadcast %1254 : vector<1x128xf32> to vector<16x128xf32>
    %1256 = arith.mulf %1253, %1255 : vector<16x128xf32>
    %1257 = arith.addf %1252, %1256 : vector<16x128xf32>
    %1258 = vector.extract_strided_slice %1247 {offsets = [2, 0], sizes = [16, 128], strides = [1, 1]} : vector<18x128xf32> to vector<16x128xf32>
    %1259 = vector.extract_strided_slice %46 {offsets = [5, 0], sizes = [1, 128], strides = [1, 1]} : vector<9x128xf32> to vector<1x128xf32>
    %1260 = vector.broadcast %1259 : vector<1x128xf32> to vector<16x128xf32>
    %1261 = arith.mulf %1258, %1260 : vector<16x128xf32>
    %1262 = arith.addf %1257, %1261 : vector<16x128xf32>
    %c270 = arith.constant 270 : index
    %c0_329 = arith.constant 0 : index
    %1263 = vector.load %arg6[%c270, %c0_329] : memref<328x128xf32, #tpu.memory_space<vmem>>, vector<18x128xf32>
    %1264 = vector.extract_strided_slice %1263 {offsets = [0, 0], sizes = [16, 128], strides = [1, 1]} : vector<18x128xf32> to vector<16x128xf32>
    %1265 = vector.extract_strided_slice %46 {offsets = [6, 0], sizes = [1, 128], strides = [1, 1]} : vector<9x128xf32> to vector<1x128xf32>
    %1266 = vector.broadcast %1265 : vector<1x128xf32> to vector<16x128xf32>
    %1267 = arith.mulf %1264, %1266 : vector<16x128xf32>
    %1268 = arith.addf %1262, %1267 : vector<16x128xf32>
    %1269 = vector.extract_strided_slice %1263 {offsets = [1, 0], sizes = [16, 128], strides = [1, 1]} : vector<18x128xf32> to vector<16x128xf32>
    %1270 = vector.extract_strided_slice %46 {offsets = [7, 0], sizes = [1, 128], strides = [1, 1]} : vector<9x128xf32> to vector<1x128xf32>
    %1271 = vector.broadcast %1270 : vector<1x128xf32> to vector<16x128xf32>
    %1272 = arith.mulf %1269, %1271 : vector<16x128xf32>
    %1273 = arith.addf %1268, %1272 : vector<16x128xf32>
    %1274 = vector.extract_strided_slice %1263 {offsets = [2, 0], sizes = [16, 128], strides = [1, 1]} : vector<18x128xf32> to vector<16x128xf32>
    %1275 = vector.extract_strided_slice %46 {offsets = [8, 0], sizes = [1, 128], strides = [1, 1]} : vector<9x128xf32> to vector<1x128xf32>
    %1276 = vector.broadcast %1275 : vector<1x128xf32> to vector<16x128xf32>
    %1277 = arith.mulf %1274, %1276 : vector<16x128xf32>
    %1278 = arith.addf %1273, %1277 : vector<16x128xf32>
    %cst_330 = arith.constant 5.000000e-01 : f32
    %1279 = vector.broadcast %cst_330 : f32 to vector<16x128xf32>
    %1280 = arith.mulf %1279, %1278 : vector<16x128xf32>
    %cst_331 = arith.constant 0.707106769 : f32
    %1281 = vector.broadcast %cst_331 : f32 to vector<16x128xf32>
    %1282 = arith.mulf %1278, %1281 : vector<16x128xf32>
    %cst_332 = arith.constant 0.000000e+00 : f32
    %1283 = vector.broadcast %cst_332 : f32 to vector<16x128xf32>
    %1284 = arith.cmpf oge, %1282, %1283 : vector<16x128xf32>
    %cst_333 = arith.constant 1.000000e+00 : f32
    %cst_334 = arith.constant -1.000000e+00 : f32
    %1285 = vector.broadcast %cst_333 : f32 to vector<16x128xf32>
    %1286 = vector.broadcast %cst_334 : f32 to vector<16x128xf32>
    %1287 = arith.select %1284, %1285, %1286 : vector<16x128xi1>, vector<16x128xf32>
    %1288 = math.absf %1282 : vector<16x128xf32>
    %cst_335 = arith.constant 0.327591091 : f32
    %1289 = vector.broadcast %cst_335 : f32 to vector<16x128xf32>
    %1290 = arith.mulf %1289, %1288 : vector<16x128xf32>
    %cst_336 = arith.constant 1.000000e+00 : f32
    %1291 = vector.broadcast %cst_336 : f32 to vector<16x128xf32>
    %1292 = arith.addf %1291, %1290 : vector<16x128xf32>
    %cst_337 = arith.constant 1.000000e+00 : f32
    %1293 = vector.broadcast %cst_337 : f32 to vector<16x128xf32>
    %1294 = arith.divf %1293, %1292 : vector<16x128xf32>
    %cst_338 = arith.constant 1.06140542 : f32
    %1295 = vector.broadcast %cst_338 : f32 to vector<16x128xf32>
    %1296 = arith.mulf %1295, %1294 : vector<16x128xf32>
    %cst_339 = arith.constant -1.45315206 : f32
    %1297 = vector.broadcast %cst_339 : f32 to vector<16x128xf32>
    %1298 = arith.addf %1296, %1297 : vector<16x128xf32>
    %1299 = arith.mulf %1298, %1294 : vector<16x128xf32>
    %cst_340 = arith.constant 1.42141378 : f32
    %1300 = vector.broadcast %cst_340 : f32 to vector<16x128xf32>
    %1301 = arith.addf %1299, %1300 : vector<16x128xf32>
    %1302 = arith.mulf %1301, %1294 : vector<16x128xf32>
    %cst_341 = arith.constant -0.284496725 : f32
    %1303 = vector.broadcast %cst_341 : f32 to vector<16x128xf32>
    %1304 = arith.addf %1302, %1303 : vector<16x128xf32>
    %1305 = arith.mulf %1304, %1294 : vector<16x128xf32>
    %cst_342 = arith.constant 0.254829586 : f32
    %1306 = vector.broadcast %cst_342 : f32 to vector<16x128xf32>
    %1307 = arith.addf %1305, %1306 : vector<16x128xf32>
    %1308 = arith.mulf %1307, %1294 : vector<16x128xf32>
    %cst_343 = arith.constant 0.000000e+00 : f32
    %1309 = vector.broadcast %cst_343 : f32 to vector<16x128xf32>
    %1310 = arith.subf %1309, %1288 : vector<16x128xf32>
    %1311 = arith.mulf %1310, %1288 : vector<16x128xf32>
    %1312 = math.exp %1311 : vector<16x128xf32>
    %1313 = arith.mulf %1308, %1312 : vector<16x128xf32>
    %cst_344 = arith.constant 1.000000e+00 : f32
    %1314 = vector.broadcast %cst_344 : f32 to vector<16x128xf32>
    %1315 = arith.subf %1314, %1313 : vector<16x128xf32>
    %1316 = arith.mulf %1287, %1315 : vector<16x128xf32>
    %cst_345 = arith.constant 1.000000e+00 : f32
    %1317 = vector.broadcast %cst_345 : f32 to vector<16x128xf32>
    %1318 = arith.addf %1317, %1316 : vector<16x128xf32>
    %1319 = arith.mulf %1280, %1318 : vector<16x128xf32>
    %c208 = arith.constant 208 : index
    %c0_346 = arith.constant 0 : index
    %1320 = vector.load %arg7[%c208, %c0_346] : memref<256x128xf32, #tpu.memory_space<vmem>>, vector<16x128xf32>
    tpu.vector_store %arg7[%c208, %c0_346], %1319 {strides = array<i32>} : memref<256x128xf32, #tpu.memory_space<vmem>>, vector<16x128xf32>,
    %cst_347 = arith.constant 0.000000e+00 : f32
    %1321 = vector.broadcast %cst_347 : f32 to vector<16x128xf32>
    %c252_348 = arith.constant 252 : index
    %c0_349 = arith.constant 0 : index
    %1322 = vector.load %arg6[%c252_348, %c0_349] : memref<328x128xf32, #tpu.memory_space<vmem>>, vector<18x128xf32>
    %1323 = vector.extract_strided_slice %1322 {offsets = [0, 0], sizes = [16, 128], strides = [1, 1]} : vector<18x128xf32> to vector<16x128xf32>
    %1324 = vector.extract_strided_slice %46 {offsets = [0, 0], sizes = [1, 128], strides = [1, 1]} : vector<9x128xf32> to vector<1x128xf32>
    %1325 = vector.broadcast %1324 : vector<1x128xf32> to vector<16x128xf32>
    %1326 = arith.mulf %1323, %1325 : vector<16x128xf32>
    %1327 = arith.addf %1321, %1326 : vector<16x128xf32>
    %1328 = vector.extract_strided_slice %1322 {offsets = [1, 0], sizes = [16, 128], strides = [1, 1]} : vector<18x128xf32> to vector<16x128xf32>
    %1329 = vector.extract_strided_slice %46 {offsets = [1, 0], sizes = [1, 128], strides = [1, 1]} : vector<9x128xf32> to vector<1x128xf32>
    %1330 = vector.broadcast %1329 : vector<1x128xf32> to vector<16x128xf32>
    %1331 = arith.mulf %1328, %1330 : vector<16x128xf32>
    %1332 = arith.addf %1327, %1331 : vector<16x128xf32>
    %1333 = vector.extract_strided_slice %1322 {offsets = [2, 0], sizes = [16, 128], strides = [1, 1]} : vector<18x128xf32> to vector<16x128xf32>
    %1334 = vector.extract_strided_slice %46 {offsets = [2, 0], sizes = [1, 128], strides = [1, 1]} : vector<9x128xf32> to vector<1x128xf32>
    %1335 = vector.broadcast %1334 : vector<1x128xf32> to vector<16x128xf32>
    %1336 = arith.mulf %1333, %1335 : vector<16x128xf32>
    %1337 = arith.addf %1332, %1336 : vector<16x128xf32>
    %c270_350 = arith.constant 270 : index
    %c0_351 = arith.constant 0 : index
    %1338 = vector.load %arg6[%c270_350, %c0_351] : memref<328x128xf32, #tpu.memory_space<vmem>>, vector<18x128xf32>
    %1339 = vector.extract_strided_slice %1338 {offsets = [0, 0], sizes = [16, 128], strides = [1, 1]} : vector<18x128xf32> to vector<16x128xf32>
    %1340 = vector.extract_strided_slice %46 {offsets = [3, 0], sizes = [1, 128], strides = [1, 1]} : vector<9x128xf32> to vector<1x128xf32>
    %1341 = vector.broadcast %1340 : vector<1x128xf32> to vector<16x128xf32>
    %1342 = arith.mulf %1339, %1341 : vector<16x128xf32>
    %1343 = arith.addf %1337, %1342 : vector<16x128xf32>
    %1344 = vector.extract_strided_slice %1338 {offsets = [1, 0], sizes = [16, 128], strides = [1, 1]} : vector<18x128xf32> to vector<16x128xf32>
    %1345 = vector.extract_strided_slice %46 {offsets = [4, 0], sizes = [1, 128], strides = [1, 1]} : vector<9x128xf32> to vector<1x128xf32>
    %1346 = vector.broadcast %1345 : vector<1x128xf32> to vector<16x128xf32>
    %1347 = arith.mulf %1344, %1346 : vector<16x128xf32>
    %1348 = arith.addf %1343, %1347 : vector<16x128xf32>
    %1349 = vector.extract_strided_slice %1338 {offsets = [2, 0], sizes = [16, 128], strides = [1, 1]} : vector<18x128xf32> to vector<16x128xf32>
    %1350 = vector.extract_strided_slice %46 {offsets = [5, 0], sizes = [1, 128], strides = [1, 1]} : vector<9x128xf32> to vector<1x128xf32>
    %1351 = vector.broadcast %1350 : vector<1x128xf32> to vector<16x128xf32>
    %1352 = arith.mulf %1349, %1351 : vector<16x128xf32>
    %1353 = arith.addf %1348, %1352 : vector<16x128xf32>
    %c288 = arith.constant 288 : index
    %c0_352 = arith.constant 0 : index
    %1354 = vector.load %arg6[%c288, %c0_352] : memref<328x128xf32, #tpu.memory_space<vmem>>, vector<18x128xf32>
    %1355 = vector.extract_strided_slice %1354 {offsets = [0, 0], sizes = [16, 128], strides = [1, 1]} : vector<18x128xf32> to vector<16x128xf32>
    %1356 = vector.extract_strided_slice %46 {offsets = [6, 0], sizes = [1, 128], strides = [1, 1]} : vector<9x128xf32> to vector<1x128xf32>
    %1357 = vector.broadcast %1356 : vector<1x128xf32> to vector<16x128xf32>
    %1358 = arith.mulf %1355, %1357 : vector<16x128xf32>
    %1359 = arith.addf %1353, %1358 : vector<16x128xf32>
    %1360 = vector.extract_strided_slice %1354 {offsets = [1, 0], sizes = [16, 128], strides = [1, 1]} : vector<18x128xf32> to vector<16x128xf32>
    %1361 = vector.extract_strided_slice %46 {offsets = [7, 0], sizes = [1, 128], strides = [1, 1]} : vector<9x128xf32> to vector<1x128xf32>
    %1362 = vector.broadcast %1361 : vector<1x128xf32> to vector<16x128xf32>
    %1363 = arith.mulf %1360, %1362 : vector<16x128xf32>
    %1364 = arith.addf %1359, %1363 : vector<16x128xf32>
    %1365 = vector.extract_strided_slice %1354 {offsets = [2, 0], sizes = [16, 128], strides = [1, 1]} : vector<18x128xf32> to vector<16x128xf32>
    %1366 = vector.extract_strided_slice %46 {offsets = [8, 0], sizes = [1, 128], strides = [1, 1]} : vector<9x128xf32> to vector<1x128xf32>
    %1367 = vector.broadcast %1366 : vector<1x128xf32> to vector<16x128xf32>
    %1368 = arith.mulf %1365, %1367 : vector<16x128xf32>
    %1369 = arith.addf %1364, %1368 : vector<16x128xf32>
    %cst_353 = arith.constant 5.000000e-01 : f32
    %1370 = vector.broadcast %cst_353 : f32 to vector<16x128xf32>
    %1371 = arith.mulf %1370, %1369 : vector<16x128xf32>
    %cst_354 = arith.constant 0.707106769 : f32
    %1372 = vector.broadcast %cst_354 : f32 to vector<16x128xf32>
    %1373 = arith.mulf %1369, %1372 : vector<16x128xf32>
    %cst_355 = arith.constant 0.000000e+00 : f32
    %1374 = vector.broadcast %cst_355 : f32 to vector<16x128xf32>
    %1375 = arith.cmpf oge, %1373, %1374 : vector<16x128xf32>
    %cst_356 = arith.constant 1.000000e+00 : f32
    %cst_357 = arith.constant -1.000000e+00 : f32
    %1376 = vector.broadcast %cst_356 : f32 to vector<16x128xf32>
    %1377 = vector.broadcast %cst_357 : f32 to vector<16x128xf32>
    %1378 = arith.select %1375, %1376, %1377 : vector<16x128xi1>, vector<16x128xf32>
    %1379 = math.absf %1373 : vector<16x128xf32>
    %cst_358 = arith.constant 0.327591091 : f32
    %1380 = vector.broadcast %cst_358 : f32 to vector<16x128xf32>
    %1381 = arith.mulf %1380, %1379 : vector<16x128xf32>
    %cst_359 = arith.constant 1.000000e+00 : f32
    %1382 = vector.broadcast %cst_359 : f32 to vector<16x128xf32>
    %1383 = arith.addf %1382, %1381 : vector<16x128xf32>
    %cst_360 = arith.constant 1.000000e+00 : f32
    %1384 = vector.broadcast %cst_360 : f32 to vector<16x128xf32>
    %1385 = arith.divf %1384, %1383 : vector<16x128xf32>
    %cst_361 = arith.constant 1.06140542 : f32
    %1386 = vector.broadcast %cst_361 : f32 to vector<16x128xf32>
    %1387 = arith.mulf %1386, %1385 : vector<16x128xf32>
    %cst_362 = arith.constant -1.45315206 : f32
    %1388 = vector.broadcast %cst_362 : f32 to vector<16x128xf32>
    %1389 = arith.addf %1387, %1388 : vector<16x128xf32>
    %1390 = arith.mulf %1389, %1385 : vector<16x128xf32>
    %cst_363 = arith.constant 1.42141378 : f32
    %1391 = vector.broadcast %cst_363 : f32 to vector<16x128xf32>
    %1392 = arith.addf %1390, %1391 : vector<16x128xf32>
    %1393 = arith.mulf %1392, %1385 : vector<16x128xf32>
    %cst_364 = arith.constant -0.284496725 : f32
    %1394 = vector.broadcast %cst_364 : f32 to vector<16x128xf32>
    %1395 = arith.addf %1393, %1394 : vector<16x128xf32>
    %1396 = arith.mulf %1395, %1385 : vector<16x128xf32>
    %cst_365 = arith.constant 0.254829586 : f32
    %1397 = vector.broadcast %cst_365 : f32 to vector<16x128xf32>
    %1398 = arith.addf %1396, %1397 : vector<16x128xf32>
    %1399 = arith.mulf %1398, %1385 : vector<16x128xf32>
    %cst_366 = arith.constant 0.000000e+00 : f32
    %1400 = vector.broadcast %cst_366 : f32 to vector<16x128xf32>
    %1401 = arith.subf %1400, %1379 : vector<16x128xf32>
    %1402 = arith.mulf %1401, %1379 : vector<16x128xf32>
    %1403 = math.exp %1402 : vector<16x128xf32>
    %1404 = arith.mulf %1399, %1403 : vector<16x128xf32>
    %cst_367 = arith.constant 1.000000e+00 : f32
    %1405 = vector.broadcast %cst_367 : f32 to vector<16x128xf32>
    %1406 = arith.subf %1405, %1404 : vector<16x128xf32>
    %1407 = arith.mulf %1378, %1406 : vector<16x128xf32>
    %cst_368 = arith.constant 1.000000e+00 : f32
    %1408 = vector.broadcast %cst_368 : f32 to vector<16x128xf32>
    %1409 = arith.addf %1408, %1407 : vector<16x128xf32>
    %1410 = arith.mulf %1371, %1409 : vector<16x128xf32>
    %c224 = arith.constant 224 : index
    %c0_369 = arith.constant 0 : index
    %1411 = vector.load %arg7[%c224, %c0_369] : memref<256x128xf32, #tpu.memory_space<vmem>>, vector<16x128xf32>
    tpu.vector_store %arg7[%c224, %c0_369], %1410 {strides = array<i32>} : memref<256x128xf32, #tpu.memory_space<vmem>>, vector<16x128xf32>,
    %cst_370 = arith.constant 0.000000e+00 : f32
    %1412 = vector.broadcast %cst_370 : f32 to vector<16x128xf32>
    %c270_371 = arith.constant 270 : index
    %c0_372 = arith.constant 0 : index
    %1413 = vector.load %arg6[%c270_371, %c0_372] : memref<328x128xf32, #tpu.memory_space<vmem>>, vector<18x128xf32>
    %1414 = vector.extract_strided_slice %1413 {offsets = [0, 0], sizes = [16, 128], strides = [1, 1]} : vector<18x128xf32> to vector<16x128xf32>
    %1415 = vector.extract_strided_slice %46 {offsets = [0, 0], sizes = [1, 128], strides = [1, 1]} : vector<9x128xf32> to vector<1x128xf32>
    %1416 = vector.broadcast %1415 : vector<1x128xf32> to vector<16x128xf32>
    %1417 = arith.mulf %1414, %1416 : vector<16x128xf32>
    %1418 = arith.addf %1412, %1417 : vector<16x128xf32>
    %1419 = vector.extract_strided_slice %1413 {offsets = [1, 0], sizes = [16, 128], strides = [1, 1]} : vector<18x128xf32> to vector<16x128xf32>
    %1420 = vector.extract_strided_slice %46 {offsets = [1, 0], sizes = [1, 128], strides = [1, 1]} : vector<9x128xf32> to vector<1x128xf32>
    %1421 = vector.broadcast %1420 : vector<1x128xf32> to vector<16x128xf32>
    %1422 = arith.mulf %1419, %1421 : vector<16x128xf32>
    %1423 = arith.addf %1418, %1422 : vector<16x128xf32>
    %1424 = vector.extract_strided_slice %1413 {offsets = [2, 0], sizes = [16, 128], strides = [1, 1]} : vector<18x128xf32> to vector<16x128xf32>
    %1425 = vector.extract_strided_slice %46 {offsets = [2, 0], sizes = [1, 128], strides = [1, 1]} : vector<9x128xf32> to vector<1x128xf32>
    %1426 = vector.broadcast %1425 : vector<1x128xf32> to vector<16x128xf32>
    %1427 = arith.mulf %1424, %1426 : vector<16x128xf32>
    %1428 = arith.addf %1423, %1427 : vector<16x128xf32>
    %c288_373 = arith.constant 288 : index
    %c0_374 = arith.constant 0 : index
    %1429 = vector.load %arg6[%c288_373, %c0_374] : memref<328x128xf32, #tpu.memory_space<vmem>>, vector<18x128xf32>
    %1430 = vector.extract_strided_slice %1429 {offsets = [0, 0], sizes = [16, 128], strides = [1, 1]} : vector<18x128xf32> to vector<16x128xf32>
    %1431 = vector.extract_strided_slice %46 {offsets = [3, 0], sizes = [1, 128], strides = [1, 1]} : vector<9x128xf32> to vector<1x128xf32>
    %1432 = vector.broadcast %1431 : vector<1x128xf32> to vector<16x128xf32>
    %1433 = arith.mulf %1430, %1432 : vector<16x128xf32>
    %1434 = arith.addf %1428, %1433 : vector<16x128xf32>
    %1435 = vector.extract_strided_slice %1429 {offsets = [1, 0], sizes = [16, 128], strides = [1, 1]} : vector<18x128xf32> to vector<16x128xf32>
    %1436 = vector.extract_strided_slice %46 {offsets = [4, 0], sizes = [1, 128], strides = [1, 1]} : vector<9x128xf32> to vector<1x128xf32>
    %1437 = vector.broadcast %1436 : vector<1x128xf32> to vector<16x128xf32>
    %1438 = arith.mulf %1435, %1437 : vector<16x128xf32>
    %1439 = arith.addf %1434, %1438 : vector<16x128xf32>
    %1440 = vector.extract_strided_slice %1429 {offsets = [2, 0], sizes = [16, 128], strides = [1, 1]} : vector<18x128xf32> to vector<16x128xf32>
    %1441 = vector.extract_strided_slice %46 {offsets = [5, 0], sizes = [1, 128], strides = [1, 1]} : vector<9x128xf32> to vector<1x128xf32>
    %1442 = vector.broadcast %1441 : vector<1x128xf32> to vector<16x128xf32>
    %1443 = arith.mulf %1440, %1442 : vector<16x128xf32>
    %1444 = arith.addf %1439, %1443 : vector<16x128xf32>
    %c306 = arith.constant 306 : index
    %c0_375 = arith.constant 0 : index
    %1445 = vector.load %arg6[%c306, %c0_375] : memref<328x128xf32, #tpu.memory_space<vmem>>, vector<18x128xf32>
    %1446 = vector.extract_strided_slice %1445 {offsets = [0, 0], sizes = [16, 128], strides = [1, 1]} : vector<18x128xf32> to vector<16x128xf32>
    %1447 = vector.extract_strided_slice %46 {offsets = [6, 0], sizes = [1, 128], strides = [1, 1]} : vector<9x128xf32> to vector<1x128xf32>
    %1448 = vector.broadcast %1447 : vector<1x128xf32> to vector<16x128xf32>
    %1449 = arith.mulf %1446, %1448 : vector<16x128xf32>
    %1450 = arith.addf %1444, %1449 : vector<16x128xf32>
    %1451 = vector.extract_strided_slice %1445 {offsets = [1, 0], sizes = [16, 128], strides = [1, 1]} : vector<18x128xf32> to vector<16x128xf32>
    %1452 = vector.extract_strided_slice %46 {offsets = [7, 0], sizes = [1, 128], strides = [1, 1]} : vector<9x128xf32> to vector<1x128xf32>
    %1453 = vector.broadcast %1452 : vector<1x128xf32> to vector<16x128xf32>
    %1454 = arith.mulf %1451, %1453 : vector<16x128xf32>
    %1455 = arith.addf %1450, %1454 : vector<16x128xf32>
    %1456 = vector.extract_strided_slice %1445 {offsets = [2, 0], sizes = [16, 128], strides = [1, 1]} : vector<18x128xf32> to vector<16x128xf32>
    %1457 = vector.extract_strided_slice %46 {offsets = [8, 0], sizes = [1, 128], strides = [1, 1]} : vector<9x128xf32> to vector<1x128xf32>
    %1458 = vector.broadcast %1457 : vector<1x128xf32> to vector<16x128xf32>
    %1459 = arith.mulf %1456, %1458 : vector<16x128xf32>
    %1460 = arith.addf %1455, %1459 : vector<16x128xf32>
    %cst_376 = arith.constant 5.000000e-01 : f32
    %1461 = vector.broadcast %cst_376 : f32 to vector<16x128xf32>
    %1462 = arith.mulf %1461, %1460 : vector<16x128xf32>
    %cst_377 = arith.constant 0.707106769 : f32
    %1463 = vector.broadcast %cst_377 : f32 to vector<16x128xf32>
    %1464 = arith.mulf %1460, %1463 : vector<16x128xf32>
    %cst_378 = arith.constant 0.000000e+00 : f32
    %1465 = vector.broadcast %cst_378 : f32 to vector<16x128xf32>
    %1466 = arith.cmpf oge, %1464, %1465 : vector<16x128xf32>
    %cst_379 = arith.constant 1.000000e+00 : f32
    %cst_380 = arith.constant -1.000000e+00 : f32
    %1467 = vector.broadcast %cst_379 : f32 to vector<16x128xf32>
    %1468 = vector.broadcast %cst_380 : f32 to vector<16x128xf32>
    %1469 = arith.select %1466, %1467, %1468 : vector<16x128xi1>, vector<16x128xf32>
    %1470 = math.absf %1464 : vector<16x128xf32>
    %cst_381 = arith.constant 0.327591091 : f32
    %1471 = vector.broadcast %cst_381 : f32 to vector<16x128xf32>
    %1472 = arith.mulf %1471, %1470 : vector<16x128xf32>
    %cst_382 = arith.constant 1.000000e+00 : f32
    %1473 = vector.broadcast %cst_382 : f32 to vector<16x128xf32>
    %1474 = arith.addf %1473, %1472 : vector<16x128xf32>
    %cst_383 = arith.constant 1.000000e+00 : f32
    %1475 = vector.broadcast %cst_383 : f32 to vector<16x128xf32>
    %1476 = arith.divf %1475, %1474 : vector<16x128xf32>
    %cst_384 = arith.constant 1.06140542 : f32
    %1477 = vector.broadcast %cst_384 : f32 to vector<16x128xf32>
    %1478 = arith.mulf %1477, %1476 : vector<16x128xf32>
    %cst_385 = arith.constant -1.45315206 : f32
    %1479 = vector.broadcast %cst_385 : f32 to vector<16x128xf32>
    %1480 = arith.addf %1478, %1479 : vector<16x128xf32>
    %1481 = arith.mulf %1480, %1476 : vector<16x128xf32>
    %cst_386 = arith.constant 1.42141378 : f32
    %1482 = vector.broadcast %cst_386 : f32 to vector<16x128xf32>
    %1483 = arith.addf %1481, %1482 : vector<16x128xf32>
    %1484 = arith.mulf %1483, %1476 : vector<16x128xf32>
    %cst_387 = arith.constant -0.284496725 : f32
    %1485 = vector.broadcast %cst_387 : f32 to vector<16x128xf32>
    %1486 = arith.addf %1484, %1485 : vector<16x128xf32>
    %1487 = arith.mulf %1486, %1476 : vector<16x128xf32>
    %cst_388 = arith.constant 0.254829586 : f32
    %1488 = vector.broadcast %cst_388 : f32 to vector<16x128xf32>
    %1489 = arith.addf %1487, %1488 : vector<16x128xf32>
    %1490 = arith.mulf %1489, %1476 : vector<16x128xf32>
    %cst_389 = arith.constant 0.000000e+00 : f32
    %1491 = vector.broadcast %cst_389 : f32 to vector<16x128xf32>
    %1492 = arith.subf %1491, %1470 : vector<16x128xf32>
    %1493 = arith.mulf %1492, %1470 : vector<16x128xf32>
    %1494 = math.exp %1493 : vector<16x128xf32>
    %1495 = arith.mulf %1490, %1494 : vector<16x128xf32>
    %cst_390 = arith.constant 1.000000e+00 : f32
    %1496 = vector.broadcast %cst_390 : f32 to vector<16x128xf32>
    %1497 = arith.subf %1496, %1495 : vector<16x128xf32>
    %1498 = arith.mulf %1469, %1497 : vector<16x128xf32>
    %cst_391 = arith.constant 1.000000e+00 : f32
    %1499 = vector.broadcast %cst_391 : f32 to vector<16x128xf32>
    %1500 = arith.addf %1499, %1498 : vector<16x128xf32>
    %1501 = arith.mulf %1462, %1500 : vector<16x128xf32>
    %c240 = arith.constant 240 : index
    %c0_392 = arith.constant 0 : index
    %1502 = vector.load %arg7[%c240, %c0_392] : memref<256x128xf32, #tpu.memory_space<vmem>>, vector<16x128xf32>
    tpu.vector_store %arg7[%c240, %c0_392], %1501 {strides = array<i32>} : memref<256x128xf32, #tpu.memory_space<vmem>>, vector<16x128xf32>,
    %c0_393 = arith.constant 0 : index
    %c0_394 = arith.constant 0 : index
    %1503 = vector.load %arg7[%c0_393, %c0_394] : memref<256x128xf32, #tpu.memory_space<vmem>>, vector<256x128xf32>
    %c0_395 = arith.constant 0 : index
    %c0_396 = arith.constant 0 : index
    %1504 = vector.load %arg4[%c0_395, %c0_396] : memref<128x32xf32, #tpu.memory_space<vmem>>, vector<128x32xf32>
    %cst_397 = arith.constant dense<0.000000e+00> : vector<256x32xf32>
    %1505 = tpu.matmul %1503, %1504, %cst_397 {dimension_numbers = #tpu.dot_dimension_numbers<[1], [0], [0], [1], [0, 0, 1, 1], [], []>} : vector<256x128xf32>, vector<128x32xf32>, vector<256x32xf32> -> vector<256x32xf32>
    %c0_398 = arith.constant 0 : index
    %c0_399 = arith.constant 0 : index
    %c0_400 = arith.constant 0 : index
    %1506 = vector.load %arg5[%c0_398, %c0_399, %c0_400] : memref<1x256x32xf32, #tpu.memory_space<vmem>>, vector<1x256x32xf32>
    %1507 = vector.shape_cast %1506 : vector<1x256x32xf32> to vector<256x32xf32>
    %1508 = vector.shape_cast %1505 : vector<256x32xf32> to vector<1x256x32xf32>
    tpu.vector_store %arg5[%c0_398, %c0_399, %c0_400], %1508 {strides = array<i32>} : memref<1x256x32xf32, #tpu.memory_space<vmem>>, vector<1x256x32xf32>,
    return
  }
  func.func @transform_0(%arg0: i32) -> (i32, i32, i32) {
    %c0_i32 = arith.constant 0 : i32
    %c0_i32_0 = arith.constant 0 : i32
    %c0_i32_1 = arith.constant 0 : i32
    return %arg0, %c0_i32, %c0_i32_0 : i32, i32, i32
  }
  func.func @transform_1(%arg0: i32) -> (i32, i32) {
    %c0_i32 = arith.constant 0 : i32
    %c0_i32_0 = arith.constant 0 : i32
    %c0_i32_1 = arith.constant 0 : i32
    return %c0_i32, %c0_i32_0 : i32, i32
  }
  func.func @transform_2(%arg0: i32) -> (i32, i32) {
    %c0_i32 = arith.constant 0 : i32
    %c0_i32_0 = arith.constant 0 : i32
    %c0_i32_1 = arith.constant 0 : i32
    return %c0_i32, %c0_i32_0 : i32, i32
  }
  func.func @transform_3(%arg0: i32) -> (i32, i32) {
    %c0_i32 = arith.constant 0 : i32
    %c0_i32_0 = arith.constant 0 : i32
    %c0_i32_1 = arith.constant 0 : i32
    return %c0_i32, %c0_i32_0 : i32, i32
  }
  func.func @transform_4(%arg0: i32) -> (i32, i32, i32) {
    %c0_i32 = arith.constant 0 : i32
    %c0_i32_0 = arith.constant 0 : i32
    %c0_i32_1 = arith.constant 0 : i32
    return %arg0, %c0_i32, %c0_i32_0 : i32, i32, i32
  }
}

</mosaic_0001>

<llo_original>
// kernel: tpu_custom_call.1
$region0: #{tpu_custom_call.1}
  #allocation0 [shape = 'u32[]', space=smem, size = 0x4, offset = 0x4, fixed_abs, tag = 'smem constant byte address 0x4 - core index']
  #allocation1 [shape = 'u32[144,128]{1,0:T(1,128)}', space=vmem, size = 0x12000, scoped, tag = 'internal scratch']
  #allocation2 [shape = 'f32[328,128]{1,0:T(8,128)}', space=vmem, size = 0x29000, scoped, tag = 'scratch operand']
  #allocation3 [shape = 'f32[256,128]{1,0:T(8,128)}', space=vmem, size = 0x20000, scoped, tag = 'scratch operand']
  %s0 = inlined_call_operand.vmem [shape: f32[2,328,32], index: 0, kind: input, shape index: {}]
  %s1 = inlined_call_operand.vmem [shape: f32[32,128], index: 1, kind: input, shape index: {}]
  %s2 = inlined_call_operand.vmem [shape: f32[9,128], index: 2, kind: input, shape index: {}]
  %s3 = inlined_call_operand.vmem [shape: f32[128,32], index: 3, kind: input, shape index: {}]
  %s4 = inlined_call_operand.vmem [shape: f32[2,256,32], index: 4, kind: output, shape index: {}]
  %s5 = sld [smem:[#allocation0]]
  $region49: #{tpu_custom_call.1} parent=0
    _
  %s7 = ssub.s32 1, %s5
  %s8 = scalar_select 0, %s7, %s5
  loop: start=0, step=1, limit=4
  $region2: #{tpu_custom_call.1} parent=0 // loop_pre_header
    _
  $region3: #{tpu_custom_call.1} parent=0 // loop_header
    %s10 = sphi 0, %s14
    %p11 = scmp.ge.s32.totalorder %s10, 4
    %s20 = sphi 0, %s22
    %s23 = sphi 0, %s20
    %s24 = sphi 0, %s23
    %s40 = sphi 0, %s24
    %s44 = sphi 0, %s44
    %s46 = sphi 0, %s44
    %s47 = sphi 0, %s46
    %s61 = sphi 0, %s47
    %s65 = sphi 0, %s65
    %s67 = sphi 0, %s65
    %s68 = sphi 0, %s67
    %s82 = sphi 0, %s68
    %s86 = sphi 0, %s86
    %s88 = sphi 0, %s86
    %s89 = sphi 0, %s88
    %s103 = sphi 0, %s89
    %s109 = sphi 0, %s111
    %s112 = sphi 0, %s109
    %s113 = sphi 0, %s112
    %s129 = sphi 0, %s113
  $region4: #{tpu_custom_call.1} parent=0 // loop_header_branch
    %13 = sbr.rel (%p11) target = $region8
  $region5: #{tpu_custom_call.1} parent=0 // loop_body
    %s15 = ssub.s32 %s10, 1
    %s16 = ssub.s32 %s10, 2
    %s17 = sadd.s32 %s10, 1
    %s18 = ssub.s32 %s10, %s17
    %p19 = scmp.eq.s32.totalorder %s18, 0
    %s21 = sadd.s32 %s20, 1
    %s22 = scalar_select %p19, %s20, %s21
    %p25 = pneg %p19
    %p26 = scmp.eq.s32.totalorder %s10, 1
    %p27 = por %p25, %p26
    %p28 = scmp.ne.s32.totalorder %s20, %s23
    %p29 = scmp.eq.s32.totalorder %s10, 0
    %p30 = por %p28, %p29
    %p31 = scmp.ne.s32.totalorder %s20, %s23
    %p32 = scmp.eq.s32.totalorder %s15, 1
    %p33 = por %p31, %p32
    %p34 = scmp.ne.s32.totalorder %s23, %s24
    %p35 = scmp.eq.s32.totalorder %s15, 0
    %p36 = por %p34, %p35
    %p37 = scmp.ne.s32.totalorder %s23, %s24
    %p38 = scmp.eq.s32.totalorder %s16, 1
    %p39 = por %p37, %p38
    %p41 = scmp.ne.s32.totalorder %s24, %s40
    %p42 = scmp.eq.s32.totalorder %s16, 0
    %p43 = por %p41, %p42
    %s45 = sadd.s32 %s44, 1
    %p48 = scmp.eq.s32.totalorder %s10, 1
    %p49 = scmp.ne.s32.totalorder %s44, %s46
    %p50 = scmp.eq.s32.totalorder %s10, 0
    %p51 = por %p49, %p50
    %p52 = scmp.ne.s32.totalorder %s44, %s46
    %p53 = scmp.eq.s32.totalorder %s15, 1
    %p54 = por %p52, %p53
    %p55 = scmp.ne.s32.totalorder %s46, %s47
    %p56 = scmp.eq.s32.totalorder %s15, 0
    %p57 = por %p55, %p56
    %p58 = scmp.ne.s32.totalorder %s46, %s47
    %p59 = scmp.eq.s32.totalorder %s16, 1
    %p60 = por %p58, %p59
    %p62 = scmp.ne.s32.totalorder %s47, %s61
    %p63 = scmp.eq.s32.totalorder %s16, 0
    %p64 = por %p62, %p63
    %s66 = sadd.s32 %s65, 1
    %p69 = scmp.eq.s32.totalorder %s10, 1
    %p70 = scmp.ne.s32.totalorder %s65, %s67
    %p71 = scmp.eq.s32.totalorder %s10, 0
    %p72 = por %p70, %p71
    %p73 = scmp.ne.s32.totalorder %s65, %s67
    %p74 = scmp.eq.s32.totalorder %s15, 1
    %p75 = por %p73, %p74
    %p76 = scmp.ne.s32.totalorder %s67, %s68
    %p77 = scmp.eq.s32.totalorder %s15, 0
    %p78 = por %p76, %p77
    %p79 = scmp.ne.s32.totalorder %s67, %s68
    %p80 = scmp.eq.s32.totalorder %s16, 1
    %p81 = por %p79, %p80
    %p83 = scmp.ne.s32.totalorder %s68, %s82
    %p84 = scmp.eq.s32.totalorder %s16, 0
    %p85 = por %p83, %p84
    %s87 = sadd.s32 %s86, 1
    %p90 = scmp.eq.s32.totalorder %s10, 1
    %p91 = scmp.ne.s32.totalorder %s86, %s88
    %p92 = scmp.eq.s32.totalorder %s10, 0
    %p93 = por %p91, %p92
    %p94 = scmp.ne.s32.totalorder %s86, %s88
    %p95 = scmp.eq.s32.totalorder %s15, 1
    %p96 = por %p94, %p95
    %p97 = scmp.ne.s32.totalorder %s88, %s89
    %p98 = scmp.eq.s32.totalorder %s15, 0
    %p99 = por %p97, %p98
    %p100 = scmp.ne.s32.totalorder %s88, %s89
    %p101 = scmp.eq.s32.totalorder %s16, 1
    %p102 = por %p100, %p101
    %p104 = scmp.ne.s32.totalorder %s89, %s103
    %p105 = scmp.eq.s32.totalorder %s16, 0
    %p106 = por %p104, %p105
    %s107 = ssub.s32 %s10, %s17
    %p108 = scmp.eq.s32.totalorder %s107, 0
    %s110 = sadd.s32 %s109, 1
    %s111 = scalar_select %p108, %s109, %s110
    %p114 = pneg %p108
    %p115 = scmp.eq.s32.totalorder %s10, 1
    %p116 = por %p114, %p115
    %p117 = scmp.ne.s32.totalorder %s109, %s112
    %p118 = scmp.eq.s32.totalorder %s10, 0
    %p119 = por %p117, %p118
    %p120 = scmp.ne.s32.totalorder %s109, %s112
    %p121 = scmp.eq.s32.totalorder %s15, 1
    %p122 = por %p120, %p121
    %p123 = scmp.ne.s32.totalorder %s112, %s113
    %p124 = scmp.eq.s32.totalorder %s15, 0
    %p125 = por %p123, %p124
    %p126 = scmp.ne.s32.totalorder %s112, %s113
    %p127 = scmp.eq.s32.totalorder %s16, 1
    %p128 = por %p126, %p127
    %p130 = scmp.ne.s32.totalorder %s113, %s129
    %p131 = scmp.eq.s32.totalorder %s16, 0
    %p132 = por %p130, %p131
    %p133 = scmp.le.s32.totalorder 1, %s10
    %p134 = scmp.lt.s32.totalorder %s10, 3
    %p135 = pnand %p133, %p134
    %p136 = pneg %p135
    // Predicated region
    $region9: #{tpu_custom_call.1} parent=5 // pred_check
      _
    $region10: #{tpu_custom_call.1} parent=5 // pred_check_branch
      %138 = sbr.rel (%p135) target = $region12
    $region11: #{tpu_custom_call.1} parent=5 // pred_region
      %s139 = ssub.s32 %s10, 1
      // Predicated region
      $region13: #{tpu_custom_call.1} parent=11 // pred_check
        %p140 = pneg %p57
      $region14: #{tpu_custom_call.1} parent=11 // pred_check_branch
        %142 = sbr.rel (%p140) target = $region16
      $region15: #{tpu_custom_call.1} parent=11 // pred_region
        _
      $region16: #{tpu_custom_call.1} parent=11 // pred_fallthru
        _
      // Predicated region
      $region17: #{tpu_custom_call.1} parent=11 // pred_check
        %p143 = pneg %p78
      $region18: #{tpu_custom_call.1} parent=11 // pred_check_branch
        %145 = sbr.rel (%p143) target = $region20
      $region19: #{tpu_custom_call.1} parent=11 // pred_region
        _
      $region20: #{tpu_custom_call.1} parent=11 // pred_fallthru
        _
      // Predicated region
      $region21: #{tpu_custom_call.1} parent=11 // pred_check
        %p146 = pneg %p99
      $region22: #{tpu_custom_call.1} parent=11 // pred_check_branch
        %148 = sbr.rel (%p146) target = $region24
      $region23: #{tpu_custom_call.1} parent=11 // pred_region
        _
      $region24: #{tpu_custom_call.1} parent=11 // pred_fallthru
        _
    $region12: #{tpu_custom_call.1} parent=5 // pred_fallthru
      _
    %p149 = scmp.lt.s32.totalorder %s10, 2
    // Predicated region
    $region25: #{tpu_custom_call.1} parent=5 // pred_check
      %p150 = pneg %p149
    $region26: #{tpu_custom_call.1} parent=5 // pred_check_branch
      %152 = sbr.rel (%p150) target = $region28
    $region27: #{tpu_custom_call.1} parent=5 // pred_region
      // Predicated region
      $region29: #{tpu_custom_call.1} parent=27 // pred_check
        %p153 = pneg %p30
      $region30: #{tpu_custom_call.1} parent=27 // pred_check_branch
        %155 = sbr.rel (%p153) target = $region32
      $region31: #{tpu_custom_call.1} parent=27 // pred_region
        %p156 = scmp.lt.s32.totalorder %s10, 1
        %s157 = scalar_select %p156, %s10, 1
        %s158 = smul.addr %s157, 41
        %s159 = smul.addr %s158, 8
        %s160 = scalar_lea.vmem %s0, %s159
      $region32: #{tpu_custom_call.1} parent=27 // pred_fallthru
        _
    $region28: #{tpu_custom_call.1} parent=5 // pred_fallthru
      _
    %p161 = scmp.le.s32.totalorder 1, %s10
    %p162 = scmp.lt.s32.totalorder %s10, 3
    %p163 = pnand %p161, %p162
    %p164 = pneg %p163
    // Predicated region
    $region33: #{tpu_custom_call.1} parent=5 // pred_check
      _
    $region34: #{tpu_custom_call.1} parent=5 // pred_check_branch
      %166 = sbr.rel (%p163) target = $region36
    $region35: #{tpu_custom_call.1} parent=5 // pred_region
      %s167 = ssub.s32 %s10, 1
      %p168 = scmp.lt.s32.totalorder %s15, 1
      %s169 = scalar_select %p168, %s15, 1
      %s170 = smul.addr %s169, 41
      %s171 = smul.addr %s170, 8
      %s172 = scalar_lea.vmem %s0, %s171
      %p173 = pneg %p36
      %p174 = pneg %p33
      %p175 = pneg %p57
      %p176 = pneg %p54
      %p177 = pneg %p78
      %p178 = pneg %p75
      %p179 = pneg %p99
      %p180 = pneg %p96
      %p181 = pneg %p125
      %p182 = pneg %p122
      %p183 = scmp.lt.s32.totalorder %s15, 1
      %s184 = scalar_select %p183, %s15, 1
      %s185 = smul.addr %s184, 32
      %s186 = smul.addr %s185, 8
      %s187 = scalar_lea.vmem %s4, %s186
      %p188 = scmp.lt.s32.totalorder %s15, 1
      %s189 = scalar_select %p188, %s15, 1
      %s190 = smul.addr %s189, 41
      %s191 = smul.addr %s190, 8
      %s192 = scalar_lea.vmem %s0, %s191
      %p193 = scmp.lt.s32.totalorder %s15, 1
      %s194 = scalar_select %p193, %s15, 1
      %s195 = smul.addr %s194, 32
      %s196 = smul.addr %s195, 8
      %s197 = scalar_lea.vmem %s4, %s196
      %v198 = vld [vmem:[%s192] sm:$0xff]
      %v199 = vld [vmem:[%s192 + $0x8] sm:$0xff]
      %v200 = vld [vmem:[%s192 + $0x10] sm:$0xff]
      %v201 = vld [vmem:[%s192 + $0x18] sm:$0xff]
      %v202 = vld [vmem:[%s192 + $0x20] sm:$0xff]
      %v203 = vld [vmem:[%s192 + $0x28] sm:$0xff]
      %v204 = vld [vmem:[%s192 + $0x30] sm:$0xff]
      %v205 = vld [vmem:[%s192 + $0x38] sm:$0xff]
      %v206 = vld [vmem:[%s192 + $0x40] sm:$0xff]
      %v207 = vld [vmem:[%s192 + $0x48] sm:$0xff]
      %v208 = vld [vmem:[%s192 + $0x50] sm:$0xff]
      %v209 = vld [vmem:[%s192 + $0x58] sm:$0xff]
      %v210 = vld [vmem:[%s192 + $0x60] sm:$0xff]
      %v211 = vld [vmem:[%s192 + $0x68] sm:$0xff]
      %v212 = vld [vmem:[%s192 + $0x70] sm:$0xff]
      %v213 = vld [vmem:[%s192 + $0x78] sm:$0xff]
      %v214 = vld [vmem:[%s192 + $0x80] sm:$0xff]
      %v215 = vld [vmem:[%s192 + $0x88] sm:$0xff]
      %v216 = vld [vmem:[%s192 + $0x90] sm:$0xff]
      %v217 = vld [vmem:[%s192 + $0x98] sm:$0xff]
      %v218 = vld [vmem:[%s192 + $0xa0] sm:$0xff]
      %v219 = vld [vmem:[%s192 + $0xa8] sm:$0xff]
      %v220 = vld [vmem:[%s192 + $0xb0] sm:$0xff]
      %v221 = vld [vmem:[%s192 + $0xb8] sm:$0xff]
      %v222 = vld [vmem:[%s192 + $0xc0] sm:$0xff]
      %v223 = vld [vmem:[%s192 + $0xc8] sm:$0xff]
      %v224 = vld [vmem:[%s192 + $0xd0] sm:$0xff]
      %v225 = vld [vmem:[%s192 + $0xd8] sm:$0xff]
      %v226 = vld [vmem:[%s192 + $0xe0] sm:$0xff]
      %v227 = vld [vmem:[%s192 + $0xe8] sm:$0xff]
      %v228 = vld [vmem:[%s192 + $0xf0] sm:$0xff]
      %v229 = vld [vmem:[%s192 + $0xf8] sm:$0xff]
      %v230 = vld [vmem:[%s192 + $0x100] sm:$0xff]
      %v231 = vld [vmem:[%s192 + $0x108] sm:$0xff]
      %v232 = vld [vmem:[%s192 + $0x110] sm:$0xff]
      %v233 = vld [vmem:[%s192 + $0x118] sm:$0xff]
      %v234 = vld [vmem:[%s192 + $0x120] sm:$0xff]
      %v235 = vld [vmem:[%s192 + $0x128] sm:$0xff]
      %v236 = vld [vmem:[%s192 + $0x130] sm:$0xff]
      %v237 = vld [vmem:[%s192 + $0x138] sm:$0xff]
      %v238 = vld [vmem:[%s192 + $0x140] sm:$0xff]
      %v239 = vld [vmem:[%s1] sm:$0xff]
      %v240 = vld [vmem:[%s1 + $0x8] sm:$0xff]
      %v241 = vld [vmem:[%s1 + $0x10] sm:$0xff]
      %v242 = vld [vmem:[%s1 + $0x18] sm:$0xff]
      %vm243 = vcmask 261120
      %v245 = vsel %vm243, %v198, 0
      %v248 = vsel %vm243, %v199, 0
      %v251 = vsel %vm243, %v200, 0
      %v254 = vsel %vm243, %v201, 0
      %v257 = vsel %vm243, %v202, 0
      %v260 = vsel %vm243, %v203, 0
      %v263 = vsel %vm243, %v204, 0
      %v266 = vsel %vm243, %v205, 0
      %v269 = vsel %vm243, %v206, 0
      %v272 = vsel %vm243, %v207, 0
      %v275 = vsel %vm243, %v208, 0
      %v278 = vsel %vm243, %v209, 0
      %v281 = vsel %vm243, %v210, 0
      %v284 = vsel %vm243, %v211, 0
      %v287 = vsel %vm243, %v212, 0
      %v290 = vsel %vm243, %v213, 0
      %v293 = vsel %vm243, %v214, 0
      %v296 = vsel %vm243, %v215, 0
      %v299 = vsel %vm243, %v216, 0
      %v302 = vsel %vm243, %v217, 0
      %v305 = vsel %vm243, %v218, 0
      %v308 = vsel %vm243, %v219, 0
      %v311 = vsel %vm243, %v220, 0
      %v314 = vsel %vm243, %v221, 0
      %v317 = vsel %vm243, %v222, 0
      %v320 = vsel %vm243, %v223, 0
      %v323 = vsel %vm243, %v224, 0
      %v326 = vsel %vm243, %v225, 0
      %v329 = vsel %vm243, %v226, 0
      %v332 = vsel %vm243, %v227, 0
      %v335 = vsel %vm243, %v228, 0
      %v338 = vsel %vm243, %v229, 0
      %v341 = vsel %vm243, %v230, 0
      %v344 = vsel %vm243, %v231, 0
      %v347 = vsel %vm243, %v232, 0
      %v350 = vsel %vm243, %v233, 0
      %v353 = vsel %vm243, %v234, 0
      %v356 = vsel %vm243, %v235, 0
      %v359 = vsel %vm243, %v236, 0
      %v362 = vsel %vm243, %v237, 0
      %v365 = vsel %vm243, %v238, 0
      %367 = vmatprep.subr.mxu0 0.0
      %368 = vmatpush1.msra.mxu0 0.0
      %369 = vmatprep.subr.mxu0 0.0
      %370 = vmatpush1.msra.mxu0 0.0
      %371 = vmatprep.subr.mxu0 0.0
      %372 = vmatpush1.msra.mxu0 0.0
      %373 = vmatprep.subr.mxu0 0.0
      %374 = vmatpush1.msra.mxu0 0.0
      %375 = vmatprep.subr.mxu0 0.0
      %376 = vmatpush1.msra.mxu0 0.0
      %377 = vmatprep.subr.mxu0 0.0
      %378 = vmatpush1.msra.mxu0 0.0
      %379 = vmatprep.subr.mxu0 0.0
      %380 = vmatpush1.msra.mxu0 0.0
      %381 = vmatprep.subr.mxu0 0.0
      %382 = vmatpush1.msra.mxu0 0.0
      %383 = vmatprep.subr.mxu0 0.0
      %384 = vmatpush1.msra.mxu0 0.0
      %385 = vmatprep.subr.mxu0 0.0
      %386 = vmatpush1.msra.mxu0 0.0
      %387 = vmatprep.subr.mxu0 0.0
      %388 = vmatpush1.msra.mxu0 0.0
      %389 = vmatprep.subr.mxu0 0.0
      %390 = vmatpush1.msra.mxu0 0.0
      %391 = vmatprep.subr.mxu0 0.0
      %392 = vmatpush1.msra.mxu0 %v242
      %393 = vmatprep.subr.mxu0 0.0
      %394 = vmatpush1.msra.mxu0 %v241
      %395 = vmatprep.subr.mxu0 0.0
      %396 = vmatpush1.msra.mxu0 %v240
      %397 = vmatprep.subr.mxu0 0.0
      %398 = vmatpush1.msra.mxu0 %v239
      %399 = vmatprep.subr.mxu0 0.0
      %400 = vmatpush2.msra.mxu0 0.0
      %401 = vmatprep.subr.mxu0 0.0
      %402 = vmatpush2.msra.mxu0 0.0
      %403 = vmatprep.subr.mxu0 0.0
      %404 = vmatpush2.msra.mxu0 0.0
      %405 = vmatprep.subr.mxu0 0.0
      %406 = vmatpush2.msra.mxu0 0.0
      %407 = vmatprep.subr.mxu0 0.0
      %408 = vmatpush2.msra.mxu0 0.0
      %409 = vmatprep.subr.mxu0 0.0
      %410 = vmatpush2.msra.mxu0 0.0
      %411 = vmatprep.subr.mxu0 0.0
      %412 = vmatpush2.msra.mxu0 0.0
      %413 = vmatprep.subr.mxu0 0.0
      %414 = vmatpush2.msra.mxu0 0.0
      %415 = vmatprep.subr.mxu0 0.0
      %416 = vmatpush2.msra.mxu0 0.0
      %417 = vmatprep.subr.mxu0 0.0
      %418 = vmatpush2.msra.mxu0 0.0
      %419 = vmatprep.subr.mxu0 0.0
      %420 = vmatpush2.msra.mxu0 0.0
      %421 = vmatprep.subr.mxu0 0.0
      %422 = vmatpush2.msra.mxu0 0.0
      %423 = vmatprep.subr.mxu0 0.0
      %424 = vmatpush2.msra.mxu0 0.0
      %425 = vmatprep.subr.mxu0 0.0
      %426 = vmatpush2.msra.mxu0 0.0
      %427 = vmatprep.subr.mxu0 0.0
      %428 = vmatpush2.msra.mxu0 0.0
      %429 = vmatprep.subr.mxu0 0.0
      %430 = vmatpush2.msra.mxu0 0.0
      %431 = vmatprep.mubr.f32.mxu0 0.0
      %432 = vmatmul.mubr.f32.gmra.mxu0 %v245
      %v433 = vpop.f32.mrf.mxu0
      %v434 = vadd.f32 0.0, %v433
      %v435 = vpop.f32.mrf.mxu0
      %436 = vmatprep.mubr.f32.mxu0 0.0
      %437 = vmatmul.mubr.f32.gmra.mxu0 %v248
      %v438 = vpop.f32.mrf.mxu0
      %v439 = vadd.f32 0.0, %v438
      %v440 = vpop.f32.mrf.mxu0
      %441 = vmatprep.mubr.f32.mxu0 0.0
      %442 = vmatmul.mubr.f32.gmra.mxu0 %v251
      %v443 = vpop.f32.mrf.mxu0
      %v444 = vadd.f32 0.0, %v443
      %v445 = vpop.f32.mrf.mxu0
      %446 = vmatprep.mubr.f32.mxu0 0.0
      %447 = vmatmul.mubr.f32.gmra.mxu0 %v254
      %v448 = vpop.f32.mrf.mxu0
      %v449 = vadd.f32 0.0, %v448
      %v450 = vpop.f32.mrf.mxu0
      %451 = vmatprep.mubr.f32.mxu0 0.0
      %452 = vmatmul.mubr.f32.gmra.mxu0 %v257
      %v453 = vpop.f32.mrf.mxu0
      %v454 = vadd.f32 0.0, %v453
      %v455 = vpop.f32.mrf.mxu0
      %456 = vmatprep.mubr.f32.mxu0 0.0
      %457 = vmatmul.mubr.f32.gmra.mxu0 %v260
      %v458 = vpop.f32.mrf.mxu0
      %v459 = vadd.f32 0.0, %v458
      %v460 = vpop.f32.mrf.mxu0
      %461 = vmatprep.mubr.f32.mxu0 0.0
      %462 = vmatmul.mubr.f32.gmra.mxu0 %v263
      %v463 = vpop.f32.mrf.mxu0
      %v464 = vadd.f32 0.0, %v463
      %v465 = vpop.f32.mrf.mxu0
      %466 = vmatprep.mubr.f32.mxu0 0.0
      %467 = vmatmul.mubr.f32.gmra.mxu0 %v266
      %v468 = vpop.f32.mrf.mxu0
      %v469 = vadd.f32 0.0, %v468
      %v470 = vpop.f32.mrf.mxu0
      %471 = vmatprep.mubr.f32.mxu0 0.0
      %472 = vmatmul.mubr.f32.gmra.mxu0 %v269
      %v473 = vpop.f32.mrf.mxu0
      %v474 = vadd.f32 0.0, %v473
      %v475 = vpop.f32.mrf.mxu0
      %476 = vmatprep.mubr.f32.mxu0 0.0
      %477 = vmatmul.mubr.f32.gmra.mxu0 %v272
      %v478 = vpop.f32.mrf.mxu0
      %v479 = vadd.f32 0.0, %v478
      %v480 = vpop.f32.mrf.mxu0
      %481 = vmatprep.mubr.f32.mxu0 0.0
      %482 = vmatmul.mubr.f32.gmra.mxu0 %v275
      %v483 = vpop.f32.mrf.mxu0
      %v484 = vadd.f32 0.0, %v483
      %v485 = vpop.f32.mrf.mxu0
      %486 = vmatprep.mubr.f32.mxu0 0.0
      %487 = vmatmul.mubr.f32.gmra.mxu0 %v278
      %v488 = vpop.f32.mrf.mxu0
      %v489 = vadd.f32 0.0, %v488
      %v490 = vpop.f32.mrf.mxu0
      %491 = vmatprep.mubr.f32.mxu0 0.0
      %492 = vmatmul.mubr.f32.gmra.mxu0 %v281
      %v493 = vpop.f32.mrf.mxu0
      %v494 = vadd.f32 0.0, %v493
      %v495 = vpop.f32.mrf.mxu0
      %496 = vmatprep.mubr.f32.mxu0 0.0
      %497 = vmatmul.mubr.f32.gmra.mxu0 %v284
      %v498 = vpop.f32.mrf.mxu0
      %v499 = vadd.f32 0.0, %v498
      %v500 = vpop.f32.mrf.mxu0
      %501 = vmatprep.mubr.f32.mxu0 0.0
      %502 = vmatmul.mubr.f32.gmra.mxu0 %v287
      %v503 = vpop.f32.mrf.mxu0
      %v504 = vadd.f32 0.0, %v503
      %v505 = vpop.f32.mrf.mxu0
      %506 = vmatprep.mubr.f32.mxu0 0.0
      %507 = vmatmul.mubr.f32.gmra.mxu0 %v290
      %v508 = vpop.f32.mrf.mxu0
      %v509 = vadd.f32 0.0, %v508
      %v510 = vpop.f32.mrf.mxu0
      %511 = vmatprep.mubr.f32.mxu0 0.0
      %512 = vmatmul.mubr.f32.gmra.mxu0 %v293
      %v513 = vpop.f32.mrf.mxu0
      %v514 = vadd.f32 0.0, %v513
      %v515 = vpop.f32.mrf.mxu0
      %516 = vmatprep.mubr.f32.mxu0 0.0
      %517 = vmatmul.mubr.f32.gmra.mxu0 %v296
      %v518 = vpop.f32.mrf.mxu0
      %v519 = vadd.f32 0.0, %v518
      %v520 = vpop.f32.mrf.mxu0
      %521 = vmatprep.mubr.f32.mxu0 0.0
      %522 = vmatmul.mubr.f32.gmra.mxu0 %v299
      %v523 = vpop.f32.mrf.mxu0
      %v524 = vadd.f32 0.0, %v523
      %v525 = vpop.f32.mrf.mxu0
      %526 = vmatprep.mubr.f32.mxu0 0.0
      %527 = vmatmul.mubr.f32.gmra.mxu0 %v302
      %v528 = vpop.f32.mrf.mxu0
      %v529 = vadd.f32 0.0, %v528
      %v530 = vpop.f32.mrf.mxu0
      %531 = vmatprep.mubr.f32.mxu0 0.0
      %532 = vmatmul.mubr.f32.gmra.mxu0 %v305
      %v533 = vpop.f32.mrf.mxu0
      %v534 = vadd.f32 0.0, %v533
      %v535 = vpop.f32.mrf.mxu0
      %536 = vmatprep.mubr.f32.mxu0 0.0
      %537 = vmatmul.mubr.f32.gmra.mxu0 %v308
      %v538 = vpop.f32.mrf.mxu0
      %v539 = vadd.f32 0.0, %v538
      %v540 = vpop.f32.mrf.mxu0
      %541 = vmatprep.mubr.f32.mxu0 0.0
      %542 = vmatmul.mubr.f32.gmra.mxu0 %v311
      %v543 = vpop.f32.mrf.mxu0
      %v544 = vadd.f32 0.0, %v543
      %v545 = vpop.f32.mrf.mxu0
      %546 = vmatprep.mubr.f32.mxu0 0.0
      %547 = vmatmul.mubr.f32.gmra.mxu0 %v314
      %v548 = vpop.f32.mrf.mxu0
      %v549 = vadd.f32 0.0, %v548
      %v550 = vpop.f32.mrf.mxu0
      %551 = vmatprep.mubr.f32.mxu0 0.0
      %552 = vmatmul.mubr.f32.gmra.mxu0 %v317
      %v553 = vpop.f32.mrf.mxu0
      %v554 = vadd.f32 0.0, %v553
      %v555 = vpop.f32.mrf.mxu0
      %556 = vmatprep.mubr.f32.mxu0 0.0
      %557 = vmatmul.mubr.f32.gmra.mxu0 %v320
      %v558 = vpop.f32.mrf.mxu0
      %v559 = vadd.f32 0.0, %v558
      %v560 = vpop.f32.mrf.mxu0
      %561 = vmatprep.mubr.f32.mxu0 0.0
      %562 = vmatmul.mubr.f32.gmra.mxu0 %v323
      %v563 = vpop.f32.mrf.mxu0
      %v564 = vadd.f32 0.0, %v563
      %v565 = vpop.f32.mrf.mxu0
      %566 = vmatprep.mubr.f32.mxu0 0.0
      %567 = vmatmul.mubr.f32.gmra.mxu0 %v326
      %v568 = vpop.f32.mrf.mxu0
      %v569 = vadd.f32 0.0, %v568
      %v570 = vpop.f32.mrf.mxu0
      %571 = vmatprep.mubr.f32.mxu0 0.0
      %572 = vmatmul.mubr.f32.gmra.mxu0 %v329
      %v573 = vpop.f32.mrf.mxu0
      %v574 = vadd.f32 0.0, %v573
      %v575 = vpop.f32.mrf.mxu0
      %576 = vmatprep.mubr.f32.mxu0 0.0
      %577 = vmatmul.mubr.f32.gmra.mxu0 %v332
      %v578 = vpop.f32.mrf.mxu0
      %v579 = vadd.f32 0.0, %v578
      %v580 = vpop.f32.mrf.mxu0
      %581 = vmatprep.mubr.f32.mxu0 0.0
      %582 = vmatmul.mubr.f32.gmra.mxu0 %v335
      %v583 = vpop.f32.mrf.mxu0
      %v584 = vadd.f32 0.0, %v583
      %v585 = vpop.f32.mrf.mxu0
      %586 = vmatprep.mubr.f32.mxu0 0.0
      %587 = vmatmul.mubr.f32.gmra.mxu0 %v338
      %v588 = vpop.f32.mrf.mxu0
      %v589 = vadd.f32 0.0, %v588
      %v590 = vpop.f32.mrf.mxu0
      %591 = vmatprep.mubr.f32.mxu0 0.0
      %592 = vmatmul.mubr.f32.gmra.mxu0 %v341
      %v593 = vpop.f32.mrf.mxu0
      %v594 = vadd.f32 0.0, %v593
      %v595 = vpop.f32.mrf.mxu0
      %596 = vmatprep.mubr.f32.mxu0 0.0
      %597 = vmatmul.mubr.f32.gmra.mxu0 %v344
      %v598 = vpop.f32.mrf.mxu0
      %v599 = vadd.f32 0.0, %v598
      %v600 = vpop.f32.mrf.mxu0
      %601 = vmatprep.mubr.f32.mxu0 0.0
      %602 = vmatmul.mubr.f32.gmra.mxu0 %v347
      %v603 = vpop.f32.mrf.mxu0
      %v604 = vadd.f32 0.0, %v603
      %v605 = vpop.f32.mrf.mxu0
      %606 = vmatprep.mubr.f32.mxu0 0.0
      %607 = vmatmul.mubr.f32.gmra.mxu0 %v350
      %v608 = vpop.f32.mrf.mxu0
      %v609 = vadd.f32 0.0, %v608
      %v610 = vpop.f32.mrf.mxu0
      %611 = vmatprep.mubr.f32.mxu0 0.0
      %612 = vmatmul.mubr.f32.gmra.mxu0 %v353
      %v613 = vpop.f32.mrf.mxu0
      %v614 = vadd.f32 0.0, %v613
      %v615 = vpop.f32.mrf.mxu0
      %616 = vmatprep.mubr.f32.mxu0 0.0
      %617 = vmatmul.mubr.f32.gmra.mxu0 %v356
      %v618 = vpop.f32.mrf.mxu0
      %v619 = vadd.f32 0.0, %v618
      %v620 = vpop.f32.mrf.mxu0
      %621 = vmatprep.mubr.f32.mxu0 0.0
      %622 = vmatmul.mubr.f32.gmra.mxu0 %v359
      %v623 = vpop.f32.mrf.mxu0
      %v624 = vadd.f32 0.0, %v623
      %v625 = vpop.f32.mrf.mxu0
      %626 = vmatprep.mubr.f32.mxu0 0.0
      %627 = vmatmul.mubr.f32.gmra.mxu0 %v362
      %v628 = vpop.f32.mrf.mxu0
      %v629 = vadd.f32 0.0, %v628
      %v630 = vpop.f32.mrf.mxu0
      %631 = vmatprep.mubr.f32.mxu0 0.0
      %632 = vmatmul.mubr.f32.gmra.mxu0 %v365
      %v633 = vpop.f32.mrf.mxu0
      %v634 = vadd.f32 0.0, %v633
      %v635 = vpop.f32.mrf.mxu0
      %636 = vdwg.mxu0
      %v637 = vmul.f32 %v434, 0.5
      %v638 = vmul.f32 %v439, 0.5
      %v639 = vmul.f32 %v444, 0.5
      %v640 = vmul.f32 %v449, 0.5
      %v641 = vmul.f32 %v454, 0.5
      %v642 = vmul.f32 %v459, 0.5
      %v643 = vmul.f32 %v464, 0.5
      %v644 = vmul.f32 %v469, 0.5
      %v645 = vmul.f32 %v474, 0.5
      %v646 = vmul.f32 %v479, 0.5
      %v647 = vmul.f32 %v484, 0.5
      %v648 = vmul.f32 %v489, 0.5
      %v649 = vmul.f32 %v494, 0.5
      %v650 = vmul.f32 %v499, 0.5
      %v651 = vmul.f32 %v504, 0.5
      %v652 = vmul.f32 %v509, 0.5
      %v653 = vmul.f32 %v514, 0.5
      %v654 = vmul.f32 %v519, 0.5
      %v655 = vmul.f32 %v524, 0.5
      %v656 = vmul.f32 %v529, 0.5
      %v657 = vmul.f32 %v534, 0.5
      %v658 = vmul.f32 %v539, 0.5
      %v659 = vmul.f32 %v544, 0.5
      %v660 = vmul.f32 %v549, 0.5
      %v661 = vmul.f32 %v554, 0.5
      %v662 = vmul.f32 %v559, 0.5
      %v663 = vmul.f32 %v564, 0.5
      %v664 = vmul.f32 %v569, 0.5
      %v665 = vmul.f32 %v574, 0.5
      %v666 = vmul.f32 %v579, 0.5
      %v667 = vmul.f32 %v584, 0.5
      %v668 = vmul.f32 %v589, 0.5
      %v669 = vmul.f32 %v594, 0.5
      %v670 = vmul.f32 %v599, 0.5
      %v671 = vmul.f32 %v604, 0.5
      %v672 = vmul.f32 %v609, 0.5
      %v673 = vmul.f32 %v614, 0.5
      %v674 = vmul.f32 %v619, 0.5
      %v675 = vmul.f32 %v624, 0.5
      %v676 = vmul.f32 %v629, 0.5
      %v677 = vmul.f32 %v634, 0.5
      %v678 = vmul.f32 %v434, 0.70710677
      %v679 = vmul.f32 %v439, 0.70710677
      %v680 = vmul.f32 %v444, 0.70710677
      %v681 = vmul.f32 %v449, 0.70710677
      %v682 = vmul.f32 %v454, 0.70710677
      %v683 = vmul.f32 %v459, 0.70710677
      %v684 = vmul.f32 %v464, 0.70710677
      %v685 = vmul.f32 %v469, 0.70710677
      %v686 = vmul.f32 %v474, 0.70710677
      %v687 = vmul.f32 %v479, 0.70710677
      %v688 = vmul.f32 %v484, 0.70710677
      %v689 = vmul.f32 %v489, 0.70710677
      %v690 = vmul.f32 %v494, 0.70710677
      %v691 = vmul.f32 %v499, 0.70710677
      %v692 = vmul.f32 %v504, 0.70710677
      %v693 = vmul.f32 %v509, 0.70710677
      %v694 = vmul.f32 %v514, 0.70710677
      %v695 = vmul.f32 %v519, 0.70710677
      %v696 = vmul.f32 %v524, 0.70710677
      %v697 = vmul.f32 %v529, 0.70710677
      %v698 = vmul.f32 %v534, 0.70710677
      %v699 = vmul.f32 %v539, 0.70710677
      %v700 = vmul.f32 %v544, 0.70710677
      %v701 = vmul.f32 %v549, 0.70710677
      %v702 = vmul.f32 %v554, 0.70710677
      %v703 = vmul.f32 %v559, 0.70710677
      %v704 = vmul.f32 %v564, 0.70710677
      %v705 = vmul.f32 %v569, 0.70710677
      %v706 = vmul.f32 %v574, 0.70710677
      %v707 = vmul.f32 %v579, 0.70710677
      %v708 = vmul.f32 %v584, 0.70710677
      %v709 = vmul.f32 %v589, 0.70710677
      %v710 = vmul.f32 %v594, 0.70710677
      %v711 = vmul.f32 %v599, 0.70710677
      %v712 = vmul.f32 %v604, 0.70710677
      %v713 = vmul.f32 %v609, 0.70710677
      %v714 = vmul.f32 %v614, 0.70710677
      %v715 = vmul.f32 %v619, 0.70710677
      %v716 = vmul.f32 %v624, 0.70710677
      %v717 = vmul.f32 %v629, 0.70710677
      %v718 = vmul.f32 %v634, 0.70710677
      %vm719 = vcmp.ge.f32.partialorder %v678, 0.0
      %vm720 = vcmp.ge.f32.partialorder %v679, 0.0
      %vm721 = vcmp.ge.f32.partialorder %v680, 0.0
      %vm722 = vcmp.ge.f32.partialorder %v681, 0.0
      %vm723 = vcmp.ge.f32.partialorder %v682, 0.0
      %vm724 = vcmp.ge.f32.partialorder %v683, 0.0
      %vm725 = vcmp.ge.f32.partialorder %v684, 0.0
      %vm726 = vcmp.ge.f32.partialorder %v685, 0.0
      %vm727 = vcmp.ge.f32.partialorder %v686, 0.0
      %vm728 = vcmp.ge.f32.partialorder %v687, 0.0
      %vm729 = vcmp.ge.f32.partialorder %v688, 0.0
      %vm730 = vcmp.ge.f32.partialorder %v689, 0.0
      %vm731 = vcmp.ge.f32.partialorder %v690, 0.0
      %vm732 = vcmp.ge.f32.partialorder %v691, 0.0
      %vm733 = vcmp.ge.f32.partialorder %v692, 0.0
      %vm734 = vcmp.ge.f32.partialorder %v693, 0.0
      %vm735 = vcmp.ge.f32.partialorder %v694, 0.0
      %vm736 = vcmp.ge.f32.partialorder %v695, 0.0
      %vm737 = vcmp.ge.f32.partialorder %v696, 0.0
      %vm738 = vcmp.ge.f32.partialorder %v697, 0.0
      %vm739 = vcmp.ge.f32.partialorder %v698, 0.0
      %vm740 = vcmp.ge.f32.partialorder %v699, 0.0
      %vm741 = vcmp.ge.f32.partialorder %v700, 0.0
      %vm742 = vcmp.ge.f32.partialorder %v701, 0.0
      %vm743 = vcmp.ge.f32.partialorder %v702, 0.0
      %vm744 = vcmp.ge.f32.partialorder %v703, 0.0
      %vm745 = vcmp.ge.f32.partialorder %v704, 0.0
      %vm746 = vcmp.ge.f32.partialorder %v705, 0.0
      %vm747 = vcmp.ge.f32.partialorder %v706, 0.0
      %vm748 = vcmp.ge.f32.partialorder %v707, 0.0
      %vm749 = vcmp.ge.f32.partialorder %v708, 0.0
      %vm750 = vcmp.ge.f32.partialorder %v709, 0.0
      %vm751 = vcmp.ge.f32.partialorder %v710, 0.0
      %vm752 = vcmp.ge.f32.partialorder %v711, 0.0
      %vm753 = vcmp.ge.f32.partialorder %v712, 0.0
      %vm754 = vcmp.ge.f32.partialorder %v713, 0.0
      %vm755 = vcmp.ge.f32.partialorder %v714, 0.0
      %vm756 = vcmp.ge.f32.partialorder %v715, 0.0
      %vm757 = vcmp.ge.f32.partialorder %v716, 0.0
      %vm758 = vcmp.ge.f32.partialorder %v717, 0.0
      %vm759 = vcmp.ge.f32.partialorder %v718, 0.0
      %v760 = vsel %vm719, 1.0, -1.0
      %v761 = vsel %vm720, 1.0, -1.0
      %v762 = vsel %vm721, 1.0, -1.0
      %v763 = vsel %vm722, 1.0, -1.0
      %v764 = vsel %vm723, 1.0, -1.0
      %v765 = vsel %vm724, 1.0, -1.0
      %v766 = vsel %vm725, 1.0, -1.0
      %v767 = vsel %vm726, 1.0, -1.0
      %v768 = vsel %vm727, 1.0, -1.0
      %v769 = vsel %vm728, 1.0, -1.0
      %v770 = vsel %vm729, 1.0, -1.0
      %v771 = vsel %vm730, 1.0, -1.0
      %v772 = vsel %vm731, 1.0, -1.0
      %v773 = vsel %vm732, 1.0, -1.0
      %v774 = vsel %vm733, 1.0, -1.0
      %v775 = vsel %vm734, 1.0, -1.0
      %v776 = vsel %vm735, 1.0, -1.0
      %v777 = vsel %vm736, 1.0, -1.0
      %v778 = vsel %vm737, 1.0, -1.0
      %v779 = vsel %vm738, 1.0, -1.0
      %v780 = vsel %vm739, 1.0, -1.0
      %v781 = vsel %vm740, 1.0, -1.0
      %v782 = vsel %vm741, 1.0, -1.0
      %v783 = vsel %vm742, 1.0, -1.0
      %v784 = vsel %vm743, 1.0, -1.0
      %v785 = vsel %vm744, 1.0, -1.0
      %v786 = vsel %vm745, 1.0, -1.0
      %v787 = vsel %vm746, 1.0, -1.0
      %v788 = vsel %vm747, 1.0, -1.0
      %v789 = vsel %vm748, 1.0, -1.0
      %v790 = vsel %vm749, 1.0, -1.0
      %v791 = vsel %vm750, 1.0, -1.0
      %v792 = vsel %vm751, 1.0, -1.0
      %v793 = vsel %vm752, 1.0, -1.0
      %v794 = vsel %vm753, 1.0, -1.0
      %v795 = vsel %vm754, 1.0, -1.0
      %v796 = vsel %vm755, 1.0, -1.0
      %v797 = vsel %vm756, 1.0, -1.0
      %v798 = vsel %vm757, 1.0, -1.0
      %v799 = vsel %vm758, 1.0, -1.0
      %v800 = vsel %vm759, 1.0, -1.0
      %v801 = vand.u32 2147483647, %v678
      %v802 = vand.u32 2147483647, %v679
      %v803 = vand.u32 2147483647, %v680
      %v804 = vand.u32 2147483647, %v681
      %v805 = vand.u32 2147483647, %v682
      %v806 = vand.u32 2147483647, %v683
      %v807 = vand.u32 2147483647, %v684
      %v808 = vand.u32 2147483647, %v685
      %v809 = vand.u32 2147483647, %v686
      %v810 = vand.u32 2147483647, %v687
      %v811 = vand.u32 2147483647, %v688
      %v812 = vand.u32 2147483647, %v689
      %v813 = vand.u32 2147483647, %v690
      %v814 = vand.u32 2147483647, %v691
      %v815 = vand.u32 2147483647, %v692
      %v816 = vand.u32 2147483647, %v693
      %v817 = vand.u32 2147483647, %v694
      %v818 = vand.u32 2147483647, %v695
      %v819 = vand.u32 2147483647, %v696
      %v820 = vand.u32 2147483647, %v697
      %v821 = vand.u32 2147483647, %v698
      %v822 = vand.u32 2147483647, %v699
      %v823 = vand.u32 2147483647, %v700
      %v824 = vand.u32 2147483647, %v701
      %v825 = vand.u32 2147483647, %v702
      %v826 = vand.u32 2147483647, %v703
      %v827 = vand.u32 2147483647, %v704
      %v828 = vand.u32 2147483647, %v705
      %v829 = vand.u32 2147483647, %v706
      %v830 = vand.u32 2147483647, %v707
      %v831 = vand.u32 2147483647, %v708
      %v832 = vand.u32 2147483647, %v709
      %v833 = vand.u32 2147483647, %v710
      %v834 = vand.u32 2147483647, %v711
      %v835 = vand.u32 2147483647, %v712
      %v836 = vand.u32 2147483647, %v713
      %v837 = vand.u32 2147483647, %v714
      %v838 = vand.u32 2147483647, %v715
      %v839 = vand.u32 2147483647, %v716
      %v840 = vand.u32 2147483647, %v717
      %v841 = vand.u32 2147483647, %v718
      %v842 = vmul.f32 %v801, 0.3275911
      %v843 = vmul.f32 %v802, 0.3275911
      %v844 = vmul.f32 %v803, 0.3275911
      %v845 = vmul.f32 %v804, 0.3275911
      %v846 = vmul.f32 %v805, 0.3275911
      %v847 = vmul.f32 %v806, 0.3275911
      %v848 = vmul.f32 %v807, 0.3275911
      %v849 = vmul.f32 %v808, 0.3275911
      %v850 = vmul.f32 %v809, 0.3275911
      %v851 = vmul.f32 %v810, 0.3275911
      %v852 = vmul.f32 %v811, 0.3275911
      %v853 = vmul.f32 %v812, 0.3275911
      %v854 = vmul.f32 %v813, 0.3275911
      %v855 = vmul.f32 %v814, 0.3275911
      %v856 = vmul.f32 %v815, 0.3275911
      %v857 = vmul.f32 %v816, 0.3275911
      %v858 = vmul.f32 %v817, 0.3275911
      %v859 = vmul.f32 %v818, 0.3275911
      %v860 = vmul.f32 %v819, 0.3275911
      %v861 = vmul.f32 %v820, 0.3275911
      %v862 = vmul.f32 %v821, 0.3275911
      %v863 = vmul.f32 %v822, 0.3275911
      %v864 = vmul.f32 %v823, 0.3275911
      %v865 = vmul.f32 %v824, 0.3275911
      %v866 = vmul.f32 %v825, 0.3275911
      %v867 = vmul.f32 %v826, 0.3275911
      %v868 = vmul.f32 %v827, 0.3275911
      %v869 = vmul.f32 %v828, 0.3275911
      %v870 = vmul.f32 %v829, 0.3275911
      %v871 = vmul.f32 %v830, 0.3275911
      %v872 = vmul.f32 %v831, 0.3275911
      %v873 = vmul.f32 %v832, 0.3275911
      %v874 = vmul.f32 %v833, 0.3275911
      %v875 = vmul.f32 %v834, 0.3275911
      %v876 = vmul.f32 %v835, 0.3275911
      %v877 = vmul.f32 %v836, 0.3275911
      %v878 = vmul.f32 %v837, 0.3275911
      %v879 = vmul.f32 %v838, 0.3275911
      %v880 = vmul.f32 %v839, 0.3275911
      %v881 = vmul.f32 %v840, 0.3275911
      %v882 = vmul.f32 %v841, 0.3275911
      %v883 = vadd.f32 %v842, 1.0
      %v884 = vadd.f32 %v843, 1.0
      %v885 = vadd.f32 %v844, 1.0
      %v886 = vadd.f32 %v845, 1.0
      %v887 = vadd.f32 %v846, 1.0
      %v888 = vadd.f32 %v847, 1.0
      %v889 = vadd.f32 %v848, 1.0
      %v890 = vadd.f32 %v849, 1.0
      %v891 = vadd.f32 %v850, 1.0
      %v892 = vadd.f32 %v851, 1.0
      %v893 = vadd.f32 %v852, 1.0
      %v894 = vadd.f32 %v853, 1.0
      %v895 = vadd.f32 %v854, 1.0
      %v896 = vadd.f32 %v855, 1.0
      %v897 = vadd.f32 %v856, 1.0
      %v898 = vadd.f32 %v857, 1.0
      %v899 = vadd.f32 %v858, 1.0
      %v900 = vadd.f32 %v859, 1.0
      %v901 = vadd.f32 %v860, 1.0
      %v902 = vadd.f32 %v861, 1.0
      %v903 = vadd.f32 %v862, 1.0
      %v904 = vadd.f32 %v863, 1.0
      %v905 = vadd.f32 %v864, 1.0
      %v906 = vadd.f32 %v865, 1.0
      %v907 = vadd.f32 %v866, 1.0
      %v908 = vadd.f32 %v867, 1.0
      %v909 = vadd.f32 %v868, 1.0
      %v910 = vadd.f32 %v869, 1.0
      %v911 = vadd.f32 %v870, 1.0
      %v912 = vadd.f32 %v871, 1.0
      %v913 = vadd.f32 %v872, 1.0
      %v914 = vadd.f32 %v873, 1.0
      %v915 = vadd.f32 %v874, 1.0
      %v916 = vadd.f32 %v875, 1.0
      %v917 = vadd.f32 %v876, 1.0
      %v918 = vadd.f32 %v877, 1.0
      %v919 = vadd.f32 %v878, 1.0
      %v920 = vadd.f32 %v879, 1.0
      %v921 = vadd.f32 %v880, 1.0
      %v922 = vadd.f32 %v881, 1.0
      %v923 = vadd.f32 %v882, 1.0
      %v924 = vrcp.pop %v883
      %v925 = vmul.f32 1.0, %v924
      %v926 = vrcp.pop %v884
      %v927 = vmul.f32 1.0, %v926
      %v928 = vrcp.pop %v885
      %v929 = vmul.f32 1.0, %v928
      %v930 = vrcp.pop %v886
      %v931 = vmul.f32 1.0, %v930
      %v932 = vrcp.pop %v887
      %v933 = vmul.f32 1.0, %v932
      %v934 = vrcp.pop %v888
      %v935 = vmul.f32 1.0, %v934
      %v936 = vrcp.pop %v889
      %v937 = vmul.f32 1.0, %v936
      %v938 = vrcp.pop %v890
      %v939 = vmul.f32 1.0, %v938
      %v940 = vrcp.pop %v891
      %v941 = vmul.f32 1.0, %v940
      %v942 = vrcp.pop %v892
      %v943 = vmul.f32 1.0, %v942
      %v944 = vrcp.pop %v893
      %v945 = vmul.f32 1.0, %v944
      %v946 = vrcp.pop %v894
      %v947 = vmul.f32 1.0, %v946
      %v948 = vrcp.pop %v895
      %v949 = vmul.f32 1.0, %v948
      %v950 = vrcp.pop %v896
      %v951 = vmul.f32 1.0, %v950
      %v952 = vrcp.pop %v897
      %v953 = vmul.f32 1.0, %v952
      %v954 = vrcp.pop %v898
      %v955 = vmul.f32 1.0, %v954
      %v956 = vrcp.pop %v899
      %v957 = vmul.f32 1.0, %v956
      %v958 = vrcp.pop %v900
      %v959 = vmul.f32 1.0, %v958
      %v960 = vrcp.pop %v901
      %v961 = vmul.f32 1.0, %v960
      %v962 = vrcp.pop %v902
      %v963 = vmul.f32 1.0, %v962
      %v964 = vrcp.pop %v903
      %v965 = vmul.f32 1.0, %v964
      %v966 = vrcp.pop %v904
      %v967 = vmul.f32 1.0, %v966
      %v968 = vrcp.pop %v905
      %v969 = vmul.f32 1.0, %v968
      %v970 = vrcp.pop %v906
      %v971 = vmul.f32 1.0, %v970
      %v972 = vrcp.pop %v907
      %v973 = vmul.f32 1.0, %v972
      %v974 = vrcp.pop %v908
      %v975 = vmul.f32 1.0, %v974
      %v976 = vrcp.pop %v909
      %v977 = vmul.f32 1.0, %v976
      %v978 = vrcp.pop %v910
      %v979 = vmul.f32 1.0, %v978
      %v980 = vrcp.pop %v911
      %v981 = vmul.f32 1.0, %v980
      %v982 = vrcp.pop %v912
      %v983 = vmul.f32 1.0, %v982
      %v984 = vrcp.pop %v913
      %v985 = vmul.f32 1.0, %v984
      %v986 = vrcp.pop %v914
      %v987 = vmul.f32 1.0, %v986
      %v988 = vrcp.pop %v915
      %v989 = vmul.f32 1.0, %v988
      %v990 = vrcp.pop %v916
      %v991 = vmul.f32 1.0, %v990
      %v992 = vrcp.pop %v917
      %v993 = vmul.f32 1.0, %v992
      %v994 = vrcp.pop %v918
      %v995 = vmul.f32 1.0, %v994
      %v996 = vrcp.pop %v919
      %v997 = vmul.f32 1.0, %v996
      %v998 = vrcp.pop %v920
      %v999 = vmul.f32 1.0, %v998
      %v1000 = vrcp.pop %v921
      %v1001 = vmul.f32 1.0, %v1000
      %v1002 = vrcp.pop %v922
      %v1003 = vmul.f32 1.0, %v1002
      %v1004 = vrcp.pop %v923
      %v1005 = vmul.f32 1.0, %v1004
      %v1006 = vmul.f32 %v925, 1.0614054
      %v1007 = vmul.f32 %v927, 1.0614054
      %v1008 = vmul.f32 %v929, 1.0614054
      %v1009 = vmul.f32 %v931, 1.0614054
      %v1010 = vmul.f32 %v933, 1.0614054
      %v1011 = vmul.f32 %v935, 1.0614054
      %v1012 = vmul.f32 %v937, 1.0614054
      %v1013 = vmul.f32 %v939, 1.0614054
      %v1014 = vmul.f32 %v941, 1.0614054
      %v1015 = vmul.f32 %v943, 1.0614054
      %v1016 = vmul.f32 %v945, 1.0614054
      %v1017 = vmul.f32 %v947, 1.0614054
      %v1018 = vmul.f32 %v949, 1.0614054
      %v1019 = vmul.f32 %v951, 1.0614054
      %v1020 = vmul.f32 %v953, 1.0614054
      %v1021 = vmul.f32 %v955, 1.0614054
      %v1022 = vmul.f32 %v957, 1.0614054
      %v1023 = vmul.f32 %v959, 1.0614054
      %v1024 = vmul.f32 %v961, 1.0614054
      %v1025 = vmul.f32 %v963, 1.0614054
      %v1026 = vmul.f32 %v965, 1.0614054
      %v1027 = vmul.f32 %v967, 1.0614054
      %v1028 = vmul.f32 %v969, 1.0614054
      %v1029 = vmul.f32 %v971, 1.0614054
      %v1030 = vmul.f32 %v973, 1.0614054
      %v1031 = vmul.f32 %v975, 1.0614054
      %v1032 = vmul.f32 %v977, 1.0614054
      %v1033 = vmul.f32 %v979, 1.0614054
      %v1034 = vmul.f32 %v981, 1.0614054
      %v1035 = vmul.f32 %v983, 1.0614054
      %v1036 = vmul.f32 %v985, 1.0614054
      %v1037 = vmul.f32 %v987, 1.0614054
      %v1038 = vmul.f32 %v989, 1.0614054
      %v1039 = vmul.f32 %v991, 1.0614054
      %v1040 = vmul.f32 %v993, 1.0614054
      %v1041 = vmul.f32 %v995, 1.0614054
      %v1042 = vmul.f32 %v997, 1.0614054
      %v1043 = vmul.f32 %v999, 1.0614054
      %v1044 = vmul.f32 %v1001, 1.0614054
      %v1045 = vmul.f32 %v1003, 1.0614054
      %v1046 = vmul.f32 %v1005, 1.0614054
      %v1047 = vadd.f32 %v1006, -1.4531521
      %v1048 = vadd.f32 %v1007, -1.4531521
      %v1049 = vadd.f32 %v1008, -1.4531521
      %v1050 = vadd.f32 %v1009, -1.4531521
      %v1051 = vadd.f32 %v1010, -1.4531521
      %v1052 = vadd.f32 %v1011, -1.4531521
      %v1053 = vadd.f32 %v1012, -1.4531521
      %v1054 = vadd.f32 %v1013, -1.4531521
      %v1055 = vadd.f32 %v1014, -1.4531521
      %v1056 = vadd.f32 %v1015, -1.4531521
      %v1057 = vadd.f32 %v1016, -1.4531521
      %v1058 = vadd.f32 %v1017, -1.4531521
      %v1059 = vadd.f32 %v1018, -1.4531521
      %v1060 = vadd.f32 %v1019, -1.4531521
      %v1061 = vadd.f32 %v1020, -1.4531521
      %v1062 = vadd.f32 %v1021, -1.4531521
      %v1063 = vadd.f32 %v1022, -1.4531521
      %v1064 = vadd.f32 %v1023, -1.4531521
      %v1065 = vadd.f32 %v1024, -1.4531521
      %v1066 = vadd.f32 %v1025, -1.4531521
      %v1067 = vadd.f32 %v1026, -1.4531521
      %v1068 = vadd.f32 %v1027, -1.4531521
      %v1069 = vadd.f32 %v1028, -1.4531521
      %v1070 = vadd.f32 %v1029, -1.4531521
      %v1071 = vadd.f32 %v1030, -1.4531521
      %v1072 = vadd.f32 %v1031, -1.4531521
      %v1073 = vadd.f32 %v1032, -1.4531521
      %v1074 = vadd.f32 %v1033, -1.4531521
      %v1075 = vadd.f32 %v1034, -1.4531521
      %v1076 = vadd.f32 %v1035, -1.4531521
      %v1077 = vadd.f32 %v1036, -1.4531521
      %v1078 = vadd.f32 %v1037, -1.4531521
      %v1079 = vadd.f32 %v1038, -1.4531521
      %v1080 = vadd.f32 %v1039, -1.4531521
      %v1081 = vadd.f32 %v1040, -1.4531521
      %v1082 = vadd.f32 %v1041, -1.4531521
      %v1083 = vadd.f32 %v1042, -1.4531521
      %v1084 = vadd.f32 %v1043, -1.4531521
      %v1085 = vadd.f32 %v1044, -1.4531521
      %v1086 = vadd.f32 %v1045, -1.4531521
      %v1087 = vadd.f32 %v1046, -1.4531521
      %v1088 = vmul.f32 %v1047, %v925
      %v1089 = vmul.f32 %v1048, %v927
      %v1090 = vmul.f32 %v1049, %v929
      %v1091 = vmul.f32 %v1050, %v931
      %v1092 = vmul.f32 %v1051, %v933
      %v1093 = vmul.f32 %v1052, %v935
      %v1094 = vmul.f32 %v1053, %v937
      %v1095 = vmul.f32 %v1054, %v939
      %v1096 = vmul.f32 %v1055, %v941
      %v1097 = vmul.f32 %v1056, %v943
      %v1098 = vmul.f32 %v1057, %v945
      %v1099 = vmul.f32 %v1058, %v947
      %v1100 = vmul.f32 %v1059, %v949
      %v1101 = vmul.f32 %v1060, %v951
      %v1102 = vmul.f32 %v1061, %v953
      %v1103 = vmul.f32 %v1062, %v955
      %v1104 = vmul.f32 %v1063, %v957
      %v1105 = vmul.f32 %v1064, %v959
      %v1106 = vmul.f32 %v1065, %v961
      %v1107 = vmul.f32 %v1066, %v963
      %v1108 = vmul.f32 %v1067, %v965
      %v1109 = vmul.f32 %v1068, %v967
      %v1110 = vmul.f32 %v1069, %v969
      %v1111 = vmul.f32 %v1070, %v971
      %v1112 = vmul.f32 %v1071, %v973
      %v1113 = vmul.f32 %v1072, %v975
      %v1114 = vmul.f32 %v1073, %v977
      %v1115 = vmul.f32 %v1074, %v979
      %v1116 = vmul.f32 %v1075, %v981
      %v1117 = vmul.f32 %v1076, %v983
      %v1118 = vmul.f32 %v1077, %v985
      %v1119 = vmul.f32 %v1078, %v987
      %v1120 = vmul.f32 %v1079, %v989
      %v1121 = vmul.f32 %v1080, %v991
      %v1122 = vmul.f32 %v1081, %v993
      %v1123 = vmul.f32 %v1082, %v995
      %v1124 = vmul.f32 %v1083, %v997
      %v1125 = vmul.f32 %v1084, %v999
      %v1126 = vmul.f32 %v1085, %v1001
      %v1127 = vmul.f32 %v1086, %v1003
      %v1128 = vmul.f32 %v1087, %v1005
      %v1129 = vadd.f32 %v1088, 1.4214138
      %v1130 = vadd.f32 %v1089, 1.4214138
      %v1131 = vadd.f32 %v1090, 1.4214138
      %v1132 = vadd.f32 %v1091, 1.4214138
      %v1133 = vadd.f32 %v1092, 1.4214138
      %v1134 = vadd.f32 %v1093, 1.4214138
      %v1135 = vadd.f32 %v1094, 1.4214138
      %v1136 = vadd.f32 %v1095, 1.4214138
      %v1137 = vadd.f32 %v1096, 1.4214138
      %v1138 = vadd.f32 %v1097, 1.4214138
      %v1139 = vadd.f32 %v1098, 1.4214138
      %v1140 = vadd.f32 %v1099, 1.4214138
      %v1141 = vadd.f32 %v1100, 1.4214138
      %v1142 = vadd.f32 %v1101, 1.4214138
      %v1143 = vadd.f32 %v1102, 1.4214138
      %v1144 = vadd.f32 %v1103, 1.4214138
      %v1145 = vadd.f32 %v1104, 1.4214138
      %v1146 = vadd.f32 %v1105, 1.4214138
      %v1147 = vadd.f32 %v1106, 1.4214138
      %v1148 = vadd.f32 %v1107, 1.4214138
      %v1149 = vadd.f32 %v1108, 1.4214138
      %v1150 = vadd.f32 %v1109, 1.4214138
      %v1151 = vadd.f32 %v1110, 1.4214138
      %v1152 = vadd.f32 %v1111, 1.4214138
      %v1153 = vadd.f32 %v1112, 1.4214138
      %v1154 = vadd.f32 %v1113, 1.4214138
      %v1155 = vadd.f32 %v1114, 1.4214138
      %v1156 = vadd.f32 %v1115, 1.4214138
      %v1157 = vadd.f32 %v1116, 1.4214138
      %v1158 = vadd.f32 %v1117, 1.4214138
      %v1159 = vadd.f32 %v1118, 1.4214138
      %v1160 = vadd.f32 %v1119, 1.4214138
      %v1161 = vadd.f32 %v1120, 1.4214138
      %v1162 = vadd.f32 %v1121, 1.4214138
      %v1163 = vadd.f32 %v1122, 1.4214138
      %v1164 = vadd.f32 %v1123, 1.4214138
      %v1165 = vadd.f32 %v1124, 1.4214138
      %v1166 = vadd.f32 %v1125, 1.4214138
      %v1167 = vadd.f32 %v1126, 1.4214138
      %v1168 = vadd.f32 %v1127, 1.4214138
      %v1169 = vadd.f32 %v1128, 1.4214138
      %v1170 = vmul.f32 %v1129, %v925
      %v1171 = vmul.f32 %v1130, %v927
      %v1172 = vmul.f32 %v1131, %v929
      %v1173 = vmul.f32 %v1132, %v931
      %v1174 = vmul.f32 %v1133, %v933
      %v1175 = vmul.f32 %v1134, %v935
      %v1176 = vmul.f32 %v1135, %v937
      %v1177 = vmul.f32 %v1136, %v939
      %v1178 = vmul.f32 %v1137, %v941
      %v1179 = vmul.f32 %v1138, %v943
      %v1180 = vmul.f32 %v1139, %v945
      %v1181 = vmul.f32 %v1140, %v947
      %v1182 = vmul.f32 %v1141, %v949
      %v1183 = vmul.f32 %v1142, %v951
      %v1184 = vmul.f32 %v1143, %v953
      %v1185 = vmul.f32 %v1144, %v955
      %v1186 = vmul.f32 %v1145, %v957
      %v1187 = vmul.f32 %v1146, %v959
      %v1188 = vmul.f32 %v1147, %v961
      %v1189 = vmul.f32 %v1148, %v963
      %v1190 = vmul.f32 %v1149, %v965
      %v1191 = vmul.f32 %v1150, %v967
      %v1192 = vmul.f32 %v1151, %v969
      %v1193 = vmul.f32 %v1152, %v971
      %v1194 = vmul.f32 %v1153, %v973
      %v1195 = vmul.f32 %v1154, %v975
      %v1196 = vmul.f32 %v1155, %v977
      %v1197 = vmul.f32 %v1156, %v979
      %v1198 = vmul.f32 %v1157, %v981
      %v1199 = vmul.f32 %v1158, %v983
      %v1200 = vmul.f32 %v1159, %v985
      %v1201 = vmul.f32 %v1160, %v987
      %v1202 = vmul.f32 %v1161, %v989
      %v1203 = vmul.f32 %v1162, %v991
      %v1204 = vmul.f32 %v1163, %v993
      %v1205 = vmul.f32 %v1164, %v995
      %v1206 = vmul.f32 %v1165, %v997
      %v1207 = vmul.f32 %v1166, %v999
      %v1208 = vmul.f32 %v1167, %v1001
      %v1209 = vmul.f32 %v1168, %v1003
      %v1210 = vmul.f32 %v1169, %v1005
      %v1211 = vadd.f32 %v1170, -0.28449672
      %v1212 = vadd.f32 %v1171, -0.28449672
      %v1213 = vadd.f32 %v1172, -0.28449672
      %v1214 = vadd.f32 %v1173, -0.28449672
      %v1215 = vadd.f32 %v1174, -0.28449672
      %v1216 = vadd.f32 %v1175, -0.28449672
      %v1217 = vadd.f32 %v1176, -0.28449672
      %v1218 = vadd.f32 %v1177, -0.28449672
      %v1219 = vadd.f32 %v1178, -0.28449672
      %v1220 = vadd.f32 %v1179, -0.28449672
      %v1221 = vadd.f32 %v1180, -0.28449672
      %v1222 = vadd.f32 %v1181, -0.28449672
      %v1223 = vadd.f32 %v1182, -0.28449672
      %v1224 = vadd.f32 %v1183, -0.28449672
      %v1225 = vadd.f32 %v1184, -0.28449672
      %v1226 = vadd.f32 %v1185, -0.28449672
      %v1227 = vadd.f32 %v1186, -0.28449672
      %v1228 = vadd.f32 %v1187, -0.28449672
      %v1229 = vadd.f32 %v1188, -0.28449672
      %v1230 = vadd.f32 %v1189, -0.28449672
      %v1231 = vadd.f32 %v1190, -0.28449672
      %v1232 = vadd.f32 %v1191, -0.28449672
      %v1233 = vadd.f32 %v1192, -0.28449672
      %v1234 = vadd.f32 %v1193, -0.28449672
      %v1235 = vadd.f32 %v1194, -0.28449672
      %v1236 = vadd.f32 %v1195, -0.28449672
      %v1237 = vadd.f32 %v1196, -0.28449672
      %v1238 = vadd.f32 %v1197, -0.28449672
      %v1239 = vadd.f32 %v1198, -0.28449672
      %v1240 = vadd.f32 %v1199, -0.28449672
      %v1241 = vadd.f32 %v1200, -0.28449672
      %v1242 = vadd.f32 %v1201, -0.28449672
      %v1243 = vadd.f32 %v1202, -0.28449672
      %v1244 = vadd.f32 %v1203, -0.28449672
      %v1245 = vadd.f32 %v1204, -0.28449672
      %v1246 = vadd.f32 %v1205, -0.28449672
      %v1247 = vadd.f32 %v1206, -0.28449672
      %v1248 = vadd.f32 %v1207, -0.28449672
      %v1249 = vadd.f32 %v1208, -0.28449672
      %v1250 = vadd.f32 %v1209, -0.28449672
      %v1251 = vadd.f32 %v1210, -0.28449672
      %v1252 = vmul.f32 %v1211, %v925
      %v1253 = vmul.f32 %v1212, %v927
      %v1254 = vmul.f32 %v1213, %v929
      %v1255 = vmul.f32 %v1214, %v931
      %v1256 = vmul.f32 %v1215, %v933
      %v1257 = vmul.f32 %v1216, %v935
      %v1258 = vmul.f32 %v1217, %v937
      %v1259 = vmul.f32 %v1218, %v939
      %v1260 = vmul.f32 %v1219, %v941
      %v1261 = vmul.f32 %v1220, %v943
      %v1262 = vmul.f32 %v1221, %v945
      %v1263 = vmul.f32 %v1222, %v947
      %v1264 = vmul.f32 %v1223, %v949
      %v1265 = vmul.f32 %v1224, %v951
      %v1266 = vmul.f32 %v1225, %v953
      %v1267 = vmul.f32 %v1226, %v955
      %v1268 = vmul.f32 %v1227, %v957
      %v1269 = vmul.f32 %v1228, %v959
      %v1270 = vmul.f32 %v1229, %v961
      %v1271 = vmul.f32 %v1230, %v963
      %v1272 = vmul.f32 %v1231, %v965
      %v1273 = vmul.f32 %v1232, %v967
      %v1274 = vmul.f32 %v1233, %v969
      %v1275 = vmul.f32 %v1234, %v971
      %v1276 = vmul.f32 %v1235, %v973
      %v1277 = vmul.f32 %v1236, %v975
      %v1278 = vmul.f32 %v1237, %v977
      %v1279 = vmul.f32 %v1238, %v979
      %v1280 = vmul.f32 %v1239, %v981
      %v1281 = vmul.f32 %v1240, %v983
      %v1282 = vmul.f32 %v1241, %v985
      %v1283 = vmul.f32 %v1242, %v987
      %v1284 = vmul.f32 %v1243, %v989
      %v1285 = vmul.f32 %v1244, %v991
      %v1286 = vmul.f32 %v1245, %v993
      %v1287 = vmul.f32 %v1246, %v995
      %v1288 = vmul.f32 %v1247, %v997
      %v1289 = vmul.f32 %v1248, %v999
      %v1290 = vmul.f32 %v1249, %v1001
      %v1291 = vmul.f32 %v1250, %v1003
      %v1292 = vmul.f32 %v1251, %v1005
      %v1293 = vadd.f32 %v1252, 0.2548296
      %v1294 = vadd.f32 %v1253, 0.2548296
      %v1295 = vadd.f32 %v1254, 0.2548296
      %v1296 = vadd.f32 %v1255, 0.2548296
      %v1297 = vadd.f32 %v1256, 0.2548296
      %v1298 = vadd.f32 %v1257, 0.2548296
      %v1299 = vadd.f32 %v1258, 0.2548296
      %v1300 = vadd.f32 %v1259, 0.2548296
      %v1301 = vadd.f32 %v1260, 0.2548296
      %v1302 = vadd.f32 %v1261, 0.2548296
      %v1303 = vadd.f32 %v1262, 0.2548296
      %v1304 = vadd.f32 %v1263, 0.2548296
      %v1305 = vadd.f32 %v1264, 0.2548296
      %v1306 = vadd.f32 %v1265, 0.2548296
      %v1307 = vadd.f32 %v1266, 0.2548296
      %v1308 = vadd.f32 %v1267, 0.2548296
      %v1309 = vadd.f32 %v1268, 0.2548296
      %v1310 = vadd.f32 %v1269, 0.2548296
      %v1311 = vadd.f32 %v1270, 0.2548296
      %v1312 = vadd.f32 %v1271, 0.2548296
      %v1313 = vadd.f32 %v1272, 0.2548296
      %v1314 = vadd.f32 %v1273, 0.2548296
      %v1315 = vadd.f32 %v1274, 0.2548296
      %v1316 = vadd.f32 %v1275, 0.2548296
      %v1317 = vadd.f32 %v1276, 0.2548296
      %v1318 = vadd.f32 %v1277, 0.2548296
      %v1319 = vadd.f32 %v1278, 0.2548296
      %v1320 = vadd.f32 %v1279, 0.2548296
      %v1321 = vadd.f32 %v1280, 0.2548296
      %v1322 = vadd.f32 %v1281, 0.2548296
      %v1323 = vadd.f32 %v1282, 0.2548296
      %v1324 = vadd.f32 %v1283, 0.2548296
      %v1325 = vadd.f32 %v1284, 0.2548296
      %v1326 = vadd.f32 %v1285, 0.2548296
      %v1327 = vadd.f32 %v1286, 0.2548296
      %v1328 = vadd.f32 %v1287, 0.2548296
      %v1329 = vadd.f32 %v1288, 0.2548296
      %v1330 = vadd.f32 %v1289, 0.2548296
      %v1331 = vadd.f32 %v1290, 0.2548296
      %v1332 = vadd.f32 %v1291, 0.2548296
      %v1333 = vadd.f32 %v1292, 0.2548296
      %v1334 = vmul.f32 %v1293, %v925
      %v1335 = vmul.f32 %v1294, %v927
      %v1336 = vmul.f32 %v1295, %v929
      %v1337 = vmul.f32 %v1296, %v931
      %v1338 = vmul.f32 %v1297, %v933
      %v1339 = vmul.f32 %v1298, %v935
      %v1340 = vmul.f32 %v1299, %v937
      %v1341 = vmul.f32 %v1300, %v939
      %v1342 = vmul.f32 %v1301, %v941
      %v1343 = vmul.f32 %v1302, %v943
      %v1344 = vmul.f32 %v1303, %v945
      %v1345 = vmul.f32 %v1304, %v947
      %v1346 = vmul.f32 %v1305, %v949
      %v1347 = vmul.f32 %v1306, %v951
      %v1348 = vmul.f32 %v1307, %v953
      %v1349 = vmul.f32 %v1308, %v955
      %v1350 = vmul.f32 %v1309, %v957
      %v1351 = vmul.f32 %v1310, %v959
      %v1352 = vmul.f32 %v1311, %v961
      %v1353 = vmul.f32 %v1312, %v963
      %v1354 = vmul.f32 %v1313, %v965
      %v1355 = vmul.f32 %v1314, %v967
      %v1356 = vmul.f32 %v1315, %v969
      %v1357 = vmul.f32 %v1316, %v971
      %v1358 = vmul.f32 %v1317, %v973
      %v1359 = vmul.f32 %v1318, %v975
      %v1360 = vmul.f32 %v1319, %v977
      %v1361 = vmul.f32 %v1320, %v979
      %v1362 = vmul.f32 %v1321, %v981
      %v1363 = vmul.f32 %v1322, %v983
      %v1364 = vmul.f32 %v1323, %v985
      %v1365 = vmul.f32 %v1324, %v987
      %v1366 = vmul.f32 %v1325, %v989
      %v1367 = vmul.f32 %v1326, %v991
      %v1368 = vmul.f32 %v1327, %v993
      %v1369 = vmul.f32 %v1328, %v995
      %v1370 = vmul.f32 %v1329, %v997
      %v1371 = vmul.f32 %v1330, %v999
      %v1372 = vmul.f32 %v1331, %v1001
      %v1373 = vmul.f32 %v1332, %v1003
      %v1374 = vmul.f32 %v1333, %v1005
      %v1375 = vsub.f32 0.0, %v801
      %v1376 = vsub.f32 0.0, %v802
      %v1377 = vsub.f32 0.0, %v803
      %v1378 = vsub.f32 0.0, %v804
      %v1379 = vsub.f32 0.0, %v805
      %v1380 = vsub.f32 0.0, %v806
      %v1381 = vsub.f32 0.0, %v807
      %v1382 = vsub.f32 0.0, %v808
      %v1383 = vsub.f32 0.0, %v809
      %v1384 = vsub.f32 0.0, %v810
      %v1385 = vsub.f32 0.0, %v811
      %v1386 = vsub.f32 0.0, %v812
      %v1387 = vsub.f32 0.0, %v813
      %v1388 = vsub.f32 0.0, %v814
      %v1389 = vsub.f32 0.0, %v815
      %v1390 = vsub.f32 0.0, %v816
      %v1391 = vsub.f32 0.0, %v817
      %v1392 = vsub.f32 0.0, %v818
      %v1393 = vsub.f32 0.0, %v819
      %v1394 = vsub.f32 0.0, %v820
      %v1395 = vsub.f32 0.0, %v821
      %v1396 = vsub.f32 0.0, %v822
      %v1397 = vsub.f32 0.0, %v823
      %v1398 = vsub.f32 0.0, %v824
      %v1399 = vsub.f32 0.0, %v825
      %v1400 = vsub.f32 0.0, %v826
      %v1401 = vsub.f32 0.0, %v827
      %v1402 = vsub.f32 0.0, %v828
      %v1403 = vsub.f32 0.0, %v829
      %v1404 = vsub.f32 0.0, %v830
      %v1405 = vsub.f32 0.0, %v831
      %v1406 = vsub.f32 0.0, %v832
      %v1407 = vsub.f32 0.0, %v833
      %v1408 = vsub.f32 0.0, %v834
      %v1409 = vsub.f32 0.0, %v835
      %v1410 = vsub.f32 0.0, %v836
      %v1411 = vsub.f32 0.0, %v837
      %v1412 = vsub.f32 0.0, %v838
      %v1413 = vsub.f32 0.0, %v839
      %v1414 = vsub.f32 0.0, %v840
      %v1415 = vsub.f32 0.0, %v841
      %v1416 = vmul.f32 %v1375, %v801
      %v1417 = vmul.f32 %v1376, %v802
      %v1418 = vmul.f32 %v1377, %v803
      %v1419 = vmul.f32 %v1378, %v804
      %v1420 = vmul.f32 %v1379, %v805
      %v1421 = vmul.f32 %v1380, %v806
      %v1422 = vmul.f32 %v1381, %v807
      %v1423 = vmul.f32 %v1382, %v808
      %v1424 = vmul.f32 %v1383, %v809
      %v1425 = vmul.f32 %v1384, %v810
      %v1426 = vmul.f32 %v1385, %v811
      %v1427 = vmul.f32 %v1386, %v812
      %v1428 = vmul.f32 %v1387, %v813
      %v1429 = vmul.f32 %v1388, %v814
      %v1430 = vmul.f32 %v1389, %v815
      %v1431 = vmul.f32 %v1390, %v816
      %v1432 = vmul.f32 %v1391, %v817
      %v1433 = vmul.f32 %v1392, %v818
      %v1434 = vmul.f32 %v1393, %v819
      %v1435 = vmul.f32 %v1394, %v820
      %v1436 = vmul.f32 %v1395, %v821
      %v1437 = vmul.f32 %v1396, %v822
      %v1438 = vmul.f32 %v1397, %v823
      %v1439 = vmul.f32 %v1398, %v824
      %v1440 = vmul.f32 %v1399, %v825
      %v1441 = vmul.f32 %v1400, %v826
      %v1442 = vmul.f32 %v1401, %v827
      %v1443 = vmul.f32 %v1402, %v828
      %v1444 = vmul.f32 %v1403, %v829
      %v1445 = vmul.f32 %v1404, %v830
      %v1446 = vmul.f32 %v1405, %v831
      %v1447 = vmul.f32 %v1406, %v832
      %v1448 = vmul.f32 %v1407, %v833
      %v1449 = vmul.f32 %v1408, %v834
      %v1450 = vmul.f32 %v1409, %v835
      %v1451 = vmul.f32 %v1410, %v836
      %v1452 = vmul.f32 %v1411, %v837
      %v1453 = vmul.f32 %v1412, %v838
      %v1454 = vmul.f32 %v1413, %v839
      %v1455 = vmul.f32 %v1414, %v840
      %v1456 = vmul.f32 %v1415, %v841
      %v1457 = vmul.f32 %v1416, 1.442695
      %v1458 = vpow.pop %v1457
      %v1459 = vmul.f32 %v1417, 1.442695
      %v1460 = vpow.pop %v1459
      %v1461 = vmul.f32 %v1418, 1.442695
      %v1462 = vpow.pop %v1461
      %v1463 = vmul.f32 %v1419, 1.442695
      %v1464 = vpow.pop %v1463
      %v1465 = vmul.f32 %v1420, 1.442695
      %v1466 = vpow.pop %v1465
      %v1467 = vmul.f32 %v1421, 1.442695
      %v1468 = vpow.pop %v1467
      %v1469 = vmul.f32 %v1422, 1.442695
      %v1470 = vpow.pop %v1469
      %v1471 = vmul.f32 %v1423, 1.442695
      %v1472 = vpow.pop %v1471
      %v1473 = vmul.f32 %v1424, 1.442695
      %v1474 = vpow.pop %v1473
      %v1475 = vmul.f32 %v1425, 1.442695
      %v1476 = vpow.pop %v1475
      %v1477 = vmul.f32 %v1426, 1.442695
      %v1478 = vpow.pop %v1477
      %v1479 = vmul.f32 %v1427, 1.442695
      %v1480 = vpow.pop %v1479
      %v1481 = vmul.f32 %v1428, 1.442695
      %v1482 = vpow.pop %v1481
      %v1483 = vmul.f32 %v1429, 1.442695
      %v1484 = vpow.pop %v1483
      %v1485 = vmul.f32 %v1430, 1.442695
      %v1486 = vpow.pop %v1485
      %v1487 = vmul.f32 %v1431, 1.442695
      %v1488 = vpow.pop %v1487
      %v1489 = vmul.f32 %v1432, 1.442695
      %v1490 = vpow.pop %v1489
      %v1491 = vmul.f32 %v1433, 1.442695
      %v1492 = vpow.pop %v1491
      %v1493 = vmul.f32 %v1434, 1.442695
      %v1494 = vpow.pop %v1493
      %v1495 = vmul.f32 %v1435, 1.442695
      %v1496 = vpow.pop %v1495
      %v1497 = vmul.f32 %v1436, 1.442695
      %v1498 = vpow.pop %v1497
      %v1499 = vmul.f32 %v1437, 1.442695
      %v1500 = vpow.pop %v1499
      %v1501 = vmul.f32 %v1438, 1.442695
      %v1502 = vpow.pop %v1501
      %v1503 = vmul.f32 %v1439, 1.442695
      %v1504 = vpow.pop %v1503
      %v1505 = vmul.f32 %v1440, 1.442695
      %v1506 = vpow.pop %v1505
      %v1507 = vmul.f32 %v1441, 1.442695
      %v1508 = vpow.pop %v1507
      %v1509 = vmul.f32 %v1442, 1.442695
      %v1510 = vpow.pop %v1509
      %v1511 = vmul.f32 %v1443, 1.442695
      %v1512 = vpow.pop %v1511
      %v1513 = vmul.f32 %v1444, 1.442695
      %v1514 = vpow.pop %v1513
      %v1515 = vmul.f32 %v1445, 1.442695
      %v1516 = vpow.pop %v1515
      %v1517 = vmul.f32 %v1446, 1.442695
      %v1518 = vpow.pop %v1517
      %v1519 = vmul.f32 %v1447, 1.442695
      %v1520 = vpow.pop %v1519
      %v1521 = vmul.f32 %v1448, 1.442695
      %v1522 = vpow.pop %v1521
      %v1523 = vmul.f32 %v1449, 1.442695
      %v1524 = vpow.pop %v1523
      %v1525 = vmul.f32 %v1450, 1.442695
      %v1526 = vpow.pop %v1525
      %v1527 = vmul.f32 %v1451, 1.442695
      %v1528 = vpow.pop %v1527
      %v1529 = vmul.f32 %v1452, 1.442695
      %v1530 = vpow.pop %v1529
      %v1531 = vmul.f32 %v1453, 1.442695
      %v1532 = vpow.pop %v1531
      %v1533 = vmul.f32 %v1454, 1.442695
      %v1534 = vpow.pop %v1533
      %v1535 = vmul.f32 %v1455, 1.442695
      %v1536 = vpow.pop %v1535
      %v1537 = vmul.f32 %v1456, 1.442695
      %v1538 = vpow.pop %v1537
      %v1539 = vmul.f32 %v1334, %v1458
      %v1540 = vmul.f32 %v1335, %v1460
      %v1541 = vmul.f32 %v1336, %v1462
      %v1542 = vmul.f32 %v1337, %v1464
      %v1543 = vmul.f32 %v1338, %v1466
      %v1544 = vmul.f32 %v1339, %v1468
      %v1545 = vmul.f32 %v1340, %v1470
      %v1546 = vmul.f32 %v1341, %v1472
      %v1547 = vmul.f32 %v1342, %v1474
      %v1548 = vmul.f32 %v1343, %v1476
      %v1549 = vmul.f32 %v1344, %v1478
      %v1550 = vmul.f32 %v1345, %v1480
      %v1551 = vmul.f32 %v1346, %v1482
      %v1552 = vmul.f32 %v1347, %v1484
      %v1553 = vmul.f32 %v1348, %v1486
      %v1554 = vmul.f32 %v1349, %v1488
      %v1555 = vmul.f32 %v1350, %v1490
      %v1556 = vmul.f32 %v1351, %v1492
      %v1557 = vmul.f32 %v1352, %v1494
      %v1558 = vmul.f32 %v1353, %v1496
      %v1559 = vmul.f32 %v1354, %v1498
      %v1560 = vmul.f32 %v1355, %v1500
      %v1561 = vmul.f32 %v1356, %v1502
      %v1562 = vmul.f32 %v1357, %v1504
      %v1563 = vmul.f32 %v1358, %v1506
      %v1564 = vmul.f32 %v1359, %v1508
      %v1565 = vmul.f32 %v1360, %v1510
      %v1566 = vmul.f32 %v1361, %v1512
      %v1567 = vmul.f32 %v1362, %v1514
      %v1568 = vmul.f32 %v1363, %v1516
      %v1569 = vmul.f32 %v1364, %v1518
      %v1570 = vmul.f32 %v1365, %v1520
      %v1571 = vmul.f32 %v1366, %v1522
      %v1572 = vmul.f32 %v1367, %v1524
      %v1573 = vmul.f32 %v1368, %v1526
      %v1574 = vmul.f32 %v1369, %v1528
      %v1575 = vmul.f32 %v1370, %v1530
      %v1576 = vmul.f32 %v1371, %v1532
      %v1577 = vmul.f32 %v1372, %v1534
      %v1578 = vmul.f32 %v1373, %v1536
      %v1579 = vmul.f32 %v1374, %v1538
      %v1580 = vsub.f32 1.0, %v1539
      %v1581 = vsub.f32 1.0, %v1540
      %v1582 = vsub.f32 1.0, %v1541
      %v1583 = vsub.f32 1.0, %v1542
      %v1584 = vsub.f32 1.0, %v1543
      %v1585 = vsub.f32 1.0, %v1544
      %v1586 = vsub.f32 1.0, %v1545
      %v1587 = vsub.f32 1.0, %v1546
      %v1588 = vsub.f32 1.0, %v1547
      %v1589 = vsub.f32 1.0, %v1548
      %v1590 = vsub.f32 1.0, %v1549
      %v1591 = vsub.f32 1.0, %v1550
      %v1592 = vsub.f32 1.0, %v1551
      %v1593 = vsub.f32 1.0, %v1552
      %v1594 = vsub.f32 1.0, %v1553
      %v1595 = vsub.f32 1.0, %v1554
      %v1596 = vsub.f32 1.0, %v1555
      %v1597 = vsub.f32 1.0, %v1556
      %v1598 = vsub.f32 1.0, %v1557
      %v1599 = vsub.f32 1.0, %v1558
      %v1600 = vsub.f32 1.0, %v1559
      %v1601 = vsub.f32 1.0, %v1560
      %v1602 = vsub.f32 1.0, %v1561
      %v1603 = vsub.f32 1.0, %v1562
      %v1604 = vsub.f32 1.0, %v1563
      %v1605 = vsub.f32 1.0, %v1564
      %v1606 = vsub.f32 1.0, %v1565
      %v1607 = vsub.f32 1.0, %v1566
      %v1608 = vsub.f32 1.0, %v1567
      %v1609 = vsub.f32 1.0, %v1568
      %v1610 = vsub.f32 1.0, %v1569
      %v1611 = vsub.f32 1.0, %v1570
      %v1612 = vsub.f32 1.0, %v1571
      %v1613 = vsub.f32 1.0, %v1572
      %v1614 = vsub.f32 1.0, %v1573
      %v1615 = vsub.f32 1.0, %v1574
      %v1616 = vsub.f32 1.0, %v1575
      %v1617 = vsub.f32 1.0, %v1576
      %v1618 = vsub.f32 1.0, %v1577
      %v1619 = vsub.f32 1.0, %v1578
      %v1620 = vsub.f32 1.0, %v1579
      %v1621 = vmul.f32 %v760, %v1580
      %v1622 = vmul.f32 %v761, %v1581
      %v1623 = vmul.f32 %v762, %v1582
      %v1624 = vmul.f32 %v763, %v1583
      %v1625 = vmul.f32 %v764, %v1584
      %v1626 = vmul.f32 %v765, %v1585
      %v1627 = vmul.f32 %v766, %v1586
      %v1628 = vmul.f32 %v767, %v1587
      %v1629 = vmul.f32 %v768, %v1588
      %v1630 = vmul.f32 %v769, %v1589
      %v1631 = vmul.f32 %v770, %v1590
      %v1632 = vmul.f32 %v771, %v1591
      %v1633 = vmul.f32 %v772, %v1592
      %v1634 = vmul.f32 %v773, %v1593
      %v1635 = vmul.f32 %v774, %v1594
      %v1636 = vmul.f32 %v775, %v1595
      %v1637 = vmul.f32 %v776, %v1596
      %v1638 = vmul.f32 %v777, %v1597
      %v1639 = vmul.f32 %v778, %v1598
      %v1640 = vmul.f32 %v779, %v1599
      %v1641 = vmul.f32 %v780, %v1600
      %v1642 = vmul.f32 %v781, %v1601
      %v1643 = vmul.f32 %v782, %v1602
      %v1644 = vmul.f32 %v783, %v1603
      %v1645 = vmul.f32 %v784, %v1604
      %v1646 = vmul.f32 %v785, %v1605
      %v1647 = vmul.f32 %v786, %v1606
      %v1648 = vmul.f32 %v787, %v1607
      %v1649 = vmul.f32 %v788, %v1608
      %v1650 = vmul.f32 %v789, %v1609
      %v1651 = vmul.f32 %v790, %v1610
      %v1652 = vmul.f32 %v791, %v1611
      %v1653 = vmul.f32 %v792, %v1612
      %v1654 = vmul.f32 %v793, %v1613
      %v1655 = vmul.f32 %v794, %v1614
      %v1656 = vmul.f32 %v795, %v1615
      %v1657 = vmul.f32 %v796, %v1616
      %v1658 = vmul.f32 %v797, %v1617
      %v1659 = vmul.f32 %v798, %v1618
      %v1660 = vmul.f32 %v799, %v1619
      %v1661 = vmul.f32 %v800, %v1620
      %v1662 = vadd.f32 %v1621, 1.0
      %v1663 = vadd.f32 %v1622, 1.0
      %v1664 = vadd.f32 %v1623, 1.0
      %v1665 = vadd.f32 %v1624, 1.0
      %v1666 = vadd.f32 %v1625, 1.0
      %v1667 = vadd.f32 %v1626, 1.0
      %v1668 = vadd.f32 %v1627, 1.0
      %v1669 = vadd.f32 %v1628, 1.0
      %v1670 = vadd.f32 %v1629, 1.0
      %v1671 = vadd.f32 %v1630, 1.0
      %v1672 = vadd.f32 %v1631, 1.0
      %v1673 = vadd.f32 %v1632, 1.0
      %v1674 = vadd.f32 %v1633, 1.0
      %v1675 = vadd.f32 %v1634, 1.0
      %v1676 = vadd.f32 %v1635, 1.0
      %v1677 = vadd.f32 %v1636, 1.0
      %v1678 = vadd.f32 %v1637, 1.0
      %v1679 = vadd.f32 %v1638, 1.0
      %v1680 = vadd.f32 %v1639, 1.0
      %v1681 = vadd.f32 %v1640, 1.0
      %v1682 = vadd.f32 %v1641, 1.0
      %v1683 = vadd.f32 %v1642, 1.0
      %v1684 = vadd.f32 %v1643, 1.0
      %v1685 = vadd.f32 %v1644, 1.0
      %v1686 = vadd.f32 %v1645, 1.0
      %v1687 = vadd.f32 %v1646, 1.0
      %v1688 = vadd.f32 %v1647, 1.0
      %v1689 = vadd.f32 %v1648, 1.0
      %v1690 = vadd.f32 %v1649, 1.0
      %v1691 = vadd.f32 %v1650, 1.0
      %v1692 = vadd.f32 %v1651, 1.0
      %v1693 = vadd.f32 %v1652, 1.0
      %v1694 = vadd.f32 %v1653, 1.0
      %v1695 = vadd.f32 %v1654, 1.0
      %v1696 = vadd.f32 %v1655, 1.0
      %v1697 = vadd.f32 %v1656, 1.0
      %v1698 = vadd.f32 %v1657, 1.0
      %v1699 = vadd.f32 %v1658, 1.0
      %v1700 = vadd.f32 %v1659, 1.0
      %v1701 = vadd.f32 %v1660, 1.0
      %v1702 = vadd.f32 %v1661, 1.0
      %v1703 = vmul.f32 %v637, %v1662
      %v1704 = vmul.f32 %v638, %v1663
      %v1705 = vmul.f32 %v639, %v1664
      %v1706 = vmul.f32 %v640, %v1665
      %v1707 = vmul.f32 %v641, %v1666
      %v1708 = vmul.f32 %v642, %v1667
      %v1709 = vmul.f32 %v643, %v1668
      %v1710 = vmul.f32 %v644, %v1669
      %v1711 = vmul.f32 %v645, %v1670
      %v1712 = vmul.f32 %v646, %v1671
      %v1713 = vmul.f32 %v647, %v1672
      %v1714 = vmul.f32 %v648, %v1673
      %v1715 = vmul.f32 %v649, %v1674
      %v1716 = vmul.f32 %v650, %v1675
      %v1717 = vmul.f32 %v651, %v1676
      %v1718 = vmul.f32 %v652, %v1677
      %v1719 = vmul.f32 %v653, %v1678
      %v1720 = vmul.f32 %v654, %v1679
      %v1721 = vmul.f32 %v655, %v1680
      %v1722 = vmul.f32 %v656, %v1681
      %v1723 = vmul.f32 %v657, %v1682
      %v1724 = vmul.f32 %v658, %v1683
      %v1725 = vmul.f32 %v659, %v1684
      %v1726 = vmul.f32 %v660, %v1685
      %v1727 = vmul.f32 %v661, %v1686
      %v1728 = vmul.f32 %v662, %v1687
      %v1729 = vmul.f32 %v663, %v1688
      %v1730 = vmul.f32 %v664, %v1689
      %v1731 = vmul.f32 %v665, %v1690
      %v1732 = vmul.f32 %v666, %v1691
      %v1733 = vmul.f32 %v667, %v1692
      %v1734 = vmul.f32 %v668, %v1693
      %v1735 = vmul.f32 %v669, %v1694
      %v1736 = vmul.f32 %v670, %v1695
      %v1737 = vmul.f32 %v671, %v1696
      %v1738 = vmul.f32 %v672, %v1697
      %v1739 = vmul.f32 %v673, %v1698
      %v1740 = vmul.f32 %v674, %v1699
      %v1741 = vmul.f32 %v675, %v1700
      %v1742 = vmul.f32 %v676, %v1701
      %v1743 = vmul.f32 %v677, %v1702
      %1744 = vst [vmem:[#allocation2] sm:$0xff] %v1703
      %1745 = vst [vmem:[#allocation2 + $0x8] sm:$0xff] %v1704
      %1746 = vst [vmem:[#allocation2 + $0x10] sm:$0xff] %v1705
      %1747 = vst [vmem:[#allocation2 + $0x18] sm:$0xff] %v1706
      %1748 = vst [vmem:[#allocation2 + $0x20] sm:$0xff] %v1707
      %1749 = vst [vmem:[#allocation2 + $0x28] sm:$0xff] %v1708
      %1750 = vst [vmem:[#allocation2 + $0x30] sm:$0xff] %v1709
      %1751 = vst [vmem:[#allocation2 + $0x38] sm:$0xff] %v1710
      %1752 = vst [vmem:[#allocation2 + $0x40] sm:$0xff] %v1711
      %1753 = vst [vmem:[#allocation2 + $0x48] sm:$0xff] %v1712
      %1754 = vst [vmem:[#allocation2 + $0x50] sm:$0xff] %v1713
      %1755 = vst [vmem:[#allocation2 + $0x58] sm:$0xff] %v1714
      %1756 = vst [vmem:[#allocation2 + $0x60] sm:$0xff] %v1715
      %1757 = vst [vmem:[#allocation2 + $0x68] sm:$0xff] %v1716
      %1758 = vst [vmem:[#allocation2 + $0x70] sm:$0xff] %v1717
      %1759 = vst [vmem:[#allocation2 + $0x78] sm:$0xff] %v1718
      %1760 = vst [vmem:[#allocation2 + $0x80] sm:$0xff] %v1719
      %1761 = vst [vmem:[#allocation2 + $0x88] sm:$0xff] %v1720
      %1762 = vst [vmem:[#allocation2 + $0x90] sm:$0xff] %v1721
      %1763 = vst [vmem:[#allocation2 + $0x98] sm:$0xff] %v1722
      %1764 = vst [vmem:[#allocation2 + $0xa0] sm:$0xff] %v1723
      %1765 = vst [vmem:[#allocation2 + $0xa8] sm:$0xff] %v1724
      %1766 = vst [vmem:[#allocation2 + $0xb0] sm:$0xff] %v1725
      %1767 = vst [vmem:[#allocation2 + $0xb8] sm:$0xff] %v1726
      %1768 = vst [vmem:[#allocation2 + $0xc0] sm:$0xff] %v1727
      %1769 = vst [vmem:[#allocation2 + $0xc8] sm:$0xff] %v1728
      %1770 = vst [vmem:[#allocation2 + $0xd0] sm:$0xff] %v1729
      %1771 = vst [vmem:[#allocation2 + $0xd8] sm:$0xff] %v1730
      %1772 = vst [vmem:[#allocation2 + $0xe0] sm:$0xff] %v1731
      %1773 = vst [vmem:[#allocation2 + $0xe8] sm:$0xff] %v1732
      %1774 = vst [vmem:[#allocation2 + $0xf0] sm:$0xff] %v1733
      %1775 = vst [vmem:[#allocation2 + $0xf8] sm:$0xff] %v1734
      %1776 = vst [vmem:[#allocation2 + $0x100] sm:$0xff] %v1735
      %1777 = vst [vmem:[#allocation2 + $0x108] sm:$0xff] %v1736
      %1778 = vst [vmem:[#allocation2 + $0x110] sm:$0xff] %v1737
      %1779 = vst [vmem:[#allocation2 + $0x118] sm:$0xff] %v1738
      %1780 = vst [vmem:[#allocation2 + $0x120] sm:$0xff] %v1739
      %1781 = vst [vmem:[#allocation2 + $0x128] sm:$0xff] %v1740
      %1782 = vst [vmem:[#allocation2 + $0x130] sm:$0xff] %v1741
      %1783 = vst [vmem:[#allocation2 + $0x138] sm:$0xff] %v1742
      %1784 = vst [vmem:[#allocation2 + $0x140] sm:$0xff] %v1743
      %v1785 = vld [vmem:[%s2] sm:$0xff]
      %v1786 = vld [vmem:[%s2 + $0x8] sm:$0x1]
      %v1787 = vld [vmem:[#allocation2] sm:$0xff]
      %v1788 = vld [vmem:[#allocation2 + $0x8] sm:$0xff]
      %v1789 = vld [vmem:[#allocation2 + $0x10] sm:$0x3]
      %v1790 = vlaneseq
      %v1791 = vshrl.u32 %v1790, 7
      %v1792 = vsub.s32 0, %v1791
      %v1793 = vrot.slane %v1785, %v1792
      %v1794 = vmul.f32 %v1787, %v1793
      %v1795 = vmul.f32 %v1788, %v1793
      %v1796 = vadd.f32 %v1794, 0.0
      %v1797 = vadd.f32 %v1795, 0.0
      %v1798 = vlaneseq
      %v1799 = vshrl.u32 %v1798, 7
      %v1800 = vsub.s32 1, %v1799
      %v1801 = vrot.slane %v1785, %v1800
      %v1802 = vmul.f32 %v1787, %v1801
      %v1803 = vmul.f32 %v1788, %v1801
      %v1804 = vmul.f32 %v1789, %v1801
      %vm1808 = vcmask 1046528
      %v1809 = vrot.slane %v1802, 1
      %v1810 = vrot.slane %v1803, 1
      %v1811 = vsel %vm1808, %v1809, %v1810
      %v1812 = vrot.slane %v1804, 1
      %v1813 = vsel %vm1808, %v1810, %v1812
      %v1816 = vadd.f32 %v1796, %v1811
      %v1817 = vadd.f32 %v1797, %v1813
      %v1818 = vlaneseq
      %v1819 = vshrl.u32 %v1818, 7
      %v1820 = vsub.s32 2, %v1819
      %v1821 = vrot.slane %v1785, %v1820
      %v1822 = vmul.f32 %v1787, %v1821
      %v1823 = vmul.f32 %v1788, %v1821
      %v1824 = vmul.f32 %v1789, %v1821
      %vm1828 = vcmask 1045504
      %v1829 = vrot.slane %v1822, 2
      %v1830 = vrot.slane %v1823, 2
      %v1831 = vsel %vm1828, %v1829, %v1830
      %v1832 = vrot.slane %v1824, 2
      %v1833 = vsel %vm1828, %v1830, %v1832
      %v1836 = vadd.f32 %v1816, %v1831
      %v1837 = vadd.f32 %v1817, %v1833
      %v1838 = vld [vmem:[#allocation2 + $0x12] sm:$0xff]
      %v1839 = vld [vmem:[#allocation2 + $0x1a] sm:$0xff]
      %v1840 = vld [vmem:[#allocation2 + $0x22] sm:$0x3]
      %v1841 = vlaneseq
      %v1842 = vshrl.u32 %v1841, 7
      %v1843 = vsub.s32 3, %v1842
      %v1844 = vrot.slane %v1785, %v1843
      %v1845 = vmul.f32 %v1838, %v1844
      %v1846 = vmul.f32 %v1839, %v1844
      %v1847 = vadd.f32 %v1836, %v1845
      %v1848 = vadd.f32 %v1837, %v1846
      %v1849 = vlaneseq
      %v1850 = vshrl.u32 %v1849, 7
      %v1851 = vsub.s32 4, %v1850
      %v1852 = vrot.slane %v1785, %v1851
      %v1853 = vmul.f32 %v1838, %v1852
      %v1854 = vmul.f32 %v1839, %v1852
      %v1855 = vmul.f32 %v1840, %v1852
      %v1859 = vrot.slane %v1853, 1
      %v1860 = vrot.slane %v1854, 1
      %v1861 = vsel %vm1808, %v1859, %v1860
      %v1862 = vrot.slane %v1855, 1
      %v1863 = vsel %vm1808, %v1860, %v1862
      %v1866 = vadd.f32 %v1847, %v1861
      %v1867 = vadd.f32 %v1848, %v1863
      %v1868 = vlaneseq
      %v1869 = vshrl.u32 %v1868, 7
      %v1870 = vsub.s32 5, %v1869
      %v1871 = vrot.slane %v1785, %v1870
      %v1872 = vmul.f32 %v1838, %v1871
      %v1873 = vmul.f32 %v1839, %v1871
      %v1874 = vmul.f32 %v1840, %v1871
      %v1878 = vrot.slane %v1872, 2
      %v1879 = vrot.slane %v1873, 2
      %v1880 = vsel %vm1828, %v1878, %v1879
      %v1881 = vrot.slane %v1874, 2
      %v1882 = vsel %vm1828, %v1879, %v1881
      %v1885 = vadd.f32 %v1866, %v1880
      %v1886 = vadd.f32 %v1867, %v1882
      %v1887 = vld [vmem:[#allocation2 + $0x24] sm:$0xff]
      %v1888 = vld [vmem:[#allocation2 + $0x2c] sm:$0xff]
      %v1889 = vld [vmem:[#allocation2 + $0x34] sm:$0x3]
      %v1890 = vlaneseq
      %v1891 = vshrl.u32 %v1890, 7
      %v1892 = vsub.s32 6, %v1891
      %v1893 = vrot.slane %v1785, %v1892
      %v1894 = vmul.f32 %v1887, %v1893
      %v1895 = vmul.f32 %v1888, %v1893
      %v1896 = vadd.f32 %v1885, %v1894
      %v1897 = vadd.f32 %v1886, %v1895
      %v1898 = vlaneseq
      %v1899 = vshrl.u32 %v1898, 7
      %v1900 = vsub.s32 7, %v1899
      %v1901 = vrot.slane %v1785, %v1900
      %v1902 = vmul.f32 %v1887, %v1901
      %v1903 = vmul.f32 %v1888, %v1901
      %v1904 = vmul.f32 %v1889, %v1901
      %v1908 = vrot.slane %v1902, 1
      %v1909 = vrot.slane %v1903, 1
      %v1910 = vsel %vm1808, %v1908, %v1909
      %v1911 = vrot.slane %v1904, 1
      %v1912 = vsel %vm1808, %v1909, %v1911
      %v1915 = vadd.f32 %v1896, %v1910
      %v1916 = vadd.f32 %v1897, %v1912
      %v1917 = vlaneseq
      %v1918 = vshrl.u32 %v1917, 7
      %v1919 = vsub.s32 0, %v1918
      %v1920 = vrot.slane %v1786, %v1919
      %v1921 = vmul.f32 %v1887, %v1920
      %v1922 = vmul.f32 %v1888, %v1920
      %v1923 = vmul.f32 %v1889, %v1920
      %v1927 = vrot.slane %v1921, 2
      %v1928 = vrot.slane %v1922, 2
      %v1929 = vsel %vm1828, %v1927, %v1928
      %v1930 = vrot.slane %v1923, 2
      %v1931 = vsel %vm1828, %v1928, %v1930
      %v1934 = vadd.f32 %v1915, %v1929
      %v1935 = vadd.f32 %v1916, %v1931
      %v1936 = vmul.f32 %v1934, 0.5
      %v1937 = vmul.f32 %v1935, 0.5
      %v1938 = vmul.f32 %v1934, 0.70710677
      %v1939 = vmul.f32 %v1935, 0.70710677
      %vm1940 = vcmp.ge.f32.partialorder %v1938, 0.0
      %vm1941 = vcmp.ge.f32.partialorder %v1939, 0.0
      %v1942 = vsel %vm1940, 1.0, -1.0
      %v1943 = vsel %vm1941, 1.0, -1.0
      %v1944 = vand.u32 2147483647, %v1938
      %v1945 = vand.u32 2147483647, %v1939
      %v1946 = vmul.f32 %v1944, 0.3275911
      %v1947 = vmul.f32 %v1945, 0.3275911
      %v1948 = vadd.f32 %v1946, 1.0
      %v1949 = vadd.f32 %v1947, 1.0
      %v1950 = vrcp.pop %v1948
      %v1951 = vmul.f32 1.0, %v1950
      %v1952 = vrcp.pop %v1949
      %v1953 = vmul.f32 1.0, %v1952
      %v1954 = vmul.f32 %v1951, 1.0614054
      %v1955 = vmul.f32 %v1953, 1.0614054
      %v1956 = vadd.f32 %v1954, -1.4531521
      %v1957 = vadd.f32 %v1955, -1.4531521
      %v1958 = vmul.f32 %v1956, %v1951
      %v1959 = vmul.f32 %v1957, %v1953
      %v1960 = vadd.f32 %v1958, 1.4214138
      %v1961 = vadd.f32 %v1959, 1.4214138
      %v1962 = vmul.f32 %v1960, %v1951
      %v1963 = vmul.f32 %v1961, %v1953
      %v1964 = vadd.f32 %v1962, -0.28449672
      %v1965 = vadd.f32 %v1963, -0.28449672
      %v1966 = vmul.f32 %v1964, %v1951
      %v1967 = vmul.f32 %v1965, %v1953
      %v1968 = vadd.f32 %v1966, 0.2548296
      %v1969 = vadd.f32 %v1967, 0.2548296
      %v1970 = vmul.f32 %v1968, %v1951
      %v1971 = vmul.f32 %v1969, %v1953
      %v1972 = vsub.f32 0.0, %v1944
      %v1973 = vsub.f32 0.0, %v1945
      %v1974 = vmul.f32 %v1972, %v1944
      %v1975 = vmul.f32 %v1973, %v1945
      %v1976 = vmul.f32 %v1974, 1.442695
      %v1977 = vpow.pop %v1976
      %v1978 = vmul.f32 %v1975, 1.442695
      %v1979 = vpow.pop %v1978
      %v1980 = vmul.f32 %v1970, %v1977
      %v1981 = vmul.f32 %v1971, %v1979
      %v1982 = vsub.f32 1.0, %v1980
      %v1983 = vsub.f32 1.0, %v1981
      %v1984 = vmul.f32 %v1942, %v1982
      %v1985 = vmul.f32 %v1943, %v1983
      %v1986 = vadd.f32 %v1984, 1.0
      %v1987 = vadd.f32 %v1985, 1.0
      %v1988 = vmul.f32 %v1936, %v1986
      %v1989 = vmul.f32 %v1937, %v1987
      %1990 = vst [vmem:[#allocation3] sm:$0xff] %v1988
      %1991 = vst [vmem:[#allocation3 + $0x8] sm:$0xff] %v1989
      %v1992 = vld [vmem:[#allocation2 + $0x12] sm:$0xff]
      %v1993 = vld [vmem:[#allocation2 + $0x1a] sm:$0xff]
      %v1994 = vld [vmem:[#allocation2 + $0x22] sm:$0x3]
      %v1995 = vmul.f32 %v1992, %v1793
      %v1996 = vmul.f32 %v1993, %v1793
      %v1997 = vadd.f32 %v1995, 0.0
      %v1998 = vadd.f32 %v1996, 0.0
      %v1999 = vmul.f32 %v1992, %v1801
      %v2000 = vmul.f32 %v1993, %v1801
      %v2001 = vmul.f32 %v1994, %v1801
      %v2005 = vrot.slane %v1999, 1
      %v2006 = vrot.slane %v2000, 1
      %v2007 = vsel %vm1808, %v2005, %v2006
      %v2008 = vrot.slane %v2001, 1
      %v2009 = vsel %vm1808, %v2006, %v2008
      %v2012 = vadd.f32 %v1997, %v2007
      %v2013 = vadd.f32 %v1998, %v2009
      %v2014 = vmul.f32 %v1992, %v1821
      %v2015 = vmul.f32 %v1993, %v1821
      %v2016 = vmul.f32 %v1994, %v1821
      %v2020 = vrot.slane %v2014, 2
      %v2021 = vrot.slane %v2015, 2
      %v2022 = vsel %vm1828, %v2020, %v2021
      %v2023 = vrot.slane %v2016, 2
      %v2024 = vsel %vm1828, %v2021, %v2023
      %v2027 = vadd.f32 %v2012, %v2022
      %v2028 = vadd.f32 %v2013, %v2024
      %v2029 = vld [vmem:[#allocation2 + $0x24] sm:$0xff]
      %v2030 = vld [vmem:[#allocation2 + $0x2c] sm:$0xff]
      %v2031 = vld [vmem:[#allocation2 + $0x34] sm:$0x3]
      %v2032 = vmul.f32 %v2029, %v1844
      %v2033 = vmul.f32 %v2030, %v1844
      %v2034 = vadd.f32 %v2027, %v2032
      %v2035 = vadd.f32 %v2028, %v2033
      %v2036 = vmul.f32 %v2029, %v1852
      %v2037 = vmul.f32 %v2030, %v1852
      %v2038 = vmul.f32 %v2031, %v1852
      %v2042 = vrot.slane %v2036, 1
      %v2043 = vrot.slane %v2037, 1
      %v2044 = vsel %vm1808, %v2042, %v2043
      %v2045 = vrot.slane %v2038, 1
      %v2046 = vsel %vm1808, %v2043, %v2045
      %v2049 = vadd.f32 %v2034, %v2044
      %v2050 = vadd.f32 %v2035, %v2046
      %v2051 = vmul.f32 %v2029, %v1871
      %v2052 = vmul.f32 %v2030, %v1871
      %v2053 = vmul.f32 %v2031, %v1871
      %v2057 = vrot.slane %v2051, 2
      %v2058 = vrot.slane %v2052, 2
      %v2059 = vsel %vm1828, %v2057, %v2058
      %v2060 = vrot.slane %v2053, 2
      %v2061 = vsel %vm1828, %v2058, %v2060
      %v2064 = vadd.f32 %v2049, %v2059
      %v2065 = vadd.f32 %v2050, %v2061
      %v2066 = vld [vmem:[#allocation2 + $0x36] sm:$0xff]
      %v2067 = vld [vmem:[#allocation2 + $0x3e] sm:$0xff]
      %v2068 = vld [vmem:[#allocation2 + $0x46] sm:$0x3]
      %v2069 = vmul.f32 %v2066, %v1893
      %v2070 = vmul.f32 %v2067, %v1893
      %v2071 = vadd.f32 %v2064, %v2069
      %v2072 = vadd.f32 %v2065, %v2070
      %v2073 = vmul.f32 %v2066, %v1901
      %v2074 = vmul.f32 %v2067, %v1901
      %v2075 = vmul.f32 %v2068, %v1901
      %v2079 = vrot.slane %v2073, 1
      %v2080 = vrot.slane %v2074, 1
      %v2081 = vsel %vm1808, %v2079, %v2080
      %v2082 = vrot.slane %v2075, 1
      %v2083 = vsel %vm1808, %v2080, %v2082
      %v2086 = vadd.f32 %v2071, %v2081
      %v2087 = vadd.f32 %v2072, %v2083
      %v2088 = vmul.f32 %v2066, %v1920
      %v2089 = vmul.f32 %v2067, %v1920
      %v2090 = vmul.f32 %v2068, %v1920
      %v2094 = vrot.slane %v2088, 2
      %v2095 = vrot.slane %v2089, 2
      %v2096 = vsel %vm1828, %v2094, %v2095
      %v2097 = vrot.slane %v2090, 2
      %v2098 = vsel %vm1828, %v2095, %v2097
      %v2101 = vadd.f32 %v2086, %v2096
      %v2102 = vadd.f32 %v2087, %v2098
      %v2103 = vmul.f32 %v2101, 0.5
      %v2104 = vmul.f32 %v2102, 0.5
      %v2105 = vmul.f32 %v2101, 0.70710677
      %v2106 = vmul.f32 %v2102, 0.70710677
      %vm2107 = vcmp.ge.f32.partialorder %v2105, 0.0
      %vm2108 = vcmp.ge.f32.partialorder %v2106, 0.0
      %v2109 = vsel %vm2107, 1.0, -1.0
      %v2110 = vsel %vm2108, 1.0, -1.0
      %v2111 = vand.u32 2147483647, %v2105
      %v2112 = vand.u32 2147483647, %v2106
      %v2113 = vmul.f32 %v2111, 0.3275911
      %v2114 = vmul.f32 %v2112, 0.3275911
      %v2115 = vadd.f32 %v2113, 1.0
      %v2116 = vadd.f32 %v2114, 1.0
      %v2117 = vrcp.pop %v2115
      %v2118 = vmul.f32 1.0, %v2117
      %v2119 = vrcp.pop %v2116
      %v2120 = vmul.f32 1.0, %v2119
      %v2121 = vmul.f32 %v2118, 1.0614054
      %v2122 = vmul.f32 %v2120, 1.0614054
      %v2123 = vadd.f32 %v2121, -1.4531521
      %v2124 = vadd.f32 %v2122, -1.4531521
      %v2125 = vmul.f32 %v2123, %v2118
      %v2126 = vmul.f32 %v2124, %v2120
      %v2127 = vadd.f32 %v2125, 1.4214138
      %v2128 = vadd.f32 %v2126, 1.4214138
      %v2129 = vmul.f32 %v2127, %v2118
      %v2130 = vmul.f32 %v2128, %v2120
      %v2131 = vadd.f32 %v2129, -0.28449672
      %v2132 = vadd.f32 %v2130, -0.28449672
      %v2133 = vmul.f32 %v2131, %v2118
      %v2134 = vmul.f32 %v2132, %v2120
      %v2135 = vadd.f32 %v2133, 0.2548296
      %v2136 = vadd.f32 %v2134, 0.2548296
      %v2137 = vmul.f32 %v2135, %v2118
      %v2138 = vmul.f32 %v2136, %v2120
      %v2139 = vsub.f32 0.0, %v2111
      %v2140 = vsub.f32 0.0, %v2112
      %v2141 = vmul.f32 %v2139, %v2111
      %v2142 = vmul.f32 %v2140, %v2112
      %v2143 = vmul.f32 %v2141, 1.442695
      %v2144 = vpow.pop %v2143
      %v2145 = vmul.f32 %v2142, 1.442695
      %v2146 = vpow.pop %v2145
      %v2147 = vmul.f32 %v2137, %v2144
      %v2148 = vmul.f32 %v2138, %v2146
      %v2149 = vsub.f32 1.0, %v2147
      %v2150 = vsub.f32 1.0, %v2148
      %v2151 = vmul.f32 %v2109, %v2149
      %v2152 = vmul.f32 %v2110, %v2150
      %v2153 = vadd.f32 %v2151, 1.0
      %v2154 = vadd.f32 %v2152, 1.0
      %v2155 = vmul.f32 %v2103, %v2153
      %v2156 = vmul.f32 %v2104, %v2154
      %2157 = vst [vmem:[#allocation3 + $0x10] sm:$0xff] %v2155
      %2158 = vst [vmem:[#allocation3 + $0x18] sm:$0xff] %v2156
      %v2159 = vld [vmem:[#allocation2 + $0x24] sm:$0xff]
      %v2160 = vld [vmem:[#allocation2 + $0x2c] sm:$0xff]
      %v2161 = vld [vmem:[#allocation2 + $0x34] sm:$0x3]
      %v2162 = vmul.f32 %v2159, %v1793
      %v2163 = vmul.f32 %v2160, %v1793
      %v2164 = vadd.f32 %v2162, 0.0
      %v2165 = vadd.f32 %v2163, 0.0
      %v2166 = vmul.f32 %v2159, %v1801
      %v2167 = vmul.f32 %v2160, %v1801
      %v2168 = vmul.f32 %v2161, %v1801
      %v2172 = vrot.slane %v2166, 1
      %v2173 = vrot.slane %v2167, 1
      %v2174 = vsel %vm1808, %v2172, %v2173
      %v2175 = vrot.slane %v2168, 1
      %v2176 = vsel %vm1808, %v2173, %v2175
      %v2179 = vadd.f32 %v2164, %v2174
      %v2180 = vadd.f32 %v2165, %v2176
      %v2181 = vmul.f32 %v2159, %v1821
      %v2182 = vmul.f32 %v2160, %v1821
      %v2183 = vmul.f32 %v2161, %v1821
      %v2187 = vrot.slane %v2181, 2
      %v2188 = vrot.slane %v2182, 2
      %v2189 = vsel %vm1828, %v2187, %v2188
      %v2190 = vrot.slane %v2183, 2
      %v2191 = vsel %vm1828, %v2188, %v2190
      %v2194 = vadd.f32 %v2179, %v2189
      %v2195 = vadd.f32 %v2180, %v2191
      %v2196 = vld [vmem:[#allocation2 + $0x36] sm:$0xff]
      %v2197 = vld [vmem:[#allocation2 + $0x3e] sm:$0xff]
      %v2198 = vld [vmem:[#allocation2 + $0x46] sm:$0x3]
      %v2199 = vmul.f32 %v2196, %v1844
      %v2200 = vmul.f32 %v2197, %v1844
      %v2201 = vadd.f32 %v2194, %v2199
      %v2202 = vadd.f32 %v2195, %v2200
      %v2203 = vmul.f32 %v2196, %v1852
      %v2204 = vmul.f32 %v2197, %v1852
      %v2205 = vmul.f32 %v2198, %v1852
      %v2209 = vrot.slane %v2203, 1
      %v2210 = vrot.slane %v2204, 1
      %v2211 = vsel %vm1808, %v2209, %v2210
      %v2212 = vrot.slane %v2205, 1
      %v2213 = vsel %vm1808, %v2210, %v2212
      %v2216 = vadd.f32 %v2201, %v2211
      %v2217 = vadd.f32 %v2202, %v2213
      %v2218 = vmul.f32 %v2196, %v1871
      %v2219 = vmul.f32 %v2197, %v1871
      %v2220 = vmul.f32 %v2198, %v1871
      %v2224 = vrot.slane %v2218, 2
      %v2225 = vrot.slane %v2219, 2
      %v2226 = vsel %vm1828, %v2224, %v2225
      %v2227 = vrot.slane %v2220, 2
      %v2228 = vsel %vm1828, %v2225, %v2227
      %v2231 = vadd.f32 %v2216, %v2226
      %v2232 = vadd.f32 %v2217, %v2228
      %v2233 = vld [vmem:[#allocation2 + $0x48] sm:$0xff]
      %v2234 = vld [vmem:[#allocation2 + $0x50] sm:$0xff]
      %v2235 = vld [vmem:[#allocation2 + $0x58] sm:$0x3]
      %v2236 = vmul.f32 %v2233, %v1893
      %v2237 = vmul.f32 %v2234, %v1893
      %v2238 = vadd.f32 %v2231, %v2236
      %v2239 = vadd.f32 %v2232, %v2237
      %v2240 = vmul.f32 %v2233, %v1901
      %v2241 = vmul.f32 %v2234, %v1901
      %v2242 = vmul.f32 %v2235, %v1901
      %v2246 = vrot.slane %v2240, 1
      %v2247 = vrot.slane %v2241, 1
      %v2248 = vsel %vm1808, %v2246, %v2247
      %v2249 = vrot.slane %v2242, 1
      %v2250 = vsel %vm1808, %v2247, %v2249
      %v2253 = vadd.f32 %v2238, %v2248
      %v2254 = vadd.f32 %v2239, %v2250
      %v2255 = vmul.f32 %v2233, %v1920
      %v2256 = vmul.f32 %v2234, %v1920
      %v2257 = vmul.f32 %v2235, %v1920
      %v2261 = vrot.slane %v2255, 2
      %v2262 = vrot.slane %v2256, 2
      %v2263 = vsel %vm1828, %v2261, %v2262
      %v2264 = vrot.slane %v2257, 2
      %v2265 = vsel %vm1828, %v2262, %v2264
      %v2268 = vadd.f32 %v2253, %v2263
      %v2269 = vadd.f32 %v2254, %v2265
      %v2270 = vmul.f32 %v2268, 0.5
      %v2271 = vmul.f32 %v2269, 0.5
      %v2272 = vmul.f32 %v2268, 0.70710677
      %v2273 = vmul.f32 %v2269, 0.70710677
      %vm2274 = vcmp.ge.f32.partialorder %v2272, 0.0
      %vm2275 = vcmp.ge.f32.partialorder %v2273, 0.0
      %v2276 = vsel %vm2274, 1.0, -1.0
      %v2277 = vsel %vm2275, 1.0, -1.0
      %v2278 = vand.u32 2147483647, %v2272
      %v2279 = vand.u32 2147483647, %v2273
      %v2280 = vmul.f32 %v2278, 0.3275911
      %v2281 = vmul.f32 %v2279, 0.3275911
      %v2282 = vadd.f32 %v2280, 1.0
      %v2283 = vadd.f32 %v2281, 1.0
      %v2284 = vrcp.pop %v2282
      %v2285 = vmul.f32 1.0, %v2284
      %v2286 = vrcp.pop %v2283
      %v2287 = vmul.f32 1.0, %v2286
      %v2288 = vmul.f32 %v2285, 1.0614054
      %v2289 = vmul.f32 %v2287, 1.0614054
      %v2290 = vadd.f32 %v2288, -1.4531521
      %v2291 = vadd.f32 %v2289, -1.4531521
      %v2292 = vmul.f32 %v2290, %v2285
      %v2293 = vmul.f32 %v2291, %v2287
      %v2294 = vadd.f32 %v2292, 1.4214138
      %v2295 = vadd.f32 %v2293, 1.4214138
      %v2296 = vmul.f32 %v2294, %v2285
      %v2297 = vmul.f32 %v2295, %v2287
      %v2298 = vadd.f32 %v2296, -0.28449672
      %v2299 = vadd.f32 %v2297, -0.28449672
      %v2300 = vmul.f32 %v2298, %v2285
      %v2301 = vmul.f32 %v2299, %v2287
      %v2302 = vadd.f32 %v2300, 0.2548296
      %v2303 = vadd.f32 %v2301, 0.2548296
      %v2304 = vmul.f32 %v2302, %v2285
      %v2305 = vmul.f32 %v2303, %v2287
      %v2306 = vsub.f32 0.0, %v2278
      %v2307 = vsub.f32 0.0, %v2279
      %v2308 = vmul.f32 %v2306, %v2278
      %v2309 = vmul.f32 %v2307, %v2279
      %v2310 = vmul.f32 %v2308, 1.442695
      %v2311 = vpow.pop %v2310
      %v2312 = vmul.f32 %v2309, 1.442695
      %v2313 = vpow.pop %v2312
      %v2314 = vmul.f32 %v2304, %v2311
      %v2315 = vmul.f32 %v2305, %v2313
      %v2316 = vsub.f32 1.0, %v2314
      %v2317 = vsub.f32 1.0, %v2315
      %v2318 = vmul.f32 %v2276, %v2316
      %v2319 = vmul.f32 %v2277, %v2317
      %v2320 = vadd.f32 %v2318, 1.0
      %v2321 = vadd.f32 %v2319, 1.0
      %v2322 = vmul.f32 %v2270, %v2320
      %v2323 = vmul.f32 %v2271, %v2321
      %2324 = vst [vmem:[#allocation3 + $0x20] sm:$0xff] %v2322
      %2325 = vst [vmem:[#allocation3 + $0x28] sm:$0xff] %v2323
      %v2326 = vld [vmem:[#allocation2 + $0x36] sm:$0xff]
      %v2327 = vld [vmem:[#allocation2 + $0x3e] sm:$0xff]
      %v2328 = vld [vmem:[#allocation2 + $0x46] sm:$0x3]
      %v2329 = vmul.f32 %v2326, %v1793
      %v2330 = vmul.f32 %v2327, %v1793
      %v2331 = vadd.f32 %v2329, 0.0
      %v2332 = vadd.f32 %v2330, 0.0
      %v2333 = vmul.f32 %v2326, %v1801
      %v2334 = vmul.f32 %v2327, %v1801
      %v2335 = vmul.f32 %v2328, %v1801
      %v2339 = vrot.slane %v2333, 1
      %v2340 = vrot.slane %v2334, 1
      %v2341 = vsel %vm1808, %v2339, %v2340
      %v2342 = vrot.slane %v2335, 1
      %v2343 = vsel %vm1808, %v2340, %v2342
      %v2346 = vadd.f32 %v2331, %v2341
      %v2347 = vadd.f32 %v2332, %v2343
      %v2348 = vmul.f32 %v2326, %v1821
      %v2349 = vmul.f32 %v2327, %v1821
      %v2350 = vmul.f32 %v2328, %v1821
      %v2354 = vrot.slane %v2348, 2
      %v2355 = vrot.slane %v2349, 2
      %v2356 = vsel %vm1828, %v2354, %v2355
      %v2357 = vrot.slane %v2350, 2
      %v2358 = vsel %vm1828, %v2355, %v2357
      %v2361 = vadd.f32 %v2346, %v2356
      %v2362 = vadd.f32 %v2347, %v2358
      %v2363 = vld [vmem:[#allocation2 + $0x48] sm:$0xff]
      %v2364 = vld [vmem:[#allocation2 + $0x50] sm:$0xff]
      %v2365 = vld [vmem:[#allocation2 + $0x58] sm:$0x3]
      %v2366 = vmul.f32 %v2363, %v1844
      %v2367 = vmul.f32 %v2364, %v1844
      %v2368 = vadd.f32 %v2361, %v2366
      %v2369 = vadd.f32 %v2362, %v2367
      %v2370 = vmul.f32 %v2363, %v1852
      %v2371 = vmul.f32 %v2364, %v1852
      %v2372 = vmul.f32 %v2365, %v1852
      %v2376 = vrot.slane %v2370, 1
      %v2377 = vrot.slane %v2371, 1
      %v2378 = vsel %vm1808, %v2376, %v2377
      %v2379 = vrot.slane %v2372, 1
      %v2380 = vsel %vm1808, %v2377, %v2379
      %v2383 = vadd.f32 %v2368, %v2378
      %v2384 = vadd.f32 %v2369, %v2380
      %v2385 = vmul.f32 %v2363, %v1871
      %v2386 = vmul.f32 %v2364, %v1871
      %v2387 = vmul.f32 %v2365, %v1871
      %v2391 = vrot.slane %v2385, 2
      %v2392 = vrot.slane %v2386, 2
      %v2393 = vsel %vm1828, %v2391, %v2392
      %v2394 = vrot.slane %v2387, 2
      %v2395 = vsel %vm1828, %v2392, %v2394
      %v2398 = vadd.f32 %v2383, %v2393
      %v2399 = vadd.f32 %v2384, %v2395
      %v2400 = vld [vmem:[#allocation2 + $0x5a] sm:$0xff]
      %v2401 = vld [vmem:[#allocation2 + $0x62] sm:$0xff]
      %v2402 = vld [vmem:[#allocation2 + $0x6a] sm:$0x3]
      %v2403 = vmul.f32 %v2400, %v1893
      %v2404 = vmul.f32 %v2401, %v1893
      %v2405 = vadd.f32 %v2398, %v2403
      %v2406 = vadd.f32 %v2399, %v2404
      %v2407 = vmul.f32 %v2400, %v1901
      %v2408 = vmul.f32 %v2401, %v1901
      %v2409 = vmul.f32 %v2402, %v1901
      %v2413 = vrot.slane %v2407, 1
      %v2414 = vrot.slane %v2408, 1
      %v2415 = vsel %vm1808, %v2413, %v2414
      %v2416 = vrot.slane %v2409, 1
      %v2417 = vsel %vm1808, %v2414, %v2416
      %v2420 = vadd.f32 %v2405, %v2415
      %v2421 = vadd.f32 %v2406, %v2417
      %v2422 = vmul.f32 %v2400, %v1920
      %v2423 = vmul.f32 %v2401, %v1920
      %v2424 = vmul.f32 %v2402, %v1920
      %v2428 = vrot.slane %v2422, 2
      %v2429 = vrot.slane %v2423, 2
      %v2430 = vsel %vm1828, %v2428, %v2429
      %v2431 = vrot.slane %v2424, 2
      %v2432 = vsel %vm1828, %v2429, %v2431
      %v2435 = vadd.f32 %v2420, %v2430
      %v2436 = vadd.f32 %v2421, %v2432
      %v2437 = vmul.f32 %v2435, 0.5
      %v2438 = vmul.f32 %v2436, 0.5
      %v2439 = vmul.f32 %v2435, 0.70710677
      %v2440 = vmul.f32 %v2436, 0.70710677
      %vm2441 = vcmp.ge.f32.partialorder %v2439, 0.0
      %vm2442 = vcmp.ge.f32.partialorder %v2440, 0.0
      %v2443 = vsel %vm2441, 1.0, -1.0
      %v2444 = vsel %vm2442, 1.0, -1.0
      %v2445 = vand.u32 2147483647, %v2439
      %v2446 = vand.u32 2147483647, %v2440
      %v2447 = vmul.f32 %v2445, 0.3275911
      %v2448 = vmul.f32 %v2446, 0.3275911
      %v2449 = vadd.f32 %v2447, 1.0
      %v2450 = vadd.f32 %v2448, 1.0
      %v2451 = vrcp.pop %v2449
      %v2452 = vmul.f32 1.0, %v2451
      %v2453 = vrcp.pop %v2450
      %v2454 = vmul.f32 1.0, %v2453
      %v2455 = vmul.f32 %v2452, 1.0614054
      %v2456 = vmul.f32 %v2454, 1.0614054
      %v2457 = vadd.f32 %v2455, -1.4531521
      %v2458 = vadd.f32 %v2456, -1.4531521
      %v2459 = vmul.f32 %v2457, %v2452
      %v2460 = vmul.f32 %v2458, %v2454
      %v2461 = vadd.f32 %v2459, 1.4214138
      %v2462 = vadd.f32 %v2460, 1.4214138
      %v2463 = vmul.f32 %v2461, %v2452
      %v2464 = vmul.f32 %v2462, %v2454
      %v2465 = vadd.f32 %v2463, -0.28449672
      %v2466 = vadd.f32 %v2464, -0.28449672
      %v2467 = vmul.f32 %v2465, %v2452
      %v2468 = vmul.f32 %v2466, %v2454
      %v2469 = vadd.f32 %v2467, 0.2548296
      %v2470 = vadd.f32 %v2468, 0.2548296
      %v2471 = vmul.f32 %v2469, %v2452
      %v2472 = vmul.f32 %v2470, %v2454
      %v2473 = vsub.f32 0.0, %v2445
      %v2474 = vsub.f32 0.0, %v2446
      %v2475 = vmul.f32 %v2473, %v2445
      %v2476 = vmul.f32 %v2474, %v2446
      %v2477 = vmul.f32 %v2475, 1.442695
      %v2478 = vpow.pop %v2477
      %v2479 = vmul.f32 %v2476, 1.442695
      %v2480 = vpow.pop %v2479
      %v2481 = vmul.f32 %v2471, %v2478
      %v2482 = vmul.f32 %v2472, %v2480
      %v2483 = vsub.f32 1.0, %v2481
      %v2484 = vsub.f32 1.0, %v2482
      %v2485 = vmul.f32 %v2443, %v2483
      %v2486 = vmul.f32 %v2444, %v2484
      %v2487 = vadd.f32 %v2485, 1.0
      %v2488 = vadd.f32 %v2486, 1.0
      %v2489 = vmul.f32 %v2437, %v2487
      %v2490 = vmul.f32 %v2438, %v2488
      %2491 = vst [vmem:[#allocation3 + $0x30] sm:$0xff] %v2489
      %2492 = vst [vmem:[#allocation3 + $0x38] sm:$0xff] %v2490
      %v2493 = vld [vmem:[#allocation2 + $0x48] sm:$0xff]
      %v2494 = vld [vmem:[#allocation2 + $0x50] sm:$0xff]
      %v2495 = vld [vmem:[#allocation2 + $0x58] sm:$0x3]
      %v2496 = vmul.f32 %v2493, %v1793
      %v2497 = vmul.f32 %v2494, %v1793
      %v2498 = vadd.f32 %v2496, 0.0
      %v2499 = vadd.f32 %v2497, 0.0
      %v2500 = vmul.f32 %v2493, %v1801
      %v2501 = vmul.f32 %v2494, %v1801
      %v2502 = vmul.f32 %v2495, %v1801
      %v2506 = vrot.slane %v2500, 1
      %v2507 = vrot.slane %v2501, 1
      %v2508 = vsel %vm1808, %v2506, %v2507
      %v2509 = vrot.slane %v2502, 1
      %v2510 = vsel %vm1808, %v2507, %v2509
      %v2513 = vadd.f32 %v2498, %v2508
      %v2514 = vadd.f32 %v2499, %v2510
      %v2515 = vmul.f32 %v2493, %v1821
      %v2516 = vmul.f32 %v2494, %v1821
      %v2517 = vmul.f32 %v2495, %v1821
      %v2521 = vrot.slane %v2515, 2
      %v2522 = vrot.slane %v2516, 2
      %v2523 = vsel %vm1828, %v2521, %v2522
      %v2524 = vrot.slane %v2517, 2
      %v2525 = vsel %vm1828, %v2522, %v2524
      %v2528 = vadd.f32 %v2513, %v2523
      %v2529 = vadd.f32 %v2514, %v2525
      %v2530 = vld [vmem:[#allocation2 + $0x5a] sm:$0xff]
      %v2531 = vld [vmem:[#allocation2 + $0x62] sm:$0xff]
      %v2532 = vld [vmem:[#allocation2 + $0x6a] sm:$0x3]
      %v2533 = vmul.f32 %v2530, %v1844
      %v2534 = vmul.f32 %v2531, %v1844
      %v2535 = vadd.f32 %v2528, %v2533
      %v2536 = vadd.f32 %v2529, %v2534
      %v2537 = vmul.f32 %v2530, %v1852
      %v2538 = vmul.f32 %v2531, %v1852
      %v2539 = vmul.f32 %v2532, %v1852
      %v2543 = vrot.slane %v2537, 1
      %v2544 = vrot.slane %v2538, 1
      %v2545 = vsel %vm1808, %v2543, %v2544
      %v2546 = vrot.slane %v2539, 1
      %v2547 = vsel %vm1808, %v2544, %v2546
      %v2550 = vadd.f32 %v2535, %v2545
      %v2551 = vadd.f32 %v2536, %v2547
      %v2552 = vmul.f32 %v2530, %v1871
      %v2553 = vmul.f32 %v2531, %v1871
      %v2554 = vmul.f32 %v2532, %v1871
      %v2558 = vrot.slane %v2552, 2
      %v2559 = vrot.slane %v2553, 2
      %v2560 = vsel %vm1828, %v2558, %v2559
      %v2561 = vrot.slane %v2554, 2
      %v2562 = vsel %vm1828, %v2559, %v2561
      %v2565 = vadd.f32 %v2550, %v2560
      %v2566 = vadd.f32 %v2551, %v2562
      %v2567 = vld [vmem:[#allocation2 + $0x6c] sm:$0xff]
      %v2568 = vld [vmem:[#allocation2 + $0x74] sm:$0xff]
      %v2569 = vld [vmem:[#allocation2 + $0x7c] sm:$0x3]
      %v2570 = vmul.f32 %v2567, %v1893
      %v2571 = vmul.f32 %v2568, %v1893
      %v2572 = vadd.f32 %v2565, %v2570
      %v2573 = vadd.f32 %v2566, %v2571
      %v2574 = vmul.f32 %v2567, %v1901
      %v2575 = vmul.f32 %v2568, %v1901
      %v2576 = vmul.f32 %v2569, %v1901
      %v2580 = vrot.slane %v2574, 1
      %v2581 = vrot.slane %v2575, 1
      %v2582 = vsel %vm1808, %v2580, %v2581
      %v2583 = vrot.slane %v2576, 1
      %v2584 = vsel %vm1808, %v2581, %v2583
      %v2587 = vadd.f32 %v2572, %v2582
      %v2588 = vadd.f32 %v2573, %v2584
      %v2589 = vmul.f32 %v2567, %v1920
      %v2590 = vmul.f32 %v2568, %v1920
      %v2591 = vmul.f32 %v2569, %v1920
      %v2595 = vrot.slane %v2589, 2
      %v2596 = vrot.slane %v2590, 2
      %v2597 = vsel %vm1828, %v2595, %v2596
      %v2598 = vrot.slane %v2591, 2
      %v2599 = vsel %vm1828, %v2596, %v2598
      %v2602 = vadd.f32 %v2587, %v2597
      %v2603 = vadd.f32 %v2588, %v2599
      %v2604 = vmul.f32 %v2602, 0.5
      %v2605 = vmul.f32 %v2603, 0.5
      %v2606 = vmul.f32 %v2602, 0.70710677
      %v2607 = vmul.f32 %v2603, 0.70710677
      %vm2608 = vcmp.ge.f32.partialorder %v2606, 0.0
      %vm2609 = vcmp.ge.f32.partialorder %v2607, 0.0
      %v2610 = vsel %vm2608, 1.0, -1.0
      %v2611 = vsel %vm2609, 1.0, -1.0
      %v2612 = vand.u32 2147483647, %v2606
      %v2613 = vand.u32 2147483647, %v2607
      %v2614 = vmul.f32 %v2612, 0.3275911
      %v2615 = vmul.f32 %v2613, 0.3275911
      %v2616 = vadd.f32 %v2614, 1.0
      %v2617 = vadd.f32 %v2615, 1.0
      %v2618 = vrcp.pop %v2616
      %v2619 = vmul.f32 1.0, %v2618
      %v2620 = vrcp.pop %v2617
      %v2621 = vmul.f32 1.0, %v2620
      %v2622 = vmul.f32 %v2619, 1.0614054
      %v2623 = vmul.f32 %v2621, 1.0614054
      %v2624 = vadd.f32 %v2622, -1.4531521
      %v2625 = vadd.f32 %v2623, -1.4531521
      %v2626 = vmul.f32 %v2624, %v2619
      %v2627 = vmul.f32 %v2625, %v2621
      %v2628 = vadd.f32 %v2626, 1.4214138
      %v2629 = vadd.f32 %v2627, 1.4214138
      %v2630 = vmul.f32 %v2628, %v2619
      %v2631 = vmul.f32 %v2629, %v2621
      %v2632 = vadd.f32 %v2630, -0.28449672
      %v2633 = vadd.f32 %v2631, -0.28449672
      %v2634 = vmul.f32 %v2632, %v2619
      %v2635 = vmul.f32 %v2633, %v2621
      %v2636 = vadd.f32 %v2634, 0.2548296
      %v2637 = vadd.f32 %v2635, 0.2548296
      %v2638 = vmul.f32 %v2636, %v2619
      %v2639 = vmul.f32 %v2637, %v2621
      %v2640 = vsub.f32 0.0, %v2612
      %v2641 = vsub.f32 0.0, %v2613
      %v2642 = vmul.f32 %v2640, %v2612
      %v2643 = vmul.f32 %v2641, %v2613
      %v2644 = vmul.f32 %v2642, 1.442695
      %v2645 = vpow.pop %v2644
      %v2646 = vmul.f32 %v2643, 1.442695
      %v2647 = vpow.pop %v2646
      %v2648 = vmul.f32 %v2638, %v2645
      %v2649 = vmul.f32 %v2639, %v2647
      %v2650 = vsub.f32 1.0, %v2648
      %v2651 = vsub.f32 1.0, %v2649
      %v2652 = vmul.f32 %v2610, %v2650
      %v2653 = vmul.f32 %v2611, %v2651
      %v2654 = vadd.f32 %v2652, 1.0
      %v2655 = vadd.f32 %v2653, 1.0
      %v2656 = vmul.f32 %v2604, %v2654
      %v2657 = vmul.f32 %v2605, %v2655
      %2658 = vst [vmem:[#allocation3 + $0x40] sm:$0xff] %v2656
      %2659 = vst [vmem:[#allocation3 + $0x48] sm:$0xff] %v2657
      %v2660 = vld [vmem:[#allocation2 + $0x5a] sm:$0xff]
      %v2661 = vld [vmem:[#allocation2 + $0x62] sm:$0xff]
      %v2662 = vld [vmem:[#allocation2 + $0x6a] sm:$0x3]
      %v2663 = vmul.f32 %v2660, %v1793
      %v2664 = vmul.f32 %v2661, %v1793
      %v2665 = vadd.f32 %v2663, 0.0
      %v2666 = vadd.f32 %v2664, 0.0
      %v2667 = vmul.f32 %v2660, %v1801
      %v2668 = vmul.f32 %v2661, %v1801
      %v2669 = vmul.f32 %v2662, %v1801
      %v2673 = vrot.slane %v2667, 1
      %v2674 = vrot.slane %v2668, 1
      %v2675 = vsel %vm1808, %v2673, %v2674
      %v2676 = vrot.slane %v2669, 1
      %v2677 = vsel %vm1808, %v2674, %v2676
      %v2680 = vadd.f32 %v2665, %v2675
      %v2681 = vadd.f32 %v2666, %v2677
      %v2682 = vmul.f32 %v2660, %v1821
      %v2683 = vmul.f32 %v2661, %v1821
      %v2684 = vmul.f32 %v2662, %v1821
      %v2688 = vrot.slane %v2682, 2
      %v2689 = vrot.slane %v2683, 2
      %v2690 = vsel %vm1828, %v2688, %v2689
      %v2691 = vrot.slane %v2684, 2
      %v2692 = vsel %vm1828, %v2689, %v2691
      %v2695 = vadd.f32 %v2680, %v2690
      %v2696 = vadd.f32 %v2681, %v2692
      %v2697 = vld [vmem:[#allocation2 + $0x6c] sm:$0xff]
      %v2698 = vld [vmem:[#allocation2 + $0x74] sm:$0xff]
      %v2699 = vld [vmem:[#allocation2 + $0x7c] sm:$0x3]
      %v2700 = vmul.f32 %v2697, %v1844
      %v2701 = vmul.f32 %v2698, %v1844
      %v2702 = vadd.f32 %v2695, %v2700
      %v2703 = vadd.f32 %v2696, %v2701
      %v2704 = vmul.f32 %v2697, %v1852
      %v2705 = vmul.f32 %v2698, %v1852
      %v2706 = vmul.f32 %v2699, %v1852
      %v2710 = vrot.slane %v2704, 1
      %v2711 = vrot.slane %v2705, 1
      %v2712 = vsel %vm1808, %v2710, %v2711
      %v2713 = vrot.slane %v2706, 1
      %v2714 = vsel %vm1808, %v2711, %v2713
      %v2717 = vadd.f32 %v2702, %v2712
      %v2718 = vadd.f32 %v2703, %v2714
      %v2719 = vmul.f32 %v2697, %v1871
      %v2720 = vmul.f32 %v2698, %v1871
      %v2721 = vmul.f32 %v2699, %v1871
      %v2725 = vrot.slane %v2719, 2
      %v2726 = vrot.slane %v2720, 2
      %v2727 = vsel %vm1828, %v2725, %v2726
      %v2728 = vrot.slane %v2721, 2
      %v2729 = vsel %vm1828, %v2726, %v2728
      %v2732 = vadd.f32 %v2717, %v2727
      %v2733 = vadd.f32 %v2718, %v2729
      %v2734 = vld [vmem:[#allocation2 + $0x7e] sm:$0xff]
      %v2735 = vld [vmem:[#allocation2 + $0x86] sm:$0xff]
      %v2736 = vld [vmem:[#allocation2 + $0x8e] sm:$0x3]
      %v2737 = vmul.f32 %v2734, %v1893
      %v2738 = vmul.f32 %v2735, %v1893
      %v2739 = vadd.f32 %v2732, %v2737
      %v2740 = vadd.f32 %v2733, %v2738
      %v2741 = vmul.f32 %v2734, %v1901
      %v2742 = vmul.f32 %v2735, %v1901
      %v2743 = vmul.f32 %v2736, %v1901
      %v2747 = vrot.slane %v2741, 1
      %v2748 = vrot.slane %v2742, 1
      %v2749 = vsel %vm1808, %v2747, %v2748
      %v2750 = vrot.slane %v2743, 1
      %v2751 = vsel %vm1808, %v2748, %v2750
      %v2754 = vadd.f32 %v2739, %v2749
      %v2755 = vadd.f32 %v2740, %v2751
      %v2756 = vmul.f32 %v2734, %v1920
      %v2757 = vmul.f32 %v2735, %v1920
      %v2758 = vmul.f32 %v2736, %v1920
      %v2762 = vrot.slane %v2756, 2
      %v2763 = vrot.slane %v2757, 2
      %v2764 = vsel %vm1828, %v2762, %v2763
      %v2765 = vrot.slane %v2758, 2
      %v2766 = vsel %vm1828, %v2763, %v2765
      %v2769 = vadd.f32 %v2754, %v2764
      %v2770 = vadd.f32 %v2755, %v2766
      %v2771 = vmul.f32 %v2769, 0.5
      %v2772 = vmul.f32 %v2770, 0.5
      %v2773 = vmul.f32 %v2769, 0.70710677
      %v2774 = vmul.f32 %v2770, 0.70710677
      %vm2775 = vcmp.ge.f32.partialorder %v2773, 0.0
      %vm2776 = vcmp.ge.f32.partialorder %v2774, 0.0
      %v2777 = vsel %vm2775, 1.0, -1.0
      %v2778 = vsel %vm2776, 1.0, -1.0
      %v2779 = vand.u32 2147483647, %v2773
      %v2780 = vand.u32 2147483647, %v2774
      %v2781 = vmul.f32 %v2779, 0.3275911
      %v2782 = vmul.f32 %v2780, 0.3275911
      %v2783 = vadd.f32 %v2781, 1.0
      %v2784 = vadd.f32 %v2782, 1.0
      %v2785 = vrcp.pop %v2783
      %v2786 = vmul.f32 1.0, %v2785
      %v2787 = vrcp.pop %v2784
      %v2788 = vmul.f32 1.0, %v2787
      %v2789 = vmul.f32 %v2786, 1.0614054
      %v2790 = vmul.f32 %v2788, 1.0614054
      %v2791 = vadd.f32 %v2789, -1.4531521
      %v2792 = vadd.f32 %v2790, -1.4531521
      %v2793 = vmul.f32 %v2791, %v2786
      %v2794 = vmul.f32 %v2792, %v2788
      %v2795 = vadd.f32 %v2793, 1.4214138
      %v2796 = vadd.f32 %v2794, 1.4214138
      %v2797 = vmul.f32 %v2795, %v2786
      %v2798 = vmul.f32 %v2796, %v2788
      %v2799 = vadd.f32 %v2797, -0.28449672
      %v2800 = vadd.f32 %v2798, -0.28449672
      %v2801 = vmul.f32 %v2799, %v2786
      %v2802 = vmul.f32 %v2800, %v2788
      %v2803 = vadd.f32 %v2801, 0.2548296
      %v2804 = vadd.f32 %v2802, 0.2548296
      %v2805 = vmul.f32 %v2803, %v2786
      %v2806 = vmul.f32 %v2804, %v2788
      %v2807 = vsub.f32 0.0, %v2779
      %v2808 = vsub.f32 0.0, %v2780
      %v2809 = vmul.f32 %v2807, %v2779
      %v2810 = vmul.f32 %v2808, %v2780
      %v2811 = vmul.f32 %v2809, 1.442695
      %v2812 = vpow.pop %v2811
      %v2813 = vmul.f32 %v2810, 1.442695
      %v2814 = vpow.pop %v2813
      %v2815 = vmul.f32 %v2805, %v2812
      %v2816 = vmul.f32 %v2806, %v2814
      %v2817 = vsub.f32 1.0, %v2815
      %v2818 = vsub.f32 1.0, %v2816
      %v2819 = vmul.f32 %v2777, %v2817
      %v2820 = vmul.f32 %v2778, %v2818
      %v2821 = vadd.f32 %v2819, 1.0
      %v2822 = vadd.f32 %v2820, 1.0
      %v2823 = vmul.f32 %v2771, %v2821
      %v2824 = vmul.f32 %v2772, %v2822
      %2825 = vst [vmem:[#allocation3 + $0x50] sm:$0xff] %v2823
      %2826 = vst [vmem:[#allocation3 + $0x58] sm:$0xff] %v2824
      %v2827 = vld [vmem:[#allocation2 + $0x6c] sm:$0xff]
      %v2828 = vld [vmem:[#allocation2 + $0x74] sm:$0xff]
      %v2829 = vld [vmem:[#allocation2 + $0x7c] sm:$0x3]
      %v2830 = vmul.f32 %v2827, %v1793
      %v2831 = vmul.f32 %v2828, %v1793
      %v2832 = vadd.f32 %v2830, 0.0
      %v2833 = vadd.f32 %v2831, 0.0
      %v2834 = vmul.f32 %v2827, %v1801
      %v2835 = vmul.f32 %v2828, %v1801
      %v2836 = vmul.f32 %v2829, %v1801
      %v2840 = vrot.slane %v2834, 1
      %v2841 = vrot.slane %v2835, 1
      %v2842 = vsel %vm1808, %v2840, %v2841
      %v2843 = vrot.slane %v2836, 1
      %v2844 = vsel %vm1808, %v2841, %v2843
      %v2847 = vadd.f32 %v2832, %v2842
      %v2848 = vadd.f32 %v2833, %v2844
      %v2849 = vmul.f32 %v2827, %v1821
      %v2850 = vmul.f32 %v2828, %v1821
      %v2851 = vmul.f32 %v2829, %v1821
      %v2855 = vrot.slane %v2849, 2
      %v2856 = vrot.slane %v2850, 2
      %v2857 = vsel %vm1828, %v2855, %v2856
      %v2858 = vrot.slane %v2851, 2
      %v2859 = vsel %vm1828, %v2856, %v2858
      %v2862 = vadd.f32 %v2847, %v2857
      %v2863 = vadd.f32 %v2848, %v2859
      %v2864 = vld [vmem:[#allocation2 + $0x7e] sm:$0xff]
      %v2865 = vld [vmem:[#allocation2 + $0x86] sm:$0xff]
      %v2866 = vld [vmem:[#allocation2 + $0x8e] sm:$0x3]
      %v2867 = vmul.f32 %v2864, %v1844
      %v2868 = vmul.f32 %v2865, %v1844
      %v2869 = vadd.f32 %v2862, %v2867
      %v2870 = vadd.f32 %v2863, %v2868
      %v2871 = vmul.f32 %v2864, %v1852
      %v2872 = vmul.f32 %v2865, %v1852
      %v2873 = vmul.f32 %v2866, %v1852
      %v2877 = vrot.slane %v2871, 1
      %v2878 = vrot.slane %v2872, 1
      %v2879 = vsel %vm1808, %v2877, %v2878
      %v2880 = vrot.slane %v2873, 1
      %v2881 = vsel %vm1808, %v2878, %v2880
      %v2884 = vadd.f32 %v2869, %v2879
      %v2885 = vadd.f32 %v2870, %v2881
      %v2886 = vmul.f32 %v2864, %v1871
      %v2887 = vmul.f32 %v2865, %v1871
      %v2888 = vmul.f32 %v2866, %v1871
      %v2892 = vrot.slane %v2886, 2
      %v2893 = vrot.slane %v2887, 2
      %v2894 = vsel %vm1828, %v2892, %v2893
      %v2895 = vrot.slane %v2888, 2
      %v2896 = vsel %vm1828, %v2893, %v2895
      %v2899 = vadd.f32 %v2884, %v2894
      %v2900 = vadd.f32 %v2885, %v2896
      %v2901 = vld [vmem:[#allocation2 + $0x90] sm:$0xff]
      %v2902 = vld [vmem:[#allocation2 + $0x98] sm:$0xff]
      %v2903 = vld [vmem:[#allocation2 + $0xa0] sm:$0x3]
      %v2904 = vmul.f32 %v2901, %v1893
      %v2905 = vmul.f32 %v2902, %v1893
      %v2906 = vadd.f32 %v2899, %v2904
      %v2907 = vadd.f32 %v2900, %v2905
      %v2908 = vmul.f32 %v2901, %v1901
      %v2909 = vmul.f32 %v2902, %v1901
      %v2910 = vmul.f32 %v2903, %v1901
      %v2914 = vrot.slane %v2908, 1
      %v2915 = vrot.slane %v2909, 1
      %v2916 = vsel %vm1808, %v2914, %v2915
      %v2917 = vrot.slane %v2910, 1
      %v2918 = vsel %vm1808, %v2915, %v2917
      %v2921 = vadd.f32 %v2906, %v2916
      %v2922 = vadd.f32 %v2907, %v2918
      %v2923 = vmul.f32 %v2901, %v1920
      %v2924 = vmul.f32 %v2902, %v1920
      %v2925 = vmul.f32 %v2903, %v1920
      %v2929 = vrot.slane %v2923, 2
      %v2930 = vrot.slane %v2924, 2
      %v2931 = vsel %vm1828, %v2929, %v2930
      %v2932 = vrot.slane %v2925, 2
      %v2933 = vsel %vm1828, %v2930, %v2932
      %v2936 = vadd.f32 %v2921, %v2931
      %v2937 = vadd.f32 %v2922, %v2933
      %v2938 = vmul.f32 %v2936, 0.5
      %v2939 = vmul.f32 %v2937, 0.5
      %v2940 = vmul.f32 %v2936, 0.70710677
      %v2941 = vmul.f32 %v2937, 0.70710677
      %vm2942 = vcmp.ge.f32.partialorder %v2940, 0.0
      %vm2943 = vcmp.ge.f32.partialorder %v2941, 0.0
      %v2944 = vsel %vm2942, 1.0, -1.0
      %v2945 = vsel %vm2943, 1.0, -1.0
      %v2946 = vand.u32 2147483647, %v2940
      %v2947 = vand.u32 2147483647, %v2941
      %v2948 = vmul.f32 %v2946, 0.3275911
      %v2949 = vmul.f32 %v2947, 0.3275911
      %v2950 = vadd.f32 %v2948, 1.0
      %v2951 = vadd.f32 %v2949, 1.0
      %v2952 = vrcp.pop %v2950
      %v2953 = vmul.f32 1.0, %v2952
      %v2954 = vrcp.pop %v2951
      %v2955 = vmul.f32 1.0, %v2954
      %v2956 = vmul.f32 %v2953, 1.0614054
      %v2957 = vmul.f32 %v2955, 1.0614054
      %v2958 = vadd.f32 %v2956, -1.4531521
      %v2959 = vadd.f32 %v2957, -1.4531521
      %v2960 = vmul.f32 %v2958, %v2953
      %v2961 = vmul.f32 %v2959, %v2955
      %v2962 = vadd.f32 %v2960, 1.4214138
      %v2963 = vadd.f32 %v2961, 1.4214138
      %v2964 = vmul.f32 %v2962, %v2953
      %v2965 = vmul.f32 %v2963, %v2955
      %v2966 = vadd.f32 %v2964, -0.28449672
      %v2967 = vadd.f32 %v2965, -0.28449672
      %v2968 = vmul.f32 %v2966, %v2953
      %v2969 = vmul.f32 %v2967, %v2955
      %v2970 = vadd.f32 %v2968, 0.2548296
      %v2971 = vadd.f32 %v2969, 0.2548296
      %v2972 = vmul.f32 %v2970, %v2953
      %v2973 = vmul.f32 %v2971, %v2955
      %v2974 = vsub.f32 0.0, %v2946
      %v2975 = vsub.f32 0.0, %v2947
      %v2976 = vmul.f32 %v2974, %v2946
      %v2977 = vmul.f32 %v2975, %v2947
      %v2978 = vmul.f32 %v2976, 1.442695
      %v2979 = vpow.pop %v2978
      %v2980 = vmul.f32 %v2977, 1.442695
      %v2981 = vpow.pop %v2980
      %v2982 = vmul.f32 %v2972, %v2979
      %v2983 = vmul.f32 %v2973, %v2981
      %v2984 = vsub.f32 1.0, %v2982
      %v2985 = vsub.f32 1.0, %v2983
      %v2986 = vmul.f32 %v2944, %v2984
      %v2987 = vmul.f32 %v2945, %v2985
      %v2988 = vadd.f32 %v2986, 1.0
      %v2989 = vadd.f32 %v2987, 1.0
      %v2990 = vmul.f32 %v2938, %v2988
      %v2991 = vmul.f32 %v2939, %v2989
      %2992 = vst [vmem:[#allocation3 + $0x60] sm:$0xff] %v2990
      %2993 = vst [vmem:[#allocation3 + $0x68] sm:$0xff] %v2991
      %v2994 = vld [vmem:[#allocation2 + $0x7e] sm:$0xff]
      %v2995 = vld [vmem:[#allocation2 + $0x86] sm:$0xff]
      %v2996 = vld [vmem:[#allocation2 + $0x8e] sm:$0x3]
      %v2997 = vmul.f32 %v2994, %v1793
      %v2998 = vmul.f32 %v2995, %v1793
      %v2999 = vadd.f32 %v2997, 0.0
      %v3000 = vadd.f32 %v2998, 0.0
      %v3001 = vmul.f32 %v2994, %v1801
      %v3002 = vmul.f32 %v2995, %v1801
      %v3003 = vmul.f32 %v2996, %v1801
      %v3007 = vrot.slane %v3001, 1
      %v3008 = vrot.slane %v3002, 1
      %v3009 = vsel %vm1808, %v3007, %v3008
      %v3010 = vrot.slane %v3003, 1
      %v3011 = vsel %vm1808, %v3008, %v3010
      %v3014 = vadd.f32 %v2999, %v3009
      %v3015 = vadd.f32 %v3000, %v3011
      %v3016 = vmul.f32 %v2994, %v1821
      %v3017 = vmul.f32 %v2995, %v1821
      %v3018 = vmul.f32 %v2996, %v1821
      %v3022 = vrot.slane %v3016, 2
      %v3023 = vrot.slane %v3017, 2
      %v3024 = vsel %vm1828, %v3022, %v3023
      %v3025 = vrot.slane %v3018, 2
      %v3026 = vsel %vm1828, %v3023, %v3025
      %v3029 = vadd.f32 %v3014, %v3024
      %v3030 = vadd.f32 %v3015, %v3026
      %v3031 = vld [vmem:[#allocation2 + $0x90] sm:$0xff]
      %v3032 = vld [vmem:[#allocation2 + $0x98] sm:$0xff]
      %v3033 = vld [vmem:[#allocation2 + $0xa0] sm:$0x3]
      %v3034 = vmul.f32 %v3031, %v1844
      %v3035 = vmul.f32 %v3032, %v1844
      %v3036 = vadd.f32 %v3029, %v3034
      %v3037 = vadd.f32 %v3030, %v3035
      %v3038 = vmul.f32 %v3031, %v1852
      %v3039 = vmul.f32 %v3032, %v1852
      %v3040 = vmul.f32 %v3033, %v1852
      %v3044 = vrot.slane %v3038, 1
      %v3045 = vrot.slane %v3039, 1
      %v3046 = vsel %vm1808, %v3044, %v3045
      %v3047 = vrot.slane %v3040, 1
      %v3048 = vsel %vm1808, %v3045, %v3047
      %v3051 = vadd.f32 %v3036, %v3046
      %v3052 = vadd.f32 %v3037, %v3048
      %v3053 = vmul.f32 %v3031, %v1871
      %v3054 = vmul.f32 %v3032, %v1871
      %v3055 = vmul.f32 %v3033, %v1871
      %v3059 = vrot.slane %v3053, 2
      %v3060 = vrot.slane %v3054, 2
      %v3061 = vsel %vm1828, %v3059, %v3060
      %v3062 = vrot.slane %v3055, 2
      %v3063 = vsel %vm1828, %v3060, %v3062
      %v3066 = vadd.f32 %v3051, %v3061
      %v3067 = vadd.f32 %v3052, %v3063
      %v3068 = vld [vmem:[#allocation2 + $0xa2] sm:$0xff]
      %v3069 = vld [vmem:[#allocation2 + $0xaa] sm:$0xff]
      %v3070 = vld [vmem:[#allocation2 + $0xb2] sm:$0x3]
      %v3071 = vmul.f32 %v3068, %v1893
      %v3072 = vmul.f32 %v3069, %v1893
      %v3073 = vadd.f32 %v3066, %v3071
      %v3074 = vadd.f32 %v3067, %v3072
      %v3075 = vmul.f32 %v3068, %v1901
      %v3076 = vmul.f32 %v3069, %v1901
      %v3077 = vmul.f32 %v3070, %v1901
      %v3081 = vrot.slane %v3075, 1
      %v3082 = vrot.slane %v3076, 1
      %v3083 = vsel %vm1808, %v3081, %v3082
      %v3084 = vrot.slane %v3077, 1
      %v3085 = vsel %vm1808, %v3082, %v3084
      %v3088 = vadd.f32 %v3073, %v3083
      %v3089 = vadd.f32 %v3074, %v3085
      %v3090 = vmul.f32 %v3068, %v1920
      %v3091 = vmul.f32 %v3069, %v1920
      %v3092 = vmul.f32 %v3070, %v1920
      %v3096 = vrot.slane %v3090, 2
      %v3097 = vrot.slane %v3091, 2
      %v3098 = vsel %vm1828, %v3096, %v3097
      %v3099 = vrot.slane %v3092, 2
      %v3100 = vsel %vm1828, %v3097, %v3099
      %v3103 = vadd.f32 %v3088, %v3098
      %v3104 = vadd.f32 %v3089, %v3100
      %v3105 = vmul.f32 %v3103, 0.5
      %v3106 = vmul.f32 %v3104, 0.5
      %v3107 = vmul.f32 %v3103, 0.70710677
      %v3108 = vmul.f32 %v3104, 0.70710677
      %vm3109 = vcmp.ge.f32.partialorder %v3107, 0.0
      %vm3110 = vcmp.ge.f32.partialorder %v3108, 0.0
      %v3111 = vsel %vm3109, 1.0, -1.0
      %v3112 = vsel %vm3110, 1.0, -1.0
      %v3113 = vand.u32 2147483647, %v3107
      %v3114 = vand.u32 2147483647, %v3108
      %v3115 = vmul.f32 %v3113, 0.3275911
      %v3116 = vmul.f32 %v3114, 0.3275911
      %v3117 = vadd.f32 %v3115, 1.0
      %v3118 = vadd.f32 %v3116, 1.0
      %v3119 = vrcp.pop %v3117
      %v3120 = vmul.f32 1.0, %v3119
      %v3121 = vrcp.pop %v3118
      %v3122 = vmul.f32 1.0, %v3121
      %v3123 = vmul.f32 %v3120, 1.0614054
      %v3124 = vmul.f32 %v3122, 1.0614054
      %v3125 = vadd.f32 %v3123, -1.4531521
      %v3126 = vadd.f32 %v3124, -1.4531521
      %v3127 = vmul.f32 %v3125, %v3120
      %v3128 = vmul.f32 %v3126, %v3122
      %v3129 = vadd.f32 %v3127, 1.4214138
      %v3130 = vadd.f32 %v3128, 1.4214138
      %v3131 = vmul.f32 %v3129, %v3120
      %v3132 = vmul.f32 %v3130, %v3122
      %v3133 = vadd.f32 %v3131, -0.28449672
      %v3134 = vadd.f32 %v3132, -0.28449672
      %v3135 = vmul.f32 %v3133, %v3120
      %v3136 = vmul.f32 %v3134, %v3122
      %v3137 = vadd.f32 %v3135, 0.2548296
      %v3138 = vadd.f32 %v3136, 0.2548296
      %v3139 = vmul.f32 %v3137, %v3120
      %v3140 = vmul.f32 %v3138, %v3122
      %v3141 = vsub.f32 0.0, %v3113
      %v3142 = vsub.f32 0.0, %v3114
      %v3143 = vmul.f32 %v3141, %v3113
      %v3144 = vmul.f32 %v3142, %v3114
      %v3145 = vmul.f32 %v3143, 1.442695
      %v3146 = vpow.pop %v3145
      %v3147 = vmul.f32 %v3144, 1.442695
      %v3148 = vpow.pop %v3147
      %v3149 = vmul.f32 %v3139, %v3146
      %v3150 = vmul.f32 %v3140, %v3148
      %v3151 = vsub.f32 1.0, %v3149
      %v3152 = vsub.f32 1.0, %v3150
      %v3153 = vmul.f32 %v3111, %v3151
      %v3154 = vmul.f32 %v3112, %v3152
      %v3155 = vadd.f32 %v3153, 1.0
      %v3156 = vadd.f32 %v3154, 1.0
      %v3157 = vmul.f32 %v3105, %v3155
      %v3158 = vmul.f32 %v3106, %v3156
      %3159 = vst [vmem:[#allocation3 + $0x70] sm:$0xff] %v3157
      %3160 = vst [vmem:[#allocation3 + $0x78] sm:$0xff] %v3158
      %v3161 = vld [vmem:[#allocation2 + $0x90] sm:$0xff]
      %v3162 = vld [vmem:[#allocation2 + $0x98] sm:$0xff]
      %v3163 = vld [vmem:[#allocation2 + $0xa0] sm:$0x3]
      %v3164 = vmul.f32 %v3161, %v1793
      %v3165 = vmul.f32 %v3162, %v1793
      %v3166 = vadd.f32 %v3164, 0.0
      %v3167 = vadd.f32 %v3165, 0.0
      %v3168 = vmul.f32 %v3161, %v1801
      %v3169 = vmul.f32 %v3162, %v1801
      %v3170 = vmul.f32 %v3163, %v1801
      %v3174 = vrot.slane %v3168, 1
      %v3175 = vrot.slane %v3169, 1
      %v3176 = vsel %vm1808, %v3174, %v3175
      %v3177 = vrot.slane %v3170, 1
      %v3178 = vsel %vm1808, %v3175, %v3177
      %v3181 = vadd.f32 %v3166, %v3176
      %v3182 = vadd.f32 %v3167, %v3178
      %v3183 = vmul.f32 %v3161, %v1821
      %v3184 = vmul.f32 %v3162, %v1821
      %v3185 = vmul.f32 %v3163, %v1821
      %v3189 = vrot.slane %v3183, 2
      %v3190 = vrot.slane %v3184, 2
      %v3191 = vsel %vm1828, %v3189, %v3190
      %v3192 = vrot.slane %v3185, 2
      %v3193 = vsel %vm1828, %v3190, %v3192
      %v3196 = vadd.f32 %v3181, %v3191
      %v3197 = vadd.f32 %v3182, %v3193
      %v3198 = vld [vmem:[#allocation2 + $0xa2] sm:$0xff]
      %v3199 = vld [vmem:[#allocation2 + $0xaa] sm:$0xff]
      %v3200 = vld [vmem:[#allocation2 + $0xb2] sm:$0x3]
      %v3201 = vmul.f32 %v3198, %v1844
      %v3202 = vmul.f32 %v3199, %v1844
      %v3203 = vadd.f32 %v3196, %v3201
      %v3204 = vadd.f32 %v3197, %v3202
      %v3205 = vmul.f32 %v3198, %v1852
      %v3206 = vmul.f32 %v3199, %v1852
      %v3207 = vmul.f32 %v3200, %v1852
      %v3211 = vrot.slane %v3205, 1
      %v3212 = vrot.slane %v3206, 1
      %v3213 = vsel %vm1808, %v3211, %v3212
      %v3214 = vrot.slane %v3207, 1
      %v3215 = vsel %vm1808, %v3212, %v3214
      %v3218 = vadd.f32 %v3203, %v3213
      %v3219 = vadd.f32 %v3204, %v3215
      %v3220 = vmul.f32 %v3198, %v1871
      %v3221 = vmul.f32 %v3199, %v1871
      %v3222 = vmul.f32 %v3200, %v1871
      %v3226 = vrot.slane %v3220, 2
      %v3227 = vrot.slane %v3221, 2
      %v3228 = vsel %vm1828, %v3226, %v3227
      %v3229 = vrot.slane %v3222, 2
      %v3230 = vsel %vm1828, %v3227, %v3229
      %v3233 = vadd.f32 %v3218, %v3228
      %v3234 = vadd.f32 %v3219, %v3230
      %v3235 = vld [vmem:[#allocation2 + $0xb4] sm:$0xff]
      %v3236 = vld [vmem:[#allocation2 + $0xbc] sm:$0xff]
      %v3237 = vld [vmem:[#allocation2 + $0xc4] sm:$0x3]
      %v3238 = vmul.f32 %v3235, %v1893
      %v3239 = vmul.f32 %v3236, %v1893
      %v3240 = vadd.f32 %v3233, %v3238
      %v3241 = vadd.f32 %v3234, %v3239
      %v3242 = vmul.f32 %v3235, %v1901
      %v3243 = vmul.f32 %v3236, %v1901
      %v3244 = vmul.f32 %v3237, %v1901
      %v3248 = vrot.slane %v3242, 1
      %v3249 = vrot.slane %v3243, 1
      %v3250 = vsel %vm1808, %v3248, %v3249
      %v3251 = vrot.slane %v3244, 1
      %v3252 = vsel %vm1808, %v3249, %v3251
      %v3255 = vadd.f32 %v3240, %v3250
      %v3256 = vadd.f32 %v3241, %v3252
      %v3257 = vmul.f32 %v3235, %v1920
      %v3258 = vmul.f32 %v3236, %v1920
      %v3259 = vmul.f32 %v3237, %v1920
      %v3263 = vrot.slane %v3257, 2
      %v3264 = vrot.slane %v3258, 2
      %v3265 = vsel %vm1828, %v3263, %v3264
      %v3266 = vrot.slane %v3259, 2
      %v3267 = vsel %vm1828, %v3264, %v3266
      %v3270 = vadd.f32 %v3255, %v3265
      %v3271 = vadd.f32 %v3256, %v3267
      %v3272 = vmul.f32 %v3270, 0.5
      %v3273 = vmul.f32 %v3271, 0.5
      %v3274 = vmul.f32 %v3270, 0.70710677
      %v3275 = vmul.f32 %v3271, 0.70710677
      %vm3276 = vcmp.ge.f32.partialorder %v3274, 0.0
      %vm3277 = vcmp.ge.f32.partialorder %v3275, 0.0
      %v3278 = vsel %vm3276, 1.0, -1.0
      %v3279 = vsel %vm3277, 1.0, -1.0
      %v3280 = vand.u32 2147483647, %v3274
      %v3281 = vand.u32 2147483647, %v3275
      %v3282 = vmul.f32 %v3280, 0.3275911
      %v3283 = vmul.f32 %v3281, 0.3275911
      %v3284 = vadd.f32 %v3282, 1.0
      %v3285 = vadd.f32 %v3283, 1.0
      %v3286 = vrcp.pop %v3284
      %v3287 = vmul.f32 1.0, %v3286
      %v3288 = vrcp.pop %v3285
      %v3289 = vmul.f32 1.0, %v3288
      %v3290 = vmul.f32 %v3287, 1.0614054
      %v3291 = vmul.f32 %v3289, 1.0614054
      %v3292 = vadd.f32 %v3290, -1.4531521
      %v3293 = vadd.f32 %v3291, -1.4531521
      %v3294 = vmul.f32 %v3292, %v3287
      %v3295 = vmul.f32 %v3293, %v3289
      %v3296 = vadd.f32 %v3294, 1.4214138
      %v3297 = vadd.f32 %v3295, 1.4214138
      %v3298 = vmul.f32 %v3296, %v3287
      %v3299 = vmul.f32 %v3297, %v3289
      %v3300 = vadd.f32 %v3298, -0.28449672
      %v3301 = vadd.f32 %v3299, -0.28449672
      %v3302 = vmul.f32 %v3300, %v3287
      %v3303 = vmul.f32 %v3301, %v3289
      %v3304 = vadd.f32 %v3302, 0.2548296
      %v3305 = vadd.f32 %v3303, 0.2548296
      %v3306 = vmul.f32 %v3304, %v3287
      %v3307 = vmul.f32 %v3305, %v3289
      %v3308 = vsub.f32 0.0, %v3280
      %v3309 = vsub.f32 0.0, %v3281
      %v3310 = vmul.f32 %v3308, %v3280
      %v3311 = vmul.f32 %v3309, %v3281
      %v3312 = vmul.f32 %v3310, 1.442695
      %v3313 = vpow.pop %v3312
      %v3314 = vmul.f32 %v3311, 1.442695
      %v3315 = vpow.pop %v3314
      %v3316 = vmul.f32 %v3306, %v3313
      %v3317 = vmul.f32 %v3307, %v3315
      %v3318 = vsub.f32 1.0, %v3316
      %v3319 = vsub.f32 1.0, %v3317
      %v3320 = vmul.f32 %v3278, %v3318
      %v3321 = vmul.f32 %v3279, %v3319
      %v3322 = vadd.f32 %v3320, 1.0
      %v3323 = vadd.f32 %v3321, 1.0
      %v3324 = vmul.f32 %v3272, %v3322
      %v3325 = vmul.f32 %v3273, %v3323
      %3326 = vst [vmem:[#allocation3 + $0x80] sm:$0xff] %v3324
      %3327 = vst [vmem:[#allocation3 + $0x88] sm:$0xff] %v3325
      %v3328 = vld [vmem:[#allocation2 + $0xa2] sm:$0xff]
      %v3329 = vld [vmem:[#allocation2 + $0xaa] sm:$0xff]
      %v3330 = vld [vmem:[#allocation2 + $0xb2] sm:$0x3]
      %v3331 = vmul.f32 %v3328, %v1793
      %v3332 = vmul.f32 %v3329, %v1793
      %v3333 = vadd.f32 %v3331, 0.0
      %v3334 = vadd.f32 %v3332, 0.0
      %v3335 = vmul.f32 %v3328, %v1801
      %v3336 = vmul.f32 %v3329, %v1801
      %v3337 = vmul.f32 %v3330, %v1801
      %v3341 = vrot.slane %v3335, 1
      %v3342 = vrot.slane %v3336, 1
      %v3343 = vsel %vm1808, %v3341, %v3342
      %v3344 = vrot.slane %v3337, 1
      %v3345 = vsel %vm1808, %v3342, %v3344
      %v3348 = vadd.f32 %v3333, %v3343
      %v3349 = vadd.f32 %v3334, %v3345
      %v3350 = vmul.f32 %v3328, %v1821
      %v3351 = vmul.f32 %v3329, %v1821
      %v3352 = vmul.f32 %v3330, %v1821
      %v3356 = vrot.slane %v3350, 2
      %v3357 = vrot.slane %v3351, 2
      %v3358 = vsel %vm1828, %v3356, %v3357
      %v3359 = vrot.slane %v3352, 2
      %v3360 = vsel %vm1828, %v3357, %v3359
      %v3363 = vadd.f32 %v3348, %v3358
      %v3364 = vadd.f32 %v3349, %v3360
      %v3365 = vld [vmem:[#allocation2 + $0xb4] sm:$0xff]
      %v3366 = vld [vmem:[#allocation2 + $0xbc] sm:$0xff]
      %v3367 = vld [vmem:[#allocation2 + $0xc4] sm:$0x3]
      %v3368 = vmul.f32 %v3365, %v1844
      %v3369 = vmul.f32 %v3366, %v1844
      %v3370 = vadd.f32 %v3363, %v3368
      %v3371 = vadd.f32 %v3364, %v3369
      %v3372 = vmul.f32 %v3365, %v1852
      %v3373 = vmul.f32 %v3366, %v1852
      %v3374 = vmul.f32 %v3367, %v1852
      %v3378 = vrot.slane %v3372, 1
      %v3379 = vrot.slane %v3373, 1
      %v3380 = vsel %vm1808, %v3378, %v3379
      %v3381 = vrot.slane %v3374, 1
      %v3382 = vsel %vm1808, %v3379, %v3381
      %v3385 = vadd.f32 %v3370, %v3380
      %v3386 = vadd.f32 %v3371, %v3382
      %v3387 = vmul.f32 %v3365, %v1871
      %v3388 = vmul.f32 %v3366, %v1871
      %v3389 = vmul.f32 %v3367, %v1871
      %v3393 = vrot.slane %v3387, 2
      %v3394 = vrot.slane %v3388, 2
      %v3395 = vsel %vm1828, %v3393, %v3394
      %v3396 = vrot.slane %v3389, 2
      %v3397 = vsel %vm1828, %v3394, %v3396
      %v3400 = vadd.f32 %v3385, %v3395
      %v3401 = vadd.f32 %v3386, %v3397
      %v3402 = vld [vmem:[#allocation2 + $0xc6] sm:$0xff]
      %v3403 = vld [vmem:[#allocation2 + $0xce] sm:$0xff]
      %v3404 = vld [vmem:[#allocation2 + $0xd6] sm:$0x3]
      %v3405 = vmul.f32 %v3402, %v1893
      %v3406 = vmul.f32 %v3403, %v1893
      %v3407 = vadd.f32 %v3400, %v3405
      %v3408 = vadd.f32 %v3401, %v3406
      %v3409 = vmul.f32 %v3402, %v1901
      %v3410 = vmul.f32 %v3403, %v1901
      %v3411 = vmul.f32 %v3404, %v1901
      %v3415 = vrot.slane %v3409, 1
      %v3416 = vrot.slane %v3410, 1
      %v3417 = vsel %vm1808, %v3415, %v3416
      %v3418 = vrot.slane %v3411, 1
      %v3419 = vsel %vm1808, %v3416, %v3418
      %v3422 = vadd.f32 %v3407, %v3417
      %v3423 = vadd.f32 %v3408, %v3419
      %v3424 = vmul.f32 %v3402, %v1920
      %v3425 = vmul.f32 %v3403, %v1920
      %v3426 = vmul.f32 %v3404, %v1920
      %v3430 = vrot.slane %v3424, 2
      %v3431 = vrot.slane %v3425, 2
      %v3432 = vsel %vm1828, %v3430, %v3431
      %v3433 = vrot.slane %v3426, 2
      %v3434 = vsel %vm1828, %v3431, %v3433
      %v3437 = vadd.f32 %v3422, %v3432
      %v3438 = vadd.f32 %v3423, %v3434
      %v3439 = vmul.f32 %v3437, 0.5
      %v3440 = vmul.f32 %v3438, 0.5
      %v3441 = vmul.f32 %v3437, 0.70710677
      %v3442 = vmul.f32 %v3438, 0.70710677
      %vm3443 = vcmp.ge.f32.partialorder %v3441, 0.0
      %vm3444 = vcmp.ge.f32.partialorder %v3442, 0.0
      %v3445 = vsel %vm3443, 1.0, -1.0
      %v3446 = vsel %vm3444, 1.0, -1.0
      %v3447 = vand.u32 2147483647, %v3441
      %v3448 = vand.u32 2147483647, %v3442
      %v3449 = vmul.f32 %v3447, 0.3275911
      %v3450 = vmul.f32 %v3448, 0.3275911
      %v3451 = vadd.f32 %v3449, 1.0
      %v3452 = vadd.f32 %v3450, 1.0
      %v3453 = vrcp.pop %v3451
      %v3454 = vmul.f32 1.0, %v3453
      %v3455 = vrcp.pop %v3452
      %v3456 = vmul.f32 1.0, %v3455
      %v3457 = vmul.f32 %v3454, 1.0614054
      %v3458 = vmul.f32 %v3456, 1.0614054
      %v3459 = vadd.f32 %v3457, -1.4531521
      %v3460 = vadd.f32 %v3458, -1.4531521
      %v3461 = vmul.f32 %v3459, %v3454
      %v3462 = vmul.f32 %v3460, %v3456
      %v3463 = vadd.f32 %v3461, 1.4214138
      %v3464 = vadd.f32 %v3462, 1.4214138
      %v3465 = vmul.f32 %v3463, %v3454
      %v3466 = vmul.f32 %v3464, %v3456
      %v3467 = vadd.f32 %v3465, -0.28449672
      %v3468 = vadd.f32 %v3466, -0.28449672
      %v3469 = vmul.f32 %v3467, %v3454
      %v3470 = vmul.f32 %v3468, %v3456
      %v3471 = vadd.f32 %v3469, 0.2548296
      %v3472 = vadd.f32 %v3470, 0.2548296
      %v3473 = vmul.f32 %v3471, %v3454
      %v3474 = vmul.f32 %v3472, %v3456
      %v3475 = vsub.f32 0.0, %v3447
      %v3476 = vsub.f32 0.0, %v3448
      %v3477 = vmul.f32 %v3475, %v3447
      %v3478 = vmul.f32 %v3476, %v3448
      %v3479 = vmul.f32 %v3477, 1.442695
      %v3480 = vpow.pop %v3479
      %v3481 = vmul.f32 %v3478, 1.442695
      %v3482 = vpow.pop %v3481
      %v3483 = vmul.f32 %v3473, %v3480
      %v3484 = vmul.f32 %v3474, %v3482
      %v3485 = vsub.f32 1.0, %v3483
      %v3486 = vsub.f32 1.0, %v3484
      %v3487 = vmul.f32 %v3445, %v3485
      %v3488 = vmul.f32 %v3446, %v3486
      %v3489 = vadd.f32 %v3487, 1.0
      %v3490 = vadd.f32 %v3488, 1.0
      %v3491 = vmul.f32 %v3439, %v3489
      %v3492 = vmul.f32 %v3440, %v3490
      %3493 = vst [vmem:[#allocation3 + $0x90] sm:$0xff] %v3491
      %3494 = vst [vmem:[#allocation3 + $0x98] sm:$0xff] %v3492
      %v3495 = vld [vmem:[#allocation2 + $0xb4] sm:$0xff]
      %v3496 = vld [vmem:[#allocation2 + $0xbc] sm:$0xff]
      %v3497 = vld [vmem:[#allocation2 + $0xc4] sm:$0x3]
      %v3498 = vmul.f32 %v3495, %v1793
      %v3499 = vmul.f32 %v3496, %v1793
      %v3500 = vadd.f32 %v3498, 0.0
      %v3501 = vadd.f32 %v3499, 0.0
      %v3502 = vmul.f32 %v3495, %v1801
      %v3503 = vmul.f32 %v3496, %v1801
      %v3504 = vmul.f32 %v3497, %v1801
      %v3508 = vrot.slane %v3502, 1
      %v3509 = vrot.slane %v3503, 1
      %v3510 = vsel %vm1808, %v3508, %v3509
      %v3511 = vrot.slane %v3504, 1
      %v3512 = vsel %vm1808, %v3509, %v3511
      %v3515 = vadd.f32 %v3500, %v3510
      %v3516 = vadd.f32 %v3501, %v3512
      %v3517 = vmul.f32 %v3495, %v1821
      %v3518 = vmul.f32 %v3496, %v1821
      %v3519 = vmul.f32 %v3497, %v1821
      %v3523 = vrot.slane %v3517, 2
      %v3524 = vrot.slane %v3518, 2
      %v3525 = vsel %vm1828, %v3523, %v3524
      %v3526 = vrot.slane %v3519, 2
      %v3527 = vsel %vm1828, %v3524, %v3526
      %v3530 = vadd.f32 %v3515, %v3525
      %v3531 = vadd.f32 %v3516, %v3527
      %v3532 = vld [vmem:[#allocation2 + $0xc6] sm:$0xff]
      %v3533 = vld [vmem:[#allocation2 + $0xce] sm:$0xff]
      %v3534 = vld [vmem:[#allocation2 + $0xd6] sm:$0x3]
      %v3535 = vmul.f32 %v3532, %v1844
      %v3536 = vmul.f32 %v3533, %v1844
      %v3537 = vadd.f32 %v3530, %v3535
      %v3538 = vadd.f32 %v3531, %v3536
      %v3539 = vmul.f32 %v3532, %v1852
      %v3540 = vmul.f32 %v3533, %v1852
      %v3541 = vmul.f32 %v3534, %v1852
      %v3545 = vrot.slane %v3539, 1
      %v3546 = vrot.slane %v3540, 1
      %v3547 = vsel %vm1808, %v3545, %v3546
      %v3548 = vrot.slane %v3541, 1
      %v3549 = vsel %vm1808, %v3546, %v3548
      %v3552 = vadd.f32 %v3537, %v3547
      %v3553 = vadd.f32 %v3538, %v3549
      %v3554 = vmul.f32 %v3532, %v1871
      %v3555 = vmul.f32 %v3533, %v1871
      %v3556 = vmul.f32 %v3534, %v1871
      %v3560 = vrot.slane %v3554, 2
      %v3561 = vrot.slane %v3555, 2
      %v3562 = vsel %vm1828, %v3560, %v3561
      %v3563 = vrot.slane %v3556, 2
      %v3564 = vsel %vm1828, %v3561, %v3563
      %v3567 = vadd.f32 %v3552, %v3562
      %v3568 = vadd.f32 %v3553, %v3564
      %v3569 = vld [vmem:[#allocation2 + $0xd8] sm:$0xff]
      %v3570 = vld [vmem:[#allocation2 + $0xe0] sm:$0xff]
      %v3571 = vld [vmem:[#allocation2 + $0xe8] sm:$0x3]
      %v3572 = vmul.f32 %v3569, %v1893
      %v3573 = vmul.f32 %v3570, %v1893
      %v3574 = vadd.f32 %v3567, %v3572
      %v3575 = vadd.f32 %v3568, %v3573
      %v3576 = vmul.f32 %v3569, %v1901
      %v3577 = vmul.f32 %v3570, %v1901
      %v3578 = vmul.f32 %v3571, %v1901
      %v3582 = vrot.slane %v3576, 1
      %v3583 = vrot.slane %v3577, 1
      %v3584 = vsel %vm1808, %v3582, %v3583
      %v3585 = vrot.slane %v3578, 1
      %v3586 = vsel %vm1808, %v3583, %v3585
      %v3589 = vadd.f32 %v3574, %v3584
      %v3590 = vadd.f32 %v3575, %v3586
      %v3591 = vmul.f32 %v3569, %v1920
      %v3592 = vmul.f32 %v3570, %v1920
      %v3593 = vmul.f32 %v3571, %v1920
      %v3597 = vrot.slane %v3591, 2
      %v3598 = vrot.slane %v3592, 2
      %v3599 = vsel %vm1828, %v3597, %v3598
      %v3600 = vrot.slane %v3593, 2
      %v3601 = vsel %vm1828, %v3598, %v3600
      %v3604 = vadd.f32 %v3589, %v3599
      %v3605 = vadd.f32 %v3590, %v3601
      %v3606 = vmul.f32 %v3604, 0.5
      %v3607 = vmul.f32 %v3605, 0.5
      %v3608 = vmul.f32 %v3604, 0.70710677
      %v3609 = vmul.f32 %v3605, 0.70710677
      %vm3610 = vcmp.ge.f32.partialorder %v3608, 0.0
      %vm3611 = vcmp.ge.f32.partialorder %v3609, 0.0
      %v3612 = vsel %vm3610, 1.0, -1.0
      %v3613 = vsel %vm3611, 1.0, -1.0
      %v3614 = vand.u32 2147483647, %v3608
      %v3615 = vand.u32 2147483647, %v3609
      %v3616 = vmul.f32 %v3614, 0.3275911
      %v3617 = vmul.f32 %v3615, 0.3275911
      %v3618 = vadd.f32 %v3616, 1.0
      %v3619 = vadd.f32 %v3617, 1.0
      %v3620 = vrcp.pop %v3618
      %v3621 = vmul.f32 1.0, %v3620
      %v3622 = vrcp.pop %v3619
      %v3623 = vmul.f32 1.0, %v3622
      %v3624 = vmul.f32 %v3621, 1.0614054
      %v3625 = vmul.f32 %v3623, 1.0614054
      %v3626 = vadd.f32 %v3624, -1.4531521
      %v3627 = vadd.f32 %v3625, -1.4531521
      %v3628 = vmul.f32 %v3626, %v3621
      %v3629 = vmul.f32 %v3627, %v3623
      %v3630 = vadd.f32 %v3628, 1.4214138
      %v3631 = vadd.f32 %v3629, 1.4214138
      %v3632 = vmul.f32 %v3630, %v3621
      %v3633 = vmul.f32 %v3631, %v3623
      %v3634 = vadd.f32 %v3632, -0.28449672
      %v3635 = vadd.f32 %v3633, -0.28449672
      %v3636 = vmul.f32 %v3634, %v3621
      %v3637 = vmul.f32 %v3635, %v3623
      %v3638 = vadd.f32 %v3636, 0.2548296
      %v3639 = vadd.f32 %v3637, 0.2548296
      %v3640 = vmul.f32 %v3638, %v3621
      %v3641 = vmul.f32 %v3639, %v3623
      %v3642 = vsub.f32 0.0, %v3614
      %v3643 = vsub.f32 0.0, %v3615
      %v3644 = vmul.f32 %v3642, %v3614
      %v3645 = vmul.f32 %v3643, %v3615
      %v3646 = vmul.f32 %v3644, 1.442695
      %v3647 = vpow.pop %v3646
      %v3648 = vmul.f32 %v3645, 1.442695
      %v3649 = vpow.pop %v3648
      %v3650 = vmul.f32 %v3640, %v3647
      %v3651 = vmul.f32 %v3641, %v3649
      %v3652 = vsub.f32 1.0, %v3650
      %v3653 = vsub.f32 1.0, %v3651
      %v3654 = vmul.f32 %v3612, %v3652
      %v3655 = vmul.f32 %v3613, %v3653
      %v3656 = vadd.f32 %v3654, 1.0
      %v3657 = vadd.f32 %v3655, 1.0
      %v3658 = vmul.f32 %v3606, %v3656
      %v3659 = vmul.f32 %v3607, %v3657
      %3660 = vst [vmem:[#allocation3 + $0xa0] sm:$0xff] %v3658
      %3661 = vst [vmem:[#allocation3 + $0xa8] sm:$0xff] %v3659
      %v3662 = vld [vmem:[#allocation2 + $0xc6] sm:$0xff]
      %v3663 = vld [vmem:[#allocation2 + $0xce] sm:$0xff]
      %v3664 = vld [vmem:[#allocation2 + $0xd6] sm:$0x3]
      %v3665 = vmul.f32 %v3662, %v1793
      %v3666 = vmul.f32 %v3663, %v1793
      %v3667 = vadd.f32 %v3665, 0.0
      %v3668 = vadd.f32 %v3666, 0.0
      %v3669 = vmul.f32 %v3662, %v1801
      %v3670 = vmul.f32 %v3663, %v1801
      %v3671 = vmul.f32 %v3664, %v1801
      %v3675 = vrot.slane %v3669, 1
      %v3676 = vrot.slane %v3670, 1
      %v3677 = vsel %vm1808, %v3675, %v3676
      %v3678 = vrot.slane %v3671, 1
      %v3679 = vsel %vm1808, %v3676, %v3678
      %v3682 = vadd.f32 %v3667, %v3677
      %v3683 = vadd.f32 %v3668, %v3679
      %v3684 = vmul.f32 %v3662, %v1821
      %v3685 = vmul.f32 %v3663, %v1821
      %v3686 = vmul.f32 %v3664, %v1821
      %v3690 = vrot.slane %v3684, 2
      %v3691 = vrot.slane %v3685, 2
      %v3692 = vsel %vm1828, %v3690, %v3691
      %v3693 = vrot.slane %v3686, 2
      %v3694 = vsel %vm1828, %v3691, %v3693
      %v3697 = vadd.f32 %v3682, %v3692
      %v3698 = vadd.f32 %v3683, %v3694
      %v3699 = vld [vmem:[#allocation2 + $0xd8] sm:$0xff]
      %v3700 = vld [vmem:[#allocation2 + $0xe0] sm:$0xff]
      %v3701 = vld [vmem:[#allocation2 + $0xe8] sm:$0x3]
      %v3702 = vmul.f32 %v3699, %v1844
      %v3703 = vmul.f32 %v3700, %v1844
      %v3704 = vadd.f32 %v3697, %v3702
      %v3705 = vadd.f32 %v3698, %v3703
      %v3706 = vmul.f32 %v3699, %v1852
      %v3707 = vmul.f32 %v3700, %v1852
      %v3708 = vmul.f32 %v3701, %v1852
      %v3712 = vrot.slane %v3706, 1
      %v3713 = vrot.slane %v3707, 1
      %v3714 = vsel %vm1808, %v3712, %v3713
      %v3715 = vrot.slane %v3708, 1
      %v3716 = vsel %vm1808, %v3713, %v3715
      %v3719 = vadd.f32 %v3704, %v3714
      %v3720 = vadd.f32 %v3705, %v3716
      %v3721 = vmul.f32 %v3699, %v1871
      %v3722 = vmul.f32 %v3700, %v1871
      %v3723 = vmul.f32 %v3701, %v1871
      %v3727 = vrot.slane %v3721, 2
      %v3728 = vrot.slane %v3722, 2
      %v3729 = vsel %vm1828, %v3727, %v3728
      %v3730 = vrot.slane %v3723, 2
      %v3731 = vsel %vm1828, %v3728, %v3730
      %v3734 = vadd.f32 %v3719, %v3729
      %v3735 = vadd.f32 %v3720, %v3731
      %v3736 = vld [vmem:[#allocation2 + $0xea] sm:$0xff]
      %v3737 = vld [vmem:[#allocation2 + $0xf2] sm:$0xff]
      %v3738 = vld [vmem:[#allocation2 + $0xfa] sm:$0x3]
      %v3739 = vmul.f32 %v3736, %v1893
      %v3740 = vmul.f32 %v3737, %v1893
      %v3741 = vadd.f32 %v3734, %v3739
      %v3742 = vadd.f32 %v3735, %v3740
      %v3743 = vmul.f32 %v3736, %v1901
      %v3744 = vmul.f32 %v3737, %v1901
      %v3745 = vmul.f32 %v3738, %v1901
      %v3749 = vrot.slane %v3743, 1
      %v3750 = vrot.slane %v3744, 1
      %v3751 = vsel %vm1808, %v3749, %v3750
      %v3752 = vrot.slane %v3745, 1
      %v3753 = vsel %vm1808, %v3750, %v3752
      %v3756 = vadd.f32 %v3741, %v3751
      %v3757 = vadd.f32 %v3742, %v3753
      %v3758 = vmul.f32 %v3736, %v1920
      %v3759 = vmul.f32 %v3737, %v1920
      %v3760 = vmul.f32 %v3738, %v1920
      %v3764 = vrot.slane %v3758, 2
      %v3765 = vrot.slane %v3759, 2
      %v3766 = vsel %vm1828, %v3764, %v3765
      %v3767 = vrot.slane %v3760, 2
      %v3768 = vsel %vm1828, %v3765, %v3767
      %v3771 = vadd.f32 %v3756, %v3766
      %v3772 = vadd.f32 %v3757, %v3768
      %v3773 = vmul.f32 %v3771, 0.5
      %v3774 = vmul.f32 %v3772, 0.5
      %v3775 = vmul.f32 %v3771, 0.70710677
      %v3776 = vmul.f32 %v3772, 0.70710677
      %vm3777 = vcmp.ge.f32.partialorder %v3775, 0.0
      %vm3778 = vcmp.ge.f32.partialorder %v3776, 0.0
      %v3779 = vsel %vm3777, 1.0, -1.0
      %v3780 = vsel %vm3778, 1.0, -1.0
      %v3781 = vand.u32 2147483647, %v3775
      %v3782 = vand.u32 2147483647, %v3776
      %v3783 = vmul.f32 %v3781, 0.3275911
      %v3784 = vmul.f32 %v3782, 0.3275911
      %v3785 = vadd.f32 %v3783, 1.0
      %v3786 = vadd.f32 %v3784, 1.0
      %v3787 = vrcp.pop %v3785
      %v3788 = vmul.f32 1.0, %v3787
      %v3789 = vrcp.pop %v3786
      %v3790 = vmul.f32 1.0, %v3789
      %v3791 = vmul.f32 %v3788, 1.0614054
      %v3792 = vmul.f32 %v3790, 1.0614054
      %v3793 = vadd.f32 %v3791, -1.4531521
      %v3794 = vadd.f32 %v3792, -1.4531521
      %v3795 = vmul.f32 %v3793, %v3788
      %v3796 = vmul.f32 %v3794, %v3790
      %v3797 = vadd.f32 %v3795, 1.4214138
      %v3798 = vadd.f32 %v3796, 1.4214138
      %v3799 = vmul.f32 %v3797, %v3788
      %v3800 = vmul.f32 %v3798, %v3790
      %v3801 = vadd.f32 %v3799, -0.28449672
      %v3802 = vadd.f32 %v3800, -0.28449672
      %v3803 = vmul.f32 %v3801, %v3788
      %v3804 = vmul.f32 %v3802, %v3790
      %v3805 = vadd.f32 %v3803, 0.2548296
      %v3806 = vadd.f32 %v3804, 0.2548296
      %v3807 = vmul.f32 %v3805, %v3788
      %v3808 = vmul.f32 %v3806, %v3790
      %v3809 = vsub.f32 0.0, %v3781
      %v3810 = vsub.f32 0.0, %v3782
      %v3811 = vmul.f32 %v3809, %v3781
      %v3812 = vmul.f32 %v3810, %v3782
      %v3813 = vmul.f32 %v3811, 1.442695
      %v3814 = vpow.pop %v3813
      %v3815 = vmul.f32 %v3812, 1.442695
      %v3816 = vpow.pop %v3815
      %v3817 = vmul.f32 %v3807, %v3814
      %v3818 = vmul.f32 %v3808, %v3816
      %v3819 = vsub.f32 1.0, %v3817
      %v3820 = vsub.f32 1.0, %v3818
      %v3821 = vmul.f32 %v3779, %v3819
      %v3822 = vmul.f32 %v3780, %v3820
      %v3823 = vadd.f32 %v3821, 1.0
      %v3824 = vadd.f32 %v3822, 1.0
      %v3825 = vmul.f32 %v3773, %v3823
      %v3826 = vmul.f32 %v3774, %v3824
      %3827 = vst [vmem:[#allocation3 + $0xb0] sm:$0xff] %v3825
      %3828 = vst [vmem:[#allocation3 + $0xb8] sm:$0xff] %v3826
      %v3829 = vld [vmem:[#allocation2 + $0xd8] sm:$0xff]
      %v3830 = vld [vmem:[#allocation2 + $0xe0] sm:$0xff]
      %v3831 = vld [vmem:[#allocation2 + $0xe8] sm:$0x3]
      %v3832 = vmul.f32 %v3829, %v1793
      %v3833 = vmul.f32 %v3830, %v1793
      %v3834 = vadd.f32 %v3832, 0.0
      %v3835 = vadd.f32 %v3833, 0.0
      %v3836 = vmul.f32 %v3829, %v1801
      %v3837 = vmul.f32 %v3830, %v1801
      %v3838 = vmul.f32 %v3831, %v1801
      %v3842 = vrot.slane %v3836, 1
      %v3843 = vrot.slane %v3837, 1
      %v3844 = vsel %vm1808, %v3842, %v3843
      %v3845 = vrot.slane %v3838, 1
      %v3846 = vsel %vm1808, %v3843, %v3845
      %v3849 = vadd.f32 %v3834, %v3844
      %v3850 = vadd.f32 %v3835, %v3846
      %v3851 = vmul.f32 %v3829, %v1821
      %v3852 = vmul.f32 %v3830, %v1821
      %v3853 = vmul.f32 %v3831, %v1821
      %v3857 = vrot.slane %v3851, 2
      %v3858 = vrot.slane %v3852, 2
      %v3859 = vsel %vm1828, %v3857, %v3858
      %v3860 = vrot.slane %v3853, 2
      %v3861 = vsel %vm1828, %v3858, %v3860
      %v3864 = vadd.f32 %v3849, %v3859
      %v3865 = vadd.f32 %v3850, %v3861
      %v3866 = vld [vmem:[#allocation2 + $0xea] sm:$0xff]
      %v3867 = vld [vmem:[#allocation2 + $0xf2] sm:$0xff]
      %v3868 = vld [vmem:[#allocation2 + $0xfa] sm:$0x3]
      %v3869 = vmul.f32 %v3866, %v1844
      %v3870 = vmul.f32 %v3867, %v1844
      %v3871 = vadd.f32 %v3864, %v3869
      %v3872 = vadd.f32 %v3865, %v3870
      %v3873 = vmul.f32 %v3866, %v1852
      %v3874 = vmul.f32 %v3867, %v1852
      %v3875 = vmul.f32 %v3868, %v1852
      %v3879 = vrot.slane %v3873, 1
      %v3880 = vrot.slane %v3874, 1
      %v3881 = vsel %vm1808, %v3879, %v3880
      %v3882 = vrot.slane %v3875, 1
      %v3883 = vsel %vm1808, %v3880, %v3882
      %v3886 = vadd.f32 %v3871, %v3881
      %v3887 = vadd.f32 %v3872, %v3883
      %v3888 = vmul.f32 %v3866, %v1871
      %v3889 = vmul.f32 %v3867, %v1871
      %v3890 = vmul.f32 %v3868, %v1871
      %v3894 = vrot.slane %v3888, 2
      %v3895 = vrot.slane %v3889, 2
      %v3896 = vsel %vm1828, %v3894, %v3895
      %v3897 = vrot.slane %v3890, 2
      %v3898 = vsel %vm1828, %v3895, %v3897
      %v3901 = vadd.f32 %v3886, %v3896
      %v3902 = vadd.f32 %v3887, %v3898
      %v3903 = vld [vmem:[#allocation2 + $0xfc] sm:$0xff]
      %v3904 = vld [vmem:[#allocation2 + $0x104] sm:$0xff]
      %v3905 = vld [vmem:[#allocation2 + $0x10c] sm:$0x3]
      %v3906 = vmul.f32 %v3903, %v1893
      %v3907 = vmul.f32 %v3904, %v1893
      %v3908 = vadd.f32 %v3901, %v3906
      %v3909 = vadd.f32 %v3902, %v3907
      %v3910 = vmul.f32 %v3903, %v1901
      %v3911 = vmul.f32 %v3904, %v1901
      %v3912 = vmul.f32 %v3905, %v1901
      %v3916 = vrot.slane %v3910, 1
      %v3917 = vrot.slane %v3911, 1
      %v3918 = vsel %vm1808, %v3916, %v3917
      %v3919 = vrot.slane %v3912, 1
      %v3920 = vsel %vm1808, %v3917, %v3919
      %v3923 = vadd.f32 %v3908, %v3918
      %v3924 = vadd.f32 %v3909, %v3920
      %v3925 = vmul.f32 %v3903, %v1920
      %v3926 = vmul.f32 %v3904, %v1920
      %v3927 = vmul.f32 %v3905, %v1920
      %v3931 = vrot.slane %v3925, 2
      %v3932 = vrot.slane %v3926, 2
      %v3933 = vsel %vm1828, %v3931, %v3932
      %v3934 = vrot.slane %v3927, 2
      %v3935 = vsel %vm1828, %v3932, %v3934
      %v3938 = vadd.f32 %v3923, %v3933
      %v3939 = vadd.f32 %v3924, %v3935
      %v3940 = vmul.f32 %v3938, 0.5
      %v3941 = vmul.f32 %v3939, 0.5
      %v3942 = vmul.f32 %v3938, 0.70710677
      %v3943 = vmul.f32 %v3939, 0.70710677
      %vm3944 = vcmp.ge.f32.partialorder %v3942, 0.0
      %vm3945 = vcmp.ge.f32.partialorder %v3943, 0.0
      %v3946 = vsel %vm3944, 1.0, -1.0
      %v3947 = vsel %vm3945, 1.0, -1.0
      %v3948 = vand.u32 2147483647, %v3942
      %v3949 = vand.u32 2147483647, %v3943
      %v3950 = vmul.f32 %v3948, 0.3275911
      %v3951 = vmul.f32 %v3949, 0.3275911
      %v3952 = vadd.f32 %v3950, 1.0
      %v3953 = vadd.f32 %v3951, 1.0
      %v3954 = vrcp.pop %v3952
      %v3955 = vmul.f32 1.0, %v3954
      %v3956 = vrcp.pop %v3953
      %v3957 = vmul.f32 1.0, %v3956
      %v3958 = vmul.f32 %v3955, 1.0614054
      %v3959 = vmul.f32 %v3957, 1.0614054
      %v3960 = vadd.f32 %v3958, -1.4531521
      %v3961 = vadd.f32 %v3959, -1.4531521
      %v3962 = vmul.f32 %v3960, %v3955
      %v3963 = vmul.f32 %v3961, %v3957
      %v3964 = vadd.f32 %v3962, 1.4214138
      %v3965 = vadd.f32 %v3963, 1.4214138
      %v3966 = vmul.f32 %v3964, %v3955
      %v3967 = vmul.f32 %v3965, %v3957
      %v3968 = vadd.f32 %v3966, -0.28449672
      %v3969 = vadd.f32 %v3967, -0.28449672
      %v3970 = vmul.f32 %v3968, %v3955
      %v3971 = vmul.f32 %v3969, %v3957
      %v3972 = vadd.f32 %v3970, 0.2548296
      %v3973 = vadd.f32 %v3971, 0.2548296
      %v3974 = vmul.f32 %v3972, %v3955
      %v3975 = vmul.f32 %v3973, %v3957
      %v3976 = vsub.f32 0.0, %v3948
      %v3977 = vsub.f32 0.0, %v3949
      %v3978 = vmul.f32 %v3976, %v3948
      %v3979 = vmul.f32 %v3977, %v3949
      %v3980 = vmul.f32 %v3978, 1.442695
      %v3981 = vpow.pop %v3980
      %v3982 = vmul.f32 %v3979, 1.442695
      %v3983 = vpow.pop %v3982
      %v3984 = vmul.f32 %v3974, %v3981
      %v3985 = vmul.f32 %v3975, %v3983
      %v3986 = vsub.f32 1.0, %v3984
      %v3987 = vsub.f32 1.0, %v3985
      %v3988 = vmul.f32 %v3946, %v3986
      %v3989 = vmul.f32 %v3947, %v3987
      %v3990 = vadd.f32 %v3988, 1.0
      %v3991 = vadd.f32 %v3989, 1.0
      %v3992 = vmul.f32 %v3940, %v3990
      %v3993 = vmul.f32 %v3941, %v3991
      %3994 = vst [vmem:[#allocation3 + $0xc0] sm:$0xff] %v3992
      %3995 = vst [vmem:[#allocation3 + $0xc8] sm:$0xff] %v3993
      %v3996 = vld [vmem:[#allocation2 + $0xea] sm:$0xff]
      %v3997 = vld [vmem:[#allocation2 + $0xf2] sm:$0xff]
      %v3998 = vld [vmem:[#allocation2 + $0xfa] sm:$0x3]
      %v3999 = vmul.f32 %v3996, %v1793
      %v4000 = vmul.f32 %v3997, %v1793
      %v4001 = vadd.f32 %v3999, 0.0
      %v4002 = vadd.f32 %v4000, 0.0
      %v4003 = vmul.f32 %v3996, %v1801
      %v4004 = vmul.f32 %v3997, %v1801
      %v4005 = vmul.f32 %v3998, %v1801
      %v4009 = vrot.slane %v4003, 1
      %v4010 = vrot.slane %v4004, 1
      %v4011 = vsel %vm1808, %v4009, %v4010
      %v4012 = vrot.slane %v4005, 1
      %v4013 = vsel %vm1808, %v4010, %v4012
      %v4016 = vadd.f32 %v4001, %v4011
      %v4017 = vadd.f32 %v4002, %v4013
      %v4018 = vmul.f32 %v3996, %v1821
      %v4019 = vmul.f32 %v3997, %v1821
      %v4020 = vmul.f32 %v3998, %v1821
      %v4024 = vrot.slane %v4018, 2
      %v4025 = vrot.slane %v4019, 2
      %v4026 = vsel %vm1828, %v4024, %v4025
      %v4027 = vrot.slane %v4020, 2
      %v4028 = vsel %vm1828, %v4025, %v4027
      %v4031 = vadd.f32 %v4016, %v4026
      %v4032 = vadd.f32 %v4017, %v4028
      %v4033 = vld [vmem:[#allocation2 + $0xfc] sm:$0xff]
      %v4034 = vld [vmem:[#allocation2 + $0x104] sm:$0xff]
      %v4035 = vld [vmem:[#allocation2 + $0x10c] sm:$0x3]
      %v4036 = vmul.f32 %v4033, %v1844
      %v4037 = vmul.f32 %v4034, %v1844
      %v4038 = vadd.f32 %v4031, %v4036
      %v4039 = vadd.f32 %v4032, %v4037
      %v4040 = vmul.f32 %v4033, %v1852
      %v4041 = vmul.f32 %v4034, %v1852
      %v4042 = vmul.f32 %v4035, %v1852
      %v4046 = vrot.slane %v4040, 1
      %v4047 = vrot.slane %v4041, 1
      %v4048 = vsel %vm1808, %v4046, %v4047
      %v4049 = vrot.slane %v4042, 1
      %v4050 = vsel %vm1808, %v4047, %v4049
      %v4053 = vadd.f32 %v4038, %v4048
      %v4054 = vadd.f32 %v4039, %v4050
      %v4055 = vmul.f32 %v4033, %v1871
      %v4056 = vmul.f32 %v4034, %v1871
      %v4057 = vmul.f32 %v4035, %v1871
      %v4061 = vrot.slane %v4055, 2
      %v4062 = vrot.slane %v4056, 2
      %v4063 = vsel %vm1828, %v4061, %v4062
      %v4064 = vrot.slane %v4057, 2
      %v4065 = vsel %vm1828, %v4062, %v4064
      %v4068 = vadd.f32 %v4053, %v4063
      %v4069 = vadd.f32 %v4054, %v4065
      %v4070 = vld [vmem:[#allocation2 + $0x10e] sm:$0xff]
      %v4071 = vld [vmem:[#allocation2 + $0x116] sm:$0xff]
      %v4072 = vld [vmem:[#allocation2 + $0x11e] sm:$0x3]
      %v4073 = vmul.f32 %v4070, %v1893
      %v4074 = vmul.f32 %v4071, %v1893
      %v4075 = vadd.f32 %v4068, %v4073
      %v4076 = vadd.f32 %v4069, %v4074
      %v4077 = vmul.f32 %v4070, %v1901
      %v4078 = vmul.f32 %v4071, %v1901
      %v4079 = vmul.f32 %v4072, %v1901
      %v4083 = vrot.slane %v4077, 1
      %v4084 = vrot.slane %v4078, 1
      %v4085 = vsel %vm1808, %v4083, %v4084
      %v4086 = vrot.slane %v4079, 1
      %v4087 = vsel %vm1808, %v4084, %v4086
      %v4090 = vadd.f32 %v4075, %v4085
      %v4091 = vadd.f32 %v4076, %v4087
      %v4092 = vmul.f32 %v4070, %v1920
      %v4093 = vmul.f32 %v4071, %v1920
      %v4094 = vmul.f32 %v4072, %v1920
      %v4098 = vrot.slane %v4092, 2
      %v4099 = vrot.slane %v4093, 2
      %v4100 = vsel %vm1828, %v4098, %v4099
      %v4101 = vrot.slane %v4094, 2
      %v4102 = vsel %vm1828, %v4099, %v4101
      %v4105 = vadd.f32 %v4090, %v4100
      %v4106 = vadd.f32 %v4091, %v4102
      %v4107 = vmul.f32 %v4105, 0.5
      %v4108 = vmul.f32 %v4106, 0.5
      %v4109 = vmul.f32 %v4105, 0.70710677
      %v4110 = vmul.f32 %v4106, 0.70710677
      %vm4111 = vcmp.ge.f32.partialorder %v4109, 0.0
      %vm4112 = vcmp.ge.f32.partialorder %v4110, 0.0
      %v4113 = vsel %vm4111, 1.0, -1.0
      %v4114 = vsel %vm4112, 1.0, -1.0
      %v4115 = vand.u32 2147483647, %v4109
      %v4116 = vand.u32 2147483647, %v4110
      %v4117 = vmul.f32 %v4115, 0.3275911
      %v4118 = vmul.f32 %v4116, 0.3275911
      %v4119 = vadd.f32 %v4117, 1.0
      %v4120 = vadd.f32 %v4118, 1.0
      %v4121 = vrcp.pop %v4119
      %v4122 = vmul.f32 1.0, %v4121
      %v4123 = vrcp.pop %v4120
      %v4124 = vmul.f32 1.0, %v4123
      %v4125 = vmul.f32 %v4122, 1.0614054
      %v4126 = vmul.f32 %v4124, 1.0614054
      %v4127 = vadd.f32 %v4125, -1.4531521
      %v4128 = vadd.f32 %v4126, -1.4531521
      %v4129 = vmul.f32 %v4127, %v4122
      %v4130 = vmul.f32 %v4128, %v4124
      %v4131 = vadd.f32 %v4129, 1.4214138
      %v4132 = vadd.f32 %v4130, 1.4214138
      %v4133 = vmul.f32 %v4131, %v4122
      %v4134 = vmul.f32 %v4132, %v4124
      %v4135 = vadd.f32 %v4133, -0.28449672
      %v4136 = vadd.f32 %v4134, -0.28449672
      %v4137 = vmul.f32 %v4135, %v4122
      %v4138 = vmul.f32 %v4136, %v4124
      %v4139 = vadd.f32 %v4137, 0.2548296
      %v4140 = vadd.f32 %v4138, 0.2548296
      %v4141 = vmul.f32 %v4139, %v4122
      %v4142 = vmul.f32 %v4140, %v4124
      %v4143 = vsub.f32 0.0, %v4115
      %v4144 = vsub.f32 0.0, %v4116
      %v4145 = vmul.f32 %v4143, %v4115
      %v4146 = vmul.f32 %v4144, %v4116
      %v4147 = vmul.f32 %v4145, 1.442695
      %v4148 = vpow.pop %v4147
      %v4149 = vmul.f32 %v4146, 1.442695
      %v4150 = vpow.pop %v4149
      %v4151 = vmul.f32 %v4141, %v4148
      %v4152 = vmul.f32 %v4142, %v4150
      %v4153 = vsub.f32 1.0, %v4151
      %v4154 = vsub.f32 1.0, %v4152
      %v4155 = vmul.f32 %v4113, %v4153
      %v4156 = vmul.f32 %v4114, %v4154
      %v4157 = vadd.f32 %v4155, 1.0
      %v4158 = vadd.f32 %v4156, 1.0
      %v4159 = vmul.f32 %v4107, %v4157
      %v4160 = vmul.f32 %v4108, %v4158
      %4161 = vst [vmem:[#allocation3 + $0xd0] sm:$0xff] %v4159
      %4162 = vst [vmem:[#allocation3 + $0xd8] sm:$0xff] %v4160
      %v4163 = vld [vmem:[#allocation2 + $0xfc] sm:$0xff]
      %v4164 = vld [vmem:[#allocation2 + $0x104] sm:$0xff]
      %v4165 = vld [vmem:[#allocation2 + $0x10c] sm:$0x3]
      %v4166 = vmul.f32 %v4163, %v1793
      %v4167 = vmul.f32 %v4164, %v1793
      %v4168 = vadd.f32 %v4166, 0.0
      %v4169 = vadd.f32 %v4167, 0.0
      %v4170 = vmul.f32 %v4163, %v1801
      %v4171 = vmul.f32 %v4164, %v1801
      %v4172 = vmul.f32 %v4165, %v1801
      %v4176 = vrot.slane %v4170, 1
      %v4177 = vrot.slane %v4171, 1
      %v4178 = vsel %vm1808, %v4176, %v4177
      %v4179 = vrot.slane %v4172, 1
      %v4180 = vsel %vm1808, %v4177, %v4179
      %v4183 = vadd.f32 %v4168, %v4178
      %v4184 = vadd.f32 %v4169, %v4180
      %v4185 = vmul.f32 %v4163, %v1821
      %v4186 = vmul.f32 %v4164, %v1821
      %v4187 = vmul.f32 %v4165, %v1821
      %v4191 = vrot.slane %v4185, 2
      %v4192 = vrot.slane %v4186, 2
      %v4193 = vsel %vm1828, %v4191, %v4192
      %v4194 = vrot.slane %v4187, 2
      %v4195 = vsel %vm1828, %v4192, %v4194
      %v4198 = vadd.f32 %v4183, %v4193
      %v4199 = vadd.f32 %v4184, %v4195
      %v4200 = vld [vmem:[#allocation2 + $0x10e] sm:$0xff]
      %v4201 = vld [vmem:[#allocation2 + $0x116] sm:$0xff]
      %v4202 = vld [vmem:[#allocation2 + $0x11e] sm:$0x3]
      %v4203 = vmul.f32 %v4200, %v1844
      %v4204 = vmul.f32 %v4201, %v1844
      %v4205 = vadd.f32 %v4198, %v4203
      %v4206 = vadd.f32 %v4199, %v4204
      %v4207 = vmul.f32 %v4200, %v1852
      %v4208 = vmul.f32 %v4201, %v1852
      %v4209 = vmul.f32 %v4202, %v1852
      %v4213 = vrot.slane %v4207, 1
      %v4214 = vrot.slane %v4208, 1
      %v4215 = vsel %vm1808, %v4213, %v4214
      %v4216 = vrot.slane %v4209, 1
      %v4217 = vsel %vm1808, %v4214, %v4216
      %v4220 = vadd.f32 %v4205, %v4215
      %v4221 = vadd.f32 %v4206, %v4217
      %v4222 = vmul.f32 %v4200, %v1871
      %v4223 = vmul.f32 %v4201, %v1871
      %v4224 = vmul.f32 %v4202, %v1871
      %v4228 = vrot.slane %v4222, 2
      %v4229 = vrot.slane %v4223, 2
      %v4230 = vsel %vm1828, %v4228, %v4229
      %v4231 = vrot.slane %v4224, 2
      %v4232 = vsel %vm1828, %v4229, %v4231
      %v4235 = vadd.f32 %v4220, %v4230
      %v4236 = vadd.f32 %v4221, %v4232
      %v4237 = vld [vmem:[#allocation2 + $0x120] sm:$0xff]
      %v4238 = vld [vmem:[#allocation2 + $0x128] sm:$0xff]
      %v4239 = vld [vmem:[#allocation2 + $0x130] sm:$0x3]
      %v4240 = vmul.f32 %v4237, %v1893
      %v4241 = vmul.f32 %v4238, %v1893
      %v4242 = vadd.f32 %v4235, %v4240
      %v4243 = vadd.f32 %v4236, %v4241
      %v4244 = vmul.f32 %v4237, %v1901
      %v4245 = vmul.f32 %v4238, %v1901
      %v4246 = vmul.f32 %v4239, %v1901
      %v4250 = vrot.slane %v4244, 1
      %v4251 = vrot.slane %v4245, 1
      %v4252 = vsel %vm1808, %v4250, %v4251
      %v4253 = vrot.slane %v4246, 1
      %v4254 = vsel %vm1808, %v4251, %v4253
      %v4257 = vadd.f32 %v4242, %v4252
      %v4258 = vadd.f32 %v4243, %v4254
      %v4259 = vmul.f32 %v4237, %v1920
      %v4260 = vmul.f32 %v4238, %v1920
      %v4261 = vmul.f32 %v4239, %v1920
      %v4265 = vrot.slane %v4259, 2
      %v4266 = vrot.slane %v4260, 2
      %v4267 = vsel %vm1828, %v4265, %v4266
      %v4268 = vrot.slane %v4261, 2
      %v4269 = vsel %vm1828, %v4266, %v4268
      %v4272 = vadd.f32 %v4257, %v4267
      %v4273 = vadd.f32 %v4258, %v4269
      %v4274 = vmul.f32 %v4272, 0.5
      %v4275 = vmul.f32 %v4273, 0.5
      %v4276 = vmul.f32 %v4272, 0.70710677
      %v4277 = vmul.f32 %v4273, 0.70710677
      %vm4278 = vcmp.ge.f32.partialorder %v4276, 0.0
      %vm4279 = vcmp.ge.f32.partialorder %v4277, 0.0
      %v4280 = vsel %vm4278, 1.0, -1.0
      %v4281 = vsel %vm4279, 1.0, -1.0
      %v4282 = vand.u32 2147483647, %v4276
      %v4283 = vand.u32 2147483647, %v4277
      %v4284 = vmul.f32 %v4282, 0.3275911
      %v4285 = vmul.f32 %v4283, 0.3275911
      %v4286 = vadd.f32 %v4284, 1.0
      %v4287 = vadd.f32 %v4285, 1.0
      %v4288 = vrcp.pop %v4286
      %v4289 = vmul.f32 1.0, %v4288
      %v4290 = vrcp.pop %v4287
      %v4291 = vmul.f32 1.0, %v4290
      %v4292 = vmul.f32 %v4289, 1.0614054
      %v4293 = vmul.f32 %v4291, 1.0614054
      %v4294 = vadd.f32 %v4292, -1.4531521
      %v4295 = vadd.f32 %v4293, -1.4531521
      %v4296 = vmul.f32 %v4294, %v4289
      %v4297 = vmul.f32 %v4295, %v4291
      %v4298 = vadd.f32 %v4296, 1.4214138
      %v4299 = vadd.f32 %v4297, 1.4214138
      %v4300 = vmul.f32 %v4298, %v4289
      %v4301 = vmul.f32 %v4299, %v4291
      %v4302 = vadd.f32 %v4300, -0.28449672
      %v4303 = vadd.f32 %v4301, -0.28449672
      %v4304 = vmul.f32 %v4302, %v4289
      %v4305 = vmul.f32 %v4303, %v4291
      %v4306 = vadd.f32 %v4304, 0.2548296
      %v4307 = vadd.f32 %v4305, 0.2548296
      %v4308 = vmul.f32 %v4306, %v4289
      %v4309 = vmul.f32 %v4307, %v4291
      %v4310 = vsub.f32 0.0, %v4282
      %v4311 = vsub.f32 0.0, %v4283
      %v4312 = vmul.f32 %v4310, %v4282
      %v4313 = vmul.f32 %v4311, %v4283
      %v4314 = vmul.f32 %v4312, 1.442695
      %v4315 = vpow.pop %v4314
      %v4316 = vmul.f32 %v4313, 1.442695
      %v4317 = vpow.pop %v4316
      %v4318 = vmul.f32 %v4308, %v4315
      %v4319 = vmul.f32 %v4309, %v4317
      %v4320 = vsub.f32 1.0, %v4318
      %v4321 = vsub.f32 1.0, %v4319
      %v4322 = vmul.f32 %v4280, %v4320
      %v4323 = vmul.f32 %v4281, %v4321
      %v4324 = vadd.f32 %v4322, 1.0
      %v4325 = vadd.f32 %v4323, 1.0
      %v4326 = vmul.f32 %v4274, %v4324
      %v4327 = vmul.f32 %v4275, %v4325
      %4328 = vst [vmem:[#allocation3 + $0xe0] sm:$0xff] %v4326
      %4329 = vst [vmem:[#allocation3 + $0xe8] sm:$0xff] %v4327
      %v4330 = vld [vmem:[#allocation2 + $0x10e] sm:$0xff]
      %v4331 = vld [vmem:[#allocation2 + $0x116] sm:$0xff]
      %v4332 = vld [vmem:[#allocation2 + $0x11e] sm:$0x3]
      %v4333 = vmul.f32 %v4330, %v1793
      %v4334 = vmul.f32 %v4331, %v1793
      %v4335 = vadd.f32 %v4333, 0.0
      %v4336 = vadd.f32 %v4334, 0.0
      %v4337 = vmul.f32 %v4330, %v1801
      %v4338 = vmul.f32 %v4331, %v1801
      %v4339 = vmul.f32 %v4332, %v1801
      %v4343 = vrot.slane %v4337, 1
      %v4344 = vrot.slane %v4338, 1
      %v4345 = vsel %vm1808, %v4343, %v4344
      %v4346 = vrot.slane %v4339, 1
      %v4347 = vsel %vm1808, %v4344, %v4346
      %v4350 = vadd.f32 %v4335, %v4345
      %v4351 = vadd.f32 %v4336, %v4347
      %v4352 = vmul.f32 %v4330, %v1821
      %v4353 = vmul.f32 %v4331, %v1821
      %v4354 = vmul.f32 %v4332, %v1821
      %v4358 = vrot.slane %v4352, 2
      %v4359 = vrot.slane %v4353, 2
      %v4360 = vsel %vm1828, %v4358, %v4359
      %v4361 = vrot.slane %v4354, 2
      %v4362 = vsel %vm1828, %v4359, %v4361
      %v4365 = vadd.f32 %v4350, %v4360
      %v4366 = vadd.f32 %v4351, %v4362
      %v4367 = vld [vmem:[#allocation2 + $0x120] sm:$0xff]
      %v4368 = vld [vmem:[#allocation2 + $0x128] sm:$0xff]
      %v4369 = vld [vmem:[#allocation2 + $0x130] sm:$0x3]
      %v4370 = vmul.f32 %v4367, %v1844
      %v4371 = vmul.f32 %v4368, %v1844
      %v4372 = vadd.f32 %v4365, %v4370
      %v4373 = vadd.f32 %v4366, %v4371
      %v4374 = vmul.f32 %v4367, %v1852
      %v4375 = vmul.f32 %v4368, %v1852
      %v4376 = vmul.f32 %v4369, %v1852
      %v4380 = vrot.slane %v4374, 1
      %v4381 = vrot.slane %v4375, 1
      %v4382 = vsel %vm1808, %v4380, %v4381
      %v4383 = vrot.slane %v4376, 1
      %v4384 = vsel %vm1808, %v4381, %v4383
      %v4387 = vadd.f32 %v4372, %v4382
      %v4388 = vadd.f32 %v4373, %v4384
      %v4389 = vmul.f32 %v4367, %v1871
      %v4390 = vmul.f32 %v4368, %v1871
      %v4391 = vmul.f32 %v4369, %v1871
      %v4395 = vrot.slane %v4389, 2
      %v4396 = vrot.slane %v4390, 2
      %v4397 = vsel %vm1828, %v4395, %v4396
      %v4398 = vrot.slane %v4391, 2
      %v4399 = vsel %vm1828, %v4396, %v4398
      %v4402 = vadd.f32 %v4387, %v4397
      %v4403 = vadd.f32 %v4388, %v4399
      %v4404 = vld [vmem:[#allocation2 + $0x132] sm:$0xff]
      %v4405 = vld [vmem:[#allocation2 + $0x13a] sm:$0xff]
      %v4406 = vld [vmem:[#allocation2 + $0x142] sm:$0x3]
      %v4407 = vmul.f32 %v4404, %v1893
      %v4408 = vmul.f32 %v4405, %v1893
      %v4409 = vadd.f32 %v4402, %v4407
      %v4410 = vadd.f32 %v4403, %v4408
      %v4411 = vmul.f32 %v4404, %v1901
      %v4412 = vmul.f32 %v4405, %v1901
      %v4413 = vmul.f32 %v4406, %v1901
      %v4417 = vrot.slane %v4411, 1
      %v4418 = vrot.slane %v4412, 1
      %v4419 = vsel %vm1808, %v4417, %v4418
      %v4420 = vrot.slane %v4413, 1
      %v4421 = vsel %vm1808, %v4418, %v4420
      %v4424 = vadd.f32 %v4409, %v4419
      %v4425 = vadd.f32 %v4410, %v4421
      %v4426 = vmul.f32 %v4404, %v1920
      %v4427 = vmul.f32 %v4405, %v1920
      %v4428 = vmul.f32 %v4406, %v1920
      %v4432 = vrot.slane %v4426, 2
      %v4433 = vrot.slane %v4427, 2
      %v4434 = vsel %vm1828, %v4432, %v4433
      %v4435 = vrot.slane %v4428, 2
      %v4436 = vsel %vm1828, %v4433, %v4435
      %v4439 = vadd.f32 %v4424, %v4434
      %v4440 = vadd.f32 %v4425, %v4436
      %v4441 = vmul.f32 %v4439, 0.5
      %v4442 = vmul.f32 %v4440, 0.5
      %v4443 = vmul.f32 %v4439, 0.70710677
      %v4444 = vmul.f32 %v4440, 0.70710677
      %vm4445 = vcmp.ge.f32.partialorder %v4443, 0.0
      %vm4446 = vcmp.ge.f32.partialorder %v4444, 0.0
      %v4447 = vsel %vm4445, 1.0, -1.0
      %v4448 = vsel %vm4446, 1.0, -1.0
      %v4449 = vand.u32 2147483647, %v4443
      %v4450 = vand.u32 2147483647, %v4444
      %v4451 = vmul.f32 %v4449, 0.3275911
      %v4452 = vmul.f32 %v4450, 0.3275911
      %v4453 = vadd.f32 %v4451, 1.0
      %v4454 = vadd.f32 %v4452, 1.0
      %v4455 = vrcp.pop %v4453
      %v4456 = vmul.f32 1.0, %v4455
      %v4457 = vrcp.pop %v4454
      %v4458 = vmul.f32 1.0, %v4457
      %v4459 = vmul.f32 %v4456, 1.0614054
      %v4460 = vmul.f32 %v4458, 1.0614054
      %v4461 = vadd.f32 %v4459, -1.4531521
      %v4462 = vadd.f32 %v4460, -1.4531521
      %v4463 = vmul.f32 %v4461, %v4456
      %v4464 = vmul.f32 %v4462, %v4458
      %v4465 = vadd.f32 %v4463, 1.4214138
      %v4466 = vadd.f32 %v4464, 1.4214138
      %v4467 = vmul.f32 %v4465, %v4456
      %v4468 = vmul.f32 %v4466, %v4458
      %v4469 = vadd.f32 %v4467, -0.28449672
      %v4470 = vadd.f32 %v4468, -0.28449672
      %v4471 = vmul.f32 %v4469, %v4456
      %v4472 = vmul.f32 %v4470, %v4458
      %v4473 = vadd.f32 %v4471, 0.2548296
      %v4474 = vadd.f32 %v4472, 0.2548296
      %v4475 = vmul.f32 %v4473, %v4456
      %v4476 = vmul.f32 %v4474, %v4458
      %v4477 = vsub.f32 0.0, %v4449
      %v4478 = vsub.f32 0.0, %v4450
      %v4479 = vmul.f32 %v4477, %v4449
      %v4480 = vmul.f32 %v4478, %v4450
      %v4481 = vmul.f32 %v4479, 1.442695
      %v4482 = vpow.pop %v4481
      %v4483 = vmul.f32 %v4480, 1.442695
      %v4484 = vpow.pop %v4483
      %v4485 = vmul.f32 %v4475, %v4482
      %v4486 = vmul.f32 %v4476, %v4484
      %v4487 = vsub.f32 1.0, %v4485
      %v4488 = vsub.f32 1.0, %v4486
      %v4489 = vmul.f32 %v4447, %v4487
      %v4490 = vmul.f32 %v4448, %v4488
      %v4491 = vadd.f32 %v4489, 1.0
      %v4492 = vadd.f32 %v4490, 1.0
      %v4493 = vmul.f32 %v4441, %v4491
      %v4494 = vmul.f32 %v4442, %v4492
      %4495 = vst [vmem:[#allocation3 + $0xf0] sm:$0xff] %v4493
      %4496 = vst [vmem:[#allocation3 + $0xf8] sm:$0xff] %v4494
      %v4497 = vld [vmem:[#allocation3] sm:$0xff]
      %v4498 = vld [vmem:[#allocation3 + $0x8] sm:$0xff]
      %v4499 = vld [vmem:[#allocation3 + $0x10] sm:$0xff]
      %v4500 = vld [vmem:[#allocation3 + $0x18] sm:$0xff]
      %v4501 = vld [vmem:[#allocation3 + $0x20] sm:$0xff]
      %v4502 = vld [vmem:[#allocation3 + $0x28] sm:$0xff]
      %v4503 = vld [vmem:[#allocation3 + $0x30] sm:$0xff]
      %v4504 = vld [vmem:[#allocation3 + $0x38] sm:$0xff]
      %v4505 = vld [vmem:[#allocation3 + $0x40] sm:$0xff]
      %v4506 = vld [vmem:[#allocation3 + $0x48] sm:$0xff]
      %v4507 = vld [vmem:[#allocation3 + $0x50] sm:$0xff]
      %v4508 = vld [vmem:[#allocation3 + $0x58] sm:$0xff]
      %v4509 = vld [vmem:[#allocation3 + $0x60] sm:$0xff]
      %v4510 = vld [vmem:[#allocation3 + $0x68] sm:$0xff]
      %v4511 = vld [vmem:[#allocation3 + $0x70] sm:$0xff]
      %v4512 = vld [vmem:[#allocation3 + $0x78] sm:$0xff]
      %v4513 = vld [vmem:[#allocation3 + $0x80] sm:$0xff]
      %v4514 = vld [vmem:[#allocation3 + $0x88] sm:$0xff]
      %v4515 = vld [vmem:[#allocation3 + $0x90] sm:$0xff]
      %v4516 = vld [vmem:[#allocation3 + $0x98] sm:$0xff]
      %v4517 = vld [vmem:[#allocation3 + $0xa0] sm:$0xff]
      %v4518 = vld [vmem:[#allocation3 + $0xa8] sm:$0xff]
      %v4519 = vld [vmem:[#allocation3 + $0xb0] sm:$0xff]
      %v4520 = vld [vmem:[#allocation3 + $0xb8] sm:$0xff]
      %v4521 = vld [vmem:[#allocation3 + $0xc0] sm:$0xff]
      %v4522 = vld [vmem:[#allocation3 + $0xc8] sm:$0xff]
      %v4523 = vld [vmem:[#allocation3 + $0xd0] sm:$0xff]
      %v4524 = vld [vmem:[#allocation3 + $0xd8] sm:$0xff]
      %v4525 = vld [vmem:[#allocation3 + $0xe0] sm:$0xff]
      %v4526 = vld [vmem:[#allocation3 + $0xe8] sm:$0xff]
      %v4527 = vld [vmem:[#allocation3 + $0xf0] sm:$0xff]
      %v4528 = vld [vmem:[#allocation3 + $0xf8] sm:$0xff]
      %v4529 = vld [vmem:[%s3] sm:$0xff]
      %v4530 = vld [vmem:[%s3 + $0x8] sm:$0xff]
      %v4531 = vld [vmem:[%s3 + $0x10] sm:$0xff]
      %v4532 = vld [vmem:[%s3 + $0x18] sm:$0xff]
      %v4533 = vld [vmem:[%s3 + $0x20] sm:$0xff]
      %v4534 = vld [vmem:[%s3 + $0x28] sm:$0xff]
      %v4535 = vld [vmem:[%s3 + $0x30] sm:$0xff]
      %v4536 = vld [vmem:[%s3 + $0x38] sm:$0xff]
      %v4537 = vld [vmem:[%s3 + $0x40] sm:$0xff]
      %v4538 = vld [vmem:[%s3 + $0x48] sm:$0xff]
      %v4539 = vld [vmem:[%s3 + $0x50] sm:$0xff]
      %v4540 = vld [vmem:[%s3 + $0x58] sm:$0xff]
      %v4541 = vld [vmem:[%s3 + $0x60] sm:$0xff]
      %v4542 = vld [vmem:[%s3 + $0x68] sm:$0xff]
      %v4543 = vld [vmem:[%s3 + $0x70] sm:$0xff]
      %v4544 = vld [vmem:[%s3 + $0x78] sm:$0xff]
      %4545 = vmatprep.subr.mxu0 0.0
      %4546 = vmatpush1.msra.mxu0 %v4544
      %4547 = vmatprep.subr.mxu0 0.0
      %4548 = vmatpush1.msra.mxu0 %v4543
      %4549 = vmatprep.subr.mxu0 0.0
      %4550 = vmatpush1.msra.mxu0 %v4542
      %4551 = vmatprep.subr.mxu0 0.0
      %4552 = vmatpush1.msra.mxu0 %v4541
      %4553 = vmatprep.subr.mxu0 0.0
      %4554 = vmatpush1.msra.mxu0 %v4540
      %4555 = vmatprep.subr.mxu0 0.0
      %4556 = vmatpush1.msra.mxu0 %v4539
      %4557 = vmatprep.subr.mxu0 0.0
      %4558 = vmatpush1.msra.mxu0 %v4538
      %4559 = vmatprep.subr.mxu0 0.0
      %4560 = vmatpush1.msra.mxu0 %v4537
      %4561 = vmatprep.subr.mxu0 0.0
      %4562 = vmatpush1.msra.mxu0 %v4536
      %4563 = vmatprep.subr.mxu0 0.0
      %4564 = vmatpush1.msra.mxu0 %v4535
      %4565 = vmatprep.subr.mxu0 0.0
      %4566 = vmatpush1.msra.mxu0 %v4534
      %4567 = vmatprep.subr.mxu0 0.0
      %4568 = vmatpush1.msra.mxu0 %v4533
      %4569 = vmatprep.subr.mxu0 0.0
      %4570 = vmatpush1.msra.mxu0 %v4532
      %4571 = vmatprep.subr.mxu0 0.0
      %4572 = vmatpush1.msra.mxu0 %v4531
      %4573 = vmatprep.subr.mxu0 0.0
      %4574 = vmatpush1.msra.mxu0 %v4530
      %4575 = vmatprep.subr.mxu0 0.0
      %4576 = vmatpush1.msra.mxu0 %v4529
      %4577 = vmatprep.subr.mxu0 0.0
      %4578 = vmatpush2.msra.mxu0 0.0
      %4579 = vmatprep.subr.mxu0 0.0
      %4580 = vmatpush2.msra.mxu0 0.0
      %4581 = vmatprep.subr.mxu0 0.0
      %4582 = vmatpush2.msra.mxu0 0.0
      %4583 = vmatprep.subr.mxu0 0.0
      %4584 = vmatpush2.msra.mxu0 0.0
      %4585 = vmatprep.subr.mxu0 0.0
      %4586 = vmatpush2.msra.mxu0 0.0
      %4587 = vmatprep.subr.mxu0 0.0
      %4588 = vmatpush2.msra.mxu0 0.0
      %4589 = vmatprep.subr.mxu0 0.0
      %4590 = vmatpush2.msra.mxu0 0.0
      %4591 = vmatprep.subr.mxu0 0.0
      %4592 = vmatpush2.msra.mxu0 0.0
      %4593 = vmatprep.subr.mxu0 0.0
      %4594 = vmatpush2.msra.mxu0 0.0
      %4595 = vmatprep.subr.mxu0 0.0
      %4596 = vmatpush2.msra.mxu0 0.0
      %4597 = vmatprep.subr.mxu0 0.0
      %4598 = vmatpush2.msra.mxu0 0.0
      %4599 = vmatprep.subr.mxu0 0.0
      %4600 = vmatpush2.msra.mxu0 0.0
      %4601 = vmatprep.subr.mxu0 0.0
      %4602 = vmatpush2.msra.mxu0 0.0
      %4603 = vmatprep.subr.mxu0 0.0
      %4604 = vmatpush2.msra.mxu0 0.0
      %4605 = vmatprep.subr.mxu0 0.0
      %4606 = vmatpush2.msra.mxu0 0.0
      %4607 = vmatprep.subr.mxu0 0.0
      %4608 = vmatpush2.msra.mxu0 0.0
      %4609 = vmatprep.mubr.f32.mxu0 0.0
      %4610 = vmatmul.mubr.f32.gmra.mxu0 %v4497
      %v4611 = vpop.f32.mrf.mxu0
      %v4612 = vadd.f32 0.0, %v4611
      %v4613 = vpop.f32.mrf.mxu0
      %4614 = vmatprep.mubr.f32.mxu0 0.0
      %4615 = vmatmul.mubr.f32.gmra.mxu0 %v4498
      %v4616 = vpop.f32.mrf.mxu0
      %v4617 = vadd.f32 0.0, %v4616
      %v4618 = vpop.f32.mrf.mxu0
      %4619 = vmatprep.mubr.f32.mxu0 0.0
      %4620 = vmatmul.mubr.f32.gmra.mxu0 %v4499
      %v4621 = vpop.f32.mrf.mxu0
      %v4622 = vadd.f32 0.0, %v4621
      %v4623 = vpop.f32.mrf.mxu0
      %4624 = vmatprep.mubr.f32.mxu0 0.0
      %4625 = vmatmul.mubr.f32.gmra.mxu0 %v4500
      %v4626 = vpop.f32.mrf.mxu0
      %v4627 = vadd.f32 0.0, %v4626
      %v4628 = vpop.f32.mrf.mxu0
      %4629 = vmatprep.mubr.f32.mxu0 0.0
      %4630 = vmatmul.mubr.f32.gmra.mxu0 %v4501
      %v4631 = vpop.f32.mrf.mxu0
      %v4632 = vadd.f32 0.0, %v4631
      %v4633 = vpop.f32.mrf.mxu0
      %4634 = vmatprep.mubr.f32.mxu0 0.0
      %4635 = vmatmul.mubr.f32.gmra.mxu0 %v4502
      %v4636 = vpop.f32.mrf.mxu0
      %v4637 = vadd.f32 0.0, %v4636
      %v4638 = vpop.f32.mrf.mxu0
      %4639 = vmatprep.mubr.f32.mxu0 0.0
      %4640 = vmatmul.mubr.f32.gmra.mxu0 %v4503
      %v4641 = vpop.f32.mrf.mxu0
      %v4642 = vadd.f32 0.0, %v4641
      %v4643 = vpop.f32.mrf.mxu0
      %4644 = vmatprep.mubr.f32.mxu0 0.0
      %4645 = vmatmul.mubr.f32.gmra.mxu0 %v4504
      %v4646 = vpop.f32.mrf.mxu0
      %v4647 = vadd.f32 0.0, %v4646
      %v4648 = vpop.f32.mrf.mxu0
      %4649 = vmatprep.mubr.f32.mxu0 0.0
      %4650 = vmatmul.mubr.f32.gmra.mxu0 %v4505
      %v4651 = vpop.f32.mrf.mxu0
      %v4652 = vadd.f32 0.0, %v4651
      %v4653 = vpop.f32.mrf.mxu0
      %4654 = vmatprep.mubr.f32.mxu0 0.0
      %4655 = vmatmul.mubr.f32.gmra.mxu0 %v4506
      %v4656 = vpop.f32.mrf.mxu0
      %v4657 = vadd.f32 0.0, %v4656
      %v4658 = vpop.f32.mrf.mxu0
      %4659 = vmatprep.mubr.f32.mxu0 0.0
      %4660 = vmatmul.mubr.f32.gmra.mxu0 %v4507
      %v4661 = vpop.f32.mrf.mxu0
      %v4662 = vadd.f32 0.0, %v4661
      %v4663 = vpop.f32.mrf.mxu0
      %4664 = vmatprep.mubr.f32.mxu0 0.0
      %4665 = vmatmul.mubr.f32.gmra.mxu0 %v4508
      %v4666 = vpop.f32.mrf.mxu0
      %v4667 = vadd.f32 0.0, %v4666
      %v4668 = vpop.f32.mrf.mxu0
      %4669 = vmatprep.mubr.f32.mxu0 0.0
      %4670 = vmatmul.mubr.f32.gmra.mxu0 %v4509
      %v4671 = vpop.f32.mrf.mxu0
      %v4672 = vadd.f32 0.0, %v4671
      %v4673 = vpop.f32.mrf.mxu0
      %4674 = vmatprep.mubr.f32.mxu0 0.0
      %4675 = vmatmul.mubr.f32.gmra.mxu0 %v4510
      %v4676 = vpop.f32.mrf.mxu0
      %v4677 = vadd.f32 0.0, %v4676
      %v4678 = vpop.f32.mrf.mxu0
      %4679 = vmatprep.mubr.f32.mxu0 0.0
      %4680 = vmatmul.mubr.f32.gmra.mxu0 %v4511
      %v4681 = vpop.f32.mrf.mxu0
      %v4682 = vadd.f32 0.0, %v4681
      %v4683 = vpop.f32.mrf.mxu0
      %4684 = vmatprep.mubr.f32.mxu0 0.0
      %4685 = vmatmul.mubr.f32.gmra.mxu0 %v4512
      %v4686 = vpop.f32.mrf.mxu0
      %v4687 = vadd.f32 0.0, %v4686
      %v4688 = vpop.f32.mrf.mxu0
      %4689 = vmatprep.mubr.f32.mxu0 0.0
      %4690 = vmatmul.mubr.f32.gmra.mxu0 %v4513
      %v4691 = vpop.f32.mrf.mxu0
      %v4692 = vadd.f32 0.0, %v4691
      %v4693 = vpop.f32.mrf.mxu0
      %4694 = vmatprep.mubr.f32.mxu0 0.0
      %4695 = vmatmul.mubr.f32.gmra.mxu0 %v4514
      %v4696 = vpop.f32.mrf.mxu0
      %v4697 = vadd.f32 0.0, %v4696
      %v4698 = vpop.f32.mrf.mxu0
      %4699 = vmatprep.mubr.f32.mxu0 0.0
      %4700 = vmatmul.mubr.f32.gmra.mxu0 %v4515
      %v4701 = vpop.f32.mrf.mxu0
      %v4702 = vadd.f32 0.0, %v4701
      %v4703 = vpop.f32.mrf.mxu0
      %4704 = vmatprep.mubr.f32.mxu0 0.0
      %4705 = vmatmul.mubr.f32.gmra.mxu0 %v4516
      %v4706 = vpop.f32.mrf.mxu0
      %v4707 = vadd.f32 0.0, %v4706
      %v4708 = vpop.f32.mrf.mxu0
      %4709 = vmatprep.mubr.f32.mxu0 0.0
      %4710 = vmatmul.mubr.f32.gmra.mxu0 %v4517
      %v4711 = vpop.f32.mrf.mxu0
      %v4712 = vadd.f32 0.0, %v4711
      %v4713 = vpop.f32.mrf.mxu0
      %4714 = vmatprep.mubr.f32.mxu0 0.0
      %4715 = vmatmul.mubr.f32.gmra.mxu0 %v4518
      %v4716 = vpop.f32.mrf.mxu0
      %v4717 = vadd.f32 0.0, %v4716
      %v4718 = vpop.f32.mrf.mxu0
      %4719 = vmatprep.mubr.f32.mxu0 0.0
      %4720 = vmatmul.mubr.f32.gmra.mxu0 %v4519
      %v4721 = vpop.f32.mrf.mxu0
      %v4722 = vadd.f32 0.0, %v4721
      %v4723 = vpop.f32.mrf.mxu0
      %4724 = vmatprep.mubr.f32.mxu0 0.0
      %4725 = vmatmul.mubr.f32.gmra.mxu0 %v4520
      %v4726 = vpop.f32.mrf.mxu0
      %v4727 = vadd.f32 0.0, %v4726
      %v4728 = vpop.f32.mrf.mxu0
      %4729 = vmatprep.mubr.f32.mxu0 0.0
      %4730 = vmatmul.mubr.f32.gmra.mxu0 %v4521
      %v4731 = vpop.f32.mrf.mxu0
      %v4732 = vadd.f32 0.0, %v4731
      %v4733 = vpop.f32.mrf.mxu0
      %4734 = vmatprep.mubr.f32.mxu0 0.0
      %4735 = vmatmul.mubr.f32.gmra.mxu0 %v4522
      %v4736 = vpop.f32.mrf.mxu0
      %v4737 = vadd.f32 0.0, %v4736
      %v4738 = vpop.f32.mrf.mxu0
      %4739 = vmatprep.mubr.f32.mxu0 0.0
      %4740 = vmatmul.mubr.f32.gmra.mxu0 %v4523
      %v4741 = vpop.f32.mrf.mxu0
      %v4742 = vadd.f32 0.0, %v4741
      %v4743 = vpop.f32.mrf.mxu0
      %4744 = vmatprep.mubr.f32.mxu0 0.0
      %4745 = vmatmul.mubr.f32.gmra.mxu0 %v4524
      %v4746 = vpop.f32.mrf.mxu0
      %v4747 = vadd.f32 0.0, %v4746
      %v4748 = vpop.f32.mrf.mxu0
      %4749 = vmatprep.mubr.f32.mxu0 0.0
      %4750 = vmatmul.mubr.f32.gmra.mxu0 %v4525
      %v4751 = vpop.f32.mrf.mxu0
      %v4752 = vadd.f32 0.0, %v4751
      %v4753 = vpop.f32.mrf.mxu0
      %4754 = vmatprep.mubr.f32.mxu0 0.0
      %4755 = vmatmul.mubr.f32.gmra.mxu0 %v4526
      %v4756 = vpop.f32.mrf.mxu0
      %v4757 = vadd.f32 0.0, %v4756
      %v4758 = vpop.f32.mrf.mxu0
      %4759 = vmatprep.mubr.f32.mxu0 0.0
      %4760 = vmatmul.mubr.f32.gmra.mxu0 %v4527
      %v4761 = vpop.f32.mrf.mxu0
      %v4762 = vadd.f32 0.0, %v4761
      %v4763 = vpop.f32.mrf.mxu0
      %4764 = vmatprep.mubr.f32.mxu0 0.0
      %4765 = vmatmul.mubr.f32.gmra.mxu0 %v4528
      %v4766 = vpop.f32.mrf.mxu0
      %v4767 = vadd.f32 0.0, %v4766
      %v4768 = vpop.f32.mrf.mxu0
      %4769 = vdwg.mxu0
      %4770 = vst.msk [vmem:[%s197] sm:$0xff] %vm243, %v4612
      %4771 = vst.msk [vmem:[%s197 + $0x8] sm:$0xff] %vm243, %v4617
      %4772 = vst.msk [vmem:[%s197 + $0x10] sm:$0xff] %vm243, %v4622
      %4773 = vst.msk [vmem:[%s197 + $0x18] sm:$0xff] %vm243, %v4627
      %4774 = vst.msk [vmem:[%s197 + $0x20] sm:$0xff] %vm243, %v4632
      %4775 = vst.msk [vmem:[%s197 + $0x28] sm:$0xff] %vm243, %v4637
      %4776 = vst.msk [vmem:[%s197 + $0x30] sm:$0xff] %vm243, %v4642
      %4777 = vst.msk [vmem:[%s197 + $0x38] sm:$0xff] %vm243, %v4647
      %4778 = vst.msk [vmem:[%s197 + $0x40] sm:$0xff] %vm243, %v4652
      %4779 = vst.msk [vmem:[%s197 + $0x48] sm:$0xff] %vm243, %v4657
      %4780 = vst.msk [vmem:[%s197 + $0x50] sm:$0xff] %vm243, %v4662
      %4781 = vst.msk [vmem:[%s197 + $0x58] sm:$0xff] %vm243, %v4667
      %4782 = vst.msk [vmem:[%s197 + $0x60] sm:$0xff] %vm243, %v4672
      %4783 = vst.msk [vmem:[%s197 + $0x68] sm:$0xff] %vm243, %v4677
      %4784 = vst.msk [vmem:[%s197 + $0x70] sm:$0xff] %vm243, %v4682
      %4785 = vst.msk [vmem:[%s197 + $0x78] sm:$0xff] %vm243, %v4687
      %4786 = vst.msk [vmem:[%s197 + $0x80] sm:$0xff] %vm243, %v4692
      %4787 = vst.msk [vmem:[%s197 + $0x88] sm:$0xff] %vm243, %v4697
      %4788 = vst.msk [vmem:[%s197 + $0x90] sm:$0xff] %vm243, %v4702
      %4789 = vst.msk [vmem:[%s197 + $0x98] sm:$0xff] %vm243, %v4707
      %4790 = vst.msk [vmem:[%s197 + $0xa0] sm:$0xff] %vm243, %v4712
      %4791 = vst.msk [vmem:[%s197 + $0xa8] sm:$0xff] %vm243, %v4717
      %4792 = vst.msk [vmem:[%s197 + $0xb0] sm:$0xff] %vm243, %v4722
      %4793 = vst.msk [vmem:[%s197 + $0xb8] sm:$0xff] %vm243, %v4727
      %4794 = vst.msk [vmem:[%s197 + $0xc0] sm:$0xff] %vm243, %v4732
      %4795 = vst.msk [vmem:[%s197 + $0xc8] sm:$0xff] %vm243, %v4737
      %4796 = vst.msk [vmem:[%s197 + $0xd0] sm:$0xff] %vm243, %v4742
      %4797 = vst.msk [vmem:[%s197 + $0xd8] sm:$0xff] %vm243, %v4747
      %4798 = vst.msk [vmem:[%s197 + $0xe0] sm:$0xff] %vm243, %v4752
      %4799 = vst.msk [vmem:[%s197 + $0xe8] sm:$0xff] %vm243, %v4757
      %4800 = vst.msk [vmem:[%s197 + $0xf0] sm:$0xff] %vm243, %v4762
      %4801 = vst.msk [vmem:[%s197 + $0xf8] sm:$0xff] %vm243, %v4767
      %p4802 = scmp.lt.s32.totalorder %s15, 1
      %s4803 = scalar_select %p4802, %s15, 1
      %s4804 = smul.addr %s4803, 32
      %s4805 = smul.addr %s4804, 8
      %s4806 = scalar_lea.vmem %s4, %s4805
      // Predicated region
      $region37: #{tpu_custom_call.1} parent=35 // pred_check
        %p4807 = pneg %p122
      $region38: #{tpu_custom_call.1} parent=35 // pred_check_branch
        %4809 = sbr.rel (%p4807) target = $region40
      $region39: #{tpu_custom_call.1} parent=35 // pred_region
        _
      $region40: #{tpu_custom_call.1} parent=35 // pred_fallthru
        _
    $region36: #{tpu_custom_call.1} parent=5 // pred_fallthru
      _
    %p4810 = scmp.le.s32.totalorder 2, %s10
    // Predicated region
    $region41: #{tpu_custom_call.1} parent=5 // pred_check
      %p4811 = pneg %p4810
    $region42: #{tpu_custom_call.1} parent=5 // pred_check_branch
      %4813 = sbr.rel (%p4811) target = $region44
    $region43: #{tpu_custom_call.1} parent=5 // pred_region
      %s4814 = ssub.s32 %s10, 2
      // Predicated region
      $region45: #{tpu_custom_call.1} parent=43 // pred_check
        %p4815 = pneg %p128
      $region46: #{tpu_custom_call.1} parent=43 // pred_check_branch
        %4817 = sbr.rel (%p4815) target = $region48
      $region47: #{tpu_custom_call.1} parent=43 // pred_region
        %p4818 = scmp.lt.s32.totalorder %s16, 1
        %s4819 = scalar_select %p4818, %s16, 1
        %s4820 = smul.addr %s4819, 32
        %s4821 = smul.addr %s4820, 8
        %s4822 = scalar_lea.vmem %s4, %s4821
      $region48: #{tpu_custom_call.1} parent=43 // pred_fallthru
        _
    $region44: #{tpu_custom_call.1} parent=5 // pred_fallthru
      _
  $region6: #{tpu_custom_call.1} parent=0 // loop_footer
    %s14 = sadd.s32 1, %s10
  $region7: #{tpu_custom_call.1} parent=0 // loop_footer_branch
    %9 = sbr.rel target = $region3
  $region8: #{tpu_custom_call.1} parent=0 // loop_exit
    _

</llo_original>
